<compile_context>
chip_gen: v7x
topology: tpu7x:2x2x1
jax: 0.10.0
libtpu: 0.0.40
codegen_flags: <defaults>
</compile_context>

<pallas_src>
import math
import numpy as np
import jax
import jax.numpy as jnp
from jax import lax
from jax.experimental import pallas as pl
from jax.experimental.pallas import tpu as pltpu

C1 = 0.01 ** 2
C2 = 0.03 ** 2
WIN_SIZES = (11, 9, 7, 5, 3)
NUM_WIN = len(WIN_SIZES)
LANES = 128
OUT_PAD = (8, LANES)              # lane-dense per-block partial-sum slab
_DEFAULT_SCOPED_VMEM = 32 << 20   # v6e/v7x scoped default (v5e is 16 MiB)


# ----------------------------------------------------------------------------
# Gaussian window (same formula as RegularizedLoss.gaussian / create_window)
# and its banded "same"-conv matrix.
# ----------------------------------------------------------------------------
def _gaussian_1d(window_size, sigma=1.5):
    g = np.array(
        [math.exp(-((x - window_size // 2) ** 2) / float(2 * sigma ** 2))
         for x in range(window_size)],
        dtype=np.float64)
    return (g / g.sum()).astype(np.float32)


def _banded_matrix(g, size):
    """size x size symmetric matrix M with M[i, j] = g[i - j + pad], |i-j|<=pad.

    Row-vector @ M = zero-padded 'same' cross-correlation with g (identical to
    F.conv2d(..., padding=ws//2) along that axis); g is symmetric so the same
    matrix also works from the left for the other axis.
    """
    ws = len(g)
    pad = ws // 2
    m = np.zeros((size, size), dtype=np.float32)
    for i in range(size):
        for j in range(max(0, i - pad), min(size, i + pad + 1)):
            m[i, j] = g[i - j + pad]
    return m


def _compiler_params(semantics, est_vmem_bytes):
    kw = dict(dimension_semantics=semantics)
    if est_vmem_bytes > _DEFAULT_SCOPED_VMEM:
        kw["vmem_limit_bytes"] = int(min(est_vmem_bytes * 1.25, 120 << 20))
    return pltpu.CompilerParams(**kw)


# ----------------------------------------------------------------------------
# Fused mssim3 kernel: one grid step = one block of (n,c)-planes.  All 5
# window sizes + 3 SSIM pairs + r-weighting are computed in-kernel; the
# per-block partial sum of (r1*l1 + r2*l2 + r3*l3) goes to a lane-dense slab.
# ----------------------------------------------------------------------------
def _make_mssim3_kernel(plane_block):
    PB = plane_block

    def kernel(gw_ref, gh_ref, x1_ref, x2_ref, x3_ref, y_ref, o_ref):
        partial = jnp.float32(0.0)
        for p in range(PB):                      # static unroll over planes
            x1 = jnp.clip(x1_ref[p].astype(jnp.float32), 0.0, 1.0)
            x2 = jnp.clip(x2_ref[p].astype(jnp.float32), 0.0, 1.0)
            x3 = jnp.clip(x3_ref[p].astype(jnp.float32), 0.0, 1.0)
            y = jnp.clip(y_ref[p].astype(jnp.float32), 0.0, 1.0)

            # Window-invariant products: computed ONCE, reused by all windows.
            yy = y * y
            pairs = ((x1, x1 * x1, x1 * y),
                     (x2, x2 * x2, x2 * y),
                     (x3, x3 * x3, x3 * y))

            for w in range(NUM_WIN):             # static unroll over windows
                gw = gw_ref[w]                   # (W, W) banded Gaussian (lane conv)
                gh = gh_ref[w]                   # (H, H) banded Gaussian (sublane conv)

                def conv(z, gw=gw, gh=gh):
                    # zero-padded 'same' conv on the MXU, bf16 single pass,
                    # f32 accumulation.
                    t = jnp.dot(z, gw, preferred_element_type=jnp.float32)
                    return jnp.dot(gh, t, preferred_element_type=jnp.float32)

                mu_y = conv(y)                   # shared by all three SSIM pairs
                mu_y_sq = mu_y * mu_y
                s_yy_c2 = conv(yy) - mu_y_sq + C2

                weighted = None
                sg_sum = None
                for (x, xx, xy) in pairs:
                    mu_x = conv(x)
                    s_xx = conv(xx) - mu_x * mu_x
                    s_xy = conv(xy) - mu_x * mu_y
                    num = (2.0 * mu_x * mu_y + C1) * (2.0 * s_xy + C2)
                    den = (mu_x * mu_x + mu_y_sq + C1) * (s_xx + s_yy_c2)
                    ssim_map = num * pl.reciprocal(den, approx=True)   # EUP
                    # torch.where(sigma1_sq < 1e-4, 1e-4, sigma1_sq) == maximum
                    sg = jnp.maximum(s_xx, 1e-4)
                    ws_map = sg * ssim_map
                    weighted = ws_map if weighted is None else weighted + ws_map
                    sg_sum = sg if sg_sum is None else sg_sum + sg

                inv = pl.reciprocal(sg_sum + 1e-7, approx=True)         # EUP
                partial = partial + jnp.sum(weighted * inv)

        o_ref[...] = jnp.full(o_ref.shape, partial, dtype=jnp.float32)

    return kernel


def mssim3_loss(img1, img2, img3, img, plane_block=1):
    N, C, H, W = img1.shape
    NC = N * C
    assert NC % plane_block == 0
    # Keep n_blocks >= 2 whenever NC >= 2 so both v7x TensorCores get work.
    n_blocks = NC // plane_block

    # Stacked banded Gaussian matrices, VMEM-resident (constant index_map).
    gw_stack = jnp.asarray(np.stack(
        [_banded_matrix(_gaussian_1d(ws), W) for ws in WIN_SIZES]))
    gh_stack = jnp.asarray(np.stack(
        [_banded_matrix(_gaussian_1d(ws), H) for ws in WIN_SIZES]))

    planes = lambda a: a.reshape(NC, H, W)      # free reshape; cast in-kernel
    img_spec = pl.BlockSpec((plane_block, H, W), lambda p: (p, 0, 0))
    gw_spec = pl.BlockSpec((NUM_WIN, W, W), lambda p: (0, 0, 0))
    gh_spec = pl.BlockSpec((NUM_WIN, H, H), lambda p: (0, 0, 0))

    plane_bytes = plane_block * H * W * 4
    est_vmem = (4 * 2 * plane_bytes                     # 4 inputs, double-buffered
                + NUM_WIN * (W * W + H * H) * 4         # resident Gaussian stacks
                + 16 * plane_bytes                      # live f32 temporaries
                + 2 * 8 * LANES * 4)

    # TODO(synk): for large H,W (>=512 on v7x / v5e) stripe the banded conv
    # into <=256-wide row/column stripes with a ws//2 halo (or roll-based
    # shift-accumulate) so MXU MACs scale with the window, not the image.
    partials = pl.pallas_call(
        _make_mssim3_kernel(plane_block),
        out_shape=jax.ShapeDtypeStruct((n_blocks,) + OUT_PAD, jnp.float32),
        grid=(n_blocks,),
        in_specs=[gw_spec, gh_spec, img_spec, img_spec, img_spec, img_spec],
        out_specs=pl.BlockSpec((1,) + OUT_PAD, lambda p: (p, 0, 0)),
        compiler_params=_compiler_params(("parallel",), est_vmem),
    )(gw_stack, gh_stack, planes(img1), planes(img2), planes(img3), planes(img))

    total = jnp.sum(partials[:, 0, 0])
    return (jnp.float32(NUM_WIN) - total / jnp.float32(NC * H * W)) / jnp.float32(NUM_WIN)


# ----------------------------------------------------------------------------
# Single fused L1 reduction for all three scalar losses:
#   mean|x_s0 - x_en_s0| + mean|x_dolp - x_en_dolp| + mean|s0_de - img_ir|
# The two (same-shape) feature pairs are tiled over the grid; the smaller
# image pair is a grid-constant block whose contribution is added at step 0.
# ----------------------------------------------------------------------------
def _rows128(x):
    flat = x.reshape(-1)
    n = flat.shape[0]
    rem = (-n) % LANES
    if rem:
        # |0 - 0| adds nothing.  Only hit for sizes not a multiple of 128.
        flat = jnp.pad(flat, (0, rem))
    return flat.reshape(-1, LANES)


def _make_fused_l1_kernel(tile_rows, rows_feat, inv_feat, inv_img, needs_mask):
    def kernel(a1_ref, b1_ref, a2_ref, b2_ref, ai_ref, bi_ref, o_ref):
        i = pl.program_id(0)
        d = (jnp.abs(a1_ref[...].astype(jnp.float32) - b1_ref[...].astype(jnp.float32))
             + jnp.abs(a2_ref[...].astype(jnp.float32) - b2_ref[...].astype(jnp.float32)))
        if needs_mask:   # ragged last tile of the feature pairs
            row = lax.broadcasted_iota(jnp.int32, d.shape, 0) + i * tile_rows
            d = jnp.where(row < rows_feat, d, 0.0)
        s = jnp.sum(d) * inv_feat
        o_ref[...] = jnp.full(o_ref.shape, s, dtype=jnp.float32)

        @pl.when(i == 0)
        def _():
            t = jnp.sum(jnp.abs(ai_ref[...].astype(jnp.float32)
                                - bi_ref[...].astype(jnp.float32))) * inv_img
            o_ref[...] = o_ref[...] + t

    return kernel


def fused_l1_losses(x_s0, x_en_s0, x_dolp, x_en_dolp, s0_de, img_ir,
                    max_tile_rows=2048):
    assert x_s0.shape == x_en_s0.shape == x_dolp.shape == x_en_dolp.shape
    assert s0_de.shape == img_ir.shape

    a1 = _rows128(x_s0)
    b1 = _rows128(x_en_s0)
    a2 = _rows128(x_dolp)
    b2 = _rows128(x_en_dolp)
    ai = _rows128(s0_de)
    bi = _rows128(img_ir)

    rows_feat = a1.shape[0]
    rows_img = ai.shape[0]
    if rows_feat <= max_tile_rows:
        tile_rows = rows_feat          # full-extent block (no (8,128) issue)
        n_tiles = 1
        needs_mask = False
    else:
        tile_rows = max_tile_rows      # 2048 rows x 128 lanes = 1 MiB / buffer
        n_tiles = pl.cdiv(rows_feat, tile_rows)
        needs_mask = (rows_feat % tile_rows) != 0

    inv_feat = 1.0 / float(x_s0.size)  # both feature pairs share element count
    inv_img = 1.0 / float(s0_de.size)

    feat_spec = pl.BlockSpec((tile_rows, LANES), lambda i: (i, 0))
    img_spec = pl.BlockSpec((rows_img, LANES), lambda i: (0, 0))

    est_vmem = 4 * 2 * tile_rows * LANES * 4 + 2 * rows_img * LANES * 4

    partials = pl.pallas_call(
        _make_fused_l1_kernel(tile_rows, rows_feat, inv_feat, inv_img, needs_mask),
        out_shape=jax.ShapeDtypeStruct((n_tiles,) + OUT_PAD, jnp.float32),
        grid=(n_tiles,),
        in_specs=[feat_spec, feat_spec, feat_spec, feat_spec, img_spec, img_spec],
        out_specs=pl.BlockSpec((1,) + OUT_PAD, lambda i: (i, 0, 0)),
        compiler_params=_compiler_params(("parallel",), est_vmem),
    )(a1, b1, a2, b2, ai, bi)

    return jnp.sum(partials[:, 0, 0])


# ----------------------------------------------------------------------------
# RegularizedLoss.forward
# ----------------------------------------------------------------------------
@jax.jit
def regularized_loss(img_ir, img_p, output_pf, s0_de, dolp_de, s1_s0, aop,
                     x_s0, x_dolp, x_en_s0, x_en_dolp):
    ssim_loss = mssim3_loss(img_ir, img_p, s1_s0, output_pf)
    # polar_loss: I_s0 = 2*(I_0+I_60+I_120)/3 == s0 exactly (the three cosines
    # 120 degrees apart sum to zero) and the reference only returns s0_loss,
    # so it reduces to L1(s0_de, img_ir); dolp_de / aop drop out of the value.
    del dolp_de, aop
    # loss = ssim + 0.25*(s0_loss + dolp_loss) + 0.25*ploss
    #      = ssim + 0.25*(s0_loss + dolp_loss + ploss)
    l1_sum = fused_l1_losses(x_s0, x_en_s0, x_dolp, x_en_dolp, s0_de, img_ir)
    return ssim_loss + 0.25 * l1_sum


if __name__ == "__main__":
    key = jax.random.PRNGKey(0)
    ks = jax.random.split(key, 11)
    N, C, H, W = 2, 1, 16, 16        # polarization image inputs (NCHW)
    Cf = 4                           # encoder-feature channels

    img_shape = (N, C, H, W)
    feat_shape = (N, Cf, H, W)

    img_ir = jax.random.uniform(ks[0], img_shape, jnp.float32)
    img_p = jax.random.uniform(ks[1], img_shape, jnp.float32)
    output_pf = jax.random.uniform(ks[2], img_shape, jnp.float32)
    s0_de = jax.random.uniform(ks[3], img_shape, jnp.float32)
    dolp_de = jax.random.uniform(ks[4], img_shape, jnp.float32)
    s1_s0 = jax.random.uniform(ks[5], img_shape, jnp.float32)
    aop = jax.random.uniform(ks[6], img_shape, jnp.float32)
    x_s0 = jax.random.uniform(ks[7], feat_shape, jnp.float32)
    x_dolp = jax.random.uniform(ks[8], feat_shape, jnp.float32)
    x_en_s0 = jax.random.uniform(ks[9], feat_shape, jnp.float32)
    x_en_dolp = jax.random.uniform(ks[10], feat_shape, jnp.float32)

    loss = regularized_loss(img_ir, img_p, output_pf, s0_de, dolp_de, s1_s0,
                            aop, x_s0, x_dolp, x_en_s0, x_en_dolp)
    jax.block_until_ready(loss)
    print("KERNEL_OK")
</pallas_src>

<mosaic_0001>
module attributes {stable_mosaic.version = 11 : i64} {
  func.func @kernel(%arg0: i32, %arg1: memref<16x128xf32, #tpu.memory_space<vmem>>, %arg2: memref<16x128xf32, #tpu.memory_space<vmem>>, %arg3: memref<16x128xf32, #tpu.memory_space<vmem>>, %arg4: memref<16x128xf32, #tpu.memory_space<vmem>>, %arg5: memref<4x128xf32, #tpu.memory_space<vmem>>, %arg6: memref<4x128xf32, #tpu.memory_space<vmem>>, %arg7: memref<1x8x128xf32, #tpu.memory_space<vmem>>) attributes {dimension_semantics = [#tpu.dimension_semantics<parallel>], iteration_bounds = array<i64: 1>, scalar_prefetch = 0 : i64, scratch_operands = 0 : i64, tpu.core_type = #tpu.core_type<tc>, window_params = [{transform_indices = @transform_0, window_bounds = array<i64: 16, 128>}, {transform_indices = @transform_1, window_bounds = array<i64: 16, 128>}, {transform_indices = @transform_2, window_bounds = array<i64: 16, 128>}, {transform_indices = @transform_3, window_bounds = array<i64: 16, 128>}, {pipeline_mode = #tpu.pipeline_mode<synchronous>, transform_indices = @transform_4, window_bounds = array<i64: 4, 128>}, {pipeline_mode = #tpu.pipeline_mode<synchronous>, transform_indices = @transform_5, window_bounds = array<i64: 4, 128>}, {transform_indices = @transform_6, window_bounds = array<i64: 1, 8, 128>}]} {
    %c0 = arith.constant 0 : index
    %c0_0 = arith.constant 0 : index
    %0 = vector.load %arg1[%c0, %c0_0] : memref<16x128xf32, #tpu.memory_space<vmem>>, vector<16x128xf32>
    %c0_1 = arith.constant 0 : index
    %c0_2 = arith.constant 0 : index
    %1 = vector.load %arg2[%c0_1, %c0_2] : memref<16x128xf32, #tpu.memory_space<vmem>>, vector<16x128xf32>
    %2 = arith.subf %0, %1 : vector<16x128xf32>
    %3 = math.absf %2 : vector<16x128xf32>
    %c0_3 = arith.constant 0 : index
    %c0_4 = arith.constant 0 : index
    %4 = vector.load %arg3[%c0_3, %c0_4] : memref<16x128xf32, #tpu.memory_space<vmem>>, vector<16x128xf32>
    %c0_5 = arith.constant 0 : index
    %c0_6 = arith.constant 0 : index
    %5 = vector.load %arg4[%c0_5, %c0_6] : memref<16x128xf32, #tpu.memory_space<vmem>>, vector<16x128xf32>
    %6 = arith.subf %4, %5 : vector<16x128xf32>
    %7 = math.absf %6 : vector<16x128xf32>
    %8 = arith.addf %3, %7 : vector<16x128xf32>
    %9 = vector.shape_cast %8 : vector<16x128xf32> to vector<1x16x128xf32>
    %cst = arith.constant dense<0.000000e+00> : vector<1xf32>
    %10 = vector.multi_reduction <add>, %9, %cst [1, 2] : vector<1x16x128xf32> to vector<1xf32>
    %11 = vector.shape_cast %10 : vector<1xf32> to vector<1x1x1xf32>
    %12 = vector.extract %11[0, 0, 0] : f32 from vector<1x1x1xf32>
    %cst_7 = arith.constant 4.8828125E-4 : f32
    %13 = arith.mulf %12, %cst_7 : f32
    %14 = vector.broadcast %13 : f32 to vector<1x8x128xf32>
    %c0_8 = arith.constant 0 : index
    %c0_9 = arith.constant 0 : index
    %c0_10 = arith.constant 0 : index
    %15 = vector.load %arg7[%c0_8, %c0_9, %c0_10] : memref<1x8x128xf32, #tpu.memory_space<vmem>>, vector<1x8x128xf32>
    tpu.vector_store %arg7[%c0_8, %c0_9, %c0_10], %14 {strides = array<i32>} : memref<1x8x128xf32, #tpu.memory_space<vmem>>, vector<1x8x128xf32>,
    %c0_i32 = arith.constant 0 : i32
    %16 = arith.cmpi eq, %arg0, %c0_i32 : i32
    %17 = arith.extui %16 : i1 to i32
    %c0_i32_11 = arith.constant 0 : i32
    %18 = arith.cmpi ne, %17, %c0_i32_11 : i32
    scf.if %18 {
      %c0_12 = arith.constant 0 : index
      %c0_13 = arith.constant 0 : index
      %19 = vector.load %arg5[%c0_12, %c0_13] : memref<4x128xf32, #tpu.memory_space<vmem>>, vector<4x128xf32>
      %c0_14 = arith.constant 0 : index
      %c0_15 = arith.constant 0 : index
      %20 = vector.load %arg6[%c0_14, %c0_15] : memref<4x128xf32, #tpu.memory_space<vmem>>, vector<4x128xf32>
      %21 = arith.subf %19, %20 : vector<4x128xf32>
      %22 = math.absf %21 : vector<4x128xf32>
      %23 = vector.shape_cast %22 : vector<4x128xf32> to vector<1x4x128xf32>
      %cst_16 = arith.constant dense<0.000000e+00> : vector<1xf32>
      %24 = vector.multi_reduction <add>, %23, %cst_16 [1, 2] : vector<1x4x128xf32> to vector<1xf32>
      %25 = vector.shape_cast %24 : vector<1xf32> to vector<1x1x1xf32>
      %26 = vector.extract %25[0, 0, 0] : f32 from vector<1x1x1xf32>
      %cst_17 = arith.constant 0.001953125 : f32
      %27 = arith.mulf %26, %cst_17 : f32
      %c0_18 = arith.constant 0 : index
      %c0_19 = arith.constant 0 : index
      %c0_20 = arith.constant 0 : index
      %28 = vector.load %arg7[%c0_18, %c0_19, %c0_20] : memref<1x8x128xf32, #tpu.memory_space<vmem>>, vector<1x8x128xf32>
      %29 = vector.broadcast %27 : f32 to vector<1x8x128xf32>
      %30 = arith.addf %28, %29 : vector<1x8x128xf32>
      %c0_21 = arith.constant 0 : index
      %c0_22 = arith.constant 0 : index
      %c0_23 = arith.constant 0 : index
      %31 = vector.load %arg7[%c0_21, %c0_22, %c0_23] : memref<1x8x128xf32, #tpu.memory_space<vmem>>, vector<1x8x128xf32>
      tpu.vector_store %arg7[%c0_21, %c0_22, %c0_23], %30 {strides = array<i32>} : memref<1x8x128xf32, #tpu.memory_space<vmem>>, vector<1x8x128xf32>,
    } else {
    }
    return
  }
  func.func @transform_0(%arg0: i32) -> (i32, i32) {
    %c0_i32 = arith.constant 0 : i32
    %c0_i32_0 = arith.constant 0 : i32
    return %arg0, %c0_i32 : i32, i32
  }
  func.func @transform_1(%arg0: i32) -> (i32, i32) {
    %c0_i32 = arith.constant 0 : i32
    %c0_i32_0 = arith.constant 0 : i32
    return %arg0, %c0_i32 : i32, i32
  }
  func.func @transform_2(%arg0: i32) -> (i32, i32) {
    %c0_i32 = arith.constant 0 : i32
    %c0_i32_0 = arith.constant 0 : i32
    return %arg0, %c0_i32 : i32, i32
  }
  func.func @transform_3(%arg0: i32) -> (i32, i32) {
    %c0_i32 = arith.constant 0 : i32
    %c0_i32_0 = arith.constant 0 : i32
    return %arg0, %c0_i32 : i32, i32
  }
  func.func @transform_4(%arg0: i32) -> (i32, i32) {
    %c0_i32 = arith.constant 0 : i32
    %c0_i32_0 = arith.constant 0 : i32
    %c0_i32_1 = arith.constant 0 : i32
    return %c0_i32, %c0_i32_0 : i32, i32
  }
  func.func @transform_5(%arg0: i32) -> (i32, i32) {
    %c0_i32 = arith.constant 0 : i32
    %c0_i32_0 = arith.constant 0 : i32
    %c0_i32_1 = arith.constant 0 : i32
    return %c0_i32, %c0_i32_0 : i32, i32
  }
  func.func @transform_6(%arg0: i32) -> (i32, i32, i32) {
    %c0_i32 = arith.constant 0 : i32
    %c0_i32_0 = arith.constant 0 : i32
    %c0_i32_1 = arith.constant 0 : i32
    return %arg0, %c0_i32, %c0_i32_0 : i32, i32, i32
  }
}

module attributes {stable_mosaic.version = 11 : i64} {
  func.func @kernel(%arg0: i32, %arg1: memref<5x16x16xf32, #tpu.memory_space<vmem>>, %arg2: memref<5x16x16xf32, #tpu.memory_space<vmem>>, %arg3: memref<1x16x16xf32, #tpu.memory_space<vmem>>, %arg4: memref<1x16x16xf32, #tpu.memory_space<vmem>>, %arg5: memref<1x16x16xf32, #tpu.memory_space<vmem>>, %arg6: memref<1x16x16xf32, #tpu.memory_space<vmem>>, %arg7: memref<1x8x128xf32, #tpu.memory_space<vmem>>) attributes {dimension_semantics = [#tpu.dimension_semantics<parallel>], iteration_bounds = array<i64: 2>, scalar_prefetch = 0 : i64, scratch_operands = 0 : i64, tpu.core_type = #tpu.core_type<tc>, window_params = [{pipeline_mode = #tpu.pipeline_mode<synchronous>, transform_indices = @transform_0, window_bounds = array<i64: 5, 16, 16>}, {pipeline_mode = #tpu.pipeline_mode<synchronous>, transform_indices = @transform_1, window_bounds = array<i64: 5, 16, 16>}, {transform_indices = @transform_2, window_bounds = array<i64: 1, 16, 16>}, {transform_indices = @transform_3, window_bounds = array<i64: 1, 16, 16>}, {transform_indices = @transform_4, window_bounds = array<i64: 1, 16, 16>}, {transform_indices = @transform_5, window_bounds = array<i64: 1, 16, 16>}, {transform_indices = @transform_6, window_bounds = array<i64: 1, 8, 128>}]} {
    %c0 = arith.constant 0 : index
    %c0_0 = arith.constant 0 : index
    %c0_1 = arith.constant 0 : index
    %0 = vector.load %arg3[%c0, %c0_0, %c0_1] : memref<1x16x16xf32, #tpu.memory_space<vmem>>, vector<1x16x16xf32>
    %1 = vector.shape_cast %0 : vector<1x16x16xf32> to vector<16x16xf32>
    %cst = arith.constant 0.000000e+00 : f32
    %cst_2 = arith.constant 1.000000e+00 : f32
    %2 = vector.broadcast %cst : f32 to vector<16x16xf32>
    %3 = arith.maximumf %2, %1 : vector<16x16xf32>
    %4 = vector.broadcast %cst_2 : f32 to vector<16x16xf32>
    %5 = arith.minimumf %4, %3 : vector<16x16xf32>
    %c0_3 = arith.constant 0 : index
    %c0_4 = arith.constant 0 : index
    %c0_5 = arith.constant 0 : index
    %6 = vector.load %arg4[%c0_3, %c0_4, %c0_5] : memref<1x16x16xf32, #tpu.memory_space<vmem>>, vector<1x16x16xf32>
    %7 = vector.shape_cast %6 : vector<1x16x16xf32> to vector<16x16xf32>
    %cst_6 = arith.constant 0.000000e+00 : f32
    %cst_7 = arith.constant 1.000000e+00 : f32
    %8 = vector.broadcast %cst_6 : f32 to vector<16x16xf32>
    %9 = arith.maximumf %8, %7 : vector<16x16xf32>
    %10 = vector.broadcast %cst_7 : f32 to vector<16x16xf32>
    %11 = arith.minimumf %10, %9 : vector<16x16xf32>
    %c0_8 = arith.constant 0 : index
    %c0_9 = arith.constant 0 : index
    %c0_10 = arith.constant 0 : index
    %12 = vector.load %arg5[%c0_8, %c0_9, %c0_10] : memref<1x16x16xf32, #tpu.memory_space<vmem>>, vector<1x16x16xf32>
    %13 = vector.shape_cast %12 : vector<1x16x16xf32> to vector<16x16xf32>
    %cst_11 = arith.constant 0.000000e+00 : f32
    %cst_12 = arith.constant 1.000000e+00 : f32
    %14 = vector.broadcast %cst_11 : f32 to vector<16x16xf32>
    %15 = arith.maximumf %14, %13 : vector<16x16xf32>
    %16 = vector.broadcast %cst_12 : f32 to vector<16x16xf32>
    %17 = arith.minimumf %16, %15 : vector<16x16xf32>
    %c0_13 = arith.constant 0 : index
    %c0_14 = arith.constant 0 : index
    %c0_15 = arith.constant 0 : index
    %18 = vector.load %arg6[%c0_13, %c0_14, %c0_15] : memref<1x16x16xf32, #tpu.memory_space<vmem>>, vector<1x16x16xf32>
    %19 = vector.shape_cast %18 : vector<1x16x16xf32> to vector<16x16xf32>
    %cst_16 = arith.constant 0.000000e+00 : f32
    %cst_17 = arith.constant 1.000000e+00 : f32
    %20 = vector.broadcast %cst_16 : f32 to vector<16x16xf32>
    %21 = arith.maximumf %20, %19 : vector<16x16xf32>
    %22 = vector.broadcast %cst_17 : f32 to vector<16x16xf32>
    %23 = arith.minimumf %22, %21 : vector<16x16xf32>
    %24 = arith.mulf %23, %23 : vector<16x16xf32>
    %25 = arith.mulf %5, %5 : vector<16x16xf32>
    %26 = arith.mulf %5, %23 : vector<16x16xf32>
    %27 = arith.mulf %11, %11 : vector<16x16xf32>
    %28 = arith.mulf %11, %23 : vector<16x16xf32>
    %29 = arith.mulf %17, %17 : vector<16x16xf32>
    %30 = arith.mulf %17, %23 : vector<16x16xf32>
    %c0_18 = arith.constant 0 : index
    %c0_19 = arith.constant 0 : index
    %c0_20 = arith.constant 0 : index
    %31 = vector.load %arg1[%c0_18, %c0_19, %c0_20] : memref<5x16x16xf32, #tpu.memory_space<vmem>>, vector<1x16x16xf32>
    %32 = vector.shape_cast %31 : vector<1x16x16xf32> to vector<16x16xf32>
    %c0_21 = arith.constant 0 : index
    %c0_22 = arith.constant 0 : index
    %c0_23 = arith.constant 0 : index
    %33 = vector.load %arg2[%c0_21, %c0_22, %c0_23] : memref<5x16x16xf32, #tpu.memory_space<vmem>>, vector<1x16x16xf32>
    %34 = vector.shape_cast %33 : vector<1x16x16xf32> to vector<16x16xf32>
    %cst_24 = arith.constant dense<0.000000e+00> : vector<16x16xf32>
    %35 = tpu.matmul %23, %32, %cst_24 {dimension_numbers = #tpu.dot_dimension_numbers<[1], [0], [0], [1], [0, 0, 1, 1], [], []>} : vector<16x16xf32>, vector<16x16xf32>, vector<16x16xf32> -> vector<16x16xf32>
    %cst_25 = arith.constant dense<0.000000e+00> : vector<16x16xf32>
    %36 = tpu.matmul %34, %35, %cst_25 {dimension_numbers = #tpu.dot_dimension_numbers<[1], [0], [0], [1], [0, 0, 1, 1], [], []>} : vector<16x16xf32>, vector<16x16xf32>, vector<16x16xf32> -> vector<16x16xf32>
    %37 = arith.mulf %36, %36 : vector<16x16xf32>
    %cst_26 = arith.constant dense<0.000000e+00> : vector<16x16xf32>
    %38 = tpu.matmul %24, %32, %cst_26 {dimension_numbers = #tpu.dot_dimension_numbers<[1], [0], [0], [1], [0, 0, 1, 1], [], []>} : vector<16x16xf32>, vector<16x16xf32>, vector<16x16xf32> -> vector<16x16xf32>
    %cst_27 = arith.constant dense<0.000000e+00> : vector<16x16xf32>
    %39 = tpu.matmul %34, %38, %cst_27 {dimension_numbers = #tpu.dot_dimension_numbers<[1], [0], [0], [1], [0, 0, 1, 1], [], []>} : vector<16x16xf32>, vector<16x16xf32>, vector<16x16xf32> -> vector<16x16xf32>
    %40 = arith.subf %39, %37 : vector<16x16xf32>
    %cst_28 = arith.constant 8.99999984E-4 : f32
    %41 = vector.broadcast %cst_28 : f32 to vector<16x16xf32>
    %42 = arith.addf %40, %41 : vector<16x16xf32>
    %cst_29 = arith.constant dense<0.000000e+00> : vector<16x16xf32>
    %43 = tpu.matmul %5, %32, %cst_29 {dimension_numbers = #tpu.dot_dimension_numbers<[1], [0], [0], [1], [0, 0, 1, 1], [], []>} : vector<16x16xf32>, vector<16x16xf32>, vector<16x16xf32> -> vector<16x16xf32>
    %cst_30 = arith.constant dense<0.000000e+00> : vector<16x16xf32>
    %44 = tpu.matmul %34, %43, %cst_30 {dimension_numbers = #tpu.dot_dimension_numbers<[1], [0], [0], [1], [0, 0, 1, 1], [], []>} : vector<16x16xf32>, vector<16x16xf32>, vector<16x16xf32> -> vector<16x16xf32>
    %cst_31 = arith.constant dense<0.000000e+00> : vector<16x16xf32>
    %45 = tpu.matmul %25, %32, %cst_31 {dimension_numbers = #tpu.dot_dimension_numbers<[1], [0], [0], [1], [0, 0, 1, 1], [], []>} : vector<16x16xf32>, vector<16x16xf32>, vector<16x16xf32> -> vector<16x16xf32>
    %cst_32 = arith.constant dense<0.000000e+00> : vector<16x16xf32>
    %46 = tpu.matmul %34, %45, %cst_32 {dimension_numbers = #tpu.dot_dimension_numbers<[1], [0], [0], [1], [0, 0, 1, 1], [], []>} : vector<16x16xf32>, vector<16x16xf32>, vector<16x16xf32> -> vector<16x16xf32>
    %47 = arith.mulf %44, %44 : vector<16x16xf32>
    %48 = arith.subf %46, %47 : vector<16x16xf32>
    %cst_33 = arith.constant dense<0.000000e+00> : vector<16x16xf32>
    %49 = tpu.matmul %26, %32, %cst_33 {dimension_numbers = #tpu.dot_dimension_numbers<[1], [0], [0], [1], [0, 0, 1, 1], [], []>} : vector<16x16xf32>, vector<16x16xf32>, vector<16x16xf32> -> vector<16x16xf32>
    %cst_34 = arith.constant dense<0.000000e+00> : vector<16x16xf32>
    %50 = tpu.matmul %34, %49, %cst_34 {dimension_numbers = #tpu.dot_dimension_numbers<[1], [0], [0], [1], [0, 0, 1, 1], [], []>} : vector<16x16xf32>, vector<16x16xf32>, vector<16x16xf32> -> vector<16x16xf32>
    %51 = arith.mulf %44, %36 : vector<16x16xf32>
    %52 = arith.subf %50, %51 : vector<16x16xf32>
    %cst_35 = arith.constant 2.000000e+00 : f32
    %53 = vector.broadcast %cst_35 : f32 to vector<16x16xf32>
    %54 = arith.mulf %53, %44 : vector<16x16xf32>
    %55 = arith.mulf %54, %36 : vector<16x16xf32>
    %cst_36 = arith.constant 9.99999974E-5 : f32
    %56 = vector.broadcast %cst_36 : f32 to vector<16x16xf32>
    %57 = arith.addf %55, %56 : vector<16x16xf32>
    %cst_37 = arith.constant 2.000000e+00 : f32
    %58 = vector.broadcast %cst_37 : f32 to vector<16x16xf32>
    %59 = arith.mulf %58, %52 : vector<16x16xf32>
    %cst_38 = arith.constant 8.99999984E-4 : f32
    %60 = vector.broadcast %cst_38 : f32 to vector<16x16xf32>
    %61 = arith.addf %59, %60 : vector<16x16xf32>
    %62 = arith.mulf %57, %61 : vector<16x16xf32>
    %63 = arith.mulf %44, %44 : vector<16x16xf32>
    %64 = arith.addf %63, %37 : vector<16x16xf32>
    %cst_39 = arith.constant 9.99999974E-5 : f32
    %65 = vector.broadcast %cst_39 : f32 to vector<16x16xf32>
    %66 = arith.addf %64, %65 : vector<16x16xf32>
    %67 = arith.addf %48, %42 : vector<16x16xf32>
    %68 = arith.mulf %66, %67 : vector<16x16xf32>
    %69 = tpu.reciprocal %68 {approx = true} : vector<16x16xf32> -> vector<16x16xf32>
    %70 = arith.mulf %62, %69 : vector<16x16xf32>
    %cst_40 = arith.constant 9.99999974E-5 : f32
    %71 = vector.broadcast %cst_40 : f32 to vector<16x16xf32>
    %72 = arith.maximumf %48, %71 : vector<16x16xf32>
    %73 = arith.mulf %72, %70 : vector<16x16xf32>
    %cst_41 = arith.constant dense<0.000000e+00> : vector<16x16xf32>
    %74 = tpu.matmul %11, %32, %cst_41 {dimension_numbers = #tpu.dot_dimension_numbers<[1], [0], [0], [1], [0, 0, 1, 1], [], []>} : vector<16x16xf32>, vector<16x16xf32>, vector<16x16xf32> -> vector<16x16xf32>
    %cst_42 = arith.constant dense<0.000000e+00> : vector<16x16xf32>
    %75 = tpu.matmul %34, %74, %cst_42 {dimension_numbers = #tpu.dot_dimension_numbers<[1], [0], [0], [1], [0, 0, 1, 1], [], []>} : vector<16x16xf32>, vector<16x16xf32>, vector<16x16xf32> -> vector<16x16xf32>
    %cst_43 = arith.constant dense<0.000000e+00> : vector<16x16xf32>
    %76 = tpu.matmul %27, %32, %cst_43 {dimension_numbers = #tpu.dot_dimension_numbers<[1], [0], [0], [1], [0, 0, 1, 1], [], []>} : vector<16x16xf32>, vector<16x16xf32>, vector<16x16xf32> -> vector<16x16xf32>
    %cst_44 = arith.constant dense<0.000000e+00> : vector<16x16xf32>
    %77 = tpu.matmul %34, %76, %cst_44 {dimension_numbers = #tpu.dot_dimension_numbers<[1], [0], [0], [1], [0, 0, 1, 1], [], []>} : vector<16x16xf32>, vector<16x16xf32>, vector<16x16xf32> -> vector<16x16xf32>
    %78 = arith.mulf %75, %75 : vector<16x16xf32>
    %79 = arith.subf %77, %78 : vector<16x16xf32>
    %cst_45 = arith.constant dense<0.000000e+00> : vector<16x16xf32>
    %80 = tpu.matmul %28, %32, %cst_45 {dimension_numbers = #tpu.dot_dimension_numbers<[1], [0], [0], [1], [0, 0, 1, 1], [], []>} : vector<16x16xf32>, vector<16x16xf32>, vector<16x16xf32> -> vector<16x16xf32>
    %cst_46 = arith.constant dense<0.000000e+00> : vector<16x16xf32>
    %81 = tpu.matmul %34, %80, %cst_46 {dimension_numbers = #tpu.dot_dimension_numbers<[1], [0], [0], [1], [0, 0, 1, 1], [], []>} : vector<16x16xf32>, vector<16x16xf32>, vector<16x16xf32> -> vector<16x16xf32>
    %82 = arith.mulf %75, %36 : vector<16x16xf32>
    %83 = arith.subf %81, %82 : vector<16x16xf32>
    %cst_47 = arith.constant 2.000000e+00 : f32
    %84 = vector.broadcast %cst_47 : f32 to vector<16x16xf32>
    %85 = arith.mulf %84, %75 : vector<16x16xf32>
    %86 = arith.mulf %85, %36 : vector<16x16xf32>
    %cst_48 = arith.constant 9.99999974E-5 : f32
    %87 = vector.broadcast %cst_48 : f32 to vector<16x16xf32>
    %88 = arith.addf %86, %87 : vector<16x16xf32>
    %cst_49 = arith.constant 2.000000e+00 : f32
    %89 = vector.broadcast %cst_49 : f32 to vector<16x16xf32>
    %90 = arith.mulf %89, %83 : vector<16x16xf32>
    %cst_50 = arith.constant 8.99999984E-4 : f32
    %91 = vector.broadcast %cst_50 : f32 to vector<16x16xf32>
    %92 = arith.addf %90, %91 : vector<16x16xf32>
    %93 = arith.mulf %88, %92 : vector<16x16xf32>
    %94 = arith.mulf %75, %75 : vector<16x16xf32>
    %95 = arith.addf %94, %37 : vector<16x16xf32>
    %cst_51 = arith.constant 9.99999974E-5 : f32
    %96 = vector.broadcast %cst_51 : f32 to vector<16x16xf32>
    %97 = arith.addf %95, %96 : vector<16x16xf32>
    %98 = arith.addf %79, %42 : vector<16x16xf32>
    %99 = arith.mulf %97, %98 : vector<16x16xf32>
    %100 = tpu.reciprocal %99 {approx = true} : vector<16x16xf32> -> vector<16x16xf32>
    %101 = arith.mulf %93, %100 : vector<16x16xf32>
    %cst_52 = arith.constant 9.99999974E-5 : f32
    %102 = vector.broadcast %cst_52 : f32 to vector<16x16xf32>
    %103 = arith.maximumf %79, %102 : vector<16x16xf32>
    %104 = arith.mulf %103, %101 : vector<16x16xf32>
    %105 = arith.addf %73, %104 : vector<16x16xf32>
    %106 = arith.addf %72, %103 : vector<16x16xf32>
    %cst_53 = arith.constant dense<0.000000e+00> : vector<16x16xf32>
    %107 = tpu.matmul %17, %32, %cst_53 {dimension_numbers = #tpu.dot_dimension_numbers<[1], [0], [0], [1], [0, 0, 1, 1], [], []>} : vector<16x16xf32>, vector<16x16xf32>, vector<16x16xf32> -> vector<16x16xf32>
    %cst_54 = arith.constant dense<0.000000e+00> : vector<16x16xf32>
    %108 = tpu.matmul %34, %107, %cst_54 {dimension_numbers = #tpu.dot_dimension_numbers<[1], [0], [0], [1], [0, 0, 1, 1], [], []>} : vector<16x16xf32>, vector<16x16xf32>, vector<16x16xf32> -> vector<16x16xf32>
    %cst_55 = arith.constant dense<0.000000e+00> : vector<16x16xf32>
    %109 = tpu.matmul %29, %32, %cst_55 {dimension_numbers = #tpu.dot_dimension_numbers<[1], [0], [0], [1], [0, 0, 1, 1], [], []>} : vector<16x16xf32>, vector<16x16xf32>, vector<16x16xf32> -> vector<16x16xf32>
    %cst_56 = arith.constant dense<0.000000e+00> : vector<16x16xf32>
    %110 = tpu.matmul %34, %109, %cst_56 {dimension_numbers = #tpu.dot_dimension_numbers<[1], [0], [0], [1], [0, 0, 1, 1], [], []>} : vector<16x16xf32>, vector<16x16xf32>, vector<16x16xf32> -> vector<16x16xf32>
    %111 = arith.mulf %108, %108 : vector<16x16xf32>
    %112 = arith.subf %110, %111 : vector<16x16xf32>
    %cst_57 = arith.constant dense<0.000000e+00> : vector<16x16xf32>
    %113 = tpu.matmul %30, %32, %cst_57 {dimension_numbers = #tpu.dot_dimension_numbers<[1], [0], [0], [1], [0, 0, 1, 1], [], []>} : vector<16x16xf32>, vector<16x16xf32>, vector<16x16xf32> -> vector<16x16xf32>
    %cst_58 = arith.constant dense<0.000000e+00> : vector<16x16xf32>
    %114 = tpu.matmul %34, %113, %cst_58 {dimension_numbers = #tpu.dot_dimension_numbers<[1], [0], [0], [1], [0, 0, 1, 1], [], []>} : vector<16x16xf32>, vector<16x16xf32>, vector<16x16xf32> -> vector<16x16xf32>
    %115 = arith.mulf %108, %36 : vector<16x16xf32>
    %116 = arith.subf %114, %115 : vector<16x16xf32>
    %cst_59 = arith.constant 2.000000e+00 : f32
    %117 = vector.broadcast %cst_59 : f32 to vector<16x16xf32>
    %118 = arith.mulf %117, %108 : vector<16x16xf32>
    %119 = arith.mulf %118, %36 : vector<16x16xf32>
    %cst_60 = arith.constant 9.99999974E-5 : f32
    %120 = vector.broadcast %cst_60 : f32 to vector<16x16xf32>
    %121 = arith.addf %119, %120 : vector<16x16xf32>
    %cst_61 = arith.constant 2.000000e+00 : f32
    %122 = vector.broadcast %cst_61 : f32 to vector<16x16xf32>
    %123 = arith.mulf %122, %116 : vector<16x16xf32>
    %cst_62 = arith.constant 8.99999984E-4 : f32
    %124 = vector.broadcast %cst_62 : f32 to vector<16x16xf32>
    %125 = arith.addf %123, %124 : vector<16x16xf32>
    %126 = arith.mulf %121, %125 : vector<16x16xf32>
    %127 = arith.mulf %108, %108 : vector<16x16xf32>
    %128 = arith.addf %127, %37 : vector<16x16xf32>
    %cst_63 = arith.constant 9.99999974E-5 : f32
    %129 = vector.broadcast %cst_63 : f32 to vector<16x16xf32>
    %130 = arith.addf %128, %129 : vector<16x16xf32>
    %131 = arith.addf %112, %42 : vector<16x16xf32>
    %132 = arith.mulf %130, %131 : vector<16x16xf32>
    %133 = tpu.reciprocal %132 {approx = true} : vector<16x16xf32> -> vector<16x16xf32>
    %134 = arith.mulf %126, %133 : vector<16x16xf32>
    %cst_64 = arith.constant 9.99999974E-5 : f32
    %135 = vector.broadcast %cst_64 : f32 to vector<16x16xf32>
    %136 = arith.maximumf %112, %135 : vector<16x16xf32>
    %137 = arith.mulf %136, %134 : vector<16x16xf32>
    %138 = arith.addf %105, %137 : vector<16x16xf32>
    %139 = arith.addf %106, %136 : vector<16x16xf32>
    %cst_65 = arith.constant 1.000000e-07 : f32
    %140 = vector.broadcast %cst_65 : f32 to vector<16x16xf32>
    %141 = arith.addf %139, %140 : vector<16x16xf32>
    %142 = tpu.reciprocal %141 {approx = true} : vector<16x16xf32> -> vector<16x16xf32>
    %143 = arith.mulf %138, %142 : vector<16x16xf32>
    %144 = vector.shape_cast %143 : vector<16x16xf32> to vector<1x16x16xf32>
    %cst_66 = arith.constant dense<0.000000e+00> : vector<1xf32>
    %145 = vector.multi_reduction <add>, %144, %cst_66 [1, 2] : vector<1x16x16xf32> to vector<1xf32>
    %146 = vector.shape_cast %145 : vector<1xf32> to vector<1x1x1xf32>
    %147 = vector.extract %146[0, 0, 0] : f32 from vector<1x1x1xf32>
    %cst_67 = arith.constant 0.000000e+00 : f32
    %148 = arith.addf %cst_67, %147 : f32
    %c1 = arith.constant 1 : index
    %c0_68 = arith.constant 0 : index
    %c0_69 = arith.constant 0 : index
    %149 = vector.load %arg1[%c1, %c0_68, %c0_69] : memref<5x16x16xf32, #tpu.memory_space<vmem>>, vector<1x16x16xf32>
    %150 = vector.shape_cast %149 : vector<1x16x16xf32> to vector<16x16xf32>
    %c1_70 = arith.constant 1 : index
    %c0_71 = arith.constant 0 : index
    %c0_72 = arith.constant 0 : index
    %151 = vector.load %arg2[%c1_70, %c0_71, %c0_72] : memref<5x16x16xf32, #tpu.memory_space<vmem>>, vector<1x16x16xf32>
    %152 = vector.shape_cast %151 : vector<1x16x16xf32> to vector<16x16xf32>
    %cst_73 = arith.constant dense<0.000000e+00> : vector<16x16xf32>
    %153 = tpu.matmul %23, %150, %cst_73 {dimension_numbers = #tpu.dot_dimension_numbers<[1], [0], [0], [1], [0, 0, 1, 1], [], []>} : vector<16x16xf32>, vector<16x16xf32>, vector<16x16xf32> -> vector<16x16xf32>
    %cst_74 = arith.constant dense<0.000000e+00> : vector<16x16xf32>
    %154 = tpu.matmul %152, %153, %cst_74 {dimension_numbers = #tpu.dot_dimension_numbers<[1], [0], [0], [1], [0, 0, 1, 1], [], []>} : vector<16x16xf32>, vector<16x16xf32>, vector<16x16xf32> -> vector<16x16xf32>
    %155 = arith.mulf %154, %154 : vector<16x16xf32>
    %cst_75 = arith.constant dense<0.000000e+00> : vector<16x16xf32>
    %156 = tpu.matmul %24, %150, %cst_75 {dimension_numbers = #tpu.dot_dimension_numbers<[1], [0], [0], [1], [0, 0, 1, 1], [], []>} : vector<16x16xf32>, vector<16x16xf32>, vector<16x16xf32> -> vector<16x16xf32>
    %cst_76 = arith.constant dense<0.000000e+00> : vector<16x16xf32>
    %157 = tpu.matmul %152, %156, %cst_76 {dimension_numbers = #tpu.dot_dimension_numbers<[1], [0], [0], [1], [0, 0, 1, 1], [], []>} : vector<16x16xf32>, vector<16x16xf32>, vector<16x16xf32> -> vector<16x16xf32>
    %158 = arith.subf %157, %155 : vector<16x16xf32>
    %cst_77 = arith.constant 8.99999984E-4 : f32
    %159 = vector.broadcast %cst_77 : f32 to vector<16x16xf32>
    %160 = arith.addf %158, %159 : vector<16x16xf32>
    %cst_78 = arith.constant dense<0.000000e+00> : vector<16x16xf32>
    %161 = tpu.matmul %5, %150, %cst_78 {dimension_numbers = #tpu.dot_dimension_numbers<[1], [0], [0], [1], [0, 0, 1, 1], [], []>} : vector<16x16xf32>, vector<16x16xf32>, vector<16x16xf32> -> vector<16x16xf32>
    %cst_79 = arith.constant dense<0.000000e+00> : vector<16x16xf32>
    %162 = tpu.matmul %152, %161, %cst_79 {dimension_numbers = #tpu.dot_dimension_numbers<[1], [0], [0], [1], [0, 0, 1, 1], [], []>} : vector<16x16xf32>, vector<16x16xf32>, vector<16x16xf32> -> vector<16x16xf32>
    %cst_80 = arith.constant dense<0.000000e+00> : vector<16x16xf32>
    %163 = tpu.matmul %25, %150, %cst_80 {dimension_numbers = #tpu.dot_dimension_numbers<[1], [0], [0], [1], [0, 0, 1, 1], [], []>} : vector<16x16xf32>, vector<16x16xf32>, vector<16x16xf32> -> vector<16x16xf32>
    %cst_81 = arith.constant dense<0.000000e+00> : vector<16x16xf32>
    %164 = tpu.matmul %152, %163, %cst_81 {dimension_numbers = #tpu.dot_dimension_numbers<[1], [0], [0], [1], [0, 0, 1, 1], [], []>} : vector<16x16xf32>, vector<16x16xf32>, vector<16x16xf32> -> vector<16x16xf32>
    %165 = arith.mulf %162, %162 : vector<16x16xf32>
    %166 = arith.subf %164, %165 : vector<16x16xf32>
    %cst_82 = arith.constant dense<0.000000e+00> : vector<16x16xf32>
    %167 = tpu.matmul %26, %150, %cst_82 {dimension_numbers = #tpu.dot_dimension_numbers<[1], [0], [0], [1], [0, 0, 1, 1], [], []>} : vector<16x16xf32>, vector<16x16xf32>, vector<16x16xf32> -> vector<16x16xf32>
    %cst_83 = arith.constant dense<0.000000e+00> : vector<16x16xf32>
    %168 = tpu.matmul %152, %167, %cst_83 {dimension_numbers = #tpu.dot_dimension_numbers<[1], [0], [0], [1], [0, 0, 1, 1], [], []>} : vector<16x16xf32>, vector<16x16xf32>, vector<16x16xf32> -> vector<16x16xf32>
    %169 = arith.mulf %162, %154 : vector<16x16xf32>
    %170 = arith.subf %168, %169 : vector<16x16xf32>
    %cst_84 = arith.constant 2.000000e+00 : f32
    %171 = vector.broadcast %cst_84 : f32 to vector<16x16xf32>
    %172 = arith.mulf %171, %162 : vector<16x16xf32>
    %173 = arith.mulf %172, %154 : vector<16x16xf32>
    %cst_85 = arith.constant 9.99999974E-5 : f32
    %174 = vector.broadcast %cst_85 : f32 to vector<16x16xf32>
    %175 = arith.addf %173, %174 : vector<16x16xf32>
    %cst_86 = arith.constant 2.000000e+00 : f32
    %176 = vector.broadcast %cst_86 : f32 to vector<16x16xf32>
    %177 = arith.mulf %176, %170 : vector<16x16xf32>
    %cst_87 = arith.constant 8.99999984E-4 : f32
    %178 = vector.broadcast %cst_87 : f32 to vector<16x16xf32>
    %179 = arith.addf %177, %178 : vector<16x16xf32>
    %180 = arith.mulf %175, %179 : vector<16x16xf32>
    %181 = arith.mulf %162, %162 : vector<16x16xf32>
    %182 = arith.addf %181, %155 : vector<16x16xf32>
    %cst_88 = arith.constant 9.99999974E-5 : f32
    %183 = vector.broadcast %cst_88 : f32 to vector<16x16xf32>
    %184 = arith.addf %182, %183 : vector<16x16xf32>
    %185 = arith.addf %166, %160 : vector<16x16xf32>
    %186 = arith.mulf %184, %185 : vector<16x16xf32>
    %187 = tpu.reciprocal %186 {approx = true} : vector<16x16xf32> -> vector<16x16xf32>
    %188 = arith.mulf %180, %187 : vector<16x16xf32>
    %cst_89 = arith.constant 9.99999974E-5 : f32
    %189 = vector.broadcast %cst_89 : f32 to vector<16x16xf32>
    %190 = arith.maximumf %166, %189 : vector<16x16xf32>
    %191 = arith.mulf %190, %188 : vector<16x16xf32>
    %cst_90 = arith.constant dense<0.000000e+00> : vector<16x16xf32>
    %192 = tpu.matmul %11, %150, %cst_90 {dimension_numbers = #tpu.dot_dimension_numbers<[1], [0], [0], [1], [0, 0, 1, 1], [], []>} : vector<16x16xf32>, vector<16x16xf32>, vector<16x16xf32> -> vector<16x16xf32>
    %cst_91 = arith.constant dense<0.000000e+00> : vector<16x16xf32>
    %193 = tpu.matmul %152, %192, %cst_91 {dimension_numbers = #tpu.dot_dimension_numbers<[1], [0], [0], [1], [0, 0, 1, 1], [], []>} : vector<16x16xf32>, vector<16x16xf32>, vector<16x16xf32> -> vector<16x16xf32>
    %cst_92 = arith.constant dense<0.000000e+00> : vector<16x16xf32>
    %194 = tpu.matmul %27, %150, %cst_92 {dimension_numbers = #tpu.dot_dimension_numbers<[1], [0], [0], [1], [0, 0, 1, 1], [], []>} : vector<16x16xf32>, vector<16x16xf32>, vector<16x16xf32> -> vector<16x16xf32>
    %cst_93 = arith.constant dense<0.000000e+00> : vector<16x16xf32>
    %195 = tpu.matmul %152, %194, %cst_93 {dimension_numbers = #tpu.dot_dimension_numbers<[1], [0], [0], [1], [0, 0, 1, 1], [], []>} : vector<16x16xf32>, vector<16x16xf32>, vector<16x16xf32> -> vector<16x16xf32>
    %196 = arith.mulf %193, %193 : vector<16x16xf32>
    %197 = arith.subf %195, %196 : vector<16x16xf32>
    %cst_94 = arith.constant dense<0.000000e+00> : vector<16x16xf32>
    %198 = tpu.matmul %28, %150, %cst_94 {dimension_numbers = #tpu.dot_dimension_numbers<[1], [0], [0], [1], [0, 0, 1, 1], [], []>} : vector<16x16xf32>, vector<16x16xf32>, vector<16x16xf32> -> vector<16x16xf32>
    %cst_95 = arith.constant dense<0.000000e+00> : vector<16x16xf32>
    %199 = tpu.matmul %152, %198, %cst_95 {dimension_numbers = #tpu.dot_dimension_numbers<[1], [0], [0], [1], [0, 0, 1, 1], [], []>} : vector<16x16xf32>, vector<16x16xf32>, vector<16x16xf32> -> vector<16x16xf32>
    %200 = arith.mulf %193, %154 : vector<16x16xf32>
    %201 = arith.subf %199, %200 : vector<16x16xf32>
    %cst_96 = arith.constant 2.000000e+00 : f32
    %202 = vector.broadcast %cst_96 : f32 to vector<16x16xf32>
    %203 = arith.mulf %202, %193 : vector<16x16xf32>
    %204 = arith.mulf %203, %154 : vector<16x16xf32>
    %cst_97 = arith.constant 9.99999974E-5 : f32
    %205 = vector.broadcast %cst_97 : f32 to vector<16x16xf32>
    %206 = arith.addf %204, %205 : vector<16x16xf32>
    %cst_98 = arith.constant 2.000000e+00 : f32
    %207 = vector.broadcast %cst_98 : f32 to vector<16x16xf32>
    %208 = arith.mulf %207, %201 : vector<16x16xf32>
    %cst_99 = arith.constant 8.99999984E-4 : f32
    %209 = vector.broadcast %cst_99 : f32 to vector<16x16xf32>
    %210 = arith.addf %208, %209 : vector<16x16xf32>
    %211 = arith.mulf %206, %210 : vector<16x16xf32>
    %212 = arith.mulf %193, %193 : vector<16x16xf32>
    %213 = arith.addf %212, %155 : vector<16x16xf32>
    %cst_100 = arith.constant 9.99999974E-5 : f32
    %214 = vector.broadcast %cst_100 : f32 to vector<16x16xf32>
    %215 = arith.addf %213, %214 : vector<16x16xf32>
    %216 = arith.addf %197, %160 : vector<16x16xf32>
    %217 = arith.mulf %215, %216 : vector<16x16xf32>
    %218 = tpu.reciprocal %217 {approx = true} : vector<16x16xf32> -> vector<16x16xf32>
    %219 = arith.mulf %211, %218 : vector<16x16xf32>
    %cst_101 = arith.constant 9.99999974E-5 : f32
    %220 = vector.broadcast %cst_101 : f32 to vector<16x16xf32>
    %221 = arith.maximumf %197, %220 : vector<16x16xf32>
    %222 = arith.mulf %221, %219 : vector<16x16xf32>
    %223 = arith.addf %191, %222 : vector<16x16xf32>
    %224 = arith.addf %190, %221 : vector<16x16xf32>
    %cst_102 = arith.constant dense<0.000000e+00> : vector<16x16xf32>
    %225 = tpu.matmul %17, %150, %cst_102 {dimension_numbers = #tpu.dot_dimension_numbers<[1], [0], [0], [1], [0, 0, 1, 1], [], []>} : vector<16x16xf32>, vector<16x16xf32>, vector<16x16xf32> -> vector<16x16xf32>
    %cst_103 = arith.constant dense<0.000000e+00> : vector<16x16xf32>
    %226 = tpu.matmul %152, %225, %cst_103 {dimension_numbers = #tpu.dot_dimension_numbers<[1], [0], [0], [1], [0, 0, 1, 1], [], []>} : vector<16x16xf32>, vector<16x16xf32>, vector<16x16xf32> -> vector<16x16xf32>
    %cst_104 = arith.constant dense<0.000000e+00> : vector<16x16xf32>
    %227 = tpu.matmul %29, %150, %cst_104 {dimension_numbers = #tpu.dot_dimension_numbers<[1], [0], [0], [1], [0, 0, 1, 1], [], []>} : vector<16x16xf32>, vector<16x16xf32>, vector<16x16xf32> -> vector<16x16xf32>
    %cst_105 = arith.constant dense<0.000000e+00> : vector<16x16xf32>
    %228 = tpu.matmul %152, %227, %cst_105 {dimension_numbers = #tpu.dot_dimension_numbers<[1], [0], [0], [1], [0, 0, 1, 1], [], []>} : vector<16x16xf32>, vector<16x16xf32>, vector<16x16xf32> -> vector<16x16xf32>
    %229 = arith.mulf %226, %226 : vector<16x16xf32>
    %230 = arith.subf %228, %229 : vector<16x16xf32>
    %cst_106 = arith.constant dense<0.000000e+00> : vector<16x16xf32>
    %231 = tpu.matmul %30, %150, %cst_106 {dimension_numbers = #tpu.dot_dimension_numbers<[1], [0], [0], [1], [0, 0, 1, 1], [], []>} : vector<16x16xf32>, vector<16x16xf32>, vector<16x16xf32> -> vector<16x16xf32>
    %cst_107 = arith.constant dense<0.000000e+00> : vector<16x16xf32>
    %232 = tpu.matmul %152, %231, %cst_107 {dimension_numbers = #tpu.dot_dimension_numbers<[1], [0], [0], [1], [0, 0, 1, 1], [], []>} : vector<16x16xf32>, vector<16x16xf32>, vector<16x16xf32> -> vector<16x16xf32>
    %233 = arith.mulf %226, %154 : vector<16x16xf32>
    %234 = arith.subf %232, %233 : vector<16x16xf32>
    %cst_108 = arith.constant 2.000000e+00 : f32
    %235 = vector.broadcast %cst_108 : f32 to vector<16x16xf32>
    %236 = arith.mulf %235, %226 : vector<16x16xf32>
    %237 = arith.mulf %236, %154 : vector<16x16xf32>
    %cst_109 = arith.constant 9.99999974E-5 : f32
    %238 = vector.broadcast %cst_109 : f32 to vector<16x16xf32>
    %239 = arith.addf %237, %238 : vector<16x16xf32>
    %cst_110 = arith.constant 2.000000e+00 : f32
    %240 = vector.broadcast %cst_110 : f32 to vector<16x16xf32>
    %241 = arith.mulf %240, %234 : vector<16x16xf32>
    %cst_111 = arith.constant 8.99999984E-4 : f32
    %242 = vector.broadcast %cst_111 : f32 to vector<16x16xf32>
    %243 = arith.addf %241, %242 : vector<16x16xf32>
    %244 = arith.mulf %239, %243 : vector<16x16xf32>
    %245 = arith.mulf %226, %226 : vector<16x16xf32>
    %246 = arith.addf %245, %155 : vector<16x16xf32>
    %cst_112 = arith.constant 9.99999974E-5 : f32
    %247 = vector.broadcast %cst_112 : f32 to vector<16x16xf32>
    %248 = arith.addf %246, %247 : vector<16x16xf32>
    %249 = arith.addf %230, %160 : vector<16x16xf32>
    %250 = arith.mulf %248, %249 : vector<16x16xf32>
    %251 = tpu.reciprocal %250 {approx = true} : vector<16x16xf32> -> vector<16x16xf32>
    %252 = arith.mulf %244, %251 : vector<16x16xf32>
    %cst_113 = arith.constant 9.99999974E-5 : f32
    %253 = vector.broadcast %cst_113 : f32 to vector<16x16xf32>
    %254 = arith.maximumf %230, %253 : vector<16x16xf32>
    %255 = arith.mulf %254, %252 : vector<16x16xf32>
    %256 = arith.addf %223, %255 : vector<16x16xf32>
    %257 = arith.addf %224, %254 : vector<16x16xf32>
    %cst_114 = arith.constant 1.000000e-07 : f32
    %258 = vector.broadcast %cst_114 : f32 to vector<16x16xf32>
    %259 = arith.addf %257, %258 : vector<16x16xf32>
    %260 = tpu.reciprocal %259 {approx = true} : vector<16x16xf32> -> vector<16x16xf32>
    %261 = arith.mulf %256, %260 : vector<16x16xf32>
    %262 = vector.shape_cast %261 : vector<16x16xf32> to vector<1x16x16xf32>
    %cst_115 = arith.constant dense<0.000000e+00> : vector<1xf32>
    %263 = vector.multi_reduction <add>, %262, %cst_115 [1, 2] : vector<1x16x16xf32> to vector<1xf32>
    %264 = vector.shape_cast %263 : vector<1xf32> to vector<1x1x1xf32>
    %265 = vector.extract %264[0, 0, 0] : f32 from vector<1x1x1xf32>
    %266 = arith.addf %148, %265 : f32
    %c2 = arith.constant 2 : index
    %c0_116 = arith.constant 0 : index
    %c0_117 = arith.constant 0 : index
    %267 = vector.load %arg1[%c2, %c0_116, %c0_117] : memref<5x16x16xf32, #tpu.memory_space<vmem>>, vector<1x16x16xf32>
    %268 = vector.shape_cast %267 : vector<1x16x16xf32> to vector<16x16xf32>
    %c2_118 = arith.constant 2 : index
    %c0_119 = arith.constant 0 : index
    %c0_120 = arith.constant 0 : index
    %269 = vector.load %arg2[%c2_118, %c0_119, %c0_120] : memref<5x16x16xf32, #tpu.memory_space<vmem>>, vector<1x16x16xf32>
    %270 = vector.shape_cast %269 : vector<1x16x16xf32> to vector<16x16xf32>
    %cst_121 = arith.constant dense<0.000000e+00> : vector<16x16xf32>
    %271 = tpu.matmul %23, %268, %cst_121 {dimension_numbers = #tpu.dot_dimension_numbers<[1], [0], [0], [1], [0, 0, 1, 1], [], []>} : vector<16x16xf32>, vector<16x16xf32>, vector<16x16xf32> -> vector<16x16xf32>
    %cst_122 = arith.constant dense<0.000000e+00> : vector<16x16xf32>
    %272 = tpu.matmul %270, %271, %cst_122 {dimension_numbers = #tpu.dot_dimension_numbers<[1], [0], [0], [1], [0, 0, 1, 1], [], []>} : vector<16x16xf32>, vector<16x16xf32>, vector<16x16xf32> -> vector<16x16xf32>
    %273 = arith.mulf %272, %272 : vector<16x16xf32>
    %cst_123 = arith.constant dense<0.000000e+00> : vector<16x16xf32>
    %274 = tpu.matmul %24, %268, %cst_123 {dimension_numbers = #tpu.dot_dimension_numbers<[1], [0], [0], [1], [0, 0, 1, 1], [], []>} : vector<16x16xf32>, vector<16x16xf32>, vector<16x16xf32> -> vector<16x16xf32>
    %cst_124 = arith.constant dense<0.000000e+00> : vector<16x16xf32>
    %275 = tpu.matmul %270, %274, %cst_124 {dimension_numbers = #tpu.dot_dimension_numbers<[1], [0], [0], [1], [0, 0, 1, 1], [], []>} : vector<16x16xf32>, vector<16x16xf32>, vector<16x16xf32> -> vector<16x16xf32>
    %276 = arith.subf %275, %273 : vector<16x16xf32>
    %cst_125 = arith.constant 8.99999984E-4 : f32
    %277 = vector.broadcast %cst_125 : f32 to vector<16x16xf32>
    %278 = arith.addf %276, %277 : vector<16x16xf32>
    %cst_126 = arith.constant dense<0.000000e+00> : vector<16x16xf32>
    %279 = tpu.matmul %5, %268, %cst_126 {dimension_numbers = #tpu.dot_dimension_numbers<[1], [0], [0], [1], [0, 0, 1, 1], [], []>} : vector<16x16xf32>, vector<16x16xf32>, vector<16x16xf32> -> vector<16x16xf32>
    %cst_127 = arith.constant dense<0.000000e+00> : vector<16x16xf32>
    %280 = tpu.matmul %270, %279, %cst_127 {dimension_numbers = #tpu.dot_dimension_numbers<[1], [0], [0], [1], [0, 0, 1, 1], [], []>} : vector<16x16xf32>, vector<16x16xf32>, vector<16x16xf32> -> vector<16x16xf32>
    %cst_128 = arith.constant dense<0.000000e+00> : vector<16x16xf32>
    %281 = tpu.matmul %25, %268, %cst_128 {dimension_numbers = #tpu.dot_dimension_numbers<[1], [0], [0], [1], [0, 0, 1, 1], [], []>} : vector<16x16xf32>, vector<16x16xf32>, vector<16x16xf32> -> vector<16x16xf32>
    %cst_129 = arith.constant dense<0.000000e+00> : vector<16x16xf32>
    %282 = tpu.matmul %270, %281, %cst_129 {dimension_numbers = #tpu.dot_dimension_numbers<[1], [0], [0], [1], [0, 0, 1, 1], [], []>} : vector<16x16xf32>, vector<16x16xf32>, vector<16x16xf32> -> vector<16x16xf32>
    %283 = arith.mulf %280, %280 : vector<16x16xf32>
    %284 = arith.subf %282, %283 : vector<16x16xf32>
    %cst_130 = arith.constant dense<0.000000e+00> : vector<16x16xf32>
    %285 = tpu.matmul %26, %268, %cst_130 {dimension_numbers = #tpu.dot_dimension_numbers<[1], [0], [0], [1], [0, 0, 1, 1], [], []>} : vector<16x16xf32>, vector<16x16xf32>, vector<16x16xf32> -> vector<16x16xf32>
    %cst_131 = arith.constant dense<0.000000e+00> : vector<16x16xf32>
    %286 = tpu.matmul %270, %285, %cst_131 {dimension_numbers = #tpu.dot_dimension_numbers<[1], [0], [0], [1], [0, 0, 1, 1], [], []>} : vector<16x16xf32>, vector<16x16xf32>, vector<16x16xf32> -> vector<16x16xf32>
    %287 = arith.mulf %280, %272 : vector<16x16xf32>
    %288 = arith.subf %286, %287 : vector<16x16xf32>
    %cst_132 = arith.constant 2.000000e+00 : f32
    %289 = vector.broadcast %cst_132 : f32 to vector<16x16xf32>
    %290 = arith.mulf %289, %280 : vector<16x16xf32>
    %291 = arith.mulf %290, %272 : vector<16x16xf32>
    %cst_133 = arith.constant 9.99999974E-5 : f32
    %292 = vector.broadcast %cst_133 : f32 to vector<16x16xf32>
    %293 = arith.addf %291, %292 : vector<16x16xf32>
    %cst_134 = arith.constant 2.000000e+00 : f32
    %294 = vector.broadcast %cst_134 : f32 to vector<16x16xf32>
    %295 = arith.mulf %294, %288 : vector<16x16xf32>
    %cst_135 = arith.constant 8.99999984E-4 : f32
    %296 = vector.broadcast %cst_135 : f32 to vector<16x16xf32>
    %297 = arith.addf %295, %296 : vector<16x16xf32>
    %298 = arith.mulf %293, %297 : vector<16x16xf32>
    %299 = arith.mulf %280, %280 : vector<16x16xf32>
    %300 = arith.addf %299, %273 : vector<16x16xf32>
    %cst_136 = arith.constant 9.99999974E-5 : f32
    %301 = vector.broadcast %cst_136 : f32 to vector<16x16xf32>
    %302 = arith.addf %300, %301 : vector<16x16xf32>
    %303 = arith.addf %284, %278 : vector<16x16xf32>
    %304 = arith.mulf %302, %303 : vector<16x16xf32>
    %305 = tpu.reciprocal %304 {approx = true} : vector<16x16xf32> -> vector<16x16xf32>
    %306 = arith.mulf %298, %305 : vector<16x16xf32>
    %cst_137 = arith.constant 9.99999974E-5 : f32
    %307 = vector.broadcast %cst_137 : f32 to vector<16x16xf32>
    %308 = arith.maximumf %284, %307 : vector<16x16xf32>
    %309 = arith.mulf %308, %306 : vector<16x16xf32>
    %cst_138 = arith.constant dense<0.000000e+00> : vector<16x16xf32>
    %310 = tpu.matmul %11, %268, %cst_138 {dimension_numbers = #tpu.dot_dimension_numbers<[1], [0], [0], [1], [0, 0, 1, 1], [], []>} : vector<16x16xf32>, vector<16x16xf32>, vector<16x16xf32> -> vector<16x16xf32>
    %cst_139 = arith.constant dense<0.000000e+00> : vector<16x16xf32>
    %311 = tpu.matmul %270, %310, %cst_139 {dimension_numbers = #tpu.dot_dimension_numbers<[1], [0], [0], [1], [0, 0, 1, 1], [], []>} : vector<16x16xf32>, vector<16x16xf32>, vector<16x16xf32> -> vector<16x16xf32>
    %cst_140 = arith.constant dense<0.000000e+00> : vector<16x16xf32>
    %312 = tpu.matmul %27, %268, %cst_140 {dimension_numbers = #tpu.dot_dimension_numbers<[1], [0], [0], [1], [0, 0, 1, 1], [], []>} : vector<16x16xf32>, vector<16x16xf32>, vector<16x16xf32> -> vector<16x16xf32>
    %cst_141 = arith.constant dense<0.000000e+00> : vector<16x16xf32>
    %313 = tpu.matmul %270, %312, %cst_141 {dimension_numbers = #tpu.dot_dimension_numbers<[1], [0], [0], [1], [0, 0, 1, 1], [], []>} : vector<16x16xf32>, vector<16x16xf32>, vector<16x16xf32> -> vector<16x16xf32>
    %314 = arith.mulf %311, %311 : vector<16x16xf32>
    %315 = arith.subf %313, %314 : vector<16x16xf32>
    %cst_142 = arith.constant dense<0.000000e+00> : vector<16x16xf32>
    %316 = tpu.matmul %28, %268, %cst_142 {dimension_numbers = #tpu.dot_dimension_numbers<[1], [0], [0], [1], [0, 0, 1, 1], [], []>} : vector<16x16xf32>, vector<16x16xf32>, vector<16x16xf32> -> vector<16x16xf32>
    %cst_143 = arith.constant dense<0.000000e+00> : vector<16x16xf32>
    %317 = tpu.matmul %270, %316, %cst_143 {dimension_numbers = #tpu.dot_dimension_numbers<[1], [0], [0], [1], [0, 0, 1, 1], [], []>} : vector<16x16xf32>, vector<16x16xf32>, vector<16x16xf32> -> vector<16x16xf32>
    %318 = arith.mulf %311, %272 : vector<16x16xf32>
    %319 = arith.subf %317, %318 : vector<16x16xf32>
    %cst_144 = arith.constant 2.000000e+00 : f32
    %320 = vector.broadcast %cst_144 : f32 to vector<16x16xf32>
    %321 = arith.mulf %320, %311 : vector<16x16xf32>
    %322 = arith.mulf %321, %272 : vector<16x16xf32>
    %cst_145 = arith.constant 9.99999974E-5 : f32
    %323 = vector.broadcast %cst_145 : f32 to vector<16x16xf32>
    %324 = arith.addf %322, %323 : vector<16x16xf32>
    %cst_146 = arith.constant 2.000000e+00 : f32
    %325 = vector.broadcast %cst_146 : f32 to vector<16x16xf32>
    %326 = arith.mulf %325, %319 : vector<16x16xf32>
    %cst_147 = arith.constant 8.99999984E-4 : f32
    %327 = vector.broadcast %cst_147 : f32 to vector<16x16xf32>
    %328 = arith.addf %326, %327 : vector<16x16xf32>
    %329 = arith.mulf %324, %328 : vector<16x16xf32>
    %330 = arith.mulf %311, %311 : vector<16x16xf32>
    %331 = arith.addf %330, %273 : vector<16x16xf32>
    %cst_148 = arith.constant 9.99999974E-5 : f32
    %332 = vector.broadcast %cst_148 : f32 to vector<16x16xf32>
    %333 = arith.addf %331, %332 : vector<16x16xf32>
    %334 = arith.addf %315, %278 : vector<16x16xf32>
    %335 = arith.mulf %333, %334 : vector<16x16xf32>
    %336 = tpu.reciprocal %335 {approx = true} : vector<16x16xf32> -> vector<16x16xf32>
    %337 = arith.mulf %329, %336 : vector<16x16xf32>
    %cst_149 = arith.constant 9.99999974E-5 : f32
    %338 = vector.broadcast %cst_149 : f32 to vector<16x16xf32>
    %339 = arith.maximumf %315, %338 : vector<16x16xf32>
    %340 = arith.mulf %339, %337 : vector<16x16xf32>
    %341 = arith.addf %309, %340 : vector<16x16xf32>
    %342 = arith.addf %308, %339 : vector<16x16xf32>
    %cst_150 = arith.constant dense<0.000000e+00> : vector<16x16xf32>
    %343 = tpu.matmul %17, %268, %cst_150 {dimension_numbers = #tpu.dot_dimension_numbers<[1], [0], [0], [1], [0, 0, 1, 1], [], []>} : vector<16x16xf32>, vector<16x16xf32>, vector<16x16xf32> -> vector<16x16xf32>
    %cst_151 = arith.constant dense<0.000000e+00> : vector<16x16xf32>
    %344 = tpu.matmul %270, %343, %cst_151 {dimension_numbers = #tpu.dot_dimension_numbers<[1], [0], [0], [1], [0, 0, 1, 1], [], []>} : vector<16x16xf32>, vector<16x16xf32>, vector<16x16xf32> -> vector<16x16xf32>
    %cst_152 = arith.constant dense<0.000000e+00> : vector<16x16xf32>
    %345 = tpu.matmul %29, %268, %cst_152 {dimension_numbers = #tpu.dot_dimension_numbers<[1], [0], [0], [1], [0, 0, 1, 1], [], []>} : vector<16x16xf32>, vector<16x16xf32>, vector<16x16xf32> -> vector<16x16xf32>
    %cst_153 = arith.constant dense<0.000000e+00> : vector<16x16xf32>
    %346 = tpu.matmul %270, %345, %cst_153 {dimension_numbers = #tpu.dot_dimension_numbers<[1], [0], [0], [1], [0, 0, 1, 1], [], []>} : vector<16x16xf32>, vector<16x16xf32>, vector<16x16xf32> -> vector<16x16xf32>
    %347 = arith.mulf %344, %344 : vector<16x16xf32>
    %348 = arith.subf %346, %347 : vector<16x16xf32>
    %cst_154 = arith.constant dense<0.000000e+00> : vector<16x16xf32>
    %349 = tpu.matmul %30, %268, %cst_154 {dimension_numbers = #tpu.dot_dimension_numbers<[1], [0], [0], [1], [0, 0, 1, 1], [], []>} : vector<16x16xf32>, vector<16x16xf32>, vector<16x16xf32> -> vector<16x16xf32>
    %cst_155 = arith.constant dense<0.000000e+00> : vector<16x16xf32>
    %350 = tpu.matmul %270, %349, %cst_155 {dimension_numbers = #tpu.dot_dimension_numbers<[1], [0], [0], [1], [0, 0, 1, 1], [], []>} : vector<16x16xf32>, vector<16x16xf32>, vector<16x16xf32> -> vector<16x16xf32>
    %351 = arith.mulf %344, %272 : vector<16x16xf32>
    %352 = arith.subf %350, %351 : vector<16x16xf32>
    %cst_156 = arith.constant 2.000000e+00 : f32
    %353 = vector.broadcast %cst_156 : f32 to vector<16x16xf32>
    %354 = arith.mulf %353, %344 : vector<16x16xf32>
    %355 = arith.mulf %354, %272 : vector<16x16xf32>
    %cst_157 = arith.constant 9.99999974E-5 : f32
    %356 = vector.broadcast %cst_157 : f32 to vector<16x16xf32>
    %357 = arith.addf %355, %356 : vector<16x16xf32>
    %cst_158 = arith.constant 2.000000e+00 : f32
    %358 = vector.broadcast %cst_158 : f32 to vector<16x16xf32>
    %359 = arith.mulf %358, %352 : vector<16x16xf32>
    %cst_159 = arith.constant 8.99999984E-4 : f32
    %360 = vector.broadcast %cst_159 : f32 to vector<16x16xf32>
    %361 = arith.addf %359, %360 : vector<16x16xf32>
    %362 = arith.mulf %357, %361 : vector<16x16xf32>
    %363 = arith.mulf %344, %344 : vector<16x16xf32>
    %364 = arith.addf %363, %273 : vector<16x16xf32>
    %cst_160 = arith.constant 9.99999974E-5 : f32
    %365 = vector.broadcast %cst_160 : f32 to vector<16x16xf32>
    %366 = arith.addf %364, %365 : vector<16x16xf32>
    %367 = arith.addf %348, %278 : vector<16x16xf32>
    %368 = arith.mulf %366, %367 : vector<16x16xf32>
    %369 = tpu.reciprocal %368 {approx = true} : vector<16x16xf32> -> vector<16x16xf32>
    %370 = arith.mulf %362, %369 : vector<16x16xf32>
    %cst_161 = arith.constant 9.99999974E-5 : f32
    %371 = vector.broadcast %cst_161 : f32 to vector<16x16xf32>
    %372 = arith.maximumf %348, %371 : vector<16x16xf32>
    %373 = arith.mulf %372, %370 : vector<16x16xf32>
    %374 = arith.addf %341, %373 : vector<16x16xf32>
    %375 = arith.addf %342, %372 : vector<16x16xf32>
    %cst_162 = arith.constant 1.000000e-07 : f32
    %376 = vector.broadcast %cst_162 : f32 to vector<16x16xf32>
    %377 = arith.addf %375, %376 : vector<16x16xf32>
    %378 = tpu.reciprocal %377 {approx = true} : vector<16x16xf32> -> vector<16x16xf32>
    %379 = arith.mulf %374, %378 : vector<16x16xf32>
    %380 = vector.shape_cast %379 : vector<16x16xf32> to vector<1x16x16xf32>
    %cst_163 = arith.constant dense<0.000000e+00> : vector<1xf32>
    %381 = vector.multi_reduction <add>, %380, %cst_163 [1, 2] : vector<1x16x16xf32> to vector<1xf32>
    %382 = vector.shape_cast %381 : vector<1xf32> to vector<1x1x1xf32>
    %383 = vector.extract %382[0, 0, 0] : f32 from vector<1x1x1xf32>
    %384 = arith.addf %266, %383 : f32
    %c3 = arith.constant 3 : index
    %c0_164 = arith.constant 0 : index
    %c0_165 = arith.constant 0 : index
    %385 = vector.load %arg1[%c3, %c0_164, %c0_165] : memref<5x16x16xf32, #tpu.memory_space<vmem>>, vector<1x16x16xf32>
    %386 = vector.shape_cast %385 : vector<1x16x16xf32> to vector<16x16xf32>
    %c3_166 = arith.constant 3 : index
    %c0_167 = arith.constant 0 : index
    %c0_168 = arith.constant 0 : index
    %387 = vector.load %arg2[%c3_166, %c0_167, %c0_168] : memref<5x16x16xf32, #tpu.memory_space<vmem>>, vector<1x16x16xf32>
    %388 = vector.shape_cast %387 : vector<1x16x16xf32> to vector<16x16xf32>
    %cst_169 = arith.constant dense<0.000000e+00> : vector<16x16xf32>
    %389 = tpu.matmul %23, %386, %cst_169 {dimension_numbers = #tpu.dot_dimension_numbers<[1], [0], [0], [1], [0, 0, 1, 1], [], []>} : vector<16x16xf32>, vector<16x16xf32>, vector<16x16xf32> -> vector<16x16xf32>
    %cst_170 = arith.constant dense<0.000000e+00> : vector<16x16xf32>
    %390 = tpu.matmul %388, %389, %cst_170 {dimension_numbers = #tpu.dot_dimension_numbers<[1], [0], [0], [1], [0, 0, 1, 1], [], []>} : vector<16x16xf32>, vector<16x16xf32>, vector<16x16xf32> -> vector<16x16xf32>
    %391 = arith.mulf %390, %390 : vector<16x16xf32>
    %cst_171 = arith.constant dense<0.000000e+00> : vector<16x16xf32>
    %392 = tpu.matmul %24, %386, %cst_171 {dimension_numbers = #tpu.dot_dimension_numbers<[1], [0], [0], [1], [0, 0, 1, 1], [], []>} : vector<16x16xf32>, vector<16x16xf32>, vector<16x16xf32> -> vector<16x16xf32>
    %cst_172 = arith.constant dense<0.000000e+00> : vector<16x16xf32>
    %393 = tpu.matmul %388, %392, %cst_172 {dimension_numbers = #tpu.dot_dimension_numbers<[1], [0], [0], [1], [0, 0, 1, 1], [], []>} : vector<16x16xf32>, vector<16x16xf32>, vector<16x16xf32> -> vector<16x16xf32>
    %394 = arith.subf %393, %391 : vector<16x16xf32>
    %cst_173 = arith.constant 8.99999984E-4 : f32
    %395 = vector.broadcast %cst_173 : f32 to vector<16x16xf32>
    %396 = arith.addf %394, %395 : vector<16x16xf32>
    %cst_174 = arith.constant dense<0.000000e+00> : vector<16x16xf32>
    %397 = tpu.matmul %5, %386, %cst_174 {dimension_numbers = #tpu.dot_dimension_numbers<[1], [0], [0], [1], [0, 0, 1, 1], [], []>} : vector<16x16xf32>, vector<16x16xf32>, vector<16x16xf32> -> vector<16x16xf32>
    %cst_175 = arith.constant dense<0.000000e+00> : vector<16x16xf32>
    %398 = tpu.matmul %388, %397, %cst_175 {dimension_numbers = #tpu.dot_dimension_numbers<[1], [0], [0], [1], [0, 0, 1, 1], [], []>} : vector<16x16xf32>, vector<16x16xf32>, vector<16x16xf32> -> vector<16x16xf32>
    %cst_176 = arith.constant dense<0.000000e+00> : vector<16x16xf32>
    %399 = tpu.matmul %25, %386, %cst_176 {dimension_numbers = #tpu.dot_dimension_numbers<[1], [0], [0], [1], [0, 0, 1, 1], [], []>} : vector<16x16xf32>, vector<16x16xf32>, vector<16x16xf32> -> vector<16x16xf32>
    %cst_177 = arith.constant dense<0.000000e+00> : vector<16x16xf32>
    %400 = tpu.matmul %388, %399, %cst_177 {dimension_numbers = #tpu.dot_dimension_numbers<[1], [0], [0], [1], [0, 0, 1, 1], [], []>} : vector<16x16xf32>, vector<16x16xf32>, vector<16x16xf32> -> vector<16x16xf32>
    %401 = arith.mulf %398, %398 : vector<16x16xf32>
    %402 = arith.subf %400, %401 : vector<16x16xf32>
    %cst_178 = arith.constant dense<0.000000e+00> : vector<16x16xf32>
    %403 = tpu.matmul %26, %386, %cst_178 {dimension_numbers = #tpu.dot_dimension_numbers<[1], [0], [0], [1], [0, 0, 1, 1], [], []>} : vector<16x16xf32>, vector<16x16xf32>, vector<16x16xf32> -> vector<16x16xf32>
    %cst_179 = arith.constant dense<0.000000e+00> : vector<16x16xf32>
    %404 = tpu.matmul %388, %403, %cst_179 {dimension_numbers = #tpu.dot_dimension_numbers<[1], [0], [0], [1], [0, 0, 1, 1], [], []>} : vector<16x16xf32>, vector<16x16xf32>, vector<16x16xf32> -> vector<16x16xf32>
    %405 = arith.mulf %398, %390 : vector<16x16xf32>
    %406 = arith.subf %404, %405 : vector<16x16xf32>
    %cst_180 = arith.constant 2.000000e+00 : f32
    %407 = vector.broadcast %cst_180 : f32 to vector<16x16xf32>
    %408 = arith.mulf %407, %398 : vector<16x16xf32>
    %409 = arith.mulf %408, %390 : vector<16x16xf32>
    %cst_181 = arith.constant 9.99999974E-5 : f32
    %410 = vector.broadcast %cst_181 : f32 to vector<16x16xf32>
    %411 = arith.addf %409, %410 : vector<16x16xf32>
    %cst_182 = arith.constant 2.000000e+00 : f32
    %412 = vector.broadcast %cst_182 : f32 to vector<16x16xf32>
    %413 = arith.mulf %412, %406 : vector<16x16xf32>
    %cst_183 = arith.constant 8.99999984E-4 : f32
    %414 = vector.broadcast %cst_183 : f32 to vector<16x16xf32>
    %415 = arith.addf %413, %414 : vector<16x16xf32>
    %416 = arith.mulf %411, %415 : vector<16x16xf32>
    %417 = arith.mulf %398, %398 : vector<16x16xf32>
    %418 = arith.addf %417, %391 : vector<16x16xf32>
    %cst_184 = arith.constant 9.99999974E-5 : f32
    %419 = vector.broadcast %cst_184 : f32 to vector<16x16xf32>
    %420 = arith.addf %418, %419 : vector<16x16xf32>
    %421 = arith.addf %402, %396 : vector<16x16xf32>
    %422 = arith.mulf %420, %421 : vector<16x16xf32>
    %423 = tpu.reciprocal %422 {approx = true} : vector<16x16xf32> -> vector<16x16xf32>
    %424 = arith.mulf %416, %423 : vector<16x16xf32>
    %cst_185 = arith.constant 9.99999974E-5 : f32
    %425 = vector.broadcast %cst_185 : f32 to vector<16x16xf32>
    %426 = arith.maximumf %402, %425 : vector<16x16xf32>
    %427 = arith.mulf %426, %424 : vector<16x16xf32>
    %cst_186 = arith.constant dense<0.000000e+00> : vector<16x16xf32>
    %428 = tpu.matmul %11, %386, %cst_186 {dimension_numbers = #tpu.dot_dimension_numbers<[1], [0], [0], [1], [0, 0, 1, 1], [], []>} : vector<16x16xf32>, vector<16x16xf32>, vector<16x16xf32> -> vector<16x16xf32>
    %cst_187 = arith.constant dense<0.000000e+00> : vector<16x16xf32>
    %429 = tpu.matmul %388, %428, %cst_187 {dimension_numbers = #tpu.dot_dimension_numbers<[1], [0], [0], [1], [0, 0, 1, 1], [], []>} : vector<16x16xf32>, vector<16x16xf32>, vector<16x16xf32> -> vector<16x16xf32>
    %cst_188 = arith.constant dense<0.000000e+00> : vector<16x16xf32>
    %430 = tpu.matmul %27, %386, %cst_188 {dimension_numbers = #tpu.dot_dimension_numbers<[1], [0], [0], [1], [0, 0, 1, 1], [], []>} : vector<16x16xf32>, vector<16x16xf32>, vector<16x16xf32> -> vector<16x16xf32>
    %cst_189 = arith.constant dense<0.000000e+00> : vector<16x16xf32>
    %431 = tpu.matmul %388, %430, %cst_189 {dimension_numbers = #tpu.dot_dimension_numbers<[1], [0], [0], [1], [0, 0, 1, 1], [], []>} : vector<16x16xf32>, vector<16x16xf32>, vector<16x16xf32> -> vector<16x16xf32>
    %432 = arith.mulf %429, %429 : vector<16x16xf32>
    %433 = arith.subf %431, %432 : vector<16x16xf32>
    %cst_190 = arith.constant dense<0.000000e+00> : vector<16x16xf32>
    %434 = tpu.matmul %28, %386, %cst_190 {dimension_numbers = #tpu.dot_dimension_numbers<[1], [0], [0], [1], [0, 0, 1, 1], [], []>} : vector<16x16xf32>, vector<16x16xf32>, vector<16x16xf32> -> vector<16x16xf32>
    %cst_191 = arith.constant dense<0.000000e+00> : vector<16x16xf32>
    %435 = tpu.matmul %388, %434, %cst_191 {dimension_numbers = #tpu.dot_dimension_numbers<[1], [0], [0], [1], [0, 0, 1, 1], [], []>} : vector<16x16xf32>, vector<16x16xf32>, vector<16x16xf32> -> vector<16x16xf32>
    %436 = arith.mulf %429, %390 : vector<16x16xf32>
    %437 = arith.subf %435, %436 : vector<16x16xf32>
    %cst_192 = arith.constant 2.000000e+00 : f32
    %438 = vector.broadcast %cst_192 : f32 to vector<16x16xf32>
    %439 = arith.mulf %438, %429 : vector<16x16xf32>
    %440 = arith.mulf %439, %390 : vector<16x16xf32>
    %cst_193 = arith.constant 9.99999974E-5 : f32
    %441 = vector.broadcast %cst_193 : f32 to vector<16x16xf32>
    %442 = arith.addf %440, %441 : vector<16x16xf32>
    %cst_194 = arith.constant 2.000000e+00 : f32
    %443 = vector.broadcast %cst_194 : f32 to vector<16x16xf32>
    %444 = arith.mulf %443, %437 : vector<16x16xf32>
    %cst_195 = arith.constant 8.99999984E-4 : f32
    %445 = vector.broadcast %cst_195 : f32 to vector<16x16xf32>
    %446 = arith.addf %444, %445 : vector<16x16xf32>
    %447 = arith.mulf %442, %446 : vector<16x16xf32>
    %448 = arith.mulf %429, %429 : vector<16x16xf32>
    %449 = arith.addf %448, %391 : vector<16x16xf32>
    %cst_196 = arith.constant 9.99999974E-5 : f32
    %450 = vector.broadcast %cst_196 : f32 to vector<16x16xf32>
    %451 = arith.addf %449, %450 : vector<16x16xf32>
    %452 = arith.addf %433, %396 : vector<16x16xf32>
    %453 = arith.mulf %451, %452 : vector<16x16xf32>
    %454 = tpu.reciprocal %453 {approx = true} : vector<16x16xf32> -> vector<16x16xf32>
    %455 = arith.mulf %447, %454 : vector<16x16xf32>
    %cst_197 = arith.constant 9.99999974E-5 : f32
    %456 = vector.broadcast %cst_197 : f32 to vector<16x16xf32>
    %457 = arith.maximumf %433, %456 : vector<16x16xf32>
    %458 = arith.mulf %457, %455 : vector<16x16xf32>
    %459 = arith.addf %427, %458 : vector<16x16xf32>
    %460 = arith.addf %426, %457 : vector<16x16xf32>
    %cst_198 = arith.constant dense<0.000000e+00> : vector<16x16xf32>
    %461 = tpu.matmul %17, %386, %cst_198 {dimension_numbers = #tpu.dot_dimension_numbers<[1], [0], [0], [1], [0, 0, 1, 1], [], []>} : vector<16x16xf32>, vector<16x16xf32>, vector<16x16xf32> -> vector<16x16xf32>
    %cst_199 = arith.constant dense<0.000000e+00> : vector<16x16xf32>
    %462 = tpu.matmul %388, %461, %cst_199 {dimension_numbers = #tpu.dot_dimension_numbers<[1], [0], [0], [1], [0, 0, 1, 1], [], []>} : vector<16x16xf32>, vector<16x16xf32>, vector<16x16xf32> -> vector<16x16xf32>
    %cst_200 = arith.constant dense<0.000000e+00> : vector<16x16xf32>
    %463 = tpu.matmul %29, %386, %cst_200 {dimension_numbers = #tpu.dot_dimension_numbers<[1], [0], [0], [1], [0, 0, 1, 1], [], []>} : vector<16x16xf32>, vector<16x16xf32>, vector<16x16xf32> -> vector<16x16xf32>
    %cst_201 = arith.constant dense<0.000000e+00> : vector<16x16xf32>
    %464 = tpu.matmul %388, %463, %cst_201 {dimension_numbers = #tpu.dot_dimension_numbers<[1], [0], [0], [1], [0, 0, 1, 1], [], []>} : vector<16x16xf32>, vector<16x16xf32>, vector<16x16xf32> -> vector<16x16xf32>
    %465 = arith.mulf %462, %462 : vector<16x16xf32>
    %466 = arith.subf %464, %465 : vector<16x16xf32>
    %cst_202 = arith.constant dense<0.000000e+00> : vector<16x16xf32>
    %467 = tpu.matmul %30, %386, %cst_202 {dimension_numbers = #tpu.dot_dimension_numbers<[1], [0], [0], [1], [0, 0, 1, 1], [], []>} : vector<16x16xf32>, vector<16x16xf32>, vector<16x16xf32> -> vector<16x16xf32>
    %cst_203 = arith.constant dense<0.000000e+00> : vector<16x16xf32>
    %468 = tpu.matmul %388, %467, %cst_203 {dimension_numbers = #tpu.dot_dimension_numbers<[1], [0], [0], [1], [0, 0, 1, 1], [], []>} : vector<16x16xf32>, vector<16x16xf32>, vector<16x16xf32> -> vector<16x16xf32>
    %469 = arith.mulf %462, %390 : vector<16x16xf32>
    %470 = arith.subf %468, %469 : vector<16x16xf32>
    %cst_204 = arith.constant 2.000000e+00 : f32
    %471 = vector.broadcast %cst_204 : f32 to vector<16x16xf32>
    %472 = arith.mulf %471, %462 : vector<16x16xf32>
    %473 = arith.mulf %472, %390 : vector<16x16xf32>
    %cst_205 = arith.constant 9.99999974E-5 : f32
    %474 = vector.broadcast %cst_205 : f32 to vector<16x16xf32>
    %475 = arith.addf %473, %474 : vector<16x16xf32>
    %cst_206 = arith.constant 2.000000e+00 : f32
    %476 = vector.broadcast %cst_206 : f32 to vector<16x16xf32>
    %477 = arith.mulf %476, %470 : vector<16x16xf32>
    %cst_207 = arith.constant 8.99999984E-4 : f32
    %478 = vector.broadcast %cst_207 : f32 to vector<16x16xf32>
    %479 = arith.addf %477, %478 : vector<16x16xf32>
    %480 = arith.mulf %475, %479 : vector<16x16xf32>
    %481 = arith.mulf %462, %462 : vector<16x16xf32>
    %482 = arith.addf %481, %391 : vector<16x16xf32>
    %cst_208 = arith.constant 9.99999974E-5 : f32
    %483 = vector.broadcast %cst_208 : f32 to vector<16x16xf32>
    %484 = arith.addf %482, %483 : vector<16x16xf32>
    %485 = arith.addf %466, %396 : vector<16x16xf32>
    %486 = arith.mulf %484, %485 : vector<16x16xf32>
    %487 = tpu.reciprocal %486 {approx = true} : vector<16x16xf32> -> vector<16x16xf32>
    %488 = arith.mulf %480, %487 : vector<16x16xf32>
    %cst_209 = arith.constant 9.99999974E-5 : f32
    %489 = vector.broadcast %cst_209 : f32 to vector<16x16xf32>
    %490 = arith.maximumf %466, %489 : vector<16x16xf32>
    %491 = arith.mulf %490, %488 : vector<16x16xf32>
    %492 = arith.addf %459, %491 : vector<16x16xf32>
    %493 = arith.addf %460, %490 : vector<16x16xf32>
    %cst_210 = arith.constant 1.000000e-07 : f32
    %494 = vector.broadcast %cst_210 : f32 to vector<16x16xf32>
    %495 = arith.addf %493, %494 : vector<16x16xf32>
    %496 = tpu.reciprocal %495 {approx = true} : vector<16x16xf32> -> vector<16x16xf32>
    %497 = arith.mulf %492, %496 : vector<16x16xf32>
    %498 = vector.shape_cast %497 : vector<16x16xf32> to vector<1x16x16xf32>
    %cst_211 = arith.constant dense<0.000000e+00> : vector<1xf32>
    %499 = vector.multi_reduction <add>, %498, %cst_211 [1, 2] : vector<1x16x16xf32> to vector<1xf32>
    %500 = vector.shape_cast %499 : vector<1xf32> to vector<1x1x1xf32>
    %501 = vector.extract %500[0, 0, 0] : f32 from vector<1x1x1xf32>
    %502 = arith.addf %384, %501 : f32
    %c4 = arith.constant 4 : index
    %c0_212 = arith.constant 0 : index
    %c0_213 = arith.constant 0 : index
    %503 = vector.load %arg1[%c4, %c0_212, %c0_213] : memref<5x16x16xf32, #tpu.memory_space<vmem>>, vector<1x16x16xf32>
    %504 = vector.shape_cast %503 : vector<1x16x16xf32> to vector<16x16xf32>
    %c4_214 = arith.constant 4 : index
    %c0_215 = arith.constant 0 : index
    %c0_216 = arith.constant 0 : index
    %505 = vector.load %arg2[%c4_214, %c0_215, %c0_216] : memref<5x16x16xf32, #tpu.memory_space<vmem>>, vector<1x16x16xf32>
    %506 = vector.shape_cast %505 : vector<1x16x16xf32> to vector<16x16xf32>
    %cst_217 = arith.constant dense<0.000000e+00> : vector<16x16xf32>
    %507 = tpu.matmul %23, %504, %cst_217 {dimension_numbers = #tpu.dot_dimension_numbers<[1], [0], [0], [1], [0, 0, 1, 1], [], []>} : vector<16x16xf32>, vector<16x16xf32>, vector<16x16xf32> -> vector<16x16xf32>
    %cst_218 = arith.constant dense<0.000000e+00> : vector<16x16xf32>
    %508 = tpu.matmul %506, %507, %cst_218 {dimension_numbers = #tpu.dot_dimension_numbers<[1], [0], [0], [1], [0, 0, 1, 1], [], []>} : vector<16x16xf32>, vector<16x16xf32>, vector<16x16xf32> -> vector<16x16xf32>
    %509 = arith.mulf %508, %508 : vector<16x16xf32>
    %cst_219 = arith.constant dense<0.000000e+00> : vector<16x16xf32>
    %510 = tpu.matmul %24, %504, %cst_219 {dimension_numbers = #tpu.dot_dimension_numbers<[1], [0], [0], [1], [0, 0, 1, 1], [], []>} : vector<16x16xf32>, vector<16x16xf32>, vector<16x16xf32> -> vector<16x16xf32>
    %cst_220 = arith.constant dense<0.000000e+00> : vector<16x16xf32>
    %511 = tpu.matmul %506, %510, %cst_220 {dimension_numbers = #tpu.dot_dimension_numbers<[1], [0], [0], [1], [0, 0, 1, 1], [], []>} : vector<16x16xf32>, vector<16x16xf32>, vector<16x16xf32> -> vector<16x16xf32>
    %512 = arith.subf %511, %509 : vector<16x16xf32>
    %cst_221 = arith.constant 8.99999984E-4 : f32
    %513 = vector.broadcast %cst_221 : f32 to vector<16x16xf32>
    %514 = arith.addf %512, %513 : vector<16x16xf32>
    %cst_222 = arith.constant dense<0.000000e+00> : vector<16x16xf32>
    %515 = tpu.matmul %5, %504, %cst_222 {dimension_numbers = #tpu.dot_dimension_numbers<[1], [0], [0], [1], [0, 0, 1, 1], [], []>} : vector<16x16xf32>, vector<16x16xf32>, vector<16x16xf32> -> vector<16x16xf32>
    %cst_223 = arith.constant dense<0.000000e+00> : vector<16x16xf32>
    %516 = tpu.matmul %506, %515, %cst_223 {dimension_numbers = #tpu.dot_dimension_numbers<[1], [0], [0], [1], [0, 0, 1, 1], [], []>} : vector<16x16xf32>, vector<16x16xf32>, vector<16x16xf32> -> vector<16x16xf32>
    %cst_224 = arith.constant dense<0.000000e+00> : vector<16x16xf32>
    %517 = tpu.matmul %25, %504, %cst_224 {dimension_numbers = #tpu.dot_dimension_numbers<[1], [0], [0], [1], [0, 0, 1, 1], [], []>} : vector<16x16xf32>, vector<16x16xf32>, vector<16x16xf32> -> vector<16x16xf32>
    %cst_225 = arith.constant dense<0.000000e+00> : vector<16x16xf32>
    %518 = tpu.matmul %506, %517, %cst_225 {dimension_numbers = #tpu.dot_dimension_numbers<[1], [0], [0], [1], [0, 0, 1, 1], [], []>} : vector<16x16xf32>, vector<16x16xf32>, vector<16x16xf32> -> vector<16x16xf32>
    %519 = arith.mulf %516, %516 : vector<16x16xf32>
    %520 = arith.subf %518, %519 : vector<16x16xf32>
    %cst_226 = arith.constant dense<0.000000e+00> : vector<16x16xf32>
    %521 = tpu.matmul %26, %504, %cst_226 {dimension_numbers = #tpu.dot_dimension_numbers<[1], [0], [0], [1], [0, 0, 1, 1], [], []>} : vector<16x16xf32>, vector<16x16xf32>, vector<16x16xf32> -> vector<16x16xf32>
    %cst_227 = arith.constant dense<0.000000e+00> : vector<16x16xf32>
    %522 = tpu.matmul %506, %521, %cst_227 {dimension_numbers = #tpu.dot_dimension_numbers<[1], [0], [0], [1], [0, 0, 1, 1], [], []>} : vector<16x16xf32>, vector<16x16xf32>, vector<16x16xf32> -> vector<16x16xf32>
    %523 = arith.mulf %516, %508 : vector<16x16xf32>
    %524 = arith.subf %522, %523 : vector<16x16xf32>
    %cst_228 = arith.constant 2.000000e+00 : f32
    %525 = vector.broadcast %cst_228 : f32 to vector<16x16xf32>
    %526 = arith.mulf %525, %516 : vector<16x16xf32>
    %527 = arith.mulf %526, %508 : vector<16x16xf32>
    %cst_229 = arith.constant 9.99999974E-5 : f32
    %528 = vector.broadcast %cst_229 : f32 to vector<16x16xf32>
    %529 = arith.addf %527, %528 : vector<16x16xf32>
    %cst_230 = arith.constant 2.000000e+00 : f32
    %530 = vector.broadcast %cst_230 : f32 to vector<16x16xf32>
    %531 = arith.mulf %530, %524 : vector<16x16xf32>
    %cst_231 = arith.constant 8.99999984E-4 : f32
    %532 = vector.broadcast %cst_231 : f32 to vector<16x16xf32>
    %533 = arith.addf %531, %532 : vector<16x16xf32>
    %534 = arith.mulf %529, %533 : vector<16x16xf32>
    %535 = arith.mulf %516, %516 : vector<16x16xf32>
    %536 = arith.addf %535, %509 : vector<16x16xf32>
    %cst_232 = arith.constant 9.99999974E-5 : f32
    %537 = vector.broadcast %cst_232 : f32 to vector<16x16xf32>
    %538 = arith.addf %536, %537 : vector<16x16xf32>
    %539 = arith.addf %520, %514 : vector<16x16xf32>
    %540 = arith.mulf %538, %539 : vector<16x16xf32>
    %541 = tpu.reciprocal %540 {approx = true} : vector<16x16xf32> -> vector<16x16xf32>
    %542 = arith.mulf %534, %541 : vector<16x16xf32>
    %cst_233 = arith.constant 9.99999974E-5 : f32
    %543 = vector.broadcast %cst_233 : f32 to vector<16x16xf32>
    %544 = arith.maximumf %520, %543 : vector<16x16xf32>
    %545 = arith.mulf %544, %542 : vector<16x16xf32>
    %cst_234 = arith.constant dense<0.000000e+00> : vector<16x16xf32>
    %546 = tpu.matmul %11, %504, %cst_234 {dimension_numbers = #tpu.dot_dimension_numbers<[1], [0], [0], [1], [0, 0, 1, 1], [], []>} : vector<16x16xf32>, vector<16x16xf32>, vector<16x16xf32> -> vector<16x16xf32>
    %cst_235 = arith.constant dense<0.000000e+00> : vector<16x16xf32>
    %547 = tpu.matmul %506, %546, %cst_235 {dimension_numbers = #tpu.dot_dimension_numbers<[1], [0], [0], [1], [0, 0, 1, 1], [], []>} : vector<16x16xf32>, vector<16x16xf32>, vector<16x16xf32> -> vector<16x16xf32>
    %cst_236 = arith.constant dense<0.000000e+00> : vector<16x16xf32>
    %548 = tpu.matmul %27, %504, %cst_236 {dimension_numbers = #tpu.dot_dimension_numbers<[1], [0], [0], [1], [0, 0, 1, 1], [], []>} : vector<16x16xf32>, vector<16x16xf32>, vector<16x16xf32> -> vector<16x16xf32>
    %cst_237 = arith.constant dense<0.000000e+00> : vector<16x16xf32>
    %549 = tpu.matmul %506, %548, %cst_237 {dimension_numbers = #tpu.dot_dimension_numbers<[1], [0], [0], [1], [0, 0, 1, 1], [], []>} : vector<16x16xf32>, vector<16x16xf32>, vector<16x16xf32> -> vector<16x16xf32>
    %550 = arith.mulf %547, %547 : vector<16x16xf32>
    %551 = arith.subf %549, %550 : vector<16x16xf32>
    %cst_238 = arith.constant dense<0.000000e+00> : vector<16x16xf32>
    %552 = tpu.matmul %28, %504, %cst_238 {dimension_numbers = #tpu.dot_dimension_numbers<[1], [0], [0], [1], [0, 0, 1, 1], [], []>} : vector<16x16xf32>, vector<16x16xf32>, vector<16x16xf32> -> vector<16x16xf32>
    %cst_239 = arith.constant dense<0.000000e+00> : vector<16x16xf32>
    %553 = tpu.matmul %506, %552, %cst_239 {dimension_numbers = #tpu.dot_dimension_numbers<[1], [0], [0], [1], [0, 0, 1, 1], [], []>} : vector<16x16xf32>, vector<16x16xf32>, vector<16x16xf32> -> vector<16x16xf32>
    %554 = arith.mulf %547, %508 : vector<16x16xf32>
    %555 = arith.subf %553, %554 : vector<16x16xf32>
    %cst_240 = arith.constant 2.000000e+00 : f32
    %556 = vector.broadcast %cst_240 : f32 to vector<16x16xf32>
    %557 = arith.mulf %556, %547 : vector<16x16xf32>
    %558 = arith.mulf %557, %508 : vector<16x16xf32>
    %cst_241 = arith.constant 9.99999974E-5 : f32
    %559 = vector.broadcast %cst_241 : f32 to vector<16x16xf32>
    %560 = arith.addf %558, %559 : vector<16x16xf32>
    %cst_242 = arith.constant 2.000000e+00 : f32
    %561 = vector.broadcast %cst_242 : f32 to vector<16x16xf32>
    %562 = arith.mulf %561, %555 : vector<16x16xf32>
    %cst_243 = arith.constant 8.99999984E-4 : f32
    %563 = vector.broadcast %cst_243 : f32 to vector<16x16xf32>
    %564 = arith.addf %562, %563 : vector<16x16xf32>
    %565 = arith.mulf %560, %564 : vector<16x16xf32>
    %566 = arith.mulf %547, %547 : vector<16x16xf32>
    %567 = arith.addf %566, %509 : vector<16x16xf32>
    %cst_244 = arith.constant 9.99999974E-5 : f32
    %568 = vector.broadcast %cst_244 : f32 to vector<16x16xf32>
    %569 = arith.addf %567, %568 : vector<16x16xf32>
    %570 = arith.addf %551, %514 : vector<16x16xf32>
    %571 = arith.mulf %569, %570 : vector<16x16xf32>
    %572 = tpu.reciprocal %571 {approx = true} : vector<16x16xf32> -> vector<16x16xf32>
    %573 = arith.mulf %565, %572 : vector<16x16xf32>
    %cst_245 = arith.constant 9.99999974E-5 : f32
    %574 = vector.broadcast %cst_245 : f32 to vector<16x16xf32>
    %575 = arith.maximumf %551, %574 : vector<16x16xf32>
    %576 = arith.mulf %575, %573 : vector<16x16xf32>
    %577 = arith.addf %545, %576 : vector<16x16xf32>
    %578 = arith.addf %544, %575 : vector<16x16xf32>
    %cst_246 = arith.constant dense<0.000000e+00> : vector<16x16xf32>
    %579 = tpu.matmul %17, %504, %cst_246 {dimension_numbers = #tpu.dot_dimension_numbers<[1], [0], [0], [1], [0, 0, 1, 1], [], []>} : vector<16x16xf32>, vector<16x16xf32>, vector<16x16xf32> -> vector<16x16xf32>
    %cst_247 = arith.constant dense<0.000000e+00> : vector<16x16xf32>
    %580 = tpu.matmul %506, %579, %cst_247 {dimension_numbers = #tpu.dot_dimension_numbers<[1], [0], [0], [1], [0, 0, 1, 1], [], []>} : vector<16x16xf32>, vector<16x16xf32>, vector<16x16xf32> -> vector<16x16xf32>
    %cst_248 = arith.constant dense<0.000000e+00> : vector<16x16xf32>
    %581 = tpu.matmul %29, %504, %cst_248 {dimension_numbers = #tpu.dot_dimension_numbers<[1], [0], [0], [1], [0, 0, 1, 1], [], []>} : vector<16x16xf32>, vector<16x16xf32>, vector<16x16xf32> -> vector<16x16xf32>
    %cst_249 = arith.constant dense<0.000000e+00> : vector<16x16xf32>
    %582 = tpu.matmul %506, %581, %cst_249 {dimension_numbers = #tpu.dot_dimension_numbers<[1], [0], [0], [1], [0, 0, 1, 1], [], []>} : vector<16x16xf32>, vector<16x16xf32>, vector<16x16xf32> -> vector<16x16xf32>
    %583 = arith.mulf %580, %580 : vector<16x16xf32>
    %584 = arith.subf %582, %583 : vector<16x16xf32>
    %cst_250 = arith.constant dense<0.000000e+00> : vector<16x16xf32>
    %585 = tpu.matmul %30, %504, %cst_250 {dimension_numbers = #tpu.dot_dimension_numbers<[1], [0], [0], [1], [0, 0, 1, 1], [], []>} : vector<16x16xf32>, vector<16x16xf32>, vector<16x16xf32> -> vector<16x16xf32>
    %cst_251 = arith.constant dense<0.000000e+00> : vector<16x16xf32>
    %586 = tpu.matmul %506, %585, %cst_251 {dimension_numbers = #tpu.dot_dimension_numbers<[1], [0], [0], [1], [0, 0, 1, 1], [], []>} : vector<16x16xf32>, vector<16x16xf32>, vector<16x16xf32> -> vector<16x16xf32>
    %587 = arith.mulf %580, %508 : vector<16x16xf32>
    %588 = arith.subf %586, %587 : vector<16x16xf32>
    %cst_252 = arith.constant 2.000000e+00 : f32
    %589 = vector.broadcast %cst_252 : f32 to vector<16x16xf32>
    %590 = arith.mulf %589, %580 : vector<16x16xf32>
    %591 = arith.mulf %590, %508 : vector<16x16xf32>
    %cst_253 = arith.constant 9.99999974E-5 : f32
    %592 = vector.broadcast %cst_253 : f32 to vector<16x16xf32>
    %593 = arith.addf %591, %592 : vector<16x16xf32>
    %cst_254 = arith.constant 2.000000e+00 : f32
    %594 = vector.broadcast %cst_254 : f32 to vector<16x16xf32>
    %595 = arith.mulf %594, %588 : vector<16x16xf32>
    %cst_255 = arith.constant 8.99999984E-4 : f32
    %596 = vector.broadcast %cst_255 : f32 to vector<16x16xf32>
    %597 = arith.addf %595, %596 : vector<16x16xf32>
    %598 = arith.mulf %593, %597 : vector<16x16xf32>
    %599 = arith.mulf %580, %580 : vector<16x16xf32>
    %600 = arith.addf %599, %509 : vector<16x16xf32>
    %cst_256 = arith.constant 9.99999974E-5 : f32
    %601 = vector.broadcast %cst_256 : f32 to vector<16x16xf32>
    %602 = arith.addf %600, %601 : vector<16x16xf32>
    %603 = arith.addf %584, %514 : vector<16x16xf32>
    %604 = arith.mulf %602, %603 : vector<16x16xf32>
    %605 = tpu.reciprocal %604 {approx = true} : vector<16x16xf32> -> vector<16x16xf32>
    %606 = arith.mulf %598, %605 : vector<16x16xf32>
    %cst_257 = arith.constant 9.99999974E-5 : f32
    %607 = vector.broadcast %cst_257 : f32 to vector<16x16xf32>
    %608 = arith.maximumf %584, %607 : vector<16x16xf32>
    %609 = arith.mulf %608, %606 : vector<16x16xf32>
    %610 = arith.addf %577, %609 : vector<16x16xf32>
    %611 = arith.addf %578, %608 : vector<16x16xf32>
    %cst_258 = arith.constant 1.000000e-07 : f32
    %612 = vector.broadcast %cst_258 : f32 to vector<16x16xf32>
    %613 = arith.addf %611, %612 : vector<16x16xf32>
    %614 = tpu.reciprocal %613 {approx = true} : vector<16x16xf32> -> vector<16x16xf32>
    %615 = arith.mulf %610, %614 : vector<16x16xf32>
    %616 = vector.shape_cast %615 : vector<16x16xf32> to vector<1x16x16xf32>
    %cst_259 = arith.constant dense<0.000000e+00> : vector<1xf32>
    %617 = vector.multi_reduction <add>, %616, %cst_259 [1, 2] : vector<1x16x16xf32> to vector<1xf32>
    %618 = vector.shape_cast %617 : vector<1xf32> to vector<1x1x1xf32>
    %619 = vector.extract %618[0, 0, 0] : f32 from vector<1x1x1xf32>
    %620 = arith.addf %502, %619 : f32
    %621 = vector.broadcast %620 : f32 to vector<1x8x128xf32>
    %c0_260 = arith.constant 0 : index
    %c0_261 = arith.constant 0 : index
    %c0_262 = arith.constant 0 : index
    %622 = vector.load %arg7[%c0_260, %c0_261, %c0_262] : memref<1x8x128xf32, #tpu.memory_space<vmem>>, vector<1x8x128xf32>
    tpu.vector_store %arg7[%c0_260, %c0_261, %c0_262], %621 {strides = array<i32>} : memref<1x8x128xf32, #tpu.memory_space<vmem>>, vector<1x8x128xf32>,
    return
  }
  func.func @transform_0(%arg0: i32) -> (i32, i32, i32) {
    %c0_i32 = arith.constant 0 : i32
    %c0_i32_0 = arith.constant 0 : i32
    %c0_i32_1 = arith.constant 0 : i32
    %c0_i32_2 = arith.constant 0 : i32
    return %c0_i32, %c0_i32_0, %c0_i32_1 : i32, i32, i32
  }
  func.func @transform_1(%arg0: i32) -> (i32, i32, i32) {
    %c0_i32 = arith.constant 0 : i32
    %c0_i32_0 = arith.constant 0 : i32
    %c0_i32_1 = arith.constant 0 : i32
    %c0_i32_2 = arith.constant 0 : i32
    return %c0_i32, %c0_i32_0, %c0_i32_1 : i32, i32, i32
  }
  func.func @transform_2(%arg0: i32) -> (i32, i32, i32) {
    %c0_i32 = arith.constant 0 : i32
    %c0_i32_0 = arith.constant 0 : i32
    %c0_i32_1 = arith.constant 0 : i32
    return %arg0, %c0_i32, %c0_i32_0 : i32, i32, i32
  }
  func.func @transform_3(%arg0: i32) -> (i32, i32, i32) {
    %c0_i32 = arith.constant 0 : i32
    %c0_i32_0 = arith.constant 0 : i32
    %c0_i32_1 = arith.constant 0 : i32
    return %arg0, %c0_i32, %c0_i32_0 : i32, i32, i32
  }
  func.func @transform_4(%arg0: i32) -> (i32, i32, i32) {
    %c0_i32 = arith.constant 0 : i32
    %c0_i32_0 = arith.constant 0 : i32
    %c0_i32_1 = arith.constant 0 : i32
    return %arg0, %c0_i32, %c0_i32_0 : i32, i32, i32
  }
  func.func @transform_5(%arg0: i32) -> (i32, i32, i32) {
    %c0_i32 = arith.constant 0 : i32
    %c0_i32_0 = arith.constant 0 : i32
    %c0_i32_1 = arith.constant 0 : i32
    return %arg0, %c0_i32, %c0_i32_0 : i32, i32, i32
  }
  func.func @transform_6(%arg0: i32) -> (i32, i32, i32) {
    %c0_i32 = arith.constant 0 : i32
    %c0_i32_0 = arith.constant 0 : i32
    %c0_i32_1 = arith.constant 0 : i32
    return %arg0, %c0_i32, %c0_i32_0 : i32, i32, i32
  }
}

</mosaic_0001>

<llo_original>
// kernel: regularized_loss.3
$region0: #{regularized_loss.3}
  #allocation0 [shape = 'u32[]', space=smem, size = 0x4, offset = 0x4, fixed_abs, tag = 'smem constant byte address 0x4 - core index']
  #allocation1 [shape = 'u32[144,128]{1,0:T(1,128)}', space=vmem, size = 0x12000, scoped, tag = 'internal scratch']
  %s0 = inlined_call_operand.vmem [shape: f32[16,128], index: 0, kind: input, shape index: {}]
  %s1 = inlined_call_operand.vmem [shape: f32[16,128], index: 1, kind: input, shape index: {}]
  %s2 = inlined_call_operand.vmem [shape: f32[16,128], index: 2, kind: input, shape index: {}]
  %s3 = inlined_call_operand.vmem [shape: f32[16,128], index: 3, kind: input, shape index: {}]
  %s4 = inlined_call_operand.vmem [shape: f32[4,128], index: 4, kind: input, shape index: {}]
  %s5 = inlined_call_operand.vmem [shape: f32[4,128], index: 5, kind: input, shape index: {}]
  %s6 = inlined_call_operand.vmem [shape: f32[1,8,128], index: 6, kind: output, shape index: {}]
  %s7 = sld [smem:[#allocation0]]
  $region38: #{regularized_loss.3} parent=0
    _
  %s9 = ssub.s32 1, %s7
  %s10 = scalar_select 0, %s9, %s7
  // Predicated region
  $region2: #{regularized_loss.3} parent=0 // pred_check
    _
  $region3: #{regularized_loss.3} parent=0 // pred_check_branch
    %12 = sbr.rel (0) target = $region5
  $region4: #{regularized_loss.3} parent=0 // pred_region
    _
  $region5: #{regularized_loss.3} parent=0 // pred_fallthru
    _
  // Predicated region
  $region6: #{regularized_loss.3} parent=0 // pred_check
    _
  $region7: #{regularized_loss.3} parent=0 // pred_check_branch
    %14 = sbr.rel (0) target = $region9
  $region8: #{regularized_loss.3} parent=0 // pred_region
    _
  $region9: #{regularized_loss.3} parent=0 // pred_fallthru
    _
  // Predicated region
  $region10: #{regularized_loss.3} parent=0 // pred_check
    _
  $region11: #{regularized_loss.3} parent=0 // pred_check_branch
    %16 = sbr.rel (0) target = $region13
  $region12: #{regularized_loss.3} parent=0 // pred_region
    _
  $region13: #{regularized_loss.3} parent=0 // pred_fallthru
    _
  // Predicated region
  $region14: #{regularized_loss.3} parent=0 // pred_check
    _
  $region15: #{regularized_loss.3} parent=0 // pred_check_branch
    %18 = sbr.rel (0) target = $region17
  $region16: #{regularized_loss.3} parent=0 // pred_region
    _
  $region17: #{regularized_loss.3} parent=0 // pred_fallthru
    _
  // Predicated region
  $region18: #{regularized_loss.3} parent=0 // pred_check
    _
  $region19: #{regularized_loss.3} parent=0 // pred_check_branch
    %20 = sbr.rel (0) target = $region21
  $region20: #{regularized_loss.3} parent=0 // pred_region
    _
  $region21: #{regularized_loss.3} parent=0 // pred_fallthru
    _
  // Predicated region
  $region22: #{regularized_loss.3} parent=0 // pred_check
    _
  $region23: #{regularized_loss.3} parent=0 // pred_check_branch
    %22 = sbr.rel (0) target = $region25
  $region24: #{regularized_loss.3} parent=0 // pred_region
    _
  $region25: #{regularized_loss.3} parent=0 // pred_fallthru
    _
  %v23 = vld [vmem:[%s0] sm:$0xff]
  %v24 = vld [vmem:[%s0 + $0x8] sm:$0xff]
  %v25 = vld [vmem:[%s1] sm:$0xff]
  %v26 = vld [vmem:[%s1 + $0x8] sm:$0xff]
  %v27 = vsub.f32 %v23, %v25
  %v28 = vsub.f32 %v24, %v26
  %v29 = vand.u32 2147483647, %v27
  %v30 = vand.u32 2147483647, %v28
  %v31 = vld [vmem:[%s2] sm:$0xff]
  %v32 = vld [vmem:[%s2 + $0x8] sm:$0xff]
  %v33 = vld [vmem:[%s3] sm:$0xff]
  %v34 = vld [vmem:[%s3 + $0x8] sm:$0xff]
  %v35 = vsub.f32 %v31, %v33
  %v36 = vsub.f32 %v32, %v34
  %v37 = vand.u32 2147483647, %v35
  %v38 = vand.u32 2147483647, %v36
  %v39 = vadd.f32 %v29, %v37
  %v40 = vadd.f32 %v30, %v38
  %v41 = vadd.f32 %v39, %v40
  %42 = vadd.xlane.f32.xlu0 %v41
  %v43 = vpop.xlane.xlu0 %42
  %v44 = vrot.slane %v43, 4
  %v45 = vadd.f32 %v43, %v44
  %v46 = vrot.slane %v45, 2
  %v47 = vadd.f32 %v45, %v46
  %v48 = vrot.slane %v47, 1
  %v49 = vadd.f32 %v47, %v48
  %s50 = vtos %v49
  %s51 = smul.f32 %s50, 0.00048828125
  %v52 = vstv %s51
  %53 = vst [vmem:[%s6] sm:$0xff] %v52
  %p54 = scmp.eq.s32.totalorder 0, 0
  // Predicated region
  $region26: #{regularized_loss.3} parent=0 // pred_check
    %p55 = pneg %p54
  $region27: #{regularized_loss.3} parent=0 // pred_check_branch
    %57 = sbr.rel (%p55) target = $region29
  $region28: #{regularized_loss.3} parent=0 // pred_region
    %v58 = vld [vmem:[%s4] sm:$0xf]
    %v59 = vld [vmem:[%s5] sm:$0xf]
    %v60 = vsub.f32 %v58, %v59
    %v61 = vand.u32 2147483647, %v60
    %vm62 = vcmask 1043456
    %v63 = vsel %vm62, %v61, 0.0
    %64 = vadd.xlane.f32.xlu0 %v63
    %v65 = vpop.xlane.xlu0 %64
    %v66 = vrot.slane %v65, 4
    %v67 = vadd.f32 %v65, %v66
    %v68 = vrot.slane %v67, 2
    %v69 = vadd.f32 %v67, %v68
    %v70 = vrot.slane %v69, 1
    %v71 = vadd.f32 %v69, %v70
    %s72 = vtos %v71
    %s73 = smul.f32 %s72, 0.001953125
    %v74 = vld [vmem:[%s6] sm:$0xff]
    %v75 = vstv %s73
    %v76 = vadd.f32 %v74, %v75
    %77 = vst [vmem:[%s6] sm:$0xff] %v76
  $region29: #{regularized_loss.3} parent=0 // pred_fallthru
    _
  // Predicated region
  $region30: #{regularized_loss.3} parent=0 // pred_check
    _
  $region31: #{regularized_loss.3} parent=0 // pred_check_branch
    %79 = sbr.rel (0) target = $region33
  $region32: #{regularized_loss.3} parent=0 // pred_region
    _
  $region33: #{regularized_loss.3} parent=0 // pred_fallthru
    _
  // Predicated region
  $region34: #{regularized_loss.3} parent=0 // pred_check
    _
  $region35: #{regularized_loss.3} parent=0 // pred_check_branch
    %81 = sbr.rel (0) target = $region37
  $region36: #{regularized_loss.3} parent=0 // pred_region
    _
  $region37: #{regularized_loss.3} parent=0 // pred_fallthru
    _

// kernel: regularized_loss.2
$region0: #{regularized_loss.2}
  #allocation0 [shape = 'u32[]', space=smem, size = 0x4, offset = 0x4, fixed_abs, tag = 'smem constant byte address 0x4 - core index']
  #allocation1 [shape = 'u32[144,128]{1,0:T(1,128)}', space=vmem, size = 0x12000, scoped, tag = 'internal scratch']
  %s0 = inlined_call_operand.vmem [shape: f32[5,16,16], index: 0, kind: input, shape index: {}, may-alias: {0,1}]
  %s1 = inlined_call_operand.vmem [shape: f32[5,16,16], index: 1, kind: input, shape index: {}, may-alias: {0,1}]
  %s2 = inlined_call_operand.vmem [shape: f32[2,16,16], index: 2, kind: input, shape index: {}]
  %s3 = inlined_call_operand.vmem [shape: f32[2,16,16], index: 3, kind: input, shape index: {}]
  %s4 = inlined_call_operand.vmem [shape: f32[2,16,16], index: 4, kind: input, shape index: {}]
  %s5 = inlined_call_operand.vmem [shape: f32[2,16,16], index: 5, kind: input, shape index: {}]
  %s6 = inlined_call_operand.vmem [shape: f32[2,8,128], index: 6, kind: output, shape index: {}]
  %s7 = sld [smem:[#allocation0]]
  $region57: #{regularized_loss.2} parent=0
    _
  %s9 = ssub.s32 1, %s7
  %s10 = scalar_select 0, %s9, %s7
  loop: start=0, step=1, limit=4
  $region2: #{regularized_loss.2} parent=0 // loop_pre_header
    _
  $region3: #{regularized_loss.2} parent=0 // loop_header
    %s12 = sphi 0, %s16
    %p13 = scmp.ge.s32.totalorder %s12, 4
    %s20 = sphi 0, %s20
    %s22 = sphi 0, %s20
    %s23 = sphi 0, %s22
    %s37 = sphi 0, %s23
    %s41 = sphi 0, %s41
    %s43 = sphi 0, %s41
    %s44 = sphi 0, %s43
    %s58 = sphi 0, %s44
    %s64 = sphi 0, %s66
    %s67 = sphi 0, %s64
    %s68 = sphi 0, %s67
    %s84 = sphi 0, %s68
    %s90 = sphi 0, %s92
    %s93 = sphi 0, %s90
    %s94 = sphi 0, %s93
    %s110 = sphi 0, %s94
    %s116 = sphi 0, %s118
    %s119 = sphi 0, %s116
    %s120 = sphi 0, %s119
    %s136 = sphi 0, %s120
    %s142 = sphi 0, %s144
    %s145 = sphi 0, %s142
    %s146 = sphi 0, %s145
    %s162 = sphi 0, %s146
    %s168 = sphi 0, %s170
    %s171 = sphi 0, %s168
    %s172 = sphi 0, %s171
    %s188 = sphi 0, %s172
  $region4: #{regularized_loss.2} parent=0 // loop_header_branch
    %15 = sbr.rel (%p13) target = $region8
  $region5: #{regularized_loss.2} parent=0 // loop_body
    %s17 = ssub.s32 %s12, 1
    %s18 = ssub.s32 %s12, 2
    %s19 = sadd.s32 %s12, 1
    %s21 = sadd.s32 %s20, 1
    %p24 = scmp.eq.s32.totalorder %s12, 1
    %p25 = scmp.ne.s32.totalorder %s20, %s22
    %p26 = scmp.eq.s32.totalorder %s12, 0
    %p27 = por %p25, %p26
    %p28 = scmp.ne.s32.totalorder %s20, %s22
    %p29 = scmp.eq.s32.totalorder %s17, 1
    %p30 = por %p28, %p29
    %p31 = scmp.ne.s32.totalorder %s22, %s23
    %p32 = scmp.eq.s32.totalorder %s17, 0
    %p33 = por %p31, %p32
    %p34 = scmp.ne.s32.totalorder %s22, %s23
    %p35 = scmp.eq.s32.totalorder %s18, 1
    %p36 = por %p34, %p35
    %p38 = scmp.ne.s32.totalorder %s23, %s37
    %p39 = scmp.eq.s32.totalorder %s18, 0
    %p40 = por %p38, %p39
    %s42 = sadd.s32 %s41, 1
    %p45 = scmp.eq.s32.totalorder %s12, 1
    %p46 = scmp.ne.s32.totalorder %s41, %s43
    %p47 = scmp.eq.s32.totalorder %s12, 0
    %p48 = por %p46, %p47
    %p49 = scmp.ne.s32.totalorder %s41, %s43
    %p50 = scmp.eq.s32.totalorder %s17, 1
    %p51 = por %p49, %p50
    %p52 = scmp.ne.s32.totalorder %s43, %s44
    %p53 = scmp.eq.s32.totalorder %s17, 0
    %p54 = por %p52, %p53
    %p55 = scmp.ne.s32.totalorder %s43, %s44
    %p56 = scmp.eq.s32.totalorder %s18, 1
    %p57 = por %p55, %p56
    %p59 = scmp.ne.s32.totalorder %s44, %s58
    %p60 = scmp.eq.s32.totalorder %s18, 0
    %p61 = por %p59, %p60
    %s62 = ssub.s32 %s12, %s19
    %p63 = scmp.eq.s32.totalorder %s62, 0
    %s65 = sadd.s32 %s64, 1
    %s66 = scalar_select %p63, %s64, %s65
    %p69 = pneg %p63
    %p70 = scmp.eq.s32.totalorder %s12, 1
    %p71 = por %p69, %p70
    %p72 = scmp.ne.s32.totalorder %s64, %s67
    %p73 = scmp.eq.s32.totalorder %s12, 0
    %p74 = por %p72, %p73
    %p75 = scmp.ne.s32.totalorder %s64, %s67
    %p76 = scmp.eq.s32.totalorder %s17, 1
    %p77 = por %p75, %p76
    %p78 = scmp.ne.s32.totalorder %s67, %s68
    %p79 = scmp.eq.s32.totalorder %s17, 0
    %p80 = por %p78, %p79
    %p81 = scmp.ne.s32.totalorder %s67, %s68
    %p82 = scmp.eq.s32.totalorder %s18, 1
    %p83 = por %p81, %p82
    %p85 = scmp.ne.s32.totalorder %s68, %s84
    %p86 = scmp.eq.s32.totalorder %s18, 0
    %p87 = por %p85, %p86
    %s88 = ssub.s32 %s12, %s19
    %p89 = scmp.eq.s32.totalorder %s88, 0
    %s91 = sadd.s32 %s90, 1
    %s92 = scalar_select %p89, %s90, %s91
    %p95 = pneg %p89
    %p96 = scmp.eq.s32.totalorder %s12, 1
    %p97 = por %p95, %p96
    %p98 = scmp.ne.s32.totalorder %s90, %s93
    %p99 = scmp.eq.s32.totalorder %s12, 0
    %p100 = por %p98, %p99
    %p101 = scmp.ne.s32.totalorder %s90, %s93
    %p102 = scmp.eq.s32.totalorder %s17, 1
    %p103 = por %p101, %p102
    %p104 = scmp.ne.s32.totalorder %s93, %s94
    %p105 = scmp.eq.s32.totalorder %s17, 0
    %p106 = por %p104, %p105
    %p107 = scmp.ne.s32.totalorder %s93, %s94
    %p108 = scmp.eq.s32.totalorder %s18, 1
    %p109 = por %p107, %p108
    %p111 = scmp.ne.s32.totalorder %s94, %s110
    %p112 = scmp.eq.s32.totalorder %s18, 0
    %p113 = por %p111, %p112
    %s114 = ssub.s32 %s12, %s19
    %p115 = scmp.eq.s32.totalorder %s114, 0
    %s117 = sadd.s32 %s116, 1
    %s118 = scalar_select %p115, %s116, %s117
    %p121 = pneg %p115
    %p122 = scmp.eq.s32.totalorder %s12, 1
    %p123 = por %p121, %p122
    %p124 = scmp.ne.s32.totalorder %s116, %s119
    %p125 = scmp.eq.s32.totalorder %s12, 0
    %p126 = por %p124, %p125
    %p127 = scmp.ne.s32.totalorder %s116, %s119
    %p128 = scmp.eq.s32.totalorder %s17, 1
    %p129 = por %p127, %p128
    %p130 = scmp.ne.s32.totalorder %s119, %s120
    %p131 = scmp.eq.s32.totalorder %s17, 0
    %p132 = por %p130, %p131
    %p133 = scmp.ne.s32.totalorder %s119, %s120
    %p134 = scmp.eq.s32.totalorder %s18, 1
    %p135 = por %p133, %p134
    %p137 = scmp.ne.s32.totalorder %s120, %s136
    %p138 = scmp.eq.s32.totalorder %s18, 0
    %p139 = por %p137, %p138
    %s140 = ssub.s32 %s12, %s19
    %p141 = scmp.eq.s32.totalorder %s140, 0
    %s143 = sadd.s32 %s142, 1
    %s144 = scalar_select %p141, %s142, %s143
    %p147 = pneg %p141
    %p148 = scmp.eq.s32.totalorder %s12, 1
    %p149 = por %p147, %p148
    %p150 = scmp.ne.s32.totalorder %s142, %s145
    %p151 = scmp.eq.s32.totalorder %s12, 0
    %p152 = por %p150, %p151
    %p153 = scmp.ne.s32.totalorder %s142, %s145
    %p154 = scmp.eq.s32.totalorder %s17, 1
    %p155 = por %p153, %p154
    %p156 = scmp.ne.s32.totalorder %s145, %s146
    %p157 = scmp.eq.s32.totalorder %s17, 0
    %p158 = por %p156, %p157
    %p159 = scmp.ne.s32.totalorder %s145, %s146
    %p160 = scmp.eq.s32.totalorder %s18, 1
    %p161 = por %p159, %p160
    %p163 = scmp.ne.s32.totalorder %s146, %s162
    %p164 = scmp.eq.s32.totalorder %s18, 0
    %p165 = por %p163, %p164
    %s166 = ssub.s32 %s12, %s19
    %p167 = scmp.eq.s32.totalorder %s166, 0
    %s169 = sadd.s32 %s168, 1
    %s170 = scalar_select %p167, %s168, %s169
    %p173 = pneg %p167
    %p174 = scmp.eq.s32.totalorder %s12, 1
    %p175 = por %p173, %p174
    %p176 = scmp.ne.s32.totalorder %s168, %s171
    %p177 = scmp.eq.s32.totalorder %s12, 0
    %p178 = por %p176, %p177
    %p179 = scmp.ne.s32.totalorder %s168, %s171
    %p180 = scmp.eq.s32.totalorder %s17, 1
    %p181 = por %p179, %p180
    %p182 = scmp.ne.s32.totalorder %s171, %s172
    %p183 = scmp.eq.s32.totalorder %s17, 0
    %p184 = por %p182, %p183
    %p185 = scmp.ne.s32.totalorder %s171, %s172
    %p186 = scmp.eq.s32.totalorder %s18, 1
    %p187 = por %p185, %p186
    %p189 = scmp.ne.s32.totalorder %s172, %s188
    %p190 = scmp.eq.s32.totalorder %s18, 0
    %p191 = por %p189, %p190
    %p192 = scmp.le.s32.totalorder 1, %s12
    %p193 = scmp.lt.s32.totalorder %s12, 3
    %p194 = pnand %p192, %p193
    %p195 = pneg %p194
    // Predicated region
    $region9: #{regularized_loss.2} parent=5 // pred_check
      _
    $region10: #{regularized_loss.2} parent=5 // pred_check_branch
      %197 = sbr.rel (%p194) target = $region12
    $region11: #{regularized_loss.2} parent=5 // pred_region
      %s198 = ssub.s32 %s12, 1
      // Predicated region
      $region13: #{regularized_loss.2} parent=11 // pred_check
        %p199 = pneg %p33
      $region14: #{regularized_loss.2} parent=11 // pred_check_branch
        %201 = sbr.rel (%p199) target = $region16
      $region15: #{regularized_loss.2} parent=11 // pred_region
        _
      $region16: #{regularized_loss.2} parent=11 // pred_fallthru
        _
      // Predicated region
      $region17: #{regularized_loss.2} parent=11 // pred_check
        %p202 = pneg %p54
      $region18: #{regularized_loss.2} parent=11 // pred_check_branch
        %204 = sbr.rel (%p202) target = $region20
      $region19: #{regularized_loss.2} parent=11 // pred_region
        _
      $region20: #{regularized_loss.2} parent=11 // pred_fallthru
        _
    $region12: #{regularized_loss.2} parent=5 // pred_fallthru
      _
    %p205 = scmp.lt.s32.totalorder %s12, 2
    // Predicated region
    $region21: #{regularized_loss.2} parent=5 // pred_check
      %p206 = pneg %p205
    $region22: #{regularized_loss.2} parent=5 // pred_check_branch
      %208 = sbr.rel (%p206) target = $region24
    $region23: #{regularized_loss.2} parent=5 // pred_region
      // Predicated region
      $region25: #{regularized_loss.2} parent=23 // pred_check
        %p209 = pneg %p74
      $region26: #{regularized_loss.2} parent=23 // pred_check_branch
        %211 = sbr.rel (%p209) target = $region28
      $region27: #{regularized_loss.2} parent=23 // pred_region
        %p212 = scmp.lt.s32.totalorder %s12, 1
        %s213 = scalar_select %p212, %s12, 1
        %s214 = smul.addr %s213, 2
        %s215 = smul.addr %s214, 8
        %s216 = scalar_lea.vmem %s2, %s215
      $region28: #{regularized_loss.2} parent=23 // pred_fallthru
        _
      // Predicated region
      $region29: #{regularized_loss.2} parent=23 // pred_check
        %p217 = pneg %p100
      $region30: #{regularized_loss.2} parent=23 // pred_check_branch
        %219 = sbr.rel (%p217) target = $region32
      $region31: #{regularized_loss.2} parent=23 // pred_region
        %p220 = scmp.lt.s32.totalorder %s12, 1
        %s221 = scalar_select %p220, %s12, 1
        %s222 = smul.addr %s221, 2
        %s223 = smul.addr %s222, 8
        %s224 = scalar_lea.vmem %s3, %s223
      $region32: #{regularized_loss.2} parent=23 // pred_fallthru
        _
      // Predicated region
      $region33: #{regularized_loss.2} parent=23 // pred_check
        %p225 = pneg %p126
      $region34: #{regularized_loss.2} parent=23 // pred_check_branch
        %227 = sbr.rel (%p225) target = $region36
      $region35: #{regularized_loss.2} parent=23 // pred_region
        %p228 = scmp.lt.s32.totalorder %s12, 1
        %s229 = scalar_select %p228, %s12, 1
        %s230 = smul.addr %s229, 2
        %s231 = smul.addr %s230, 8
        %s232 = scalar_lea.vmem %s4, %s231
      $region36: #{regularized_loss.2} parent=23 // pred_fallthru
        _
      // Predicated region
      $region37: #{regularized_loss.2} parent=23 // pred_check
        %p233 = pneg %p152
      $region38: #{regularized_loss.2} parent=23 // pred_check_branch
        %235 = sbr.rel (%p233) target = $region40
      $region39: #{regularized_loss.2} parent=23 // pred_region
        %p236 = scmp.lt.s32.totalorder %s12, 1
        %s237 = scalar_select %p236, %s12, 1
        %s238 = smul.addr %s237, 2
        %s239 = smul.addr %s238, 8
        %s240 = scalar_lea.vmem %s5, %s239
      $region40: #{regularized_loss.2} parent=23 // pred_fallthru
        _
    $region24: #{regularized_loss.2} parent=5 // pred_fallthru
      _
    %p241 = scmp.le.s32.totalorder 1, %s12
    %p242 = scmp.lt.s32.totalorder %s12, 3
    %p243 = pnand %p241, %p242
    %p244 = pneg %p243
    // Predicated region
    $region41: #{regularized_loss.2} parent=5 // pred_check
      _
    $region42: #{regularized_loss.2} parent=5 // pred_check_branch
      %246 = sbr.rel (%p243) target = $region44
    $region43: #{regularized_loss.2} parent=5 // pred_region
      %s247 = ssub.s32 %s12, 1
      %p248 = pneg %p33
      %p249 = pneg %p30
      %p250 = pneg %p54
      %p251 = pneg %p51
      %p252 = scmp.lt.s32.totalorder %s17, 1
      %s253 = scalar_select %p252, %s17, 1
      %s254 = smul.addr %s253, 2
      %s255 = smul.addr %s254, 8
      %s256 = scalar_lea.vmem %s2, %s255
      %p257 = pneg %p80
      %p258 = pneg %p77
      %p259 = scmp.lt.s32.totalorder %s17, 1
      %s260 = scalar_select %p259, %s17, 1
      %s261 = smul.addr %s260, 2
      %s262 = smul.addr %s261, 8
      %s263 = scalar_lea.vmem %s3, %s262
      %p264 = pneg %p106
      %p265 = pneg %p103
      %p266 = scmp.lt.s32.totalorder %s17, 1
      %s267 = scalar_select %p266, %s17, 1
      %s268 = smul.addr %s267, 2
      %s269 = smul.addr %s268, 8
      %s270 = scalar_lea.vmem %s4, %s269
      %p271 = pneg %p132
      %p272 = pneg %p129
      %p273 = scmp.lt.s32.totalorder %s17, 1
      %s274 = scalar_select %p273, %s17, 1
      %s275 = smul.addr %s274, 2
      %s276 = smul.addr %s275, 8
      %s277 = scalar_lea.vmem %s5, %s276
      %p278 = pneg %p158
      %p279 = pneg %p155
      %p280 = pneg %p184
      %p281 = pneg %p181
      %p282 = scmp.lt.s32.totalorder %s17, 1
      %s283 = scalar_select %p282, %s17, 1
      %s284 = smul.addr %s283, 8
      %s285 = scalar_lea.vmem %s6, %s284
      %p286 = scmp.lt.s32.totalorder %s17, 1
      %s287 = scalar_select %p286, %s17, 1
      %s288 = smul.addr %s287, 2
      %s289 = smul.addr %s288, 8
      %s290 = scalar_lea.vmem %s2, %s289
      %p291 = scmp.lt.s32.totalorder %s17, 1
      %s292 = scalar_select %p291, %s17, 1
      %s293 = smul.addr %s292, 2
      %s294 = smul.addr %s293, 8
      %s295 = scalar_lea.vmem %s3, %s294
      %p296 = scmp.lt.s32.totalorder %s17, 1
      %s297 = scalar_select %p296, %s17, 1
      %s298 = smul.addr %s297, 2
      %s299 = smul.addr %s298, 8
      %s300 = scalar_lea.vmem %s4, %s299
      %p301 = scmp.lt.s32.totalorder %s17, 1
      %s302 = scalar_select %p301, %s17, 1
      %s303 = smul.addr %s302, 2
      %s304 = smul.addr %s303, 8
      %s305 = scalar_lea.vmem %s5, %s304
      %p306 = scmp.lt.s32.totalorder %s17, 1
      %s307 = scalar_select %p306, %s17, 1
      %s308 = smul.addr %s307, 8
      %s309 = scalar_lea.vmem %s6, %s308
      %v310 = vld [vmem:[%s290] sm:$0xff]
      %v311 = vld [vmem:[%s290 + $0x8] sm:$0xff]
      %v312 = vmax.f32 %v310, 0.0
      %v313 = vmax.f32 %v311, 0.0
      %v314 = vmin.f32 %v312, 1.0
      %v315 = vmin.f32 %v313, 1.0
      %v316 = vld [vmem:[%s295] sm:$0xff]
      %v317 = vld [vmem:[%s295 + $0x8] sm:$0xff]
      %v318 = vmax.f32 %v316, 0.0
      %v319 = vmax.f32 %v317, 0.0
      %v320 = vmin.f32 %v318, 1.0
      %v321 = vmin.f32 %v319, 1.0
      %v322 = vld [vmem:[%s300] sm:$0xff]
      %v323 = vld [vmem:[%s300 + $0x8] sm:$0xff]
      %v324 = vmax.f32 %v322, 0.0
      %v325 = vmax.f32 %v323, 0.0
      %v326 = vmin.f32 %v324, 1.0
      %v327 = vmin.f32 %v325, 1.0
      %v328 = vld [vmem:[%s305] sm:$0xff]
      %v329 = vld [vmem:[%s305 + $0x8] sm:$0xff]
      %v330 = vmax.f32 %v328, 0.0
      %v331 = vmax.f32 %v329, 0.0
      %v332 = vmin.f32 %v330, 1.0
      %v333 = vmin.f32 %v331, 1.0
      %v334 = vmul.f32 %v332, %v332
      %v335 = vmul.f32 %v333, %v333
      %v336 = vmul.f32 %v314, %v314
      %v337 = vmul.f32 %v315, %v315
      %v338 = vmul.f32 %v314, %v332
      %v339 = vmul.f32 %v315, %v333
      %v340 = vmul.f32 %v320, %v320
      %v341 = vmul.f32 %v321, %v321
      %v342 = vmul.f32 %v320, %v332
      %v343 = vmul.f32 %v321, %v333
      %v344 = vmul.f32 %v326, %v326
      %v345 = vmul.f32 %v327, %v327
      %v346 = vmul.f32 %v326, %v332
      %v347 = vmul.f32 %v327, %v333
      %v348 = vld [vmem:[%s0] sm:$0xff]
      %v349 = vld [vmem:[%s0 + $0x8] sm:$0xff]
      %v350 = vld [vmem:[%s1] sm:$0xff]
      %v351 = vld [vmem:[%s1 + $0x8] sm:$0xff]
      %vm352 = vcmask 130048
      %v354 = vsel %vm352, %v332, 0
      %v357 = vsel %vm352, %v333, 0
      %359 = vmatprep.subr.mxu0 0.0
      %360 = vmatpush1.msra.mxu0 %v348
      %361 = vmatprep.subr.mxu0 0.0
      %362 = vmatpush1.msra.mxu0 %v349
      %363 = vmatprep.subr.mxu0 0.0
      %364 = vmatpush1.msra.mxu0 0.0
      %365 = vmatprep.subr.mxu0 0.0
      %366 = vmatpush1.msra.mxu0 0.0
      %367 = vmatprep.subr.mxu0 0.0
      %368 = vmatpush1.msra.mxu0 0.0
      %369 = vmatprep.subr.mxu0 0.0
      %370 = vmatpush1.msra.mxu0 0.0
      %371 = vmatprep.subr.mxu0 0.0
      %372 = vmatpush1.msra.mxu0 0.0
      %373 = vmatprep.subr.mxu0 0.0
      %374 = vmatpush1.msra.mxu0 0.0
      %375 = vmatprep.subr.mxu0 0.0
      %376 = vmatpush1.msra.mxu0 0.0
      %377 = vmatprep.subr.mxu0 0.0
      %378 = vmatpush1.msra.mxu0 0.0
      %379 = vmatprep.subr.mxu0 0.0
      %380 = vmatpush1.msra.mxu0 0.0
      %381 = vmatprep.subr.mxu0 0.0
      %382 = vmatpush1.msra.mxu0 0.0
      %383 = vmatprep.subr.mxu0 0.0
      %384 = vmatpush1.msra.mxu0 0.0
      %385 = vmatprep.subr.mxu0 0.0
      %386 = vmatpush1.msra.mxu0 0.0
      %387 = vmatprep.subr.mxu0 0.0
      %388 = vmatpush1.msra.mxu0 0.0
      %389 = vmatprep.subr.mxu0 0.0
      %390 = vmatpush1.msra.mxu0 0.0
      %391 = vmatprep.subr.mxu0 0.0
      %392 = vmatpush1.msra.mxu0 0.0
      %393 = vmatprep.subr.mxu0 0.0
      %394 = vmatpush1.msra.mxu0 0.0
      %395 = vmatprep.subr.mxu0 0.0
      %396 = vmatpush1.msra.mxu0 0.0
      %397 = vmatprep.subr.mxu0 0.0
      %398 = vmatpush1.msra.mxu0 0.0
      %399 = vmatprep.subr.mxu0 0.0
      %400 = vmatpush1.msra.mxu0 0.0
      %401 = vmatprep.subr.mxu0 0.0
      %402 = vmatpush1.msra.mxu0 0.0
      %403 = vmatprep.subr.mxu0 0.0
      %404 = vmatpush1.msra.mxu0 0.0
      %405 = vmatprep.subr.mxu0 0.0
      %406 = vmatpush1.msra.mxu0 0.0
      %407 = vmatprep.subr.mxu0 0.0
      %408 = vmatpush1.msra.mxu0 0.0
      %409 = vmatprep.subr.mxu0 0.0
      %410 = vmatpush1.msra.mxu0 0.0
      %411 = vmatprep.subr.mxu0 0.0
      %412 = vmatpush1.msra.mxu0 0.0
      %413 = vmatprep.subr.mxu0 0.0
      %414 = vmatpush1.msra.mxu0 0.0
      %415 = vmatprep.subr.mxu0 0.0
      %416 = vmatpush1.msra.mxu0 0.0
      %417 = vmatprep.subr.mxu0 0.0
      %418 = vmatpush1.msra.mxu0 0.0
      %419 = vmatprep.subr.mxu0 0.0
      %420 = vmatpush1.msra.mxu0 0.0
      %421 = vmatprep.subr.mxu0 0.0
      %422 = vmatpush1.msra.mxu0 0.0
      %423 = vmatprep.mubr.f32.mxu0 0.0
      %424 = vmatmul.mubr.f32.gmra.mrb[0].mxu0 %v354
      %v425 = vpop.f32.mrb[0].mxu0
      %v426 = vadd.f32 0.0, %v425
      %v427 = vpop.f32.mrb[0].mxu0
      %428 = vmatprep.mubr.f32.mxu0 0.0
      %429 = vmatmul.mubr.f32.gmra.mrb[0].mxu0 %v357
      %v430 = vpop.f32.mrb[0].mxu0
      %v431 = vadd.f32 0.0, %v430
      %v432 = vpop.f32.mrb[0].mxu0
      %433 = vdwg.mxu0
      %v435 = vsel %vm352, %v350, 0
      %v438 = vsel %vm352, %v351, 0
      %440 = vmatprep.subr.mxu0 0.0
      %441 = vmatpush1.msra.mxu0 %v426
      %442 = vmatprep.subr.mxu0 0.0
      %443 = vmatpush1.msra.mxu0 %v431
      %444 = vmatprep.subr.mxu0 0.0
      %445 = vmatpush1.msra.mxu0 0.0
      %446 = vmatprep.subr.mxu0 0.0
      %447 = vmatpush1.msra.mxu0 0.0
      %448 = vmatprep.subr.mxu0 0.0
      %449 = vmatpush1.msra.mxu0 0.0
      %450 = vmatprep.subr.mxu0 0.0
      %451 = vmatpush1.msra.mxu0 0.0
      %452 = vmatprep.subr.mxu0 0.0
      %453 = vmatpush1.msra.mxu0 0.0
      %454 = vmatprep.subr.mxu0 0.0
      %455 = vmatpush1.msra.mxu0 0.0
      %456 = vmatprep.subr.mxu0 0.0
      %457 = vmatpush1.msra.mxu0 0.0
      %458 = vmatprep.subr.mxu0 0.0
      %459 = vmatpush1.msra.mxu0 0.0
      %460 = vmatprep.subr.mxu0 0.0
      %461 = vmatpush1.msra.mxu0 0.0
      %462 = vmatprep.subr.mxu0 0.0
      %463 = vmatpush1.msra.mxu0 0.0
      %464 = vmatprep.subr.mxu0 0.0
      %465 = vmatpush1.msra.mxu0 0.0
      %466 = vmatprep.subr.mxu0 0.0
      %467 = vmatpush1.msra.mxu0 0.0
      %468 = vmatprep.subr.mxu0 0.0
      %469 = vmatpush1.msra.mxu0 0.0
      %470 = vmatprep.subr.mxu0 0.0
      %471 = vmatpush1.msra.mxu0 0.0
      %472 = vmatprep.subr.mxu0 0.0
      %473 = vmatpush1.msra.mxu0 0.0
      %474 = vmatprep.subr.mxu0 0.0
      %475 = vmatpush1.msra.mxu0 0.0
      %476 = vmatprep.subr.mxu0 0.0
      %477 = vmatpush1.msra.mxu0 0.0
      %478 = vmatprep.subr.mxu0 0.0
      %479 = vmatpush1.msra.mxu0 0.0
      %480 = vmatprep.subr.mxu0 0.0
      %481 = vmatpush1.msra.mxu0 0.0
      %482 = vmatprep.subr.mxu0 0.0
      %483 = vmatpush1.msra.mxu0 0.0
      %484 = vmatprep.subr.mxu0 0.0
      %485 = vmatpush1.msra.mxu0 0.0
      %486 = vmatprep.subr.mxu0 0.0
      %487 = vmatpush1.msra.mxu0 0.0
      %488 = vmatprep.subr.mxu0 0.0
      %489 = vmatpush1.msra.mxu0 0.0
      %490 = vmatprep.subr.mxu0 0.0
      %491 = vmatpush1.msra.mxu0 0.0
      %492 = vmatprep.subr.mxu0 0.0
      %493 = vmatpush1.msra.mxu0 0.0
      %494 = vmatprep.subr.mxu0 0.0
      %495 = vmatpush1.msra.mxu0 0.0
      %496 = vmatprep.subr.mxu0 0.0
      %497 = vmatpush1.msra.mxu0 0.0
      %498 = vmatprep.subr.mxu0 0.0
      %499 = vmatpush1.msra.mxu0 0.0
      %500 = vmatprep.subr.mxu0 0.0
      %501 = vmatpush1.msra.mxu0 0.0
      %502 = vmatprep.subr.mxu0 0.0
      %503 = vmatpush1.msra.mxu0 0.0
      %504 = vmatprep.mubr.f32.mxu0 0.0
      %505 = vmatmul.mubr.f32.gmra.mrb[0].mxu0 %v435
      %v506 = vpop.f32.mrb[0].mxu0
      %v507 = vadd.f32 0.0, %v506
      %v508 = vpop.f32.mrb[0].mxu0
      %509 = vmatprep.mubr.f32.mxu0 0.0
      %510 = vmatmul.mubr.f32.gmra.mrb[0].mxu0 %v438
      %v511 = vpop.f32.mrb[0].mxu0
      %v512 = vadd.f32 0.0, %v511
      %v513 = vpop.f32.mrb[0].mxu0
      %514 = vdwg.mxu0
      %v515 = vmul.f32 %v507, %v507
      %v516 = vmul.f32 %v512, %v512
      %v518 = vsel %vm352, %v334, 0
      %v521 = vsel %vm352, %v335, 0
      %523 = vmatprep.subr.mxu0 0.0
      %524 = vmatpush1.msra.mxu0 %v348
      %525 = vmatprep.subr.mxu0 0.0
      %526 = vmatpush1.msra.mxu0 %v349
      %527 = vmatprep.subr.mxu0 0.0
      %528 = vmatpush1.msra.mxu0 0.0
      %529 = vmatprep.subr.mxu0 0.0
      %530 = vmatpush1.msra.mxu0 0.0
      %531 = vmatprep.subr.mxu0 0.0
      %532 = vmatpush1.msra.mxu0 0.0
      %533 = vmatprep.subr.mxu0 0.0
      %534 = vmatpush1.msra.mxu0 0.0
      %535 = vmatprep.subr.mxu0 0.0
      %536 = vmatpush1.msra.mxu0 0.0
      %537 = vmatprep.subr.mxu0 0.0
      %538 = vmatpush1.msra.mxu0 0.0
      %539 = vmatprep.subr.mxu0 0.0
      %540 = vmatpush1.msra.mxu0 0.0
      %541 = vmatprep.subr.mxu0 0.0
      %542 = vmatpush1.msra.mxu0 0.0
      %543 = vmatprep.subr.mxu0 0.0
      %544 = vmatpush1.msra.mxu0 0.0
      %545 = vmatprep.subr.mxu0 0.0
      %546 = vmatpush1.msra.mxu0 0.0
      %547 = vmatprep.subr.mxu0 0.0
      %548 = vmatpush1.msra.mxu0 0.0
      %549 = vmatprep.subr.mxu0 0.0
      %550 = vmatpush1.msra.mxu0 0.0
      %551 = vmatprep.subr.mxu0 0.0
      %552 = vmatpush1.msra.mxu0 0.0
      %553 = vmatprep.subr.mxu0 0.0
      %554 = vmatpush1.msra.mxu0 0.0
      %555 = vmatprep.subr.mxu0 0.0
      %556 = vmatpush1.msra.mxu0 0.0
      %557 = vmatprep.subr.mxu0 0.0
      %558 = vmatpush1.msra.mxu0 0.0
      %559 = vmatprep.subr.mxu0 0.0
      %560 = vmatpush1.msra.mxu0 0.0
      %561 = vmatprep.subr.mxu0 0.0
      %562 = vmatpush1.msra.mxu0 0.0
      %563 = vmatprep.subr.mxu0 0.0
      %564 = vmatpush1.msra.mxu0 0.0
      %565 = vmatprep.subr.mxu0 0.0
      %566 = vmatpush1.msra.mxu0 0.0
      %567 = vmatprep.subr.mxu0 0.0
      %568 = vmatpush1.msra.mxu0 0.0
      %569 = vmatprep.subr.mxu0 0.0
      %570 = vmatpush1.msra.mxu0 0.0
      %571 = vmatprep.subr.mxu0 0.0
      %572 = vmatpush1.msra.mxu0 0.0
      %573 = vmatprep.subr.mxu0 0.0
      %574 = vmatpush1.msra.mxu0 0.0
      %575 = vmatprep.subr.mxu0 0.0
      %576 = vmatpush1.msra.mxu0 0.0
      %577 = vmatprep.subr.mxu0 0.0
      %578 = vmatpush1.msra.mxu0 0.0
      %579 = vmatprep.subr.mxu0 0.0
      %580 = vmatpush1.msra.mxu0 0.0
      %581 = vmatprep.subr.mxu0 0.0
      %582 = vmatpush1.msra.mxu0 0.0
      %583 = vmatprep.subr.mxu0 0.0
      %584 = vmatpush1.msra.mxu0 0.0
      %585 = vmatprep.subr.mxu0 0.0
      %586 = vmatpush1.msra.mxu0 0.0
      %587 = vmatprep.mubr.f32.mxu0 0.0
      %588 = vmatmul.mubr.f32.gmra.mrb[0].mxu0 %v518
      %v589 = vpop.f32.mrb[0].mxu0
      %v590 = vadd.f32 0.0, %v589
      %v591 = vpop.f32.mrb[0].mxu0
      %592 = vmatprep.mubr.f32.mxu0 0.0
      %593 = vmatmul.mubr.f32.gmra.mrb[0].mxu0 %v521
      %v594 = vpop.f32.mrb[0].mxu0
      %v595 = vadd.f32 0.0, %v594
      %v596 = vpop.f32.mrb[0].mxu0
      %597 = vdwg.mxu0
      %598 = vmatprep.subr.mxu0 0.0
      %599 = vmatpush1.msra.mxu0 %v590
      %600 = vmatprep.subr.mxu0 0.0
      %601 = vmatpush1.msra.mxu0 %v595
      %602 = vmatprep.subr.mxu0 0.0
      %603 = vmatpush1.msra.mxu0 0.0
      %604 = vmatprep.subr.mxu0 0.0
      %605 = vmatpush1.msra.mxu0 0.0
      %606 = vmatprep.subr.mxu0 0.0
      %607 = vmatpush1.msra.mxu0 0.0
      %608 = vmatprep.subr.mxu0 0.0
      %609 = vmatpush1.msra.mxu0 0.0
      %610 = vmatprep.subr.mxu0 0.0
      %611 = vmatpush1.msra.mxu0 0.0
      %612 = vmatprep.subr.mxu0 0.0
      %613 = vmatpush1.msra.mxu0 0.0
      %614 = vmatprep.subr.mxu0 0.0
      %615 = vmatpush1.msra.mxu0 0.0
      %616 = vmatprep.subr.mxu0 0.0
      %617 = vmatpush1.msra.mxu0 0.0
      %618 = vmatprep.subr.mxu0 0.0
      %619 = vmatpush1.msra.mxu0 0.0
      %620 = vmatprep.subr.mxu0 0.0
      %621 = vmatpush1.msra.mxu0 0.0
      %622 = vmatprep.subr.mxu0 0.0
      %623 = vmatpush1.msra.mxu0 0.0
      %624 = vmatprep.subr.mxu0 0.0
      %625 = vmatpush1.msra.mxu0 0.0
      %626 = vmatprep.subr.mxu0 0.0
      %627 = vmatpush1.msra.mxu0 0.0
      %628 = vmatprep.subr.mxu0 0.0
      %629 = vmatpush1.msra.mxu0 0.0
      %630 = vmatprep.subr.mxu0 0.0
      %631 = vmatpush1.msra.mxu0 0.0
      %632 = vmatprep.subr.mxu0 0.0
      %633 = vmatpush1.msra.mxu0 0.0
      %634 = vmatprep.subr.mxu0 0.0
      %635 = vmatpush1.msra.mxu0 0.0
      %636 = vmatprep.subr.mxu0 0.0
      %637 = vmatpush1.msra.mxu0 0.0
      %638 = vmatprep.subr.mxu0 0.0
      %639 = vmatpush1.msra.mxu0 0.0
      %640 = vmatprep.subr.mxu0 0.0
      %641 = vmatpush1.msra.mxu0 0.0
      %642 = vmatprep.subr.mxu0 0.0
      %643 = vmatpush1.msra.mxu0 0.0
      %644 = vmatprep.subr.mxu0 0.0
      %645 = vmatpush1.msra.mxu0 0.0
      %646 = vmatprep.subr.mxu0 0.0
      %647 = vmatpush1.msra.mxu0 0.0
      %648 = vmatprep.subr.mxu0 0.0
      %649 = vmatpush1.msra.mxu0 0.0
      %650 = vmatprep.subr.mxu0 0.0
      %651 = vmatpush1.msra.mxu0 0.0
      %652 = vmatprep.subr.mxu0 0.0
      %653 = vmatpush1.msra.mxu0 0.0
      %654 = vmatprep.subr.mxu0 0.0
      %655 = vmatpush1.msra.mxu0 0.0
      %656 = vmatprep.subr.mxu0 0.0
      %657 = vmatpush1.msra.mxu0 0.0
      %658 = vmatprep.subr.mxu0 0.0
      %659 = vmatpush1.msra.mxu0 0.0
      %660 = vmatprep.subr.mxu0 0.0
      %661 = vmatpush1.msra.mxu0 0.0
      %662 = vmatprep.mubr.f32.mxu0 0.0
      %663 = vmatmul.mubr.f32.gmra.mrb[0].mxu0 %v435
      %v664 = vpop.f32.mrb[0].mxu0
      %v665 = vadd.f32 0.0, %v664
      %v666 = vpop.f32.mrb[0].mxu0
      %667 = vmatprep.mubr.f32.mxu0 0.0
      %668 = vmatmul.mubr.f32.gmra.mrb[0].mxu0 %v438
      %v669 = vpop.f32.mrb[0].mxu0
      %v670 = vadd.f32 0.0, %v669
      %v671 = vpop.f32.mrb[0].mxu0
      %672 = vdwg.mxu0
      %v673 = vsub.f32 %v665, %v515
      %v674 = vsub.f32 %v670, %v516
      %v675 = vadd.f32 %v673, 0.0009
      %v676 = vadd.f32 %v674, 0.0009
      %v678 = vsel %vm352, %v314, 0
      %v681 = vsel %vm352, %v315, 0
      %683 = vmatprep.subr.mxu0 0.0
      %684 = vmatpush1.msra.mxu0 %v348
      %685 = vmatprep.subr.mxu0 0.0
      %686 = vmatpush1.msra.mxu0 %v349
      %687 = vmatprep.subr.mxu0 0.0
      %688 = vmatpush1.msra.mxu0 0.0
      %689 = vmatprep.subr.mxu0 0.0
      %690 = vmatpush1.msra.mxu0 0.0
      %691 = vmatprep.subr.mxu0 0.0
      %692 = vmatpush1.msra.mxu0 0.0
      %693 = vmatprep.subr.mxu0 0.0
      %694 = vmatpush1.msra.mxu0 0.0
      %695 = vmatprep.subr.mxu0 0.0
      %696 = vmatpush1.msra.mxu0 0.0
      %697 = vmatprep.subr.mxu0 0.0
      %698 = vmatpush1.msra.mxu0 0.0
      %699 = vmatprep.subr.mxu0 0.0
      %700 = vmatpush1.msra.mxu0 0.0
      %701 = vmatprep.subr.mxu0 0.0
      %702 = vmatpush1.msra.mxu0 0.0
      %703 = vmatprep.subr.mxu0 0.0
      %704 = vmatpush1.msra.mxu0 0.0
      %705 = vmatprep.subr.mxu0 0.0
      %706 = vmatpush1.msra.mxu0 0.0
      %707 = vmatprep.subr.mxu0 0.0
      %708 = vmatpush1.msra.mxu0 0.0
      %709 = vmatprep.subr.mxu0 0.0
      %710 = vmatpush1.msra.mxu0 0.0
      %711 = vmatprep.subr.mxu0 0.0
      %712 = vmatpush1.msra.mxu0 0.0
      %713 = vmatprep.subr.mxu0 0.0
      %714 = vmatpush1.msra.mxu0 0.0
      %715 = vmatprep.subr.mxu0 0.0
      %716 = vmatpush1.msra.mxu0 0.0
      %717 = vmatprep.subr.mxu0 0.0
      %718 = vmatpush1.msra.mxu0 0.0
      %719 = vmatprep.subr.mxu0 0.0
      %720 = vmatpush1.msra.mxu0 0.0
      %721 = vmatprep.subr.mxu0 0.0
      %722 = vmatpush1.msra.mxu0 0.0
      %723 = vmatprep.subr.mxu0 0.0
      %724 = vmatpush1.msra.mxu0 0.0
      %725 = vmatprep.subr.mxu0 0.0
      %726 = vmatpush1.msra.mxu0 0.0
      %727 = vmatprep.subr.mxu0 0.0
      %728 = vmatpush1.msra.mxu0 0.0
      %729 = vmatprep.subr.mxu0 0.0
      %730 = vmatpush1.msra.mxu0 0.0
      %731 = vmatprep.subr.mxu0 0.0
      %732 = vmatpush1.msra.mxu0 0.0
      %733 = vmatprep.subr.mxu0 0.0
      %734 = vmatpush1.msra.mxu0 0.0
      %735 = vmatprep.subr.mxu0 0.0
      %736 = vmatpush1.msra.mxu0 0.0
      %737 = vmatprep.subr.mxu0 0.0
      %738 = vmatpush1.msra.mxu0 0.0
      %739 = vmatprep.subr.mxu0 0.0
      %740 = vmatpush1.msra.mxu0 0.0
      %741 = vmatprep.subr.mxu0 0.0
      %742 = vmatpush1.msra.mxu0 0.0
      %743 = vmatprep.subr.mxu0 0.0
      %744 = vmatpush1.msra.mxu0 0.0
      %745 = vmatprep.subr.mxu0 0.0
      %746 = vmatpush1.msra.mxu0 0.0
      %747 = vmatprep.mubr.f32.mxu0 0.0
      %748 = vmatmul.mubr.f32.gmra.mrb[0].mxu0 %v678
      %v749 = vpop.f32.mrb[0].mxu0
      %v750 = vadd.f32 0.0, %v749
      %v751 = vpop.f32.mrb[0].mxu0
      %752 = vmatprep.mubr.f32.mxu0 0.0
      %753 = vmatmul.mubr.f32.gmra.mrb[0].mxu0 %v681
      %v754 = vpop.f32.mrb[0].mxu0
      %v755 = vadd.f32 0.0, %v754
      %v756 = vpop.f32.mrb[0].mxu0
      %757 = vdwg.mxu0
      %758 = vmatprep.subr.mxu0 0.0
      %759 = vmatpush1.msra.mxu0 %v750
      %760 = vmatprep.subr.mxu0 0.0
      %761 = vmatpush1.msra.mxu0 %v755
      %762 = vmatprep.subr.mxu0 0.0
      %763 = vmatpush1.msra.mxu0 0.0
      %764 = vmatprep.subr.mxu0 0.0
      %765 = vmatpush1.msra.mxu0 0.0
      %766 = vmatprep.subr.mxu0 0.0
      %767 = vmatpush1.msra.mxu0 0.0
      %768 = vmatprep.subr.mxu0 0.0
      %769 = vmatpush1.msra.mxu0 0.0
      %770 = vmatprep.subr.mxu0 0.0
      %771 = vmatpush1.msra.mxu0 0.0
      %772 = vmatprep.subr.mxu0 0.0
      %773 = vmatpush1.msra.mxu0 0.0
      %774 = vmatprep.subr.mxu0 0.0
      %775 = vmatpush1.msra.mxu0 0.0
      %776 = vmatprep.subr.mxu0 0.0
      %777 = vmatpush1.msra.mxu0 0.0
      %778 = vmatprep.subr.mxu0 0.0
      %779 = vmatpush1.msra.mxu0 0.0
      %780 = vmatprep.subr.mxu0 0.0
      %781 = vmatpush1.msra.mxu0 0.0
      %782 = vmatprep.subr.mxu0 0.0
      %783 = vmatpush1.msra.mxu0 0.0
      %784 = vmatprep.subr.mxu0 0.0
      %785 = vmatpush1.msra.mxu0 0.0
      %786 = vmatprep.subr.mxu0 0.0
      %787 = vmatpush1.msra.mxu0 0.0
      %788 = vmatprep.subr.mxu0 0.0
      %789 = vmatpush1.msra.mxu0 0.0
      %790 = vmatprep.subr.mxu0 0.0
      %791 = vmatpush1.msra.mxu0 0.0
      %792 = vmatprep.subr.mxu0 0.0
      %793 = vmatpush1.msra.mxu0 0.0
      %794 = vmatprep.subr.mxu0 0.0
      %795 = vmatpush1.msra.mxu0 0.0
      %796 = vmatprep.subr.mxu0 0.0
      %797 = vmatpush1.msra.mxu0 0.0
      %798 = vmatprep.subr.mxu0 0.0
      %799 = vmatpush1.msra.mxu0 0.0
      %800 = vmatprep.subr.mxu0 0.0
      %801 = vmatpush1.msra.mxu0 0.0
      %802 = vmatprep.subr.mxu0 0.0
      %803 = vmatpush1.msra.mxu0 0.0
      %804 = vmatprep.subr.mxu0 0.0
      %805 = vmatpush1.msra.mxu0 0.0
      %806 = vmatprep.subr.mxu0 0.0
      %807 = vmatpush1.msra.mxu0 0.0
      %808 = vmatprep.subr.mxu0 0.0
      %809 = vmatpush1.msra.mxu0 0.0
      %810 = vmatprep.subr.mxu0 0.0
      %811 = vmatpush1.msra.mxu0 0.0
      %812 = vmatprep.subr.mxu0 0.0
      %813 = vmatpush1.msra.mxu0 0.0
      %814 = vmatprep.subr.mxu0 0.0
      %815 = vmatpush1.msra.mxu0 0.0
      %816 = vmatprep.subr.mxu0 0.0
      %817 = vmatpush1.msra.mxu0 0.0
      %818 = vmatprep.subr.mxu0 0.0
      %819 = vmatpush1.msra.mxu0 0.0
      %820 = vmatprep.subr.mxu0 0.0
      %821 = vmatpush1.msra.mxu0 0.0
      %822 = vmatprep.mubr.f32.mxu0 0.0
      %823 = vmatmul.mubr.f32.gmra.mrb[0].mxu0 %v435
      %v824 = vpop.f32.mrb[0].mxu0
      %v825 = vadd.f32 0.0, %v824
      %v826 = vpop.f32.mrb[0].mxu0
      %827 = vmatprep.mubr.f32.mxu0 0.0
      %828 = vmatmul.mubr.f32.gmra.mrb[0].mxu0 %v438
      %v829 = vpop.f32.mrb[0].mxu0
      %v830 = vadd.f32 0.0, %v829
      %v831 = vpop.f32.mrb[0].mxu0
      %832 = vdwg.mxu0
      %v834 = vsel %vm352, %v336, 0
      %v837 = vsel %vm352, %v337, 0
      %839 = vmatprep.subr.mxu0 0.0
      %840 = vmatpush1.msra.mxu0 %v348
      %841 = vmatprep.subr.mxu0 0.0
      %842 = vmatpush1.msra.mxu0 %v349
      %843 = vmatprep.subr.mxu0 0.0
      %844 = vmatpush1.msra.mxu0 0.0
      %845 = vmatprep.subr.mxu0 0.0
      %846 = vmatpush1.msra.mxu0 0.0
      %847 = vmatprep.subr.mxu0 0.0
      %848 = vmatpush1.msra.mxu0 0.0
      %849 = vmatprep.subr.mxu0 0.0
      %850 = vmatpush1.msra.mxu0 0.0
      %851 = vmatprep.subr.mxu0 0.0
      %852 = vmatpush1.msra.mxu0 0.0
      %853 = vmatprep.subr.mxu0 0.0
      %854 = vmatpush1.msra.mxu0 0.0
      %855 = vmatprep.subr.mxu0 0.0
      %856 = vmatpush1.msra.mxu0 0.0
      %857 = vmatprep.subr.mxu0 0.0
      %858 = vmatpush1.msra.mxu0 0.0
      %859 = vmatprep.subr.mxu0 0.0
      %860 = vmatpush1.msra.mxu0 0.0
      %861 = vmatprep.subr.mxu0 0.0
      %862 = vmatpush1.msra.mxu0 0.0
      %863 = vmatprep.subr.mxu0 0.0
      %864 = vmatpush1.msra.mxu0 0.0
      %865 = vmatprep.subr.mxu0 0.0
      %866 = vmatpush1.msra.mxu0 0.0
      %867 = vmatprep.subr.mxu0 0.0
      %868 = vmatpush1.msra.mxu0 0.0
      %869 = vmatprep.subr.mxu0 0.0
      %870 = vmatpush1.msra.mxu0 0.0
      %871 = vmatprep.subr.mxu0 0.0
      %872 = vmatpush1.msra.mxu0 0.0
      %873 = vmatprep.subr.mxu0 0.0
      %874 = vmatpush1.msra.mxu0 0.0
      %875 = vmatprep.subr.mxu0 0.0
      %876 = vmatpush1.msra.mxu0 0.0
      %877 = vmatprep.subr.mxu0 0.0
      %878 = vmatpush1.msra.mxu0 0.0
      %879 = vmatprep.subr.mxu0 0.0
      %880 = vmatpush1.msra.mxu0 0.0
      %881 = vmatprep.subr.mxu0 0.0
      %882 = vmatpush1.msra.mxu0 0.0
      %883 = vmatprep.subr.mxu0 0.0
      %884 = vmatpush1.msra.mxu0 0.0
      %885 = vmatprep.subr.mxu0 0.0
      %886 = vmatpush1.msra.mxu0 0.0
      %887 = vmatprep.subr.mxu0 0.0
      %888 = vmatpush1.msra.mxu0 0.0
      %889 = vmatprep.subr.mxu0 0.0
      %890 = vmatpush1.msra.mxu0 0.0
      %891 = vmatprep.subr.mxu0 0.0
      %892 = vmatpush1.msra.mxu0 0.0
      %893 = vmatprep.subr.mxu0 0.0
      %894 = vmatpush1.msra.mxu0 0.0
      %895 = vmatprep.subr.mxu0 0.0
      %896 = vmatpush1.msra.mxu0 0.0
      %897 = vmatprep.subr.mxu0 0.0
      %898 = vmatpush1.msra.mxu0 0.0
      %899 = vmatprep.subr.mxu0 0.0
      %900 = vmatpush1.msra.mxu0 0.0
      %901 = vmatprep.subr.mxu0 0.0
      %902 = vmatpush1.msra.mxu0 0.0
      %903 = vmatprep.mubr.f32.mxu0 0.0
      %904 = vmatmul.mubr.f32.gmra.mrb[0].mxu0 %v834
      %v905 = vpop.f32.mrb[0].mxu0
      %v906 = vadd.f32 0.0, %v905
      %v907 = vpop.f32.mrb[0].mxu0
      %908 = vmatprep.mubr.f32.mxu0 0.0
      %909 = vmatmul.mubr.f32.gmra.mrb[0].mxu0 %v837
      %v910 = vpop.f32.mrb[0].mxu0
      %v911 = vadd.f32 0.0, %v910
      %v912 = vpop.f32.mrb[0].mxu0
      %913 = vdwg.mxu0
      %914 = vmatprep.subr.mxu0 0.0
      %915 = vmatpush1.msra.mxu0 %v906
      %916 = vmatprep.subr.mxu0 0.0
      %917 = vmatpush1.msra.mxu0 %v911
      %918 = vmatprep.subr.mxu0 0.0
      %919 = vmatpush1.msra.mxu0 0.0
      %920 = vmatprep.subr.mxu0 0.0
      %921 = vmatpush1.msra.mxu0 0.0
      %922 = vmatprep.subr.mxu0 0.0
      %923 = vmatpush1.msra.mxu0 0.0
      %924 = vmatprep.subr.mxu0 0.0
      %925 = vmatpush1.msra.mxu0 0.0
      %926 = vmatprep.subr.mxu0 0.0
      %927 = vmatpush1.msra.mxu0 0.0
      %928 = vmatprep.subr.mxu0 0.0
      %929 = vmatpush1.msra.mxu0 0.0
      %930 = vmatprep.subr.mxu0 0.0
      %931 = vmatpush1.msra.mxu0 0.0
      %932 = vmatprep.subr.mxu0 0.0
      %933 = vmatpush1.msra.mxu0 0.0
      %934 = vmatprep.subr.mxu0 0.0
      %935 = vmatpush1.msra.mxu0 0.0
      %936 = vmatprep.subr.mxu0 0.0
      %937 = vmatpush1.msra.mxu0 0.0
      %938 = vmatprep.subr.mxu0 0.0
      %939 = vmatpush1.msra.mxu0 0.0
      %940 = vmatprep.subr.mxu0 0.0
      %941 = vmatpush1.msra.mxu0 0.0
      %942 = vmatprep.subr.mxu0 0.0
      %943 = vmatpush1.msra.mxu0 0.0
      %944 = vmatprep.subr.mxu0 0.0
      %945 = vmatpush1.msra.mxu0 0.0
      %946 = vmatprep.subr.mxu0 0.0
      %947 = vmatpush1.msra.mxu0 0.0
      %948 = vmatprep.subr.mxu0 0.0
      %949 = vmatpush1.msra.mxu0 0.0
      %950 = vmatprep.subr.mxu0 0.0
      %951 = vmatpush1.msra.mxu0 0.0
      %952 = vmatprep.subr.mxu0 0.0
      %953 = vmatpush1.msra.mxu0 0.0
      %954 = vmatprep.subr.mxu0 0.0
      %955 = vmatpush1.msra.mxu0 0.0
      %956 = vmatprep.subr.mxu0 0.0
      %957 = vmatpush1.msra.mxu0 0.0
      %958 = vmatprep.subr.mxu0 0.0
      %959 = vmatpush1.msra.mxu0 0.0
      %960 = vmatprep.subr.mxu0 0.0
      %961 = vmatpush1.msra.mxu0 0.0
      %962 = vmatprep.subr.mxu0 0.0
      %963 = vmatpush1.msra.mxu0 0.0
      %964 = vmatprep.subr.mxu0 0.0
      %965 = vmatpush1.msra.mxu0 0.0
      %966 = vmatprep.subr.mxu0 0.0
      %967 = vmatpush1.msra.mxu0 0.0
      %968 = vmatprep.subr.mxu0 0.0
      %969 = vmatpush1.msra.mxu0 0.0
      %970 = vmatprep.subr.mxu0 0.0
      %971 = vmatpush1.msra.mxu0 0.0
      %972 = vmatprep.subr.mxu0 0.0
      %973 = vmatpush1.msra.mxu0 0.0
      %974 = vmatprep.subr.mxu0 0.0
      %975 = vmatpush1.msra.mxu0 0.0
      %976 = vmatprep.subr.mxu0 0.0
      %977 = vmatpush1.msra.mxu0 0.0
      %978 = vmatprep.mubr.f32.mxu0 0.0
      %979 = vmatmul.mubr.f32.gmra.mrb[0].mxu0 %v435
      %v980 = vpop.f32.mrb[0].mxu0
      %v981 = vadd.f32 0.0, %v980
      %v982 = vpop.f32.mrb[0].mxu0
      %983 = vmatprep.mubr.f32.mxu0 0.0
      %984 = vmatmul.mubr.f32.gmra.mrb[0].mxu0 %v438
      %v985 = vpop.f32.mrb[0].mxu0
      %v986 = vadd.f32 0.0, %v985
      %v987 = vpop.f32.mrb[0].mxu0
      %988 = vdwg.mxu0
      %v989 = vmul.f32 %v825, %v825
      %v990 = vmul.f32 %v830, %v830
      %v991 = vsub.f32 %v981, %v989
      %v992 = vsub.f32 %v986, %v990
      %v994 = vsel %vm352, %v338, 0
      %v997 = vsel %vm352, %v339, 0
      %999 = vmatprep.subr.mxu0 0.0
      %1000 = vmatpush1.msra.mxu0 %v348
      %1001 = vmatprep.subr.mxu0 0.0
      %1002 = vmatpush1.msra.mxu0 %v349
      %1003 = vmatprep.subr.mxu0 0.0
      %1004 = vmatpush1.msra.mxu0 0.0
      %1005 = vmatprep.subr.mxu0 0.0
      %1006 = vmatpush1.msra.mxu0 0.0
      %1007 = vmatprep.subr.mxu0 0.0
      %1008 = vmatpush1.msra.mxu0 0.0
      %1009 = vmatprep.subr.mxu0 0.0
      %1010 = vmatpush1.msra.mxu0 0.0
      %1011 = vmatprep.subr.mxu0 0.0
      %1012 = vmatpush1.msra.mxu0 0.0
      %1013 = vmatprep.subr.mxu0 0.0
      %1014 = vmatpush1.msra.mxu0 0.0
      %1015 = vmatprep.subr.mxu0 0.0
      %1016 = vmatpush1.msra.mxu0 0.0
      %1017 = vmatprep.subr.mxu0 0.0
      %1018 = vmatpush1.msra.mxu0 0.0
      %1019 = vmatprep.subr.mxu0 0.0
      %1020 = vmatpush1.msra.mxu0 0.0
      %1021 = vmatprep.subr.mxu0 0.0
      %1022 = vmatpush1.msra.mxu0 0.0
      %1023 = vmatprep.subr.mxu0 0.0
      %1024 = vmatpush1.msra.mxu0 0.0
      %1025 = vmatprep.subr.mxu0 0.0
      %1026 = vmatpush1.msra.mxu0 0.0
      %1027 = vmatprep.subr.mxu0 0.0
      %1028 = vmatpush1.msra.mxu0 0.0
      %1029 = vmatprep.subr.mxu0 0.0
      %1030 = vmatpush1.msra.mxu0 0.0
      %1031 = vmatprep.subr.mxu0 0.0
      %1032 = vmatpush1.msra.mxu0 0.0
      %1033 = vmatprep.subr.mxu0 0.0
      %1034 = vmatpush1.msra.mxu0 0.0
      %1035 = vmatprep.subr.mxu0 0.0
      %1036 = vmatpush1.msra.mxu0 0.0
      %1037 = vmatprep.subr.mxu0 0.0
      %1038 = vmatpush1.msra.mxu0 0.0
      %1039 = vmatprep.subr.mxu0 0.0
      %1040 = vmatpush1.msra.mxu0 0.0
      %1041 = vmatprep.subr.mxu0 0.0
      %1042 = vmatpush1.msra.mxu0 0.0
      %1043 = vmatprep.subr.mxu0 0.0
      %1044 = vmatpush1.msra.mxu0 0.0
      %1045 = vmatprep.subr.mxu0 0.0
      %1046 = vmatpush1.msra.mxu0 0.0
      %1047 = vmatprep.subr.mxu0 0.0
      %1048 = vmatpush1.msra.mxu0 0.0
      %1049 = vmatprep.subr.mxu0 0.0
      %1050 = vmatpush1.msra.mxu0 0.0
      %1051 = vmatprep.subr.mxu0 0.0
      %1052 = vmatpush1.msra.mxu0 0.0
      %1053 = vmatprep.subr.mxu0 0.0
      %1054 = vmatpush1.msra.mxu0 0.0
      %1055 = vmatprep.subr.mxu0 0.0
      %1056 = vmatpush1.msra.mxu0 0.0
      %1057 = vmatprep.subr.mxu0 0.0
      %1058 = vmatpush1.msra.mxu0 0.0
      %1059 = vmatprep.subr.mxu0 0.0
      %1060 = vmatpush1.msra.mxu0 0.0
      %1061 = vmatprep.subr.mxu0 0.0
      %1062 = vmatpush1.msra.mxu0 0.0
      %1063 = vmatprep.mubr.f32.mxu0 0.0
      %1064 = vmatmul.mubr.f32.gmra.mrb[0].mxu0 %v994
      %v1065 = vpop.f32.mrb[0].mxu0
      %v1066 = vadd.f32 0.0, %v1065
      %v1067 = vpop.f32.mrb[0].mxu0
      %1068 = vmatprep.mubr.f32.mxu0 0.0
      %1069 = vmatmul.mubr.f32.gmra.mrb[0].mxu0 %v997
      %v1070 = vpop.f32.mrb[0].mxu0
      %v1071 = vadd.f32 0.0, %v1070
      %v1072 = vpop.f32.mrb[0].mxu0
      %1073 = vdwg.mxu0
      %1074 = vmatprep.subr.mxu0 0.0
      %1075 = vmatpush1.msra.mxu0 %v1066
      %1076 = vmatprep.subr.mxu0 0.0
      %1077 = vmatpush1.msra.mxu0 %v1071
      %1078 = vmatprep.subr.mxu0 0.0
      %1079 = vmatpush1.msra.mxu0 0.0
      %1080 = vmatprep.subr.mxu0 0.0
      %1081 = vmatpush1.msra.mxu0 0.0
      %1082 = vmatprep.subr.mxu0 0.0
      %1083 = vmatpush1.msra.mxu0 0.0
      %1084 = vmatprep.subr.mxu0 0.0
      %1085 = vmatpush1.msra.mxu0 0.0
      %1086 = vmatprep.subr.mxu0 0.0
      %1087 = vmatpush1.msra.mxu0 0.0
      %1088 = vmatprep.subr.mxu0 0.0
      %1089 = vmatpush1.msra.mxu0 0.0
      %1090 = vmatprep.subr.mxu0 0.0
      %1091 = vmatpush1.msra.mxu0 0.0
      %1092 = vmatprep.subr.mxu0 0.0
      %1093 = vmatpush1.msra.mxu0 0.0
      %1094 = vmatprep.subr.mxu0 0.0
      %1095 = vmatpush1.msra.mxu0 0.0
      %1096 = vmatprep.subr.mxu0 0.0
      %1097 = vmatpush1.msra.mxu0 0.0
      %1098 = vmatprep.subr.mxu0 0.0
      %1099 = vmatpush1.msra.mxu0 0.0
      %1100 = vmatprep.subr.mxu0 0.0
      %1101 = vmatpush1.msra.mxu0 0.0
      %1102 = vmatprep.subr.mxu0 0.0
      %1103 = vmatpush1.msra.mxu0 0.0
      %1104 = vmatprep.subr.mxu0 0.0
      %1105 = vmatpush1.msra.mxu0 0.0
      %1106 = vmatprep.subr.mxu0 0.0
      %1107 = vmatpush1.msra.mxu0 0.0
      %1108 = vmatprep.subr.mxu0 0.0
      %1109 = vmatpush1.msra.mxu0 0.0
      %1110 = vmatprep.subr.mxu0 0.0
      %1111 = vmatpush1.msra.mxu0 0.0
      %1112 = vmatprep.subr.mxu0 0.0
      %1113 = vmatpush1.msra.mxu0 0.0
      %1114 = vmatprep.subr.mxu0 0.0
      %1115 = vmatpush1.msra.mxu0 0.0
      %1116 = vmatprep.subr.mxu0 0.0
      %1117 = vmatpush1.msra.mxu0 0.0
      %1118 = vmatprep.subr.mxu0 0.0
      %1119 = vmatpush1.msra.mxu0 0.0
      %1120 = vmatprep.subr.mxu0 0.0
      %1121 = vmatpush1.msra.mxu0 0.0
      %1122 = vmatprep.subr.mxu0 0.0
      %1123 = vmatpush1.msra.mxu0 0.0
      %1124 = vmatprep.subr.mxu0 0.0
      %1125 = vmatpush1.msra.mxu0 0.0
      %1126 = vmatprep.subr.mxu0 0.0
      %1127 = vmatpush1.msra.mxu0 0.0
      %1128 = vmatprep.subr.mxu0 0.0
      %1129 = vmatpush1.msra.mxu0 0.0
      %1130 = vmatprep.subr.mxu0 0.0
      %1131 = vmatpush1.msra.mxu0 0.0
      %1132 = vmatprep.subr.mxu0 0.0
      %1133 = vmatpush1.msra.mxu0 0.0
      %1134 = vmatprep.subr.mxu0 0.0
      %1135 = vmatpush1.msra.mxu0 0.0
      %1136 = vmatprep.subr.mxu0 0.0
      %1137 = vmatpush1.msra.mxu0 0.0
      %1138 = vmatprep.mubr.f32.mxu0 0.0
      %1139 = vmatmul.mubr.f32.gmra.mrb[0].mxu0 %v435
      %v1140 = vpop.f32.mrb[0].mxu0
      %v1141 = vadd.f32 0.0, %v1140
      %v1142 = vpop.f32.mrb[0].mxu0
      %1143 = vmatprep.mubr.f32.mxu0 0.0
      %1144 = vmatmul.mubr.f32.gmra.mrb[0].mxu0 %v438
      %v1145 = vpop.f32.mrb[0].mxu0
      %v1146 = vadd.f32 0.0, %v1145
      %v1147 = vpop.f32.mrb[0].mxu0
      %1148 = vdwg.mxu0
      %v1149 = vmul.f32 %v825, %v507
      %v1150 = vmul.f32 %v830, %v512
      %v1151 = vsub.f32 %v1141, %v1149
      %v1152 = vsub.f32 %v1146, %v1150
      %v1153 = vmul.f32 %v825, 2.0
      %v1154 = vmul.f32 %v830, 2.0
      %v1155 = vmul.f32 %v1153, %v507
      %v1156 = vmul.f32 %v1154, %v512
      %v1157 = vadd.f32 %v1155, 0.0001
      %v1158 = vadd.f32 %v1156, 0.0001
      %v1159 = vmul.f32 %v1151, 2.0
      %v1160 = vmul.f32 %v1152, 2.0
      %v1161 = vadd.f32 %v1159, 0.0009
      %v1162 = vadd.f32 %v1160, 0.0009
      %v1163 = vmul.f32 %v1157, %v1161
      %v1164 = vmul.f32 %v1158, %v1162
      %v1165 = vadd.f32 %v989, %v515
      %v1166 = vadd.f32 %v990, %v516
      %v1167 = vadd.f32 %v1165, 0.0001
      %v1168 = vadd.f32 %v1166, 0.0001
      %v1169 = vadd.f32 %v991, %v675
      %v1170 = vadd.f32 %v992, %v676
      %v1171 = vmul.f32 %v1167, %v1169
      %v1172 = vmul.f32 %v1168, %v1170
      %v1173 = vrcp.pop %v1171
      %v1174 = vrcp.pop %v1172
      %v1175 = vmul.f32 %v1163, %v1173
      %v1176 = vmul.f32 %v1164, %v1174
      %v1177 = vmax.f32 %v991, 0.0001
      %v1178 = vmax.f32 %v992, 0.0001
      %v1179 = vmul.f32 %v1177, %v1175
      %v1180 = vmul.f32 %v1178, %v1176
      %v1182 = vsel %vm352, %v320, 0
      %v1185 = vsel %vm352, %v321, 0
      %1187 = vmatprep.subr.mxu0 0.0
      %1188 = vmatpush1.msra.mxu0 %v348
      %1189 = vmatprep.subr.mxu0 0.0
      %1190 = vmatpush1.msra.mxu0 %v349
      %1191 = vmatprep.subr.mxu0 0.0
      %1192 = vmatpush1.msra.mxu0 0.0
      %1193 = vmatprep.subr.mxu0 0.0
      %1194 = vmatpush1.msra.mxu0 0.0
      %1195 = vmatprep.subr.mxu0 0.0
      %1196 = vmatpush1.msra.mxu0 0.0
      %1197 = vmatprep.subr.mxu0 0.0
      %1198 = vmatpush1.msra.mxu0 0.0
      %1199 = vmatprep.subr.mxu0 0.0
      %1200 = vmatpush1.msra.mxu0 0.0
      %1201 = vmatprep.subr.mxu0 0.0
      %1202 = vmatpush1.msra.mxu0 0.0
      %1203 = vmatprep.subr.mxu0 0.0
      %1204 = vmatpush1.msra.mxu0 0.0
      %1205 = vmatprep.subr.mxu0 0.0
      %1206 = vmatpush1.msra.mxu0 0.0
      %1207 = vmatprep.subr.mxu0 0.0
      %1208 = vmatpush1.msra.mxu0 0.0
      %1209 = vmatprep.subr.mxu0 0.0
      %1210 = vmatpush1.msra.mxu0 0.0
      %1211 = vmatprep.subr.mxu0 0.0
      %1212 = vmatpush1.msra.mxu0 0.0
      %1213 = vmatprep.subr.mxu0 0.0
      %1214 = vmatpush1.msra.mxu0 0.0
      %1215 = vmatprep.subr.mxu0 0.0
      %1216 = vmatpush1.msra.mxu0 0.0
      %1217 = vmatprep.subr.mxu0 0.0
      %1218 = vmatpush1.msra.mxu0 0.0
      %1219 = vmatprep.subr.mxu0 0.0
      %1220 = vmatpush1.msra.mxu0 0.0
      %1221 = vmatprep.subr.mxu0 0.0
      %1222 = vmatpush1.msra.mxu0 0.0
      %1223 = vmatprep.subr.mxu0 0.0
      %1224 = vmatpush1.msra.mxu0 0.0
      %1225 = vmatprep.subr.mxu0 0.0
      %1226 = vmatpush1.msra.mxu0 0.0
      %1227 = vmatprep.subr.mxu0 0.0
      %1228 = vmatpush1.msra.mxu0 0.0
      %1229 = vmatprep.subr.mxu0 0.0
      %1230 = vmatpush1.msra.mxu0 0.0
      %1231 = vmatprep.subr.mxu0 0.0
      %1232 = vmatpush1.msra.mxu0 0.0
      %1233 = vmatprep.subr.mxu0 0.0
      %1234 = vmatpush1.msra.mxu0 0.0
      %1235 = vmatprep.subr.mxu0 0.0
      %1236 = vmatpush1.msra.mxu0 0.0
      %1237 = vmatprep.subr.mxu0 0.0
      %1238 = vmatpush1.msra.mxu0 0.0
      %1239 = vmatprep.subr.mxu0 0.0
      %1240 = vmatpush1.msra.mxu0 0.0
      %1241 = vmatprep.subr.mxu0 0.0
      %1242 = vmatpush1.msra.mxu0 0.0
      %1243 = vmatprep.subr.mxu0 0.0
      %1244 = vmatpush1.msra.mxu0 0.0
      %1245 = vmatprep.subr.mxu0 0.0
      %1246 = vmatpush1.msra.mxu0 0.0
      %1247 = vmatprep.subr.mxu0 0.0
      %1248 = vmatpush1.msra.mxu0 0.0
      %1249 = vmatprep.subr.mxu0 0.0
      %1250 = vmatpush1.msra.mxu0 0.0
      %1251 = vmatprep.mubr.f32.mxu0 0.0
      %1252 = vmatmul.mubr.f32.gmra.mrb[0].mxu0 %v1182
      %v1253 = vpop.f32.mrb[0].mxu0
      %v1254 = vadd.f32 0.0, %v1253
      %v1255 = vpop.f32.mrb[0].mxu0
      %1256 = vmatprep.mubr.f32.mxu0 0.0
      %1257 = vmatmul.mubr.f32.gmra.mrb[0].mxu0 %v1185
      %v1258 = vpop.f32.mrb[0].mxu0
      %v1259 = vadd.f32 0.0, %v1258
      %v1260 = vpop.f32.mrb[0].mxu0
      %1261 = vdwg.mxu0
      %1262 = vmatprep.subr.mxu0 0.0
      %1263 = vmatpush1.msra.mxu0 %v1254
      %1264 = vmatprep.subr.mxu0 0.0
      %1265 = vmatpush1.msra.mxu0 %v1259
      %1266 = vmatprep.subr.mxu0 0.0
      %1267 = vmatpush1.msra.mxu0 0.0
      %1268 = vmatprep.subr.mxu0 0.0
      %1269 = vmatpush1.msra.mxu0 0.0
      %1270 = vmatprep.subr.mxu0 0.0
      %1271 = vmatpush1.msra.mxu0 0.0
      %1272 = vmatprep.subr.mxu0 0.0
      %1273 = vmatpush1.msra.mxu0 0.0
      %1274 = vmatprep.subr.mxu0 0.0
      %1275 = vmatpush1.msra.mxu0 0.0
      %1276 = vmatprep.subr.mxu0 0.0
      %1277 = vmatpush1.msra.mxu0 0.0
      %1278 = vmatprep.subr.mxu0 0.0
      %1279 = vmatpush1.msra.mxu0 0.0
      %1280 = vmatprep.subr.mxu0 0.0
      %1281 = vmatpush1.msra.mxu0 0.0
      %1282 = vmatprep.subr.mxu0 0.0
      %1283 = vmatpush1.msra.mxu0 0.0
      %1284 = vmatprep.subr.mxu0 0.0
      %1285 = vmatpush1.msra.mxu0 0.0
      %1286 = vmatprep.subr.mxu0 0.0
      %1287 = vmatpush1.msra.mxu0 0.0
      %1288 = vmatprep.subr.mxu0 0.0
      %1289 = vmatpush1.msra.mxu0 0.0
      %1290 = vmatprep.subr.mxu0 0.0
      %1291 = vmatpush1.msra.mxu0 0.0
      %1292 = vmatprep.subr.mxu0 0.0
      %1293 = vmatpush1.msra.mxu0 0.0
      %1294 = vmatprep.subr.mxu0 0.0
      %1295 = vmatpush1.msra.mxu0 0.0
      %1296 = vmatprep.subr.mxu0 0.0
      %1297 = vmatpush1.msra.mxu0 0.0
      %1298 = vmatprep.subr.mxu0 0.0
      %1299 = vmatpush1.msra.mxu0 0.0
      %1300 = vmatprep.subr.mxu0 0.0
      %1301 = vmatpush1.msra.mxu0 0.0
      %1302 = vmatprep.subr.mxu0 0.0
      %1303 = vmatpush1.msra.mxu0 0.0
      %1304 = vmatprep.subr.mxu0 0.0
      %1305 = vmatpush1.msra.mxu0 0.0
      %1306 = vmatprep.subr.mxu0 0.0
      %1307 = vmatpush1.msra.mxu0 0.0
      %1308 = vmatprep.subr.mxu0 0.0
      %1309 = vmatpush1.msra.mxu0 0.0
      %1310 = vmatprep.subr.mxu0 0.0
      %1311 = vmatpush1.msra.mxu0 0.0
      %1312 = vmatprep.subr.mxu0 0.0
      %1313 = vmatpush1.msra.mxu0 0.0
      %1314 = vmatprep.subr.mxu0 0.0
      %1315 = vmatpush1.msra.mxu0 0.0
      %1316 = vmatprep.subr.mxu0 0.0
      %1317 = vmatpush1.msra.mxu0 0.0
      %1318 = vmatprep.subr.mxu0 0.0
      %1319 = vmatpush1.msra.mxu0 0.0
      %1320 = vmatprep.subr.mxu0 0.0
      %1321 = vmatpush1.msra.mxu0 0.0
      %1322 = vmatprep.subr.mxu0 0.0
      %1323 = vmatpush1.msra.mxu0 0.0
      %1324 = vmatprep.subr.mxu0 0.0
      %1325 = vmatpush1.msra.mxu0 0.0
      %1326 = vmatprep.mubr.f32.mxu0 0.0
      %1327 = vmatmul.mubr.f32.gmra.mrb[0].mxu0 %v435
      %v1328 = vpop.f32.mrb[0].mxu0
      %v1329 = vadd.f32 0.0, %v1328
      %v1330 = vpop.f32.mrb[0].mxu0
      %1331 = vmatprep.mubr.f32.mxu0 0.0
      %1332 = vmatmul.mubr.f32.gmra.mrb[0].mxu0 %v438
      %v1333 = vpop.f32.mrb[0].mxu0
      %v1334 = vadd.f32 0.0, %v1333
      %v1335 = vpop.f32.mrb[0].mxu0
      %1336 = vdwg.mxu0
      %v1338 = vsel %vm352, %v340, 0
      %v1341 = vsel %vm352, %v341, 0
      %1343 = vmatprep.subr.mxu0 0.0
      %1344 = vmatpush1.msra.mxu0 %v348
      %1345 = vmatprep.subr.mxu0 0.0
      %1346 = vmatpush1.msra.mxu0 %v349
      %1347 = vmatprep.subr.mxu0 0.0
      %1348 = vmatpush1.msra.mxu0 0.0
      %1349 = vmatprep.subr.mxu0 0.0
      %1350 = vmatpush1.msra.mxu0 0.0
      %1351 = vmatprep.subr.mxu0 0.0
      %1352 = vmatpush1.msra.mxu0 0.0
      %1353 = vmatprep.subr.mxu0 0.0
      %1354 = vmatpush1.msra.mxu0 0.0
      %1355 = vmatprep.subr.mxu0 0.0
      %1356 = vmatpush1.msra.mxu0 0.0
      %1357 = vmatprep.subr.mxu0 0.0
      %1358 = vmatpush1.msra.mxu0 0.0
      %1359 = vmatprep.subr.mxu0 0.0
      %1360 = vmatpush1.msra.mxu0 0.0
      %1361 = vmatprep.subr.mxu0 0.0
      %1362 = vmatpush1.msra.mxu0 0.0
      %1363 = vmatprep.subr.mxu0 0.0
      %1364 = vmatpush1.msra.mxu0 0.0
      %1365 = vmatprep.subr.mxu0 0.0
      %1366 = vmatpush1.msra.mxu0 0.0
      %1367 = vmatprep.subr.mxu0 0.0
      %1368 = vmatpush1.msra.mxu0 0.0
      %1369 = vmatprep.subr.mxu0 0.0
      %1370 = vmatpush1.msra.mxu0 0.0
      %1371 = vmatprep.subr.mxu0 0.0
      %1372 = vmatpush1.msra.mxu0 0.0
      %1373 = vmatprep.subr.mxu0 0.0
      %1374 = vmatpush1.msra.mxu0 0.0
      %1375 = vmatprep.subr.mxu0 0.0
      %1376 = vmatpush1.msra.mxu0 0.0
      %1377 = vmatprep.subr.mxu0 0.0
      %1378 = vmatpush1.msra.mxu0 0.0
      %1379 = vmatprep.subr.mxu0 0.0
      %1380 = vmatpush1.msra.mxu0 0.0
      %1381 = vmatprep.subr.mxu0 0.0
      %1382 = vmatpush1.msra.mxu0 0.0
      %1383 = vmatprep.subr.mxu0 0.0
      %1384 = vmatpush1.msra.mxu0 0.0
      %1385 = vmatprep.subr.mxu0 0.0
      %1386 = vmatpush1.msra.mxu0 0.0
      %1387 = vmatprep.subr.mxu0 0.0
      %1388 = vmatpush1.msra.mxu0 0.0
      %1389 = vmatprep.subr.mxu0 0.0
      %1390 = vmatpush1.msra.mxu0 0.0
      %1391 = vmatprep.subr.mxu0 0.0
      %1392 = vmatpush1.msra.mxu0 0.0
      %1393 = vmatprep.subr.mxu0 0.0
      %1394 = vmatpush1.msra.mxu0 0.0
      %1395 = vmatprep.subr.mxu0 0.0
      %1396 = vmatpush1.msra.mxu0 0.0
      %1397 = vmatprep.subr.mxu0 0.0
      %1398 = vmatpush1.msra.mxu0 0.0
      %1399 = vmatprep.subr.mxu0 0.0
      %1400 = vmatpush1.msra.mxu0 0.0
      %1401 = vmatprep.subr.mxu0 0.0
      %1402 = vmatpush1.msra.mxu0 0.0
      %1403 = vmatprep.subr.mxu0 0.0
      %1404 = vmatpush1.msra.mxu0 0.0
      %1405 = vmatprep.subr.mxu0 0.0
      %1406 = vmatpush1.msra.mxu0 0.0
      %1407 = vmatprep.mubr.f32.mxu0 0.0
      %1408 = vmatmul.mubr.f32.gmra.mrb[0].mxu0 %v1338
      %v1409 = vpop.f32.mrb[0].mxu0
      %v1410 = vadd.f32 0.0, %v1409
      %v1411 = vpop.f32.mrb[0].mxu0
      %1412 = vmatprep.mubr.f32.mxu0 0.0
      %1413 = vmatmul.mubr.f32.gmra.mrb[0].mxu0 %v1341
      %v1414 = vpop.f32.mrb[0].mxu0
      %v1415 = vadd.f32 0.0, %v1414
      %v1416 = vpop.f32.mrb[0].mxu0
      %1417 = vdwg.mxu0
      %1418 = vmatprep.subr.mxu0 0.0
      %1419 = vmatpush1.msra.mxu0 %v1410
      %1420 = vmatprep.subr.mxu0 0.0
      %1421 = vmatpush1.msra.mxu0 %v1415
      %1422 = vmatprep.subr.mxu0 0.0
      %1423 = vmatpush1.msra.mxu0 0.0
      %1424 = vmatprep.subr.mxu0 0.0
      %1425 = vmatpush1.msra.mxu0 0.0
      %1426 = vmatprep.subr.mxu0 0.0
      %1427 = vmatpush1.msra.mxu0 0.0
      %1428 = vmatprep.subr.mxu0 0.0
      %1429 = vmatpush1.msra.mxu0 0.0
      %1430 = vmatprep.subr.mxu0 0.0
      %1431 = vmatpush1.msra.mxu0 0.0
      %1432 = vmatprep.subr.mxu0 0.0
      %1433 = vmatpush1.msra.mxu0 0.0
      %1434 = vmatprep.subr.mxu0 0.0
      %1435 = vmatpush1.msra.mxu0 0.0
      %1436 = vmatprep.subr.mxu0 0.0
      %1437 = vmatpush1.msra.mxu0 0.0
      %1438 = vmatprep.subr.mxu0 0.0
      %1439 = vmatpush1.msra.mxu0 0.0
      %1440 = vmatprep.subr.mxu0 0.0
      %1441 = vmatpush1.msra.mxu0 0.0
      %1442 = vmatprep.subr.mxu0 0.0
      %1443 = vmatpush1.msra.mxu0 0.0
      %1444 = vmatprep.subr.mxu0 0.0
      %1445 = vmatpush1.msra.mxu0 0.0
      %1446 = vmatprep.subr.mxu0 0.0
      %1447 = vmatpush1.msra.mxu0 0.0
      %1448 = vmatprep.subr.mxu0 0.0
      %1449 = vmatpush1.msra.mxu0 0.0
      %1450 = vmatprep.subr.mxu0 0.0
      %1451 = vmatpush1.msra.mxu0 0.0
      %1452 = vmatprep.subr.mxu0 0.0
      %1453 = vmatpush1.msra.mxu0 0.0
      %1454 = vmatprep.subr.mxu0 0.0
      %1455 = vmatpush1.msra.mxu0 0.0
      %1456 = vmatprep.subr.mxu0 0.0
      %1457 = vmatpush1.msra.mxu0 0.0
      %1458 = vmatprep.subr.mxu0 0.0
      %1459 = vmatpush1.msra.mxu0 0.0
      %1460 = vmatprep.subr.mxu0 0.0
      %1461 = vmatpush1.msra.mxu0 0.0
      %1462 = vmatprep.subr.mxu0 0.0
      %1463 = vmatpush1.msra.mxu0 0.0
      %1464 = vmatprep.subr.mxu0 0.0
      %1465 = vmatpush1.msra.mxu0 0.0
      %1466 = vmatprep.subr.mxu0 0.0
      %1467 = vmatpush1.msra.mxu0 0.0
      %1468 = vmatprep.subr.mxu0 0.0
      %1469 = vmatpush1.msra.mxu0 0.0
      %1470 = vmatprep.subr.mxu0 0.0
      %1471 = vmatpush1.msra.mxu0 0.0
      %1472 = vmatprep.subr.mxu0 0.0
      %1473 = vmatpush1.msra.mxu0 0.0
      %1474 = vmatprep.subr.mxu0 0.0
      %1475 = vmatpush1.msra.mxu0 0.0
      %1476 = vmatprep.subr.mxu0 0.0
      %1477 = vmatpush1.msra.mxu0 0.0
      %1478 = vmatprep.subr.mxu0 0.0
      %1479 = vmatpush1.msra.mxu0 0.0
      %1480 = vmatprep.subr.mxu0 0.0
      %1481 = vmatpush1.msra.mxu0 0.0
      %1482 = vmatprep.mubr.f32.mxu0 0.0
      %1483 = vmatmul.mubr.f32.gmra.mrb[0].mxu0 %v435
      %v1484 = vpop.f32.mrb[0].mxu0
      %v1485 = vadd.f32 0.0, %v1484
      %v1486 = vpop.f32.mrb[0].mxu0
      %1487 = vmatprep.mubr.f32.mxu0 0.0
      %1488 = vmatmul.mubr.f32.gmra.mrb[0].mxu0 %v438
      %v1489 = vpop.f32.mrb[0].mxu0
      %v1490 = vadd.f32 0.0, %v1489
      %v1491 = vpop.f32.mrb[0].mxu0
      %1492 = vdwg.mxu0
      %v1493 = vmul.f32 %v1329, %v1329
      %v1494 = vmul.f32 %v1334, %v1334
      %v1495 = vsub.f32 %v1485, %v1493
      %v1496 = vsub.f32 %v1490, %v1494
      %v1498 = vsel %vm352, %v342, 0
      %v1501 = vsel %vm352, %v343, 0
      %1503 = vmatprep.subr.mxu0 0.0
      %1504 = vmatpush1.msra.mxu0 %v348
      %1505 = vmatprep.subr.mxu0 0.0
      %1506 = vmatpush1.msra.mxu0 %v349
      %1507 = vmatprep.subr.mxu0 0.0
      %1508 = vmatpush1.msra.mxu0 0.0
      %1509 = vmatprep.subr.mxu0 0.0
      %1510 = vmatpush1.msra.mxu0 0.0
      %1511 = vmatprep.subr.mxu0 0.0
      %1512 = vmatpush1.msra.mxu0 0.0
      %1513 = vmatprep.subr.mxu0 0.0
      %1514 = vmatpush1.msra.mxu0 0.0
      %1515 = vmatprep.subr.mxu0 0.0
      %1516 = vmatpush1.msra.mxu0 0.0
      %1517 = vmatprep.subr.mxu0 0.0
      %1518 = vmatpush1.msra.mxu0 0.0
      %1519 = vmatprep.subr.mxu0 0.0
      %1520 = vmatpush1.msra.mxu0 0.0
      %1521 = vmatprep.subr.mxu0 0.0
      %1522 = vmatpush1.msra.mxu0 0.0
      %1523 = vmatprep.subr.mxu0 0.0
      %1524 = vmatpush1.msra.mxu0 0.0
      %1525 = vmatprep.subr.mxu0 0.0
      %1526 = vmatpush1.msra.mxu0 0.0
      %1527 = vmatprep.subr.mxu0 0.0
      %1528 = vmatpush1.msra.mxu0 0.0
      %1529 = vmatprep.subr.mxu0 0.0
      %1530 = vmatpush1.msra.mxu0 0.0
      %1531 = vmatprep.subr.mxu0 0.0
      %1532 = vmatpush1.msra.mxu0 0.0
      %1533 = vmatprep.subr.mxu0 0.0
      %1534 = vmatpush1.msra.mxu0 0.0
      %1535 = vmatprep.subr.mxu0 0.0
      %1536 = vmatpush1.msra.mxu0 0.0
      %1537 = vmatprep.subr.mxu0 0.0
      %1538 = vmatpush1.msra.mxu0 0.0
      %1539 = vmatprep.subr.mxu0 0.0
      %1540 = vmatpush1.msra.mxu0 0.0
      %1541 = vmatprep.subr.mxu0 0.0
      %1542 = vmatpush1.msra.mxu0 0.0
      %1543 = vmatprep.subr.mxu0 0.0
      %1544 = vmatpush1.msra.mxu0 0.0
      %1545 = vmatprep.subr.mxu0 0.0
      %1546 = vmatpush1.msra.mxu0 0.0
      %1547 = vmatprep.subr.mxu0 0.0
      %1548 = vmatpush1.msra.mxu0 0.0
      %1549 = vmatprep.subr.mxu0 0.0
      %1550 = vmatpush1.msra.mxu0 0.0
      %1551 = vmatprep.subr.mxu0 0.0
      %1552 = vmatpush1.msra.mxu0 0.0
      %1553 = vmatprep.subr.mxu0 0.0
      %1554 = vmatpush1.msra.mxu0 0.0
      %1555 = vmatprep.subr.mxu0 0.0
      %1556 = vmatpush1.msra.mxu0 0.0
      %1557 = vmatprep.subr.mxu0 0.0
      %1558 = vmatpush1.msra.mxu0 0.0
      %1559 = vmatprep.subr.mxu0 0.0
      %1560 = vmatpush1.msra.mxu0 0.0
      %1561 = vmatprep.subr.mxu0 0.0
      %1562 = vmatpush1.msra.mxu0 0.0
      %1563 = vmatprep.subr.mxu0 0.0
      %1564 = vmatpush1.msra.mxu0 0.0
      %1565 = vmatprep.subr.mxu0 0.0
      %1566 = vmatpush1.msra.mxu0 0.0
      %1567 = vmatprep.mubr.f32.mxu0 0.0
      %1568 = vmatmul.mubr.f32.gmra.mrb[0].mxu0 %v1498
      %v1569 = vpop.f32.mrb[0].mxu0
      %v1570 = vadd.f32 0.0, %v1569
      %v1571 = vpop.f32.mrb[0].mxu0
      %1572 = vmatprep.mubr.f32.mxu0 0.0
      %1573 = vmatmul.mubr.f32.gmra.mrb[0].mxu0 %v1501
      %v1574 = vpop.f32.mrb[0].mxu0
      %v1575 = vadd.f32 0.0, %v1574
      %v1576 = vpop.f32.mrb[0].mxu0
      %1577 = vdwg.mxu0
      %1578 = vmatprep.subr.mxu0 0.0
      %1579 = vmatpush1.msra.mxu0 %v1570
      %1580 = vmatprep.subr.mxu0 0.0
      %1581 = vmatpush1.msra.mxu0 %v1575
      %1582 = vmatprep.subr.mxu0 0.0
      %1583 = vmatpush1.msra.mxu0 0.0
      %1584 = vmatprep.subr.mxu0 0.0
      %1585 = vmatpush1.msra.mxu0 0.0
      %1586 = vmatprep.subr.mxu0 0.0
      %1587 = vmatpush1.msra.mxu0 0.0
      %1588 = vmatprep.subr.mxu0 0.0
      %1589 = vmatpush1.msra.mxu0 0.0
      %1590 = vmatprep.subr.mxu0 0.0
      %1591 = vmatpush1.msra.mxu0 0.0
      %1592 = vmatprep.subr.mxu0 0.0
      %1593 = vmatpush1.msra.mxu0 0.0
      %1594 = vmatprep.subr.mxu0 0.0
      %1595 = vmatpush1.msra.mxu0 0.0
      %1596 = vmatprep.subr.mxu0 0.0
      %1597 = vmatpush1.msra.mxu0 0.0
      %1598 = vmatprep.subr.mxu0 0.0
      %1599 = vmatpush1.msra.mxu0 0.0
      %1600 = vmatprep.subr.mxu0 0.0
      %1601 = vmatpush1.msra.mxu0 0.0
      %1602 = vmatprep.subr.mxu0 0.0
      %1603 = vmatpush1.msra.mxu0 0.0
      %1604 = vmatprep.subr.mxu0 0.0
      %1605 = vmatpush1.msra.mxu0 0.0
      %1606 = vmatprep.subr.mxu0 0.0
      %1607 = vmatpush1.msra.mxu0 0.0
      %1608 = vmatprep.subr.mxu0 0.0
      %1609 = vmatpush1.msra.mxu0 0.0
      %1610 = vmatprep.subr.mxu0 0.0
      %1611 = vmatpush1.msra.mxu0 0.0
      %1612 = vmatprep.subr.mxu0 0.0
      %1613 = vmatpush1.msra.mxu0 0.0
      %1614 = vmatprep.subr.mxu0 0.0
      %1615 = vmatpush1.msra.mxu0 0.0
      %1616 = vmatprep.subr.mxu0 0.0
      %1617 = vmatpush1.msra.mxu0 0.0
      %1618 = vmatprep.subr.mxu0 0.0
      %1619 = vmatpush1.msra.mxu0 0.0
      %1620 = vmatprep.subr.mxu0 0.0
      %1621 = vmatpush1.msra.mxu0 0.0
      %1622 = vmatprep.subr.mxu0 0.0
      %1623 = vmatpush1.msra.mxu0 0.0
      %1624 = vmatprep.subr.mxu0 0.0
      %1625 = vmatpush1.msra.mxu0 0.0
      %1626 = vmatprep.subr.mxu0 0.0
      %1627 = vmatpush1.msra.mxu0 0.0
      %1628 = vmatprep.subr.mxu0 0.0
      %1629 = vmatpush1.msra.mxu0 0.0
      %1630 = vmatprep.subr.mxu0 0.0
      %1631 = vmatpush1.msra.mxu0 0.0
      %1632 = vmatprep.subr.mxu0 0.0
      %1633 = vmatpush1.msra.mxu0 0.0
      %1634 = vmatprep.subr.mxu0 0.0
      %1635 = vmatpush1.msra.mxu0 0.0
      %1636 = vmatprep.subr.mxu0 0.0
      %1637 = vmatpush1.msra.mxu0 0.0
      %1638 = vmatprep.subr.mxu0 0.0
      %1639 = vmatpush1.msra.mxu0 0.0
      %1640 = vmatprep.subr.mxu0 0.0
      %1641 = vmatpush1.msra.mxu0 0.0
      %1642 = vmatprep.mubr.f32.mxu0 0.0
      %1643 = vmatmul.mubr.f32.gmra.mrb[0].mxu0 %v435
      %v1644 = vpop.f32.mrb[0].mxu0
      %v1645 = vadd.f32 0.0, %v1644
      %v1646 = vpop.f32.mrb[0].mxu0
      %1647 = vmatprep.mubr.f32.mxu0 0.0
      %1648 = vmatmul.mubr.f32.gmra.mrb[0].mxu0 %v438
      %v1649 = vpop.f32.mrb[0].mxu0
      %v1650 = vadd.f32 0.0, %v1649
      %v1651 = vpop.f32.mrb[0].mxu0
      %1652 = vdwg.mxu0
      %v1653 = vmul.f32 %v1329, %v507
      %v1654 = vmul.f32 %v1334, %v512
      %v1655 = vsub.f32 %v1645, %v1653
      %v1656 = vsub.f32 %v1650, %v1654
      %v1657 = vmul.f32 %v1329, 2.0
      %v1658 = vmul.f32 %v1334, 2.0
      %v1659 = vmul.f32 %v1657, %v507
      %v1660 = vmul.f32 %v1658, %v512
      %v1661 = vadd.f32 %v1659, 0.0001
      %v1662 = vadd.f32 %v1660, 0.0001
      %v1663 = vmul.f32 %v1655, 2.0
      %v1664 = vmul.f32 %v1656, 2.0
      %v1665 = vadd.f32 %v1663, 0.0009
      %v1666 = vadd.f32 %v1664, 0.0009
      %v1667 = vmul.f32 %v1661, %v1665
      %v1668 = vmul.f32 %v1662, %v1666
      %v1669 = vadd.f32 %v1493, %v515
      %v1670 = vadd.f32 %v1494, %v516
      %v1671 = vadd.f32 %v1669, 0.0001
      %v1672 = vadd.f32 %v1670, 0.0001
      %v1673 = vadd.f32 %v1495, %v675
      %v1674 = vadd.f32 %v1496, %v676
      %v1675 = vmul.f32 %v1671, %v1673
      %v1676 = vmul.f32 %v1672, %v1674
      %v1677 = vrcp.pop %v1675
      %v1678 = vrcp.pop %v1676
      %v1679 = vmul.f32 %v1667, %v1677
      %v1680 = vmul.f32 %v1668, %v1678
      %v1681 = vmax.f32 %v1495, 0.0001
      %v1682 = vmax.f32 %v1496, 0.0001
      %v1683 = vmul.f32 %v1681, %v1679
      %v1684 = vmul.f32 %v1682, %v1680
      %v1685 = vadd.f32 %v1179, %v1683
      %v1686 = vadd.f32 %v1180, %v1684
      %v1687 = vadd.f32 %v1177, %v1681
      %v1688 = vadd.f32 %v1178, %v1682
      %v1690 = vsel %vm352, %v326, 0
      %v1693 = vsel %vm352, %v327, 0
      %1695 = vmatprep.subr.mxu0 0.0
      %1696 = vmatpush1.msra.mxu0 %v348
      %1697 = vmatprep.subr.mxu0 0.0
      %1698 = vmatpush1.msra.mxu0 %v349
      %1699 = vmatprep.subr.mxu0 0.0
      %1700 = vmatpush1.msra.mxu0 0.0
      %1701 = vmatprep.subr.mxu0 0.0
      %1702 = vmatpush1.msra.mxu0 0.0
      %1703 = vmatprep.subr.mxu0 0.0
      %1704 = vmatpush1.msra.mxu0 0.0
      %1705 = vmatprep.subr.mxu0 0.0
      %1706 = vmatpush1.msra.mxu0 0.0
      %1707 = vmatprep.subr.mxu0 0.0
      %1708 = vmatpush1.msra.mxu0 0.0
      %1709 = vmatprep.subr.mxu0 0.0
      %1710 = vmatpush1.msra.mxu0 0.0
      %1711 = vmatprep.subr.mxu0 0.0
      %1712 = vmatpush1.msra.mxu0 0.0
      %1713 = vmatprep.subr.mxu0 0.0
      %1714 = vmatpush1.msra.mxu0 0.0
      %1715 = vmatprep.subr.mxu0 0.0
      %1716 = vmatpush1.msra.mxu0 0.0
      %1717 = vmatprep.subr.mxu0 0.0
      %1718 = vmatpush1.msra.mxu0 0.0
      %1719 = vmatprep.subr.mxu0 0.0
      %1720 = vmatpush1.msra.mxu0 0.0
      %1721 = vmatprep.subr.mxu0 0.0
      %1722 = vmatpush1.msra.mxu0 0.0
      %1723 = vmatprep.subr.mxu0 0.0
      %1724 = vmatpush1.msra.mxu0 0.0
      %1725 = vmatprep.subr.mxu0 0.0
      %1726 = vmatpush1.msra.mxu0 0.0
      %1727 = vmatprep.subr.mxu0 0.0
      %1728 = vmatpush1.msra.mxu0 0.0
      %1729 = vmatprep.subr.mxu0 0.0
      %1730 = vmatpush1.msra.mxu0 0.0
      %1731 = vmatprep.subr.mxu0 0.0
      %1732 = vmatpush1.msra.mxu0 0.0
      %1733 = vmatprep.subr.mxu0 0.0
      %1734 = vmatpush1.msra.mxu0 0.0
      %1735 = vmatprep.subr.mxu0 0.0
      %1736 = vmatpush1.msra.mxu0 0.0
      %1737 = vmatprep.subr.mxu0 0.0
      %1738 = vmatpush1.msra.mxu0 0.0
      %1739 = vmatprep.subr.mxu0 0.0
      %1740 = vmatpush1.msra.mxu0 0.0
      %1741 = vmatprep.subr.mxu0 0.0
      %1742 = vmatpush1.msra.mxu0 0.0
      %1743 = vmatprep.subr.mxu0 0.0
      %1744 = vmatpush1.msra.mxu0 0.0
      %1745 = vmatprep.subr.mxu0 0.0
      %1746 = vmatpush1.msra.mxu0 0.0
      %1747 = vmatprep.subr.mxu0 0.0
      %1748 = vmatpush1.msra.mxu0 0.0
      %1749 = vmatprep.subr.mxu0 0.0
      %1750 = vmatpush1.msra.mxu0 0.0
      %1751 = vmatprep.subr.mxu0 0.0
      %1752 = vmatpush1.msra.mxu0 0.0
      %1753 = vmatprep.subr.mxu0 0.0
      %1754 = vmatpush1.msra.mxu0 0.0
      %1755 = vmatprep.subr.mxu0 0.0
      %1756 = vmatpush1.msra.mxu0 0.0
      %1757 = vmatprep.subr.mxu0 0.0
      %1758 = vmatpush1.msra.mxu0 0.0
      %1759 = vmatprep.mubr.f32.mxu0 0.0
      %1760 = vmatmul.mubr.f32.gmra.mrb[0].mxu0 %v1690
      %v1761 = vpop.f32.mrb[0].mxu0
      %v1762 = vadd.f32 0.0, %v1761
      %v1763 = vpop.f32.mrb[0].mxu0
      %1764 = vmatprep.mubr.f32.mxu0 0.0
      %1765 = vmatmul.mubr.f32.gmra.mrb[0].mxu0 %v1693
      %v1766 = vpop.f32.mrb[0].mxu0
      %v1767 = vadd.f32 0.0, %v1766
      %v1768 = vpop.f32.mrb[0].mxu0
      %1769 = vdwg.mxu0
      %1770 = vmatprep.subr.mxu0 0.0
      %1771 = vmatpush1.msra.mxu0 %v1762
      %1772 = vmatprep.subr.mxu0 0.0
      %1773 = vmatpush1.msra.mxu0 %v1767
      %1774 = vmatprep.subr.mxu0 0.0
      %1775 = vmatpush1.msra.mxu0 0.0
      %1776 = vmatprep.subr.mxu0 0.0
      %1777 = vmatpush1.msra.mxu0 0.0
      %1778 = vmatprep.subr.mxu0 0.0
      %1779 = vmatpush1.msra.mxu0 0.0
      %1780 = vmatprep.subr.mxu0 0.0
      %1781 = vmatpush1.msra.mxu0 0.0
      %1782 = vmatprep.subr.mxu0 0.0
      %1783 = vmatpush1.msra.mxu0 0.0
      %1784 = vmatprep.subr.mxu0 0.0
      %1785 = vmatpush1.msra.mxu0 0.0
      %1786 = vmatprep.subr.mxu0 0.0
      %1787 = vmatpush1.msra.mxu0 0.0
      %1788 = vmatprep.subr.mxu0 0.0
      %1789 = vmatpush1.msra.mxu0 0.0
      %1790 = vmatprep.subr.mxu0 0.0
      %1791 = vmatpush1.msra.mxu0 0.0
      %1792 = vmatprep.subr.mxu0 0.0
      %1793 = vmatpush1.msra.mxu0 0.0
      %1794 = vmatprep.subr.mxu0 0.0
      %1795 = vmatpush1.msra.mxu0 0.0
      %1796 = vmatprep.subr.mxu0 0.0
      %1797 = vmatpush1.msra.mxu0 0.0
      %1798 = vmatprep.subr.mxu0 0.0
      %1799 = vmatpush1.msra.mxu0 0.0
      %1800 = vmatprep.subr.mxu0 0.0
      %1801 = vmatpush1.msra.mxu0 0.0
      %1802 = vmatprep.subr.mxu0 0.0
      %1803 = vmatpush1.msra.mxu0 0.0
      %1804 = vmatprep.subr.mxu0 0.0
      %1805 = vmatpush1.msra.mxu0 0.0
      %1806 = vmatprep.subr.mxu0 0.0
      %1807 = vmatpush1.msra.mxu0 0.0
      %1808 = vmatprep.subr.mxu0 0.0
      %1809 = vmatpush1.msra.mxu0 0.0
      %1810 = vmatprep.subr.mxu0 0.0
      %1811 = vmatpush1.msra.mxu0 0.0
      %1812 = vmatprep.subr.mxu0 0.0
      %1813 = vmatpush1.msra.mxu0 0.0
      %1814 = vmatprep.subr.mxu0 0.0
      %1815 = vmatpush1.msra.mxu0 0.0
      %1816 = vmatprep.subr.mxu0 0.0
      %1817 = vmatpush1.msra.mxu0 0.0
      %1818 = vmatprep.subr.mxu0 0.0
      %1819 = vmatpush1.msra.mxu0 0.0
      %1820 = vmatprep.subr.mxu0 0.0
      %1821 = vmatpush1.msra.mxu0 0.0
      %1822 = vmatprep.subr.mxu0 0.0
      %1823 = vmatpush1.msra.mxu0 0.0
      %1824 = vmatprep.subr.mxu0 0.0
      %1825 = vmatpush1.msra.mxu0 0.0
      %1826 = vmatprep.subr.mxu0 0.0
      %1827 = vmatpush1.msra.mxu0 0.0
      %1828 = vmatprep.subr.mxu0 0.0
      %1829 = vmatpush1.msra.mxu0 0.0
      %1830 = vmatprep.subr.mxu0 0.0
      %1831 = vmatpush1.msra.mxu0 0.0
      %1832 = vmatprep.subr.mxu0 0.0
      %1833 = vmatpush1.msra.mxu0 0.0
      %1834 = vmatprep.mubr.f32.mxu0 0.0
      %1835 = vmatmul.mubr.f32.gmra.mrb[0].mxu0 %v435
      %v1836 = vpop.f32.mrb[0].mxu0
      %v1837 = vadd.f32 0.0, %v1836
      %v1838 = vpop.f32.mrb[0].mxu0
      %1839 = vmatprep.mubr.f32.mxu0 0.0
      %1840 = vmatmul.mubr.f32.gmra.mrb[0].mxu0 %v438
      %v1841 = vpop.f32.mrb[0].mxu0
      %v1842 = vadd.f32 0.0, %v1841
      %v1843 = vpop.f32.mrb[0].mxu0
      %1844 = vdwg.mxu0
      %v1846 = vsel %vm352, %v344, 0
      %v1849 = vsel %vm352, %v345, 0
      %1851 = vmatprep.subr.mxu0 0.0
      %1852 = vmatpush1.msra.mxu0 %v348
      %1853 = vmatprep.subr.mxu0 0.0
      %1854 = vmatpush1.msra.mxu0 %v349
      %1855 = vmatprep.subr.mxu0 0.0
      %1856 = vmatpush1.msra.mxu0 0.0
      %1857 = vmatprep.subr.mxu0 0.0
      %1858 = vmatpush1.msra.mxu0 0.0
      %1859 = vmatprep.subr.mxu0 0.0
      %1860 = vmatpush1.msra.mxu0 0.0
      %1861 = vmatprep.subr.mxu0 0.0
      %1862 = vmatpush1.msra.mxu0 0.0
      %1863 = vmatprep.subr.mxu0 0.0
      %1864 = vmatpush1.msra.mxu0 0.0
      %1865 = vmatprep.subr.mxu0 0.0
      %1866 = vmatpush1.msra.mxu0 0.0
      %1867 = vmatprep.subr.mxu0 0.0
      %1868 = vmatpush1.msra.mxu0 0.0
      %1869 = vmatprep.subr.mxu0 0.0
      %1870 = vmatpush1.msra.mxu0 0.0
      %1871 = vmatprep.subr.mxu0 0.0
      %1872 = vmatpush1.msra.mxu0 0.0
      %1873 = vmatprep.subr.mxu0 0.0
      %1874 = vmatpush1.msra.mxu0 0.0
      %1875 = vmatprep.subr.mxu0 0.0
      %1876 = vmatpush1.msra.mxu0 0.0
      %1877 = vmatprep.subr.mxu0 0.0
      %1878 = vmatpush1.msra.mxu0 0.0
      %1879 = vmatprep.subr.mxu0 0.0
      %1880 = vmatpush1.msra.mxu0 0.0
      %1881 = vmatprep.subr.mxu0 0.0
      %1882 = vmatpush1.msra.mxu0 0.0
      %1883 = vmatprep.subr.mxu0 0.0
      %1884 = vmatpush1.msra.mxu0 0.0
      %1885 = vmatprep.subr.mxu0 0.0
      %1886 = vmatpush1.msra.mxu0 0.0
      %1887 = vmatprep.subr.mxu0 0.0
      %1888 = vmatpush1.msra.mxu0 0.0
      %1889 = vmatprep.subr.mxu0 0.0
      %1890 = vmatpush1.msra.mxu0 0.0
      %1891 = vmatprep.subr.mxu0 0.0
      %1892 = vmatpush1.msra.mxu0 0.0
      %1893 = vmatprep.subr.mxu0 0.0
      %1894 = vmatpush1.msra.mxu0 0.0
      %1895 = vmatprep.subr.mxu0 0.0
      %1896 = vmatpush1.msra.mxu0 0.0
      %1897 = vmatprep.subr.mxu0 0.0
      %1898 = vmatpush1.msra.mxu0 0.0
      %1899 = vmatprep.subr.mxu0 0.0
      %1900 = vmatpush1.msra.mxu0 0.0
      %1901 = vmatprep.subr.mxu0 0.0
      %1902 = vmatpush1.msra.mxu0 0.0
      %1903 = vmatprep.subr.mxu0 0.0
      %1904 = vmatpush1.msra.mxu0 0.0
      %1905 = vmatprep.subr.mxu0 0.0
      %1906 = vmatpush1.msra.mxu0 0.0
      %1907 = vmatprep.subr.mxu0 0.0
      %1908 = vmatpush1.msra.mxu0 0.0
      %1909 = vmatprep.subr.mxu0 0.0
      %1910 = vmatpush1.msra.mxu0 0.0
      %1911 = vmatprep.subr.mxu0 0.0
      %1912 = vmatpush1.msra.mxu0 0.0
      %1913 = vmatprep.subr.mxu0 0.0
      %1914 = vmatpush1.msra.mxu0 0.0
      %1915 = vmatprep.mubr.f32.mxu0 0.0
      %1916 = vmatmul.mubr.f32.gmra.mrb[0].mxu0 %v1846
      %v1917 = vpop.f32.mrb[0].mxu0
      %v1918 = vadd.f32 0.0, %v1917
      %v1919 = vpop.f32.mrb[0].mxu0
      %1920 = vmatprep.mubr.f32.mxu0 0.0
      %1921 = vmatmul.mubr.f32.gmra.mrb[0].mxu0 %v1849
      %v1922 = vpop.f32.mrb[0].mxu0
      %v1923 = vadd.f32 0.0, %v1922
      %v1924 = vpop.f32.mrb[0].mxu0
      %1925 = vdwg.mxu0
      %1926 = vmatprep.subr.mxu0 0.0
      %1927 = vmatpush1.msra.mxu0 %v1918
      %1928 = vmatprep.subr.mxu0 0.0
      %1929 = vmatpush1.msra.mxu0 %v1923
      %1930 = vmatprep.subr.mxu0 0.0
      %1931 = vmatpush1.msra.mxu0 0.0
      %1932 = vmatprep.subr.mxu0 0.0
      %1933 = vmatpush1.msra.mxu0 0.0
      %1934 = vmatprep.subr.mxu0 0.0
      %1935 = vmatpush1.msra.mxu0 0.0
      %1936 = vmatprep.subr.mxu0 0.0
      %1937 = vmatpush1.msra.mxu0 0.0
      %1938 = vmatprep.subr.mxu0 0.0
      %1939 = vmatpush1.msra.mxu0 0.0
      %1940 = vmatprep.subr.mxu0 0.0
      %1941 = vmatpush1.msra.mxu0 0.0
      %1942 = vmatprep.subr.mxu0 0.0
      %1943 = vmatpush1.msra.mxu0 0.0
      %1944 = vmatprep.subr.mxu0 0.0
      %1945 = vmatpush1.msra.mxu0 0.0
      %1946 = vmatprep.subr.mxu0 0.0
      %1947 = vmatpush1.msra.mxu0 0.0
      %1948 = vmatprep.subr.mxu0 0.0
      %1949 = vmatpush1.msra.mxu0 0.0
      %1950 = vmatprep.subr.mxu0 0.0
      %1951 = vmatpush1.msra.mxu0 0.0
      %1952 = vmatprep.subr.mxu0 0.0
      %1953 = vmatpush1.msra.mxu0 0.0
      %1954 = vmatprep.subr.mxu0 0.0
      %1955 = vmatpush1.msra.mxu0 0.0
      %1956 = vmatprep.subr.mxu0 0.0
      %1957 = vmatpush1.msra.mxu0 0.0
      %1958 = vmatprep.subr.mxu0 0.0
      %1959 = vmatpush1.msra.mxu0 0.0
      %1960 = vmatprep.subr.mxu0 0.0
      %1961 = vmatpush1.msra.mxu0 0.0
      %1962 = vmatprep.subr.mxu0 0.0
      %1963 = vmatpush1.msra.mxu0 0.0
      %1964 = vmatprep.subr.mxu0 0.0
      %1965 = vmatpush1.msra.mxu0 0.0
      %1966 = vmatprep.subr.mxu0 0.0
      %1967 = vmatpush1.msra.mxu0 0.0
      %1968 = vmatprep.subr.mxu0 0.0
      %1969 = vmatpush1.msra.mxu0 0.0
      %1970 = vmatprep.subr.mxu0 0.0
      %1971 = vmatpush1.msra.mxu0 0.0
      %1972 = vmatprep.subr.mxu0 0.0
      %1973 = vmatpush1.msra.mxu0 0.0
      %1974 = vmatprep.subr.mxu0 0.0
      %1975 = vmatpush1.msra.mxu0 0.0
      %1976 = vmatprep.subr.mxu0 0.0
      %1977 = vmatpush1.msra.mxu0 0.0
      %1978 = vmatprep.subr.mxu0 0.0
      %1979 = vmatpush1.msra.mxu0 0.0
      %1980 = vmatprep.subr.mxu0 0.0
      %1981 = vmatpush1.msra.mxu0 0.0
      %1982 = vmatprep.subr.mxu0 0.0
      %1983 = vmatpush1.msra.mxu0 0.0
      %1984 = vmatprep.subr.mxu0 0.0
      %1985 = vmatpush1.msra.mxu0 0.0
      %1986 = vmatprep.subr.mxu0 0.0
      %1987 = vmatpush1.msra.mxu0 0.0
      %1988 = vmatprep.subr.mxu0 0.0
      %1989 = vmatpush1.msra.mxu0 0.0
      %1990 = vmatprep.mubr.f32.mxu0 0.0
      %1991 = vmatmul.mubr.f32.gmra.mrb[0].mxu0 %v435
      %v1992 = vpop.f32.mrb[0].mxu0
      %v1993 = vadd.f32 0.0, %v1992
      %v1994 = vpop.f32.mrb[0].mxu0
      %1995 = vmatprep.mubr.f32.mxu0 0.0
      %1996 = vmatmul.mubr.f32.gmra.mrb[0].mxu0 %v438
      %v1997 = vpop.f32.mrb[0].mxu0
      %v1998 = vadd.f32 0.0, %v1997
      %v1999 = vpop.f32.mrb[0].mxu0
      %2000 = vdwg.mxu0
      %v2001 = vmul.f32 %v1837, %v1837
      %v2002 = vmul.f32 %v1842, %v1842
      %v2003 = vsub.f32 %v1993, %v2001
      %v2004 = vsub.f32 %v1998, %v2002
      %v2006 = vsel %vm352, %v346, 0
      %v2009 = vsel %vm352, %v347, 0
      %2011 = vmatprep.subr.mxu0 0.0
      %2012 = vmatpush1.msra.mxu0 %v348
      %2013 = vmatprep.subr.mxu0 0.0
      %2014 = vmatpush1.msra.mxu0 %v349
      %2015 = vmatprep.subr.mxu0 0.0
      %2016 = vmatpush1.msra.mxu0 0.0
      %2017 = vmatprep.subr.mxu0 0.0
      %2018 = vmatpush1.msra.mxu0 0.0
      %2019 = vmatprep.subr.mxu0 0.0
      %2020 = vmatpush1.msra.mxu0 0.0
      %2021 = vmatprep.subr.mxu0 0.0
      %2022 = vmatpush1.msra.mxu0 0.0
      %2023 = vmatprep.subr.mxu0 0.0
      %2024 = vmatpush1.msra.mxu0 0.0
      %2025 = vmatprep.subr.mxu0 0.0
      %2026 = vmatpush1.msra.mxu0 0.0
      %2027 = vmatprep.subr.mxu0 0.0
      %2028 = vmatpush1.msra.mxu0 0.0
      %2029 = vmatprep.subr.mxu0 0.0
      %2030 = vmatpush1.msra.mxu0 0.0
      %2031 = vmatprep.subr.mxu0 0.0
      %2032 = vmatpush1.msra.mxu0 0.0
      %2033 = vmatprep.subr.mxu0 0.0
      %2034 = vmatpush1.msra.mxu0 0.0
      %2035 = vmatprep.subr.mxu0 0.0
      %2036 = vmatpush1.msra.mxu0 0.0
      %2037 = vmatprep.subr.mxu0 0.0
      %2038 = vmatpush1.msra.mxu0 0.0
      %2039 = vmatprep.subr.mxu0 0.0
      %2040 = vmatpush1.msra.mxu0 0.0
      %2041 = vmatprep.subr.mxu0 0.0
      %2042 = vmatpush1.msra.mxu0 0.0
      %2043 = vmatprep.subr.mxu0 0.0
      %2044 = vmatpush1.msra.mxu0 0.0
      %2045 = vmatprep.subr.mxu0 0.0
      %2046 = vmatpush1.msra.mxu0 0.0
      %2047 = vmatprep.subr.mxu0 0.0
      %2048 = vmatpush1.msra.mxu0 0.0
      %2049 = vmatprep.subr.mxu0 0.0
      %2050 = vmatpush1.msra.mxu0 0.0
      %2051 = vmatprep.subr.mxu0 0.0
      %2052 = vmatpush1.msra.mxu0 0.0
      %2053 = vmatprep.subr.mxu0 0.0
      %2054 = vmatpush1.msra.mxu0 0.0
      %2055 = vmatprep.subr.mxu0 0.0
      %2056 = vmatpush1.msra.mxu0 0.0
      %2057 = vmatprep.subr.mxu0 0.0
      %2058 = vmatpush1.msra.mxu0 0.0
      %2059 = vmatprep.subr.mxu0 0.0
      %2060 = vmatpush1.msra.mxu0 0.0
      %2061 = vmatprep.subr.mxu0 0.0
      %2062 = vmatpush1.msra.mxu0 0.0
      %2063 = vmatprep.subr.mxu0 0.0
      %2064 = vmatpush1.msra.mxu0 0.0
      %2065 = vmatprep.subr.mxu0 0.0
      %2066 = vmatpush1.msra.mxu0 0.0
      %2067 = vmatprep.subr.mxu0 0.0
      %2068 = vmatpush1.msra.mxu0 0.0
      %2069 = vmatprep.subr.mxu0 0.0
      %2070 = vmatpush1.msra.mxu0 0.0
      %2071 = vmatprep.subr.mxu0 0.0
      %2072 = vmatpush1.msra.mxu0 0.0
      %2073 = vmatprep.subr.mxu0 0.0
      %2074 = vmatpush1.msra.mxu0 0.0
      %2075 = vmatprep.mubr.f32.mxu0 0.0
      %2076 = vmatmul.mubr.f32.gmra.mrb[0].mxu0 %v2006
      %v2077 = vpop.f32.mrb[0].mxu0
      %v2078 = vadd.f32 0.0, %v2077
      %v2079 = vpop.f32.mrb[0].mxu0
      %2080 = vmatprep.mubr.f32.mxu0 0.0
      %2081 = vmatmul.mubr.f32.gmra.mrb[0].mxu0 %v2009
      %v2082 = vpop.f32.mrb[0].mxu0
      %v2083 = vadd.f32 0.0, %v2082
      %v2084 = vpop.f32.mrb[0].mxu0
      %2085 = vdwg.mxu0
      %2086 = vmatprep.subr.mxu0 0.0
      %2087 = vmatpush1.msra.mxu0 %v2078
      %2088 = vmatprep.subr.mxu0 0.0
      %2089 = vmatpush1.msra.mxu0 %v2083
      %2090 = vmatprep.subr.mxu0 0.0
      %2091 = vmatpush1.msra.mxu0 0.0
      %2092 = vmatprep.subr.mxu0 0.0
      %2093 = vmatpush1.msra.mxu0 0.0
      %2094 = vmatprep.subr.mxu0 0.0
      %2095 = vmatpush1.msra.mxu0 0.0
      %2096 = vmatprep.subr.mxu0 0.0
      %2097 = vmatpush1.msra.mxu0 0.0
      %2098 = vmatprep.subr.mxu0 0.0
      %2099 = vmatpush1.msra.mxu0 0.0
      %2100 = vmatprep.subr.mxu0 0.0
      %2101 = vmatpush1.msra.mxu0 0.0
      %2102 = vmatprep.subr.mxu0 0.0
      %2103 = vmatpush1.msra.mxu0 0.0
      %2104 = vmatprep.subr.mxu0 0.0
      %2105 = vmatpush1.msra.mxu0 0.0
      %2106 = vmatprep.subr.mxu0 0.0
      %2107 = vmatpush1.msra.mxu0 0.0
      %2108 = vmatprep.subr.mxu0 0.0
      %2109 = vmatpush1.msra.mxu0 0.0
      %2110 = vmatprep.subr.mxu0 0.0
      %2111 = vmatpush1.msra.mxu0 0.0
      %2112 = vmatprep.subr.mxu0 0.0
      %2113 = vmatpush1.msra.mxu0 0.0
      %2114 = vmatprep.subr.mxu0 0.0
      %2115 = vmatpush1.msra.mxu0 0.0
      %2116 = vmatprep.subr.mxu0 0.0
      %2117 = vmatpush1.msra.mxu0 0.0
      %2118 = vmatprep.subr.mxu0 0.0
      %2119 = vmatpush1.msra.mxu0 0.0
      %2120 = vmatprep.subr.mxu0 0.0
      %2121 = vmatpush1.msra.mxu0 0.0
      %2122 = vmatprep.subr.mxu0 0.0
      %2123 = vmatpush1.msra.mxu0 0.0
      %2124 = vmatprep.subr.mxu0 0.0
      %2125 = vmatpush1.msra.mxu0 0.0
      %2126 = vmatprep.subr.mxu0 0.0
      %2127 = vmatpush1.msra.mxu0 0.0
      %2128 = vmatprep.subr.mxu0 0.0
      %2129 = vmatpush1.msra.mxu0 0.0
      %2130 = vmatprep.subr.mxu0 0.0
      %2131 = vmatpush1.msra.mxu0 0.0
      %2132 = vmatprep.subr.mxu0 0.0
      %2133 = vmatpush1.msra.mxu0 0.0
      %2134 = vmatprep.subr.mxu0 0.0
      %2135 = vmatpush1.msra.mxu0 0.0
      %2136 = vmatprep.subr.mxu0 0.0
      %2137 = vmatpush1.msra.mxu0 0.0
      %2138 = vmatprep.subr.mxu0 0.0
      %2139 = vmatpush1.msra.mxu0 0.0
      %2140 = vmatprep.subr.mxu0 0.0
      %2141 = vmatpush1.msra.mxu0 0.0
      %2142 = vmatprep.subr.mxu0 0.0
      %2143 = vmatpush1.msra.mxu0 0.0
      %2144 = vmatprep.subr.mxu0 0.0
      %2145 = vmatpush1.msra.mxu0 0.0
      %2146 = vmatprep.subr.mxu0 0.0
      %2147 = vmatpush1.msra.mxu0 0.0
      %2148 = vmatprep.subr.mxu0 0.0
      %2149 = vmatpush1.msra.mxu0 0.0
      %2150 = vmatprep.mubr.f32.mxu0 0.0
      %2151 = vmatmul.mubr.f32.gmra.mrb[0].mxu0 %v435
      %v2152 = vpop.f32.mrb[0].mxu0
      %v2153 = vadd.f32 0.0, %v2152
      %v2154 = vpop.f32.mrb[0].mxu0
      %2155 = vmatprep.mubr.f32.mxu0 0.0
      %2156 = vmatmul.mubr.f32.gmra.mrb[0].mxu0 %v438
      %v2157 = vpop.f32.mrb[0].mxu0
      %v2158 = vadd.f32 0.0, %v2157
      %v2159 = vpop.f32.mrb[0].mxu0
      %2160 = vdwg.mxu0
      %v2161 = vmul.f32 %v1837, %v507
      %v2162 = vmul.f32 %v1842, %v512
      %v2163 = vsub.f32 %v2153, %v2161
      %v2164 = vsub.f32 %v2158, %v2162
      %v2165 = vmul.f32 %v1837, 2.0
      %v2166 = vmul.f32 %v1842, 2.0
      %v2167 = vmul.f32 %v2165, %v507
      %v2168 = vmul.f32 %v2166, %v512
      %v2169 = vadd.f32 %v2167, 0.0001
      %v2170 = vadd.f32 %v2168, 0.0001
      %v2171 = vmul.f32 %v2163, 2.0
      %v2172 = vmul.f32 %v2164, 2.0
      %v2173 = vadd.f32 %v2171, 0.0009
      %v2174 = vadd.f32 %v2172, 0.0009
      %v2175 = vmul.f32 %v2169, %v2173
      %v2176 = vmul.f32 %v2170, %v2174
      %v2177 = vadd.f32 %v2001, %v515
      %v2178 = vadd.f32 %v2002, %v516
      %v2179 = vadd.f32 %v2177, 0.0001
      %v2180 = vadd.f32 %v2178, 0.0001
      %v2181 = vadd.f32 %v2003, %v675
      %v2182 = vadd.f32 %v2004, %v676
      %v2183 = vmul.f32 %v2179, %v2181
      %v2184 = vmul.f32 %v2180, %v2182
      %v2185 = vrcp.pop %v2183
      %v2186 = vrcp.pop %v2184
      %v2187 = vmul.f32 %v2175, %v2185
      %v2188 = vmul.f32 %v2176, %v2186
      %v2189 = vmax.f32 %v2003, 0.0001
      %v2190 = vmax.f32 %v2004, 0.0001
      %v2191 = vmul.f32 %v2189, %v2187
      %v2192 = vmul.f32 %v2190, %v2188
      %v2193 = vadd.f32 %v1685, %v2191
      %v2194 = vadd.f32 %v1686, %v2192
      %v2195 = vadd.f32 %v1687, %v2189
      %v2196 = vadd.f32 %v1688, %v2190
      %v2197 = vadd.f32 %v2195, 1e-07
      %v2198 = vadd.f32 %v2196, 1e-07
      %v2199 = vrcp.pop %v2197
      %v2200 = vrcp.pop %v2198
      %v2201 = vmul.f32 %v2193, %v2199
      %v2202 = vmul.f32 %v2194, %v2200
      %v2203 = vsel %vm352, %v2201, 0.0
      %v2204 = vsel %vm352, %v2202, 0.0
      %v2205 = vadd.f32 %v2203, %v2204
      %2206 = vadd.xlane.f32.xlu0 %v2205
      %v2207 = vpop.xlane.xlu0 %2206
      %v2208 = vrot.slane %v2207, 4
      %v2209 = vadd.f32 %v2207, %v2208
      %v2210 = vrot.slane %v2209, 2
      %v2211 = vadd.f32 %v2209, %v2210
      %v2212 = vrot.slane %v2211, 1
      %v2213 = vadd.f32 %v2211, %v2212
      %s2214 = vtos %v2213
      %s2215 = sadd.f32 %s2214, 0.0
      %s2216 = scalar_lea.vmem %s0, 16
      %v2217 = vld [vmem:[%s2216] sm:$0xff]
      %v2218 = vld [vmem:[%s2216 + $0x8] sm:$0xff]
      %s2219 = scalar_lea.vmem %s1, 16
      %v2220 = vld [vmem:[%s2219] sm:$0xff]
      %v2221 = vld [vmem:[%s2219 + $0x8] sm:$0xff]
      %2222 = vmatprep.subr.mxu0 0.0
      %2223 = vmatpush1.msra.mxu0 %v2217
      %2224 = vmatprep.subr.mxu0 0.0
      %2225 = vmatpush1.msra.mxu0 %v2218
      %2226 = vmatprep.subr.mxu0 0.0
      %2227 = vmatpush1.msra.mxu0 0.0
      %2228 = vmatprep.subr.mxu0 0.0
      %2229 = vmatpush1.msra.mxu0 0.0
      %2230 = vmatprep.subr.mxu0 0.0
      %2231 = vmatpush1.msra.mxu0 0.0
      %2232 = vmatprep.subr.mxu0 0.0
      %2233 = vmatpush1.msra.mxu0 0.0
      %2234 = vmatprep.subr.mxu0 0.0
      %2235 = vmatpush1.msra.mxu0 0.0
      %2236 = vmatprep.subr.mxu0 0.0
      %2237 = vmatpush1.msra.mxu0 0.0
      %2238 = vmatprep.subr.mxu0 0.0
      %2239 = vmatpush1.msra.mxu0 0.0
      %2240 = vmatprep.subr.mxu0 0.0
      %2241 = vmatpush1.msra.mxu0 0.0
      %2242 = vmatprep.subr.mxu0 0.0
      %2243 = vmatpush1.msra.mxu0 0.0
      %2244 = vmatprep.subr.mxu0 0.0
      %2245 = vmatpush1.msra.mxu0 0.0
      %2246 = vmatprep.subr.mxu0 0.0
      %2247 = vmatpush1.msra.mxu0 0.0
      %2248 = vmatprep.subr.mxu0 0.0
      %2249 = vmatpush1.msra.mxu0 0.0
      %2250 = vmatprep.subr.mxu0 0.0
      %2251 = vmatpush1.msra.mxu0 0.0
      %2252 = vmatprep.subr.mxu0 0.0
      %2253 = vmatpush1.msra.mxu0 0.0
      %2254 = vmatprep.subr.mxu0 0.0
      %2255 = vmatpush1.msra.mxu0 0.0
      %2256 = vmatprep.subr.mxu0 0.0
      %2257 = vmatpush1.msra.mxu0 0.0
      %2258 = vmatprep.subr.mxu0 0.0
      %2259 = vmatpush1.msra.mxu0 0.0
      %2260 = vmatprep.subr.mxu0 0.0
      %2261 = vmatpush1.msra.mxu0 0.0
      %2262 = vmatprep.subr.mxu0 0.0
      %2263 = vmatpush1.msra.mxu0 0.0
      %2264 = vmatprep.subr.mxu0 0.0
      %2265 = vmatpush1.msra.mxu0 0.0
      %2266 = vmatprep.subr.mxu0 0.0
      %2267 = vmatpush1.msra.mxu0 0.0
      %2268 = vmatprep.subr.mxu0 0.0
      %2269 = vmatpush1.msra.mxu0 0.0
      %2270 = vmatprep.subr.mxu0 0.0
      %2271 = vmatpush1.msra.mxu0 0.0
      %2272 = vmatprep.subr.mxu0 0.0
      %2273 = vmatpush1.msra.mxu0 0.0
      %2274 = vmatprep.subr.mxu0 0.0
      %2275 = vmatpush1.msra.mxu0 0.0
      %2276 = vmatprep.subr.mxu0 0.0
      %2277 = vmatpush1.msra.mxu0 0.0
      %2278 = vmatprep.subr.mxu0 0.0
      %2279 = vmatpush1.msra.mxu0 0.0
      %2280 = vmatprep.subr.mxu0 0.0
      %2281 = vmatpush1.msra.mxu0 0.0
      %2282 = vmatprep.subr.mxu0 0.0
      %2283 = vmatpush1.msra.mxu0 0.0
      %2284 = vmatprep.subr.mxu0 0.0
      %2285 = vmatpush1.msra.mxu0 0.0
      %2286 = vmatprep.mubr.f32.mxu0 0.0
      %2287 = vmatmul.mubr.f32.gmra.mrb[0].mxu0 %v354
      %v2288 = vpop.f32.mrb[0].mxu0
      %v2289 = vadd.f32 0.0, %v2288
      %v2290 = vpop.f32.mrb[0].mxu0
      %2291 = vmatprep.mubr.f32.mxu0 0.0
      %2292 = vmatmul.mubr.f32.gmra.mrb[0].mxu0 %v357
      %v2293 = vpop.f32.mrb[0].mxu0
      %v2294 = vadd.f32 0.0, %v2293
      %v2295 = vpop.f32.mrb[0].mxu0
      %2296 = vdwg.mxu0
      %v2298 = vsel %vm352, %v2220, 0
      %v2301 = vsel %vm352, %v2221, 0
      %2303 = vmatprep.subr.mxu0 0.0
      %2304 = vmatpush1.msra.mxu0 %v2289
      %2305 = vmatprep.subr.mxu0 0.0
      %2306 = vmatpush1.msra.mxu0 %v2294
      %2307 = vmatprep.subr.mxu0 0.0
      %2308 = vmatpush1.msra.mxu0 0.0
      %2309 = vmatprep.subr.mxu0 0.0
      %2310 = vmatpush1.msra.mxu0 0.0
      %2311 = vmatprep.subr.mxu0 0.0
      %2312 = vmatpush1.msra.mxu0 0.0
      %2313 = vmatprep.subr.mxu0 0.0
      %2314 = vmatpush1.msra.mxu0 0.0
      %2315 = vmatprep.subr.mxu0 0.0
      %2316 = vmatpush1.msra.mxu0 0.0
      %2317 = vmatprep.subr.mxu0 0.0
      %2318 = vmatpush1.msra.mxu0 0.0
      %2319 = vmatprep.subr.mxu0 0.0
      %2320 = vmatpush1.msra.mxu0 0.0
      %2321 = vmatprep.subr.mxu0 0.0
      %2322 = vmatpush1.msra.mxu0 0.0
      %2323 = vmatprep.subr.mxu0 0.0
      %2324 = vmatpush1.msra.mxu0 0.0
      %2325 = vmatprep.subr.mxu0 0.0
      %2326 = vmatpush1.msra.mxu0 0.0
      %2327 = vmatprep.subr.mxu0 0.0
      %2328 = vmatpush1.msra.mxu0 0.0
      %2329 = vmatprep.subr.mxu0 0.0
      %2330 = vmatpush1.msra.mxu0 0.0
      %2331 = vmatprep.subr.mxu0 0.0
      %2332 = vmatpush1.msra.mxu0 0.0
      %2333 = vmatprep.subr.mxu0 0.0
      %2334 = vmatpush1.msra.mxu0 0.0
      %2335 = vmatprep.subr.mxu0 0.0
      %2336 = vmatpush1.msra.mxu0 0.0
      %2337 = vmatprep.subr.mxu0 0.0
      %2338 = vmatpush1.msra.mxu0 0.0
      %2339 = vmatprep.subr.mxu0 0.0
      %2340 = vmatpush1.msra.mxu0 0.0
      %2341 = vmatprep.subr.mxu0 0.0
      %2342 = vmatpush1.msra.mxu0 0.0
      %2343 = vmatprep.subr.mxu0 0.0
      %2344 = vmatpush1.msra.mxu0 0.0
      %2345 = vmatprep.subr.mxu0 0.0
      %2346 = vmatpush1.msra.mxu0 0.0
      %2347 = vmatprep.subr.mxu0 0.0
      %2348 = vmatpush1.msra.mxu0 0.0
      %2349 = vmatprep.subr.mxu0 0.0
      %2350 = vmatpush1.msra.mxu0 0.0
      %2351 = vmatprep.subr.mxu0 0.0
      %2352 = vmatpush1.msra.mxu0 0.0
      %2353 = vmatprep.subr.mxu0 0.0
      %2354 = vmatpush1.msra.mxu0 0.0
      %2355 = vmatprep.subr.mxu0 0.0
      %2356 = vmatpush1.msra.mxu0 0.0
      %2357 = vmatprep.subr.mxu0 0.0
      %2358 = vmatpush1.msra.mxu0 0.0
      %2359 = vmatprep.subr.mxu0 0.0
      %2360 = vmatpush1.msra.mxu0 0.0
      %2361 = vmatprep.subr.mxu0 0.0
      %2362 = vmatpush1.msra.mxu0 0.0
      %2363 = vmatprep.subr.mxu0 0.0
      %2364 = vmatpush1.msra.mxu0 0.0
      %2365 = vmatprep.subr.mxu0 0.0
      %2366 = vmatpush1.msra.mxu0 0.0
      %2367 = vmatprep.mubr.f32.mxu0 0.0
      %2368 = vmatmul.mubr.f32.gmra.mrb[0].mxu0 %v2298
      %v2369 = vpop.f32.mrb[0].mxu0
      %v2370 = vadd.f32 0.0, %v2369
      %v2371 = vpop.f32.mrb[0].mxu0
      %2372 = vmatprep.mubr.f32.mxu0 0.0
      %2373 = vmatmul.mubr.f32.gmra.mrb[0].mxu0 %v2301
      %v2374 = vpop.f32.mrb[0].mxu0
      %v2375 = vadd.f32 0.0, %v2374
      %v2376 = vpop.f32.mrb[0].mxu0
      %2377 = vdwg.mxu0
      %v2378 = vmul.f32 %v2370, %v2370
      %v2379 = vmul.f32 %v2375, %v2375
      %2380 = vmatprep.subr.mxu0 0.0
      %2381 = vmatpush1.msra.mxu0 %v2217
      %2382 = vmatprep.subr.mxu0 0.0
      %2383 = vmatpush1.msra.mxu0 %v2218
      %2384 = vmatprep.subr.mxu0 0.0
      %2385 = vmatpush1.msra.mxu0 0.0
      %2386 = vmatprep.subr.mxu0 0.0
      %2387 = vmatpush1.msra.mxu0 0.0
      %2388 = vmatprep.subr.mxu0 0.0
      %2389 = vmatpush1.msra.mxu0 0.0
      %2390 = vmatprep.subr.mxu0 0.0
      %2391 = vmatpush1.msra.mxu0 0.0
      %2392 = vmatprep.subr.mxu0 0.0
      %2393 = vmatpush1.msra.mxu0 0.0
      %2394 = vmatprep.subr.mxu0 0.0
      %2395 = vmatpush1.msra.mxu0 0.0
      %2396 = vmatprep.subr.mxu0 0.0
      %2397 = vmatpush1.msra.mxu0 0.0
      %2398 = vmatprep.subr.mxu0 0.0
      %2399 = vmatpush1.msra.mxu0 0.0
      %2400 = vmatprep.subr.mxu0 0.0
      %2401 = vmatpush1.msra.mxu0 0.0
      %2402 = vmatprep.subr.mxu0 0.0
      %2403 = vmatpush1.msra.mxu0 0.0
      %2404 = vmatprep.subr.mxu0 0.0
      %2405 = vmatpush1.msra.mxu0 0.0
      %2406 = vmatprep.subr.mxu0 0.0
      %2407 = vmatpush1.msra.mxu0 0.0
      %2408 = vmatprep.subr.mxu0 0.0
      %2409 = vmatpush1.msra.mxu0 0.0
      %2410 = vmatprep.subr.mxu0 0.0
      %2411 = vmatpush1.msra.mxu0 0.0
      %2412 = vmatprep.subr.mxu0 0.0
      %2413 = vmatpush1.msra.mxu0 0.0
      %2414 = vmatprep.subr.mxu0 0.0
      %2415 = vmatpush1.msra.mxu0 0.0
      %2416 = vmatprep.subr.mxu0 0.0
      %2417 = vmatpush1.msra.mxu0 0.0
      %2418 = vmatprep.subr.mxu0 0.0
      %2419 = vmatpush1.msra.mxu0 0.0
      %2420 = vmatprep.subr.mxu0 0.0
      %2421 = vmatpush1.msra.mxu0 0.0
      %2422 = vmatprep.subr.mxu0 0.0
      %2423 = vmatpush1.msra.mxu0 0.0
      %2424 = vmatprep.subr.mxu0 0.0
      %2425 = vmatpush1.msra.mxu0 0.0
      %2426 = vmatprep.subr.mxu0 0.0
      %2427 = vmatpush1.msra.mxu0 0.0
      %2428 = vmatprep.subr.mxu0 0.0
      %2429 = vmatpush1.msra.mxu0 0.0
      %2430 = vmatprep.subr.mxu0 0.0
      %2431 = vmatpush1.msra.mxu0 0.0
      %2432 = vmatprep.subr.mxu0 0.0
      %2433 = vmatpush1.msra.mxu0 0.0
      %2434 = vmatprep.subr.mxu0 0.0
      %2435 = vmatpush1.msra.mxu0 0.0
      %2436 = vmatprep.subr.mxu0 0.0
      %2437 = vmatpush1.msra.mxu0 0.0
      %2438 = vmatprep.subr.mxu0 0.0
      %2439 = vmatpush1.msra.mxu0 0.0
      %2440 = vmatprep.subr.mxu0 0.0
      %2441 = vmatpush1.msra.mxu0 0.0
      %2442 = vmatprep.subr.mxu0 0.0
      %2443 = vmatpush1.msra.mxu0 0.0
      %2444 = vmatprep.mubr.f32.mxu0 0.0
      %2445 = vmatmul.mubr.f32.gmra.mrb[0].mxu0 %v518
      %v2446 = vpop.f32.mrb[0].mxu0
      %v2447 = vadd.f32 0.0, %v2446
      %v2448 = vpop.f32.mrb[0].mxu0
      %2449 = vmatprep.mubr.f32.mxu0 0.0
      %2450 = vmatmul.mubr.f32.gmra.mrb[0].mxu0 %v521
      %v2451 = vpop.f32.mrb[0].mxu0
      %v2452 = vadd.f32 0.0, %v2451
      %v2453 = vpop.f32.mrb[0].mxu0
      %2454 = vdwg.mxu0
      %2455 = vmatprep.subr.mxu0 0.0
      %2456 = vmatpush1.msra.mxu0 %v2447
      %2457 = vmatprep.subr.mxu0 0.0
      %2458 = vmatpush1.msra.mxu0 %v2452
      %2459 = vmatprep.subr.mxu0 0.0
      %2460 = vmatpush1.msra.mxu0 0.0
      %2461 = vmatprep.subr.mxu0 0.0
      %2462 = vmatpush1.msra.mxu0 0.0
      %2463 = vmatprep.subr.mxu0 0.0
      %2464 = vmatpush1.msra.mxu0 0.0
      %2465 = vmatprep.subr.mxu0 0.0
      %2466 = vmatpush1.msra.mxu0 0.0
      %2467 = vmatprep.subr.mxu0 0.0
      %2468 = vmatpush1.msra.mxu0 0.0
      %2469 = vmatprep.subr.mxu0 0.0
      %2470 = vmatpush1.msra.mxu0 0.0
      %2471 = vmatprep.subr.mxu0 0.0
      %2472 = vmatpush1.msra.mxu0 0.0
      %2473 = vmatprep.subr.mxu0 0.0
      %2474 = vmatpush1.msra.mxu0 0.0
      %2475 = vmatprep.subr.mxu0 0.0
      %2476 = vmatpush1.msra.mxu0 0.0
      %2477 = vmatprep.subr.mxu0 0.0
      %2478 = vmatpush1.msra.mxu0 0.0
      %2479 = vmatprep.subr.mxu0 0.0
      %2480 = vmatpush1.msra.mxu0 0.0
      %2481 = vmatprep.subr.mxu0 0.0
      %2482 = vmatpush1.msra.mxu0 0.0
      %2483 = vmatprep.subr.mxu0 0.0
      %2484 = vmatpush1.msra.mxu0 0.0
      %2485 = vmatprep.subr.mxu0 0.0
      %2486 = vmatpush1.msra.mxu0 0.0
      %2487 = vmatprep.subr.mxu0 0.0
      %2488 = vmatpush1.msra.mxu0 0.0
      %2489 = vmatprep.subr.mxu0 0.0
      %2490 = vmatpush1.msra.mxu0 0.0
      %2491 = vmatprep.subr.mxu0 0.0
      %2492 = vmatpush1.msra.mxu0 0.0
      %2493 = vmatprep.subr.mxu0 0.0
      %2494 = vmatpush1.msra.mxu0 0.0
      %2495 = vmatprep.subr.mxu0 0.0
      %2496 = vmatpush1.msra.mxu0 0.0
      %2497 = vmatprep.subr.mxu0 0.0
      %2498 = vmatpush1.msra.mxu0 0.0
      %2499 = vmatprep.subr.mxu0 0.0
      %2500 = vmatpush1.msra.mxu0 0.0
      %2501 = vmatprep.subr.mxu0 0.0
      %2502 = vmatpush1.msra.mxu0 0.0
      %2503 = vmatprep.subr.mxu0 0.0
      %2504 = vmatpush1.msra.mxu0 0.0
      %2505 = vmatprep.subr.mxu0 0.0
      %2506 = vmatpush1.msra.mxu0 0.0
      %2507 = vmatprep.subr.mxu0 0.0
      %2508 = vmatpush1.msra.mxu0 0.0
      %2509 = vmatprep.subr.mxu0 0.0
      %2510 = vmatpush1.msra.mxu0 0.0
      %2511 = vmatprep.subr.mxu0 0.0
      %2512 = vmatpush1.msra.mxu0 0.0
      %2513 = vmatprep.subr.mxu0 0.0
      %2514 = vmatpush1.msra.mxu0 0.0
      %2515 = vmatprep.subr.mxu0 0.0
      %2516 = vmatpush1.msra.mxu0 0.0
      %2517 = vmatprep.subr.mxu0 0.0
      %2518 = vmatpush1.msra.mxu0 0.0
      %2519 = vmatprep.mubr.f32.mxu0 0.0
      %2520 = vmatmul.mubr.f32.gmra.mrb[0].mxu0 %v2298
      %v2521 = vpop.f32.mrb[0].mxu0
      %v2522 = vadd.f32 0.0, %v2521
      %v2523 = vpop.f32.mrb[0].mxu0
      %2524 = vmatprep.mubr.f32.mxu0 0.0
      %2525 = vmatmul.mubr.f32.gmra.mrb[0].mxu0 %v2301
      %v2526 = vpop.f32.mrb[0].mxu0
      %v2527 = vadd.f32 0.0, %v2526
      %v2528 = vpop.f32.mrb[0].mxu0
      %2529 = vdwg.mxu0
      %v2530 = vsub.f32 %v2522, %v2378
      %v2531 = vsub.f32 %v2527, %v2379
      %v2532 = vadd.f32 %v2530, 0.0009
      %v2533 = vadd.f32 %v2531, 0.0009
      %2534 = vmatprep.subr.mxu0 0.0
      %2535 = vmatpush1.msra.mxu0 %v2217
      %2536 = vmatprep.subr.mxu0 0.0
      %2537 = vmatpush1.msra.mxu0 %v2218
      %2538 = vmatprep.subr.mxu0 0.0
      %2539 = vmatpush1.msra.mxu0 0.0
      %2540 = vmatprep.subr.mxu0 0.0
      %2541 = vmatpush1.msra.mxu0 0.0
      %2542 = vmatprep.subr.mxu0 0.0
      %2543 = vmatpush1.msra.mxu0 0.0
      %2544 = vmatprep.subr.mxu0 0.0
      %2545 = vmatpush1.msra.mxu0 0.0
      %2546 = vmatprep.subr.mxu0 0.0
      %2547 = vmatpush1.msra.mxu0 0.0
      %2548 = vmatprep.subr.mxu0 0.0
      %2549 = vmatpush1.msra.mxu0 0.0
      %2550 = vmatprep.subr.mxu0 0.0
      %2551 = vmatpush1.msra.mxu0 0.0
      %2552 = vmatprep.subr.mxu0 0.0
      %2553 = vmatpush1.msra.mxu0 0.0
      %2554 = vmatprep.subr.mxu0 0.0
      %2555 = vmatpush1.msra.mxu0 0.0
      %2556 = vmatprep.subr.mxu0 0.0
      %2557 = vmatpush1.msra.mxu0 0.0
      %2558 = vmatprep.subr.mxu0 0.0
      %2559 = vmatpush1.msra.mxu0 0.0
      %2560 = vmatprep.subr.mxu0 0.0
      %2561 = vmatpush1.msra.mxu0 0.0
      %2562 = vmatprep.subr.mxu0 0.0
      %2563 = vmatpush1.msra.mxu0 0.0
      %2564 = vmatprep.subr.mxu0 0.0
      %2565 = vmatpush1.msra.mxu0 0.0
      %2566 = vmatprep.subr.mxu0 0.0
      %2567 = vmatpush1.msra.mxu0 0.0
      %2568 = vmatprep.subr.mxu0 0.0
      %2569 = vmatpush1.msra.mxu0 0.0
      %2570 = vmatprep.subr.mxu0 0.0
      %2571 = vmatpush1.msra.mxu0 0.0
      %2572 = vmatprep.subr.mxu0 0.0
      %2573 = vmatpush1.msra.mxu0 0.0
      %2574 = vmatprep.subr.mxu0 0.0
      %2575 = vmatpush1.msra.mxu0 0.0
      %2576 = vmatprep.subr.mxu0 0.0
      %2577 = vmatpush1.msra.mxu0 0.0
      %2578 = vmatprep.subr.mxu0 0.0
      %2579 = vmatpush1.msra.mxu0 0.0
      %2580 = vmatprep.subr.mxu0 0.0
      %2581 = vmatpush1.msra.mxu0 0.0
      %2582 = vmatprep.subr.mxu0 0.0
      %2583 = vmatpush1.msra.mxu0 0.0
      %2584 = vmatprep.subr.mxu0 0.0
      %2585 = vmatpush1.msra.mxu0 0.0
      %2586 = vmatprep.subr.mxu0 0.0
      %2587 = vmatpush1.msra.mxu0 0.0
      %2588 = vmatprep.subr.mxu0 0.0
      %2589 = vmatpush1.msra.mxu0 0.0
      %2590 = vmatprep.subr.mxu0 0.0
      %2591 = vmatpush1.msra.mxu0 0.0
      %2592 = vmatprep.subr.mxu0 0.0
      %2593 = vmatpush1.msra.mxu0 0.0
      %2594 = vmatprep.subr.mxu0 0.0
      %2595 = vmatpush1.msra.mxu0 0.0
      %2596 = vmatprep.subr.mxu0 0.0
      %2597 = vmatpush1.msra.mxu0 0.0
      %2598 = vmatprep.mubr.f32.mxu0 0.0
      %2599 = vmatmul.mubr.f32.gmra.mrb[0].mxu0 %v678
      %v2600 = vpop.f32.mrb[0].mxu0
      %v2601 = vadd.f32 0.0, %v2600
      %v2602 = vpop.f32.mrb[0].mxu0
      %2603 = vmatprep.mubr.f32.mxu0 0.0
      %2604 = vmatmul.mubr.f32.gmra.mrb[0].mxu0 %v681
      %v2605 = vpop.f32.mrb[0].mxu0
      %v2606 = vadd.f32 0.0, %v2605
      %v2607 = vpop.f32.mrb[0].mxu0
      %2608 = vdwg.mxu0
      %2609 = vmatprep.subr.mxu0 0.0
      %2610 = vmatpush1.msra.mxu0 %v2601
      %2611 = vmatprep.subr.mxu0 0.0
      %2612 = vmatpush1.msra.mxu0 %v2606
      %2613 = vmatprep.subr.mxu0 0.0
      %2614 = vmatpush1.msra.mxu0 0.0
      %2615 = vmatprep.subr.mxu0 0.0
      %2616 = vmatpush1.msra.mxu0 0.0
      %2617 = vmatprep.subr.mxu0 0.0
      %2618 = vmatpush1.msra.mxu0 0.0
      %2619 = vmatprep.subr.mxu0 0.0
      %2620 = vmatpush1.msra.mxu0 0.0
      %2621 = vmatprep.subr.mxu0 0.0
      %2622 = vmatpush1.msra.mxu0 0.0
      %2623 = vmatprep.subr.mxu0 0.0
      %2624 = vmatpush1.msra.mxu0 0.0
      %2625 = vmatprep.subr.mxu0 0.0
      %2626 = vmatpush1.msra.mxu0 0.0
      %2627 = vmatprep.subr.mxu0 0.0
      %2628 = vmatpush1.msra.mxu0 0.0
      %2629 = vmatprep.subr.mxu0 0.0
      %2630 = vmatpush1.msra.mxu0 0.0
      %2631 = vmatprep.subr.mxu0 0.0
      %2632 = vmatpush1.msra.mxu0 0.0
      %2633 = vmatprep.subr.mxu0 0.0
      %2634 = vmatpush1.msra.mxu0 0.0
      %2635 = vmatprep.subr.mxu0 0.0
      %2636 = vmatpush1.msra.mxu0 0.0
      %2637 = vmatprep.subr.mxu0 0.0
      %2638 = vmatpush1.msra.mxu0 0.0
      %2639 = vmatprep.subr.mxu0 0.0
      %2640 = vmatpush1.msra.mxu0 0.0
      %2641 = vmatprep.subr.mxu0 0.0
      %2642 = vmatpush1.msra.mxu0 0.0
      %2643 = vmatprep.subr.mxu0 0.0
      %2644 = vmatpush1.msra.mxu0 0.0
      %2645 = vmatprep.subr.mxu0 0.0
      %2646 = vmatpush1.msra.mxu0 0.0
      %2647 = vmatprep.subr.mxu0 0.0
      %2648 = vmatpush1.msra.mxu0 0.0
      %2649 = vmatprep.subr.mxu0 0.0
      %2650 = vmatpush1.msra.mxu0 0.0
      %2651 = vmatprep.subr.mxu0 0.0
      %2652 = vmatpush1.msra.mxu0 0.0
      %2653 = vmatprep.subr.mxu0 0.0
      %2654 = vmatpush1.msra.mxu0 0.0
      %2655 = vmatprep.subr.mxu0 0.0
      %2656 = vmatpush1.msra.mxu0 0.0
      %2657 = vmatprep.subr.mxu0 0.0
      %2658 = vmatpush1.msra.mxu0 0.0
      %2659 = vmatprep.subr.mxu0 0.0
      %2660 = vmatpush1.msra.mxu0 0.0
      %2661 = vmatprep.subr.mxu0 0.0
      %2662 = vmatpush1.msra.mxu0 0.0
      %2663 = vmatprep.subr.mxu0 0.0
      %2664 = vmatpush1.msra.mxu0 0.0
      %2665 = vmatprep.subr.mxu0 0.0
      %2666 = vmatpush1.msra.mxu0 0.0
      %2667 = vmatprep.subr.mxu0 0.0
      %2668 = vmatpush1.msra.mxu0 0.0
      %2669 = vmatprep.subr.mxu0 0.0
      %2670 = vmatpush1.msra.mxu0 0.0
      %2671 = vmatprep.subr.mxu0 0.0
      %2672 = vmatpush1.msra.mxu0 0.0
      %2673 = vmatprep.mubr.f32.mxu0 0.0
      %2674 = vmatmul.mubr.f32.gmra.mrb[0].mxu0 %v2298
      %v2675 = vpop.f32.mrb[0].mxu0
      %v2676 = vadd.f32 0.0, %v2675
      %v2677 = vpop.f32.mrb[0].mxu0
      %2678 = vmatprep.mubr.f32.mxu0 0.0
      %2679 = vmatmul.mubr.f32.gmra.mrb[0].mxu0 %v2301
      %v2680 = vpop.f32.mrb[0].mxu0
      %v2681 = vadd.f32 0.0, %v2680
      %v2682 = vpop.f32.mrb[0].mxu0
      %2683 = vdwg.mxu0
      %2684 = vmatprep.subr.mxu0 0.0
      %2685 = vmatpush1.msra.mxu0 %v2217
      %2686 = vmatprep.subr.mxu0 0.0
      %2687 = vmatpush1.msra.mxu0 %v2218
      %2688 = vmatprep.subr.mxu0 0.0
      %2689 = vmatpush1.msra.mxu0 0.0
      %2690 = vmatprep.subr.mxu0 0.0
      %2691 = vmatpush1.msra.mxu0 0.0
      %2692 = vmatprep.subr.mxu0 0.0
      %2693 = vmatpush1.msra.mxu0 0.0
      %2694 = vmatprep.subr.mxu0 0.0
      %2695 = vmatpush1.msra.mxu0 0.0
      %2696 = vmatprep.subr.mxu0 0.0
      %2697 = vmatpush1.msra.mxu0 0.0
      %2698 = vmatprep.subr.mxu0 0.0
      %2699 = vmatpush1.msra.mxu0 0.0
      %2700 = vmatprep.subr.mxu0 0.0
      %2701 = vmatpush1.msra.mxu0 0.0
      %2702 = vmatprep.subr.mxu0 0.0
      %2703 = vmatpush1.msra.mxu0 0.0
      %2704 = vmatprep.subr.mxu0 0.0
      %2705 = vmatpush1.msra.mxu0 0.0
      %2706 = vmatprep.subr.mxu0 0.0
      %2707 = vmatpush1.msra.mxu0 0.0
      %2708 = vmatprep.subr.mxu0 0.0
      %2709 = vmatpush1.msra.mxu0 0.0
      %2710 = vmatprep.subr.mxu0 0.0
      %2711 = vmatpush1.msra.mxu0 0.0
      %2712 = vmatprep.subr.mxu0 0.0
      %2713 = vmatpush1.msra.mxu0 0.0
      %2714 = vmatprep.subr.mxu0 0.0
      %2715 = vmatpush1.msra.mxu0 0.0
      %2716 = vmatprep.subr.mxu0 0.0
      %2717 = vmatpush1.msra.mxu0 0.0
      %2718 = vmatprep.subr.mxu0 0.0
      %2719 = vmatpush1.msra.mxu0 0.0
      %2720 = vmatprep.subr.mxu0 0.0
      %2721 = vmatpush1.msra.mxu0 0.0
      %2722 = vmatprep.subr.mxu0 0.0
      %2723 = vmatpush1.msra.mxu0 0.0
      %2724 = vmatprep.subr.mxu0 0.0
      %2725 = vmatpush1.msra.mxu0 0.0
      %2726 = vmatprep.subr.mxu0 0.0
      %2727 = vmatpush1.msra.mxu0 0.0
      %2728 = vmatprep.subr.mxu0 0.0
      %2729 = vmatpush1.msra.mxu0 0.0
      %2730 = vmatprep.subr.mxu0 0.0
      %2731 = vmatpush1.msra.mxu0 0.0
      %2732 = vmatprep.subr.mxu0 0.0
      %2733 = vmatpush1.msra.mxu0 0.0
      %2734 = vmatprep.subr.mxu0 0.0
      %2735 = vmatpush1.msra.mxu0 0.0
      %2736 = vmatprep.subr.mxu0 0.0
      %2737 = vmatpush1.msra.mxu0 0.0
      %2738 = vmatprep.subr.mxu0 0.0
      %2739 = vmatpush1.msra.mxu0 0.0
      %2740 = vmatprep.subr.mxu0 0.0
      %2741 = vmatpush1.msra.mxu0 0.0
      %2742 = vmatprep.subr.mxu0 0.0
      %2743 = vmatpush1.msra.mxu0 0.0
      %2744 = vmatprep.subr.mxu0 0.0
      %2745 = vmatpush1.msra.mxu0 0.0
      %2746 = vmatprep.subr.mxu0 0.0
      %2747 = vmatpush1.msra.mxu0 0.0
      %2748 = vmatprep.mubr.f32.mxu0 0.0
      %2749 = vmatmul.mubr.f32.gmra.mrb[0].mxu0 %v834
      %v2750 = vpop.f32.mrb[0].mxu0
      %v2751 = vadd.f32 0.0, %v2750
      %v2752 = vpop.f32.mrb[0].mxu0
      %2753 = vmatprep.mubr.f32.mxu0 0.0
      %2754 = vmatmul.mubr.f32.gmra.mrb[0].mxu0 %v837
      %v2755 = vpop.f32.mrb[0].mxu0
      %v2756 = vadd.f32 0.0, %v2755
      %v2757 = vpop.f32.mrb[0].mxu0
      %2758 = vdwg.mxu0
      %2759 = vmatprep.subr.mxu0 0.0
      %2760 = vmatpush1.msra.mxu0 %v2751
      %2761 = vmatprep.subr.mxu0 0.0
      %2762 = vmatpush1.msra.mxu0 %v2756
      %2763 = vmatprep.subr.mxu0 0.0
      %2764 = vmatpush1.msra.mxu0 0.0
      %2765 = vmatprep.subr.mxu0 0.0
      %2766 = vmatpush1.msra.mxu0 0.0
      %2767 = vmatprep.subr.mxu0 0.0
      %2768 = vmatpush1.msra.mxu0 0.0
      %2769 = vmatprep.subr.mxu0 0.0
      %2770 = vmatpush1.msra.mxu0 0.0
      %2771 = vmatprep.subr.mxu0 0.0
      %2772 = vmatpush1.msra.mxu0 0.0
      %2773 = vmatprep.subr.mxu0 0.0
      %2774 = vmatpush1.msra.mxu0 0.0
      %2775 = vmatprep.subr.mxu0 0.0
      %2776 = vmatpush1.msra.mxu0 0.0
      %2777 = vmatprep.subr.mxu0 0.0
      %2778 = vmatpush1.msra.mxu0 0.0
      %2779 = vmatprep.subr.mxu0 0.0
      %2780 = vmatpush1.msra.mxu0 0.0
      %2781 = vmatprep.subr.mxu0 0.0
      %2782 = vmatpush1.msra.mxu0 0.0
      %2783 = vmatprep.subr.mxu0 0.0
      %2784 = vmatpush1.msra.mxu0 0.0
      %2785 = vmatprep.subr.mxu0 0.0
      %2786 = vmatpush1.msra.mxu0 0.0
      %2787 = vmatprep.subr.mxu0 0.0
      %2788 = vmatpush1.msra.mxu0 0.0
      %2789 = vmatprep.subr.mxu0 0.0
      %2790 = vmatpush1.msra.mxu0 0.0
      %2791 = vmatprep.subr.mxu0 0.0
      %2792 = vmatpush1.msra.mxu0 0.0
      %2793 = vmatprep.subr.mxu0 0.0
      %2794 = vmatpush1.msra.mxu0 0.0
      %2795 = vmatprep.subr.mxu0 0.0
      %2796 = vmatpush1.msra.mxu0 0.0
      %2797 = vmatprep.subr.mxu0 0.0
      %2798 = vmatpush1.msra.mxu0 0.0
      %2799 = vmatprep.subr.mxu0 0.0
      %2800 = vmatpush1.msra.mxu0 0.0
      %2801 = vmatprep.subr.mxu0 0.0
      %2802 = vmatpush1.msra.mxu0 0.0
      %2803 = vmatprep.subr.mxu0 0.0
      %2804 = vmatpush1.msra.mxu0 0.0
      %2805 = vmatprep.subr.mxu0 0.0
      %2806 = vmatpush1.msra.mxu0 0.0
      %2807 = vmatprep.subr.mxu0 0.0
      %2808 = vmatpush1.msra.mxu0 0.0
      %2809 = vmatprep.subr.mxu0 0.0
      %2810 = vmatpush1.msra.mxu0 0.0
      %2811 = vmatprep.subr.mxu0 0.0
      %2812 = vmatpush1.msra.mxu0 0.0
      %2813 = vmatprep.subr.mxu0 0.0
      %2814 = vmatpush1.msra.mxu0 0.0
      %2815 = vmatprep.subr.mxu0 0.0
      %2816 = vmatpush1.msra.mxu0 0.0
      %2817 = vmatprep.subr.mxu0 0.0
      %2818 = vmatpush1.msra.mxu0 0.0
      %2819 = vmatprep.subr.mxu0 0.0
      %2820 = vmatpush1.msra.mxu0 0.0
      %2821 = vmatprep.subr.mxu0 0.0
      %2822 = vmatpush1.msra.mxu0 0.0
      %2823 = vmatprep.mubr.f32.mxu0 0.0
      %2824 = vmatmul.mubr.f32.gmra.mrb[0].mxu0 %v2298
      %v2825 = vpop.f32.mrb[0].mxu0
      %v2826 = vadd.f32 0.0, %v2825
      %v2827 = vpop.f32.mrb[0].mxu0
      %2828 = vmatprep.mubr.f32.mxu0 0.0
      %2829 = vmatmul.mubr.f32.gmra.mrb[0].mxu0 %v2301
      %v2830 = vpop.f32.mrb[0].mxu0
      %v2831 = vadd.f32 0.0, %v2830
      %v2832 = vpop.f32.mrb[0].mxu0
      %2833 = vdwg.mxu0
      %v2834 = vmul.f32 %v2676, %v2676
      %v2835 = vmul.f32 %v2681, %v2681
      %v2836 = vsub.f32 %v2826, %v2834
      %v2837 = vsub.f32 %v2831, %v2835
      %2838 = vmatprep.subr.mxu0 0.0
      %2839 = vmatpush1.msra.mxu0 %v2217
      %2840 = vmatprep.subr.mxu0 0.0
      %2841 = vmatpush1.msra.mxu0 %v2218
      %2842 = vmatprep.subr.mxu0 0.0
      %2843 = vmatpush1.msra.mxu0 0.0
      %2844 = vmatprep.subr.mxu0 0.0
      %2845 = vmatpush1.msra.mxu0 0.0
      %2846 = vmatprep.subr.mxu0 0.0
      %2847 = vmatpush1.msra.mxu0 0.0
      %2848 = vmatprep.subr.mxu0 0.0
      %2849 = vmatpush1.msra.mxu0 0.0
      %2850 = vmatprep.subr.mxu0 0.0
      %2851 = vmatpush1.msra.mxu0 0.0
      %2852 = vmatprep.subr.mxu0 0.0
      %2853 = vmatpush1.msra.mxu0 0.0
      %2854 = vmatprep.subr.mxu0 0.0
      %2855 = vmatpush1.msra.mxu0 0.0
      %2856 = vmatprep.subr.mxu0 0.0
      %2857 = vmatpush1.msra.mxu0 0.0
      %2858 = vmatprep.subr.mxu0 0.0
      %2859 = vmatpush1.msra.mxu0 0.0
      %2860 = vmatprep.subr.mxu0 0.0
      %2861 = vmatpush1.msra.mxu0 0.0
      %2862 = vmatprep.subr.mxu0 0.0
      %2863 = vmatpush1.msra.mxu0 0.0
      %2864 = vmatprep.subr.mxu0 0.0
      %2865 = vmatpush1.msra.mxu0 0.0
      %2866 = vmatprep.subr.mxu0 0.0
      %2867 = vmatpush1.msra.mxu0 0.0
      %2868 = vmatprep.subr.mxu0 0.0
      %2869 = vmatpush1.msra.mxu0 0.0
      %2870 = vmatprep.subr.mxu0 0.0
      %2871 = vmatpush1.msra.mxu0 0.0
      %2872 = vmatprep.subr.mxu0 0.0
      %2873 = vmatpush1.msra.mxu0 0.0
      %2874 = vmatprep.subr.mxu0 0.0
      %2875 = vmatpush1.msra.mxu0 0.0
      %2876 = vmatprep.subr.mxu0 0.0
      %2877 = vmatpush1.msra.mxu0 0.0
      %2878 = vmatprep.subr.mxu0 0.0
      %2879 = vmatpush1.msra.mxu0 0.0
      %2880 = vmatprep.subr.mxu0 0.0
      %2881 = vmatpush1.msra.mxu0 0.0
      %2882 = vmatprep.subr.mxu0 0.0
      %2883 = vmatpush1.msra.mxu0 0.0
      %2884 = vmatprep.subr.mxu0 0.0
      %2885 = vmatpush1.msra.mxu0 0.0
      %2886 = vmatprep.subr.mxu0 0.0
      %2887 = vmatpush1.msra.mxu0 0.0
      %2888 = vmatprep.subr.mxu0 0.0
      %2889 = vmatpush1.msra.mxu0 0.0
      %2890 = vmatprep.subr.mxu0 0.0
      %2891 = vmatpush1.msra.mxu0 0.0
      %2892 = vmatprep.subr.mxu0 0.0
      %2893 = vmatpush1.msra.mxu0 0.0
      %2894 = vmatprep.subr.mxu0 0.0
      %2895 = vmatpush1.msra.mxu0 0.0
      %2896 = vmatprep.subr.mxu0 0.0
      %2897 = vmatpush1.msra.mxu0 0.0
      %2898 = vmatprep.subr.mxu0 0.0
      %2899 = vmatpush1.msra.mxu0 0.0
      %2900 = vmatprep.subr.mxu0 0.0
      %2901 = vmatpush1.msra.mxu0 0.0
      %2902 = vmatprep.mubr.f32.mxu0 0.0
      %2903 = vmatmul.mubr.f32.gmra.mrb[0].mxu0 %v994
      %v2904 = vpop.f32.mrb[0].mxu0
      %v2905 = vadd.f32 0.0, %v2904
      %v2906 = vpop.f32.mrb[0].mxu0
      %2907 = vmatprep.mubr.f32.mxu0 0.0
      %2908 = vmatmul.mubr.f32.gmra.mrb[0].mxu0 %v997
      %v2909 = vpop.f32.mrb[0].mxu0
      %v2910 = vadd.f32 0.0, %v2909
      %v2911 = vpop.f32.mrb[0].mxu0
      %2912 = vdwg.mxu0
      %2913 = vmatprep.subr.mxu0 0.0
      %2914 = vmatpush1.msra.mxu0 %v2905
      %2915 = vmatprep.subr.mxu0 0.0
      %2916 = vmatpush1.msra.mxu0 %v2910
      %2917 = vmatprep.subr.mxu0 0.0
      %2918 = vmatpush1.msra.mxu0 0.0
      %2919 = vmatprep.subr.mxu0 0.0
      %2920 = vmatpush1.msra.mxu0 0.0
      %2921 = vmatprep.subr.mxu0 0.0
      %2922 = vmatpush1.msra.mxu0 0.0
      %2923 = vmatprep.subr.mxu0 0.0
      %2924 = vmatpush1.msra.mxu0 0.0
      %2925 = vmatprep.subr.mxu0 0.0
      %2926 = vmatpush1.msra.mxu0 0.0
      %2927 = vmatprep.subr.mxu0 0.0
      %2928 = vmatpush1.msra.mxu0 0.0
      %2929 = vmatprep.subr.mxu0 0.0
      %2930 = vmatpush1.msra.mxu0 0.0
      %2931 = vmatprep.subr.mxu0 0.0
      %2932 = vmatpush1.msra.mxu0 0.0
      %2933 = vmatprep.subr.mxu0 0.0
      %2934 = vmatpush1.msra.mxu0 0.0
      %2935 = vmatprep.subr.mxu0 0.0
      %2936 = vmatpush1.msra.mxu0 0.0
      %2937 = vmatprep.subr.mxu0 0.0
      %2938 = vmatpush1.msra.mxu0 0.0
      %2939 = vmatprep.subr.mxu0 0.0
      %2940 = vmatpush1.msra.mxu0 0.0
      %2941 = vmatprep.subr.mxu0 0.0
      %2942 = vmatpush1.msra.mxu0 0.0
      %2943 = vmatprep.subr.mxu0 0.0
      %2944 = vmatpush1.msra.mxu0 0.0
      %2945 = vmatprep.subr.mxu0 0.0
      %2946 = vmatpush1.msra.mxu0 0.0
      %2947 = vmatprep.subr.mxu0 0.0
      %2948 = vmatpush1.msra.mxu0 0.0
      %2949 = vmatprep.subr.mxu0 0.0
      %2950 = vmatpush1.msra.mxu0 0.0
      %2951 = vmatprep.subr.mxu0 0.0
      %2952 = vmatpush1.msra.mxu0 0.0
      %2953 = vmatprep.subr.mxu0 0.0
      %2954 = vmatpush1.msra.mxu0 0.0
      %2955 = vmatprep.subr.mxu0 0.0
      %2956 = vmatpush1.msra.mxu0 0.0
      %2957 = vmatprep.subr.mxu0 0.0
      %2958 = vmatpush1.msra.mxu0 0.0
      %2959 = vmatprep.subr.mxu0 0.0
      %2960 = vmatpush1.msra.mxu0 0.0
      %2961 = vmatprep.subr.mxu0 0.0
      %2962 = vmatpush1.msra.mxu0 0.0
      %2963 = vmatprep.subr.mxu0 0.0
      %2964 = vmatpush1.msra.mxu0 0.0
      %2965 = vmatprep.subr.mxu0 0.0
      %2966 = vmatpush1.msra.mxu0 0.0
      %2967 = vmatprep.subr.mxu0 0.0
      %2968 = vmatpush1.msra.mxu0 0.0
      %2969 = vmatprep.subr.mxu0 0.0
      %2970 = vmatpush1.msra.mxu0 0.0
      %2971 = vmatprep.subr.mxu0 0.0
      %2972 = vmatpush1.msra.mxu0 0.0
      %2973 = vmatprep.subr.mxu0 0.0
      %2974 = vmatpush1.msra.mxu0 0.0
      %2975 = vmatprep.subr.mxu0 0.0
      %2976 = vmatpush1.msra.mxu0 0.0
      %2977 = vmatprep.mubr.f32.mxu0 0.0
      %2978 = vmatmul.mubr.f32.gmra.mrb[0].mxu0 %v2298
      %v2979 = vpop.f32.mrb[0].mxu0
      %v2980 = vadd.f32 0.0, %v2979
      %v2981 = vpop.f32.mrb[0].mxu0
      %2982 = vmatprep.mubr.f32.mxu0 0.0
      %2983 = vmatmul.mubr.f32.gmra.mrb[0].mxu0 %v2301
      %v2984 = vpop.f32.mrb[0].mxu0
      %v2985 = vadd.f32 0.0, %v2984
      %v2986 = vpop.f32.mrb[0].mxu0
      %2987 = vdwg.mxu0
      %v2988 = vmul.f32 %v2676, %v2370
      %v2989 = vmul.f32 %v2681, %v2375
      %v2990 = vsub.f32 %v2980, %v2988
      %v2991 = vsub.f32 %v2985, %v2989
      %v2992 = vmul.f32 %v2676, 2.0
      %v2993 = vmul.f32 %v2681, 2.0
      %v2994 = vmul.f32 %v2992, %v2370
      %v2995 = vmul.f32 %v2993, %v2375
      %v2996 = vadd.f32 %v2994, 0.0001
      %v2997 = vadd.f32 %v2995, 0.0001
      %v2998 = vmul.f32 %v2990, 2.0
      %v2999 = vmul.f32 %v2991, 2.0
      %v3000 = vadd.f32 %v2998, 0.0009
      %v3001 = vadd.f32 %v2999, 0.0009
      %v3002 = vmul.f32 %v2996, %v3000
      %v3003 = vmul.f32 %v2997, %v3001
      %v3004 = vadd.f32 %v2834, %v2378
      %v3005 = vadd.f32 %v2835, %v2379
      %v3006 = vadd.f32 %v3004, 0.0001
      %v3007 = vadd.f32 %v3005, 0.0001
      %v3008 = vadd.f32 %v2836, %v2532
      %v3009 = vadd.f32 %v2837, %v2533
      %v3010 = vmul.f32 %v3006, %v3008
      %v3011 = vmul.f32 %v3007, %v3009
      %v3012 = vrcp.pop %v3010
      %v3013 = vrcp.pop %v3011
      %v3014 = vmul.f32 %v3002, %v3012
      %v3015 = vmul.f32 %v3003, %v3013
      %v3016 = vmax.f32 %v2836, 0.0001
      %v3017 = vmax.f32 %v2837, 0.0001
      %v3018 = vmul.f32 %v3016, %v3014
      %v3019 = vmul.f32 %v3017, %v3015
      %3020 = vmatprep.subr.mxu0 0.0
      %3021 = vmatpush1.msra.mxu0 %v2217
      %3022 = vmatprep.subr.mxu0 0.0
      %3023 = vmatpush1.msra.mxu0 %v2218
      %3024 = vmatprep.subr.mxu0 0.0
      %3025 = vmatpush1.msra.mxu0 0.0
      %3026 = vmatprep.subr.mxu0 0.0
      %3027 = vmatpush1.msra.mxu0 0.0
      %3028 = vmatprep.subr.mxu0 0.0
      %3029 = vmatpush1.msra.mxu0 0.0
      %3030 = vmatprep.subr.mxu0 0.0
      %3031 = vmatpush1.msra.mxu0 0.0
      %3032 = vmatprep.subr.mxu0 0.0
      %3033 = vmatpush1.msra.mxu0 0.0
      %3034 = vmatprep.subr.mxu0 0.0
      %3035 = vmatpush1.msra.mxu0 0.0
      %3036 = vmatprep.subr.mxu0 0.0
      %3037 = vmatpush1.msra.mxu0 0.0
      %3038 = vmatprep.subr.mxu0 0.0
      %3039 = vmatpush1.msra.mxu0 0.0
      %3040 = vmatprep.subr.mxu0 0.0
      %3041 = vmatpush1.msra.mxu0 0.0
      %3042 = vmatprep.subr.mxu0 0.0
      %3043 = vmatpush1.msra.mxu0 0.0
      %3044 = vmatprep.subr.mxu0 0.0
      %3045 = vmatpush1.msra.mxu0 0.0
      %3046 = vmatprep.subr.mxu0 0.0
      %3047 = vmatpush1.msra.mxu0 0.0
      %3048 = vmatprep.subr.mxu0 0.0
      %3049 = vmatpush1.msra.mxu0 0.0
      %3050 = vmatprep.subr.mxu0 0.0
      %3051 = vmatpush1.msra.mxu0 0.0
      %3052 = vmatprep.subr.mxu0 0.0
      %3053 = vmatpush1.msra.mxu0 0.0
      %3054 = vmatprep.subr.mxu0 0.0
      %3055 = vmatpush1.msra.mxu0 0.0
      %3056 = vmatprep.subr.mxu0 0.0
      %3057 = vmatpush1.msra.mxu0 0.0
      %3058 = vmatprep.subr.mxu0 0.0
      %3059 = vmatpush1.msra.mxu0 0.0
      %3060 = vmatprep.subr.mxu0 0.0
      %3061 = vmatpush1.msra.mxu0 0.0
      %3062 = vmatprep.subr.mxu0 0.0
      %3063 = vmatpush1.msra.mxu0 0.0
      %3064 = vmatprep.subr.mxu0 0.0
      %3065 = vmatpush1.msra.mxu0 0.0
      %3066 = vmatprep.subr.mxu0 0.0
      %3067 = vmatpush1.msra.mxu0 0.0
      %3068 = vmatprep.subr.mxu0 0.0
      %3069 = vmatpush1.msra.mxu0 0.0
      %3070 = vmatprep.subr.mxu0 0.0
      %3071 = vmatpush1.msra.mxu0 0.0
      %3072 = vmatprep.subr.mxu0 0.0
      %3073 = vmatpush1.msra.mxu0 0.0
      %3074 = vmatprep.subr.mxu0 0.0
      %3075 = vmatpush1.msra.mxu0 0.0
      %3076 = vmatprep.subr.mxu0 0.0
      %3077 = vmatpush1.msra.mxu0 0.0
      %3078 = vmatprep.subr.mxu0 0.0
      %3079 = vmatpush1.msra.mxu0 0.0
      %3080 = vmatprep.subr.mxu0 0.0
      %3081 = vmatpush1.msra.mxu0 0.0
      %3082 = vmatprep.subr.mxu0 0.0
      %3083 = vmatpush1.msra.mxu0 0.0
      %3084 = vmatprep.mubr.f32.mxu0 0.0
      %3085 = vmatmul.mubr.f32.gmra.mrb[0].mxu0 %v1182
      %v3086 = vpop.f32.mrb[0].mxu0
      %v3087 = vadd.f32 0.0, %v3086
      %v3088 = vpop.f32.mrb[0].mxu0
      %3089 = vmatprep.mubr.f32.mxu0 0.0
      %3090 = vmatmul.mubr.f32.gmra.mrb[0].mxu0 %v1185
      %v3091 = vpop.f32.mrb[0].mxu0
      %v3092 = vadd.f32 0.0, %v3091
      %v3093 = vpop.f32.mrb[0].mxu0
      %3094 = vdwg.mxu0
      %3095 = vmatprep.subr.mxu0 0.0
      %3096 = vmatpush1.msra.mxu0 %v3087
      %3097 = vmatprep.subr.mxu0 0.0
      %3098 = vmatpush1.msra.mxu0 %v3092
      %3099 = vmatprep.subr.mxu0 0.0
      %3100 = vmatpush1.msra.mxu0 0.0
      %3101 = vmatprep.subr.mxu0 0.0
      %3102 = vmatpush1.msra.mxu0 0.0
      %3103 = vmatprep.subr.mxu0 0.0
      %3104 = vmatpush1.msra.mxu0 0.0
      %3105 = vmatprep.subr.mxu0 0.0
      %3106 = vmatpush1.msra.mxu0 0.0
      %3107 = vmatprep.subr.mxu0 0.0
      %3108 = vmatpush1.msra.mxu0 0.0
      %3109 = vmatprep.subr.mxu0 0.0
      %3110 = vmatpush1.msra.mxu0 0.0
      %3111 = vmatprep.subr.mxu0 0.0
      %3112 = vmatpush1.msra.mxu0 0.0
      %3113 = vmatprep.subr.mxu0 0.0
      %3114 = vmatpush1.msra.mxu0 0.0
      %3115 = vmatprep.subr.mxu0 0.0
      %3116 = vmatpush1.msra.mxu0 0.0
      %3117 = vmatprep.subr.mxu0 0.0
      %3118 = vmatpush1.msra.mxu0 0.0
      %3119 = vmatprep.subr.mxu0 0.0
      %3120 = vmatpush1.msra.mxu0 0.0
      %3121 = vmatprep.subr.mxu0 0.0
      %3122 = vmatpush1.msra.mxu0 0.0
      %3123 = vmatprep.subr.mxu0 0.0
      %3124 = vmatpush1.msra.mxu0 0.0
      %3125 = vmatprep.subr.mxu0 0.0
      %3126 = vmatpush1.msra.mxu0 0.0
      %3127 = vmatprep.subr.mxu0 0.0
      %3128 = vmatpush1.msra.mxu0 0.0
      %3129 = vmatprep.subr.mxu0 0.0
      %3130 = vmatpush1.msra.mxu0 0.0
      %3131 = vmatprep.subr.mxu0 0.0
      %3132 = vmatpush1.msra.mxu0 0.0
      %3133 = vmatprep.subr.mxu0 0.0
      %3134 = vmatpush1.msra.mxu0 0.0
      %3135 = vmatprep.subr.mxu0 0.0
      %3136 = vmatpush1.msra.mxu0 0.0
      %3137 = vmatprep.subr.mxu0 0.0
      %3138 = vmatpush1.msra.mxu0 0.0
      %3139 = vmatprep.subr.mxu0 0.0
      %3140 = vmatpush1.msra.mxu0 0.0
      %3141 = vmatprep.subr.mxu0 0.0
      %3142 = vmatpush1.msra.mxu0 0.0
      %3143 = vmatprep.subr.mxu0 0.0
      %3144 = vmatpush1.msra.mxu0 0.0
      %3145 = vmatprep.subr.mxu0 0.0
      %3146 = vmatpush1.msra.mxu0 0.0
      %3147 = vmatprep.subr.mxu0 0.0
      %3148 = vmatpush1.msra.mxu0 0.0
      %3149 = vmatprep.subr.mxu0 0.0
      %3150 = vmatpush1.msra.mxu0 0.0
      %3151 = vmatprep.subr.mxu0 0.0
      %3152 = vmatpush1.msra.mxu0 0.0
      %3153 = vmatprep.subr.mxu0 0.0
      %3154 = vmatpush1.msra.mxu0 0.0
      %3155 = vmatprep.subr.mxu0 0.0
      %3156 = vmatpush1.msra.mxu0 0.0
      %3157 = vmatprep.subr.mxu0 0.0
      %3158 = vmatpush1.msra.mxu0 0.0
      %3159 = vmatprep.mubr.f32.mxu0 0.0
      %3160 = vmatmul.mubr.f32.gmra.mrb[0].mxu0 %v2298
      %v3161 = vpop.f32.mrb[0].mxu0
      %v3162 = vadd.f32 0.0, %v3161
      %v3163 = vpop.f32.mrb[0].mxu0
      %3164 = vmatprep.mubr.f32.mxu0 0.0
      %3165 = vmatmul.mubr.f32.gmra.mrb[0].mxu0 %v2301
      %v3166 = vpop.f32.mrb[0].mxu0
      %v3167 = vadd.f32 0.0, %v3166
      %v3168 = vpop.f32.mrb[0].mxu0
      %3169 = vdwg.mxu0
      %3170 = vmatprep.subr.mxu0 0.0
      %3171 = vmatpush1.msra.mxu0 %v2217
      %3172 = vmatprep.subr.mxu0 0.0
      %3173 = vmatpush1.msra.mxu0 %v2218
      %3174 = vmatprep.subr.mxu0 0.0
      %3175 = vmatpush1.msra.mxu0 0.0
      %3176 = vmatprep.subr.mxu0 0.0
      %3177 = vmatpush1.msra.mxu0 0.0
      %3178 = vmatprep.subr.mxu0 0.0
      %3179 = vmatpush1.msra.mxu0 0.0
      %3180 = vmatprep.subr.mxu0 0.0
      %3181 = vmatpush1.msra.mxu0 0.0
      %3182 = vmatprep.subr.mxu0 0.0
      %3183 = vmatpush1.msra.mxu0 0.0
      %3184 = vmatprep.subr.mxu0 0.0
      %3185 = vmatpush1.msra.mxu0 0.0
      %3186 = vmatprep.subr.mxu0 0.0
      %3187 = vmatpush1.msra.mxu0 0.0
      %3188 = vmatprep.subr.mxu0 0.0
      %3189 = vmatpush1.msra.mxu0 0.0
      %3190 = vmatprep.subr.mxu0 0.0
      %3191 = vmatpush1.msra.mxu0 0.0
      %3192 = vmatprep.subr.mxu0 0.0
      %3193 = vmatpush1.msra.mxu0 0.0
      %3194 = vmatprep.subr.mxu0 0.0
      %3195 = vmatpush1.msra.mxu0 0.0
      %3196 = vmatprep.subr.mxu0 0.0
      %3197 = vmatpush1.msra.mxu0 0.0
      %3198 = vmatprep.subr.mxu0 0.0
      %3199 = vmatpush1.msra.mxu0 0.0
      %3200 = vmatprep.subr.mxu0 0.0
      %3201 = vmatpush1.msra.mxu0 0.0
      %3202 = vmatprep.subr.mxu0 0.0
      %3203 = vmatpush1.msra.mxu0 0.0
      %3204 = vmatprep.subr.mxu0 0.0
      %3205 = vmatpush1.msra.mxu0 0.0
      %3206 = vmatprep.subr.mxu0 0.0
      %3207 = vmatpush1.msra.mxu0 0.0
      %3208 = vmatprep.subr.mxu0 0.0
      %3209 = vmatpush1.msra.mxu0 0.0
      %3210 = vmatprep.subr.mxu0 0.0
      %3211 = vmatpush1.msra.mxu0 0.0
      %3212 = vmatprep.subr.mxu0 0.0
      %3213 = vmatpush1.msra.mxu0 0.0
      %3214 = vmatprep.subr.mxu0 0.0
      %3215 = vmatpush1.msra.mxu0 0.0
      %3216 = vmatprep.subr.mxu0 0.0
      %3217 = vmatpush1.msra.mxu0 0.0
      %3218 = vmatprep.subr.mxu0 0.0
      %3219 = vmatpush1.msra.mxu0 0.0
      %3220 = vmatprep.subr.mxu0 0.0
      %3221 = vmatpush1.msra.mxu0 0.0
      %3222 = vmatprep.subr.mxu0 0.0
      %3223 = vmatpush1.msra.mxu0 0.0
      %3224 = vmatprep.subr.mxu0 0.0
      %3225 = vmatpush1.msra.mxu0 0.0
      %3226 = vmatprep.subr.mxu0 0.0
      %3227 = vmatpush1.msra.mxu0 0.0
      %3228 = vmatprep.subr.mxu0 0.0
      %3229 = vmatpush1.msra.mxu0 0.0
      %3230 = vmatprep.subr.mxu0 0.0
      %3231 = vmatpush1.msra.mxu0 0.0
      %3232 = vmatprep.subr.mxu0 0.0
      %3233 = vmatpush1.msra.mxu0 0.0
      %3234 = vmatprep.mubr.f32.mxu0 0.0
      %3235 = vmatmul.mubr.f32.gmra.mrb[0].mxu0 %v1338
      %v3236 = vpop.f32.mrb[0].mxu0
      %v3237 = vadd.f32 0.0, %v3236
      %v3238 = vpop.f32.mrb[0].mxu0
      %3239 = vmatprep.mubr.f32.mxu0 0.0
      %3240 = vmatmul.mubr.f32.gmra.mrb[0].mxu0 %v1341
      %v3241 = vpop.f32.mrb[0].mxu0
      %v3242 = vadd.f32 0.0, %v3241
      %v3243 = vpop.f32.mrb[0].mxu0
      %3244 = vdwg.mxu0
      %3245 = vmatprep.subr.mxu0 0.0
      %3246 = vmatpush1.msra.mxu0 %v3237
      %3247 = vmatprep.subr.mxu0 0.0
      %3248 = vmatpush1.msra.mxu0 %v3242
      %3249 = vmatprep.subr.mxu0 0.0
      %3250 = vmatpush1.msra.mxu0 0.0
      %3251 = vmatprep.subr.mxu0 0.0
      %3252 = vmatpush1.msra.mxu0 0.0
      %3253 = vmatprep.subr.mxu0 0.0
      %3254 = vmatpush1.msra.mxu0 0.0
      %3255 = vmatprep.subr.mxu0 0.0
      %3256 = vmatpush1.msra.mxu0 0.0
      %3257 = vmatprep.subr.mxu0 0.0
      %3258 = vmatpush1.msra.mxu0 0.0
      %3259 = vmatprep.subr.mxu0 0.0
      %3260 = vmatpush1.msra.mxu0 0.0
      %3261 = vmatprep.subr.mxu0 0.0
      %3262 = vmatpush1.msra.mxu0 0.0
      %3263 = vmatprep.subr.mxu0 0.0
      %3264 = vmatpush1.msra.mxu0 0.0
      %3265 = vmatprep.subr.mxu0 0.0
      %3266 = vmatpush1.msra.mxu0 0.0
      %3267 = vmatprep.subr.mxu0 0.0
      %3268 = vmatpush1.msra.mxu0 0.0
      %3269 = vmatprep.subr.mxu0 0.0
      %3270 = vmatpush1.msra.mxu0 0.0
      %3271 = vmatprep.subr.mxu0 0.0
      %3272 = vmatpush1.msra.mxu0 0.0
      %3273 = vmatprep.subr.mxu0 0.0
      %3274 = vmatpush1.msra.mxu0 0.0
      %3275 = vmatprep.subr.mxu0 0.0
      %3276 = vmatpush1.msra.mxu0 0.0
      %3277 = vmatprep.subr.mxu0 0.0
      %3278 = vmatpush1.msra.mxu0 0.0
      %3279 = vmatprep.subr.mxu0 0.0
      %3280 = vmatpush1.msra.mxu0 0.0
      %3281 = vmatprep.subr.mxu0 0.0
      %3282 = vmatpush1.msra.mxu0 0.0
      %3283 = vmatprep.subr.mxu0 0.0
      %3284 = vmatpush1.msra.mxu0 0.0
      %3285 = vmatprep.subr.mxu0 0.0
      %3286 = vmatpush1.msra.mxu0 0.0
      %3287 = vmatprep.subr.mxu0 0.0
      %3288 = vmatpush1.msra.mxu0 0.0
      %3289 = vmatprep.subr.mxu0 0.0
      %3290 = vmatpush1.msra.mxu0 0.0
      %3291 = vmatprep.subr.mxu0 0.0
      %3292 = vmatpush1.msra.mxu0 0.0
      %3293 = vmatprep.subr.mxu0 0.0
      %3294 = vmatpush1.msra.mxu0 0.0
      %3295 = vmatprep.subr.mxu0 0.0
      %3296 = vmatpush1.msra.mxu0 0.0
      %3297 = vmatprep.subr.mxu0 0.0
      %3298 = vmatpush1.msra.mxu0 0.0
      %3299 = vmatprep.subr.mxu0 0.0
      %3300 = vmatpush1.msra.mxu0 0.0
      %3301 = vmatprep.subr.mxu0 0.0
      %3302 = vmatpush1.msra.mxu0 0.0
      %3303 = vmatprep.subr.mxu0 0.0
      %3304 = vmatpush1.msra.mxu0 0.0
      %3305 = vmatprep.subr.mxu0 0.0
      %3306 = vmatpush1.msra.mxu0 0.0
      %3307 = vmatprep.subr.mxu0 0.0
      %3308 = vmatpush1.msra.mxu0 0.0
      %3309 = vmatprep.mubr.f32.mxu0 0.0
      %3310 = vmatmul.mubr.f32.gmra.mrb[0].mxu0 %v2298
      %v3311 = vpop.f32.mrb[0].mxu0
      %v3312 = vadd.f32 0.0, %v3311
      %v3313 = vpop.f32.mrb[0].mxu0
      %3314 = vmatprep.mubr.f32.mxu0 0.0
      %3315 = vmatmul.mubr.f32.gmra.mrb[0].mxu0 %v2301
      %v3316 = vpop.f32.mrb[0].mxu0
      %v3317 = vadd.f32 0.0, %v3316
      %v3318 = vpop.f32.mrb[0].mxu0
      %3319 = vdwg.mxu0
      %v3320 = vmul.f32 %v3162, %v3162
      %v3321 = vmul.f32 %v3167, %v3167
      %v3322 = vsub.f32 %v3312, %v3320
      %v3323 = vsub.f32 %v3317, %v3321
      %3324 = vmatprep.subr.mxu0 0.0
      %3325 = vmatpush1.msra.mxu0 %v2217
      %3326 = vmatprep.subr.mxu0 0.0
      %3327 = vmatpush1.msra.mxu0 %v2218
      %3328 = vmatprep.subr.mxu0 0.0
      %3329 = vmatpush1.msra.mxu0 0.0
      %3330 = vmatprep.subr.mxu0 0.0
      %3331 = vmatpush1.msra.mxu0 0.0
      %3332 = vmatprep.subr.mxu0 0.0
      %3333 = vmatpush1.msra.mxu0 0.0
      %3334 = vmatprep.subr.mxu0 0.0
      %3335 = vmatpush1.msra.mxu0 0.0
      %3336 = vmatprep.subr.mxu0 0.0
      %3337 = vmatpush1.msra.mxu0 0.0
      %3338 = vmatprep.subr.mxu0 0.0
      %3339 = vmatpush1.msra.mxu0 0.0
      %3340 = vmatprep.subr.mxu0 0.0
      %3341 = vmatpush1.msra.mxu0 0.0
      %3342 = vmatprep.subr.mxu0 0.0
      %3343 = vmatpush1.msra.mxu0 0.0
      %3344 = vmatprep.subr.mxu0 0.0
      %3345 = vmatpush1.msra.mxu0 0.0
      %3346 = vmatprep.subr.mxu0 0.0
      %3347 = vmatpush1.msra.mxu0 0.0
      %3348 = vmatprep.subr.mxu0 0.0
      %3349 = vmatpush1.msra.mxu0 0.0
      %3350 = vmatprep.subr.mxu0 0.0
      %3351 = vmatpush1.msra.mxu0 0.0
      %3352 = vmatprep.subr.mxu0 0.0
      %3353 = vmatpush1.msra.mxu0 0.0
      %3354 = vmatprep.subr.mxu0 0.0
      %3355 = vmatpush1.msra.mxu0 0.0
      %3356 = vmatprep.subr.mxu0 0.0
      %3357 = vmatpush1.msra.mxu0 0.0
      %3358 = vmatprep.subr.mxu0 0.0
      %3359 = vmatpush1.msra.mxu0 0.0
      %3360 = vmatprep.subr.mxu0 0.0
      %3361 = vmatpush1.msra.mxu0 0.0
      %3362 = vmatprep.subr.mxu0 0.0
      %3363 = vmatpush1.msra.mxu0 0.0
      %3364 = vmatprep.subr.mxu0 0.0
      %3365 = vmatpush1.msra.mxu0 0.0
      %3366 = vmatprep.subr.mxu0 0.0
      %3367 = vmatpush1.msra.mxu0 0.0
      %3368 = vmatprep.subr.mxu0 0.0
      %3369 = vmatpush1.msra.mxu0 0.0
      %3370 = vmatprep.subr.mxu0 0.0
      %3371 = vmatpush1.msra.mxu0 0.0
      %3372 = vmatprep.subr.mxu0 0.0
      %3373 = vmatpush1.msra.mxu0 0.0
      %3374 = vmatprep.subr.mxu0 0.0
      %3375 = vmatpush1.msra.mxu0 0.0
      %3376 = vmatprep.subr.mxu0 0.0
      %3377 = vmatpush1.msra.mxu0 0.0
      %3378 = vmatprep.subr.mxu0 0.0
      %3379 = vmatpush1.msra.mxu0 0.0
      %3380 = vmatprep.subr.mxu0 0.0
      %3381 = vmatpush1.msra.mxu0 0.0
      %3382 = vmatprep.subr.mxu0 0.0
      %3383 = vmatpush1.msra.mxu0 0.0
      %3384 = vmatprep.subr.mxu0 0.0
      %3385 = vmatpush1.msra.mxu0 0.0
      %3386 = vmatprep.subr.mxu0 0.0
      %3387 = vmatpush1.msra.mxu0 0.0
      %3388 = vmatprep.mubr.f32.mxu0 0.0
      %3389 = vmatmul.mubr.f32.gmra.mrb[0].mxu0 %v1498
      %v3390 = vpop.f32.mrb[0].mxu0
      %v3391 = vadd.f32 0.0, %v3390
      %v3392 = vpop.f32.mrb[0].mxu0
      %3393 = vmatprep.mubr.f32.mxu0 0.0
      %3394 = vmatmul.mubr.f32.gmra.mrb[0].mxu0 %v1501
      %v3395 = vpop.f32.mrb[0].mxu0
      %v3396 = vadd.f32 0.0, %v3395
      %v3397 = vpop.f32.mrb[0].mxu0
      %3398 = vdwg.mxu0
      %3399 = vmatprep.subr.mxu0 0.0
      %3400 = vmatpush1.msra.mxu0 %v3391
      %3401 = vmatprep.subr.mxu0 0.0
      %3402 = vmatpush1.msra.mxu0 %v3396
      %3403 = vmatprep.subr.mxu0 0.0
      %3404 = vmatpush1.msra.mxu0 0.0
      %3405 = vmatprep.subr.mxu0 0.0
      %3406 = vmatpush1.msra.mxu0 0.0
      %3407 = vmatprep.subr.mxu0 0.0
      %3408 = vmatpush1.msra.mxu0 0.0
      %3409 = vmatprep.subr.mxu0 0.0
      %3410 = vmatpush1.msra.mxu0 0.0
      %3411 = vmatprep.subr.mxu0 0.0
      %3412 = vmatpush1.msra.mxu0 0.0
      %3413 = vmatprep.subr.mxu0 0.0
      %3414 = vmatpush1.msra.mxu0 0.0
      %3415 = vmatprep.subr.mxu0 0.0
      %3416 = vmatpush1.msra.mxu0 0.0
      %3417 = vmatprep.subr.mxu0 0.0
      %3418 = vmatpush1.msra.mxu0 0.0
      %3419 = vmatprep.subr.mxu0 0.0
      %3420 = vmatpush1.msra.mxu0 0.0
      %3421 = vmatprep.subr.mxu0 0.0
      %3422 = vmatpush1.msra.mxu0 0.0
      %3423 = vmatprep.subr.mxu0 0.0
      %3424 = vmatpush1.msra.mxu0 0.0
      %3425 = vmatprep.subr.mxu0 0.0
      %3426 = vmatpush1.msra.mxu0 0.0
      %3427 = vmatprep.subr.mxu0 0.0
      %3428 = vmatpush1.msra.mxu0 0.0
      %3429 = vmatprep.subr.mxu0 0.0
      %3430 = vmatpush1.msra.mxu0 0.0
      %3431 = vmatprep.subr.mxu0 0.0
      %3432 = vmatpush1.msra.mxu0 0.0
      %3433 = vmatprep.subr.mxu0 0.0
      %3434 = vmatpush1.msra.mxu0 0.0
      %3435 = vmatprep.subr.mxu0 0.0
      %3436 = vmatpush1.msra.mxu0 0.0
      %3437 = vmatprep.subr.mxu0 0.0
      %3438 = vmatpush1.msra.mxu0 0.0
      %3439 = vmatprep.subr.mxu0 0.0
      %3440 = vmatpush1.msra.mxu0 0.0
      %3441 = vmatprep.subr.mxu0 0.0
      %3442 = vmatpush1.msra.mxu0 0.0
      %3443 = vmatprep.subr.mxu0 0.0
      %3444 = vmatpush1.msra.mxu0 0.0
      %3445 = vmatprep.subr.mxu0 0.0
      %3446 = vmatpush1.msra.mxu0 0.0
      %3447 = vmatprep.subr.mxu0 0.0
      %3448 = vmatpush1.msra.mxu0 0.0
      %3449 = vmatprep.subr.mxu0 0.0
      %3450 = vmatpush1.msra.mxu0 0.0
      %3451 = vmatprep.subr.mxu0 0.0
      %3452 = vmatpush1.msra.mxu0 0.0
      %3453 = vmatprep.subr.mxu0 0.0
      %3454 = vmatpush1.msra.mxu0 0.0
      %3455 = vmatprep.subr.mxu0 0.0
      %3456 = vmatpush1.msra.mxu0 0.0
      %3457 = vmatprep.subr.mxu0 0.0
      %3458 = vmatpush1.msra.mxu0 0.0
      %3459 = vmatprep.subr.mxu0 0.0
      %3460 = vmatpush1.msra.mxu0 0.0
      %3461 = vmatprep.subr.mxu0 0.0
      %3462 = vmatpush1.msra.mxu0 0.0
      %3463 = vmatprep.mubr.f32.mxu0 0.0
      %3464 = vmatmul.mubr.f32.gmra.mrb[0].mxu0 %v2298
      %v3465 = vpop.f32.mrb[0].mxu0
      %v3466 = vadd.f32 0.0, %v3465
      %v3467 = vpop.f32.mrb[0].mxu0
      %3468 = vmatprep.mubr.f32.mxu0 0.0
      %3469 = vmatmul.mubr.f32.gmra.mrb[0].mxu0 %v2301
      %v3470 = vpop.f32.mrb[0].mxu0
      %v3471 = vadd.f32 0.0, %v3470
      %v3472 = vpop.f32.mrb[0].mxu0
      %3473 = vdwg.mxu0
      %v3474 = vmul.f32 %v3162, %v2370
      %v3475 = vmul.f32 %v3167, %v2375
      %v3476 = vsub.f32 %v3466, %v3474
      %v3477 = vsub.f32 %v3471, %v3475
      %v3478 = vmul.f32 %v3162, 2.0
      %v3479 = vmul.f32 %v3167, 2.0
      %v3480 = vmul.f32 %v3478, %v2370
      %v3481 = vmul.f32 %v3479, %v2375
      %v3482 = vadd.f32 %v3480, 0.0001
      %v3483 = vadd.f32 %v3481, 0.0001
      %v3484 = vmul.f32 %v3476, 2.0
      %v3485 = vmul.f32 %v3477, 2.0
      %v3486 = vadd.f32 %v3484, 0.0009
      %v3487 = vadd.f32 %v3485, 0.0009
      %v3488 = vmul.f32 %v3482, %v3486
      %v3489 = vmul.f32 %v3483, %v3487
      %v3490 = vadd.f32 %v3320, %v2378
      %v3491 = vadd.f32 %v3321, %v2379
      %v3492 = vadd.f32 %v3490, 0.0001
      %v3493 = vadd.f32 %v3491, 0.0001
      %v3494 = vadd.f32 %v3322, %v2532
      %v3495 = vadd.f32 %v3323, %v2533
      %v3496 = vmul.f32 %v3492, %v3494
      %v3497 = vmul.f32 %v3493, %v3495
      %v3498 = vrcp.pop %v3496
      %v3499 = vrcp.pop %v3497
      %v3500 = vmul.f32 %v3488, %v3498
      %v3501 = vmul.f32 %v3489, %v3499
      %v3502 = vmax.f32 %v3322, 0.0001
      %v3503 = vmax.f32 %v3323, 0.0001
      %v3504 = vmul.f32 %v3502, %v3500
      %v3505 = vmul.f32 %v3503, %v3501
      %v3506 = vadd.f32 %v3018, %v3504
      %v3507 = vadd.f32 %v3019, %v3505
      %v3508 = vadd.f32 %v3016, %v3502
      %v3509 = vadd.f32 %v3017, %v3503
      %3510 = vmatprep.subr.mxu0 0.0
      %3511 = vmatpush1.msra.mxu0 %v2217
      %3512 = vmatprep.subr.mxu0 0.0
      %3513 = vmatpush1.msra.mxu0 %v2218
      %3514 = vmatprep.subr.mxu0 0.0
      %3515 = vmatpush1.msra.mxu0 0.0
      %3516 = vmatprep.subr.mxu0 0.0
      %3517 = vmatpush1.msra.mxu0 0.0
      %3518 = vmatprep.subr.mxu0 0.0
      %3519 = vmatpush1.msra.mxu0 0.0
      %3520 = vmatprep.subr.mxu0 0.0
      %3521 = vmatpush1.msra.mxu0 0.0
      %3522 = vmatprep.subr.mxu0 0.0
      %3523 = vmatpush1.msra.mxu0 0.0
      %3524 = vmatprep.subr.mxu0 0.0
      %3525 = vmatpush1.msra.mxu0 0.0
      %3526 = vmatprep.subr.mxu0 0.0
      %3527 = vmatpush1.msra.mxu0 0.0
      %3528 = vmatprep.subr.mxu0 0.0
      %3529 = vmatpush1.msra.mxu0 0.0
      %3530 = vmatprep.subr.mxu0 0.0
      %3531 = vmatpush1.msra.mxu0 0.0
      %3532 = vmatprep.subr.mxu0 0.0
      %3533 = vmatpush1.msra.mxu0 0.0
      %3534 = vmatprep.subr.mxu0 0.0
      %3535 = vmatpush1.msra.mxu0 0.0
      %3536 = vmatprep.subr.mxu0 0.0
      %3537 = vmatpush1.msra.mxu0 0.0
      %3538 = vmatprep.subr.mxu0 0.0
      %3539 = vmatpush1.msra.mxu0 0.0
      %3540 = vmatprep.subr.mxu0 0.0
      %3541 = vmatpush1.msra.mxu0 0.0
      %3542 = vmatprep.subr.mxu0 0.0
      %3543 = vmatpush1.msra.mxu0 0.0
      %3544 = vmatprep.subr.mxu0 0.0
      %3545 = vmatpush1.msra.mxu0 0.0
      %3546 = vmatprep.subr.mxu0 0.0
      %3547 = vmatpush1.msra.mxu0 0.0
      %3548 = vmatprep.subr.mxu0 0.0
      %3549 = vmatpush1.msra.mxu0 0.0
      %3550 = vmatprep.subr.mxu0 0.0
      %3551 = vmatpush1.msra.mxu0 0.0
      %3552 = vmatprep.subr.mxu0 0.0
      %3553 = vmatpush1.msra.mxu0 0.0
      %3554 = vmatprep.subr.mxu0 0.0
      %3555 = vmatpush1.msra.mxu0 0.0
      %3556 = vmatprep.subr.mxu0 0.0
      %3557 = vmatpush1.msra.mxu0 0.0
      %3558 = vmatprep.subr.mxu0 0.0
      %3559 = vmatpush1.msra.mxu0 0.0
      %3560 = vmatprep.subr.mxu0 0.0
      %3561 = vmatpush1.msra.mxu0 0.0
      %3562 = vmatprep.subr.mxu0 0.0
      %3563 = vmatpush1.msra.mxu0 0.0
      %3564 = vmatprep.subr.mxu0 0.0
      %3565 = vmatpush1.msra.mxu0 0.0
      %3566 = vmatprep.subr.mxu0 0.0
      %3567 = vmatpush1.msra.mxu0 0.0
      %3568 = vmatprep.subr.mxu0 0.0
      %3569 = vmatpush1.msra.mxu0 0.0
      %3570 = vmatprep.subr.mxu0 0.0
      %3571 = vmatpush1.msra.mxu0 0.0
      %3572 = vmatprep.subr.mxu0 0.0
      %3573 = vmatpush1.msra.mxu0 0.0
      %3574 = vmatprep.mubr.f32.mxu0 0.0
      %3575 = vmatmul.mubr.f32.gmra.mrb[0].mxu0 %v1690
      %v3576 = vpop.f32.mrb[0].mxu0
      %v3577 = vadd.f32 0.0, %v3576
      %v3578 = vpop.f32.mrb[0].mxu0
      %3579 = vmatprep.mubr.f32.mxu0 0.0
      %3580 = vmatmul.mubr.f32.gmra.mrb[0].mxu0 %v1693
      %v3581 = vpop.f32.mrb[0].mxu0
      %v3582 = vadd.f32 0.0, %v3581
      %v3583 = vpop.f32.mrb[0].mxu0
      %3584 = vdwg.mxu0
      %3585 = vmatprep.subr.mxu0 0.0
      %3586 = vmatpush1.msra.mxu0 %v3577
      %3587 = vmatprep.subr.mxu0 0.0
      %3588 = vmatpush1.msra.mxu0 %v3582
      %3589 = vmatprep.subr.mxu0 0.0
      %3590 = vmatpush1.msra.mxu0 0.0
      %3591 = vmatprep.subr.mxu0 0.0
      %3592 = vmatpush1.msra.mxu0 0.0
      %3593 = vmatprep.subr.mxu0 0.0
      %3594 = vmatpush1.msra.mxu0 0.0
      %3595 = vmatprep.subr.mxu0 0.0
      %3596 = vmatpush1.msra.mxu0 0.0
      %3597 = vmatprep.subr.mxu0 0.0
      %3598 = vmatpush1.msra.mxu0 0.0
      %3599 = vmatprep.subr.mxu0 0.0
      %3600 = vmatpush1.msra.mxu0 0.0
      %3601 = vmatprep.subr.mxu0 0.0
      %3602 = vmatpush1.msra.mxu0 0.0
      %3603 = vmatprep.subr.mxu0 0.0
      %3604 = vmatpush1.msra.mxu0 0.0
      %3605 = vmatprep.subr.mxu0 0.0
      %3606 = vmatpush1.msra.mxu0 0.0
      %3607 = vmatprep.subr.mxu0 0.0
      %3608 = vmatpush1.msra.mxu0 0.0
      %3609 = vmatprep.subr.mxu0 0.0
      %3610 = vmatpush1.msra.mxu0 0.0
      %3611 = vmatprep.subr.mxu0 0.0
      %3612 = vmatpush1.msra.mxu0 0.0
      %3613 = vmatprep.subr.mxu0 0.0
      %3614 = vmatpush1.msra.mxu0 0.0
      %3615 = vmatprep.subr.mxu0 0.0
      %3616 = vmatpush1.msra.mxu0 0.0
      %3617 = vmatprep.subr.mxu0 0.0
      %3618 = vmatpush1.msra.mxu0 0.0
      %3619 = vmatprep.subr.mxu0 0.0
      %3620 = vmatpush1.msra.mxu0 0.0
      %3621 = vmatprep.subr.mxu0 0.0
      %3622 = vmatpush1.msra.mxu0 0.0
      %3623 = vmatprep.subr.mxu0 0.0
      %3624 = vmatpush1.msra.mxu0 0.0
      %3625 = vmatprep.subr.mxu0 0.0
      %3626 = vmatpush1.msra.mxu0 0.0
      %3627 = vmatprep.subr.mxu0 0.0
      %3628 = vmatpush1.msra.mxu0 0.0
      %3629 = vmatprep.subr.mxu0 0.0
      %3630 = vmatpush1.msra.mxu0 0.0
      %3631 = vmatprep.subr.mxu0 0.0
      %3632 = vmatpush1.msra.mxu0 0.0
      %3633 = vmatprep.subr.mxu0 0.0
      %3634 = vmatpush1.msra.mxu0 0.0
      %3635 = vmatprep.subr.mxu0 0.0
      %3636 = vmatpush1.msra.mxu0 0.0
      %3637 = vmatprep.subr.mxu0 0.0
      %3638 = vmatpush1.msra.mxu0 0.0
      %3639 = vmatprep.subr.mxu0 0.0
      %3640 = vmatpush1.msra.mxu0 0.0
      %3641 = vmatprep.subr.mxu0 0.0
      %3642 = vmatpush1.msra.mxu0 0.0
      %3643 = vmatprep.subr.mxu0 0.0
      %3644 = vmatpush1.msra.mxu0 0.0
      %3645 = vmatprep.subr.mxu0 0.0
      %3646 = vmatpush1.msra.mxu0 0.0
      %3647 = vmatprep.subr.mxu0 0.0
      %3648 = vmatpush1.msra.mxu0 0.0
      %3649 = vmatprep.mubr.f32.mxu0 0.0
      %3650 = vmatmul.mubr.f32.gmra.mrb[0].mxu0 %v2298
      %v3651 = vpop.f32.mrb[0].mxu0
      %v3652 = vadd.f32 0.0, %v3651
      %v3653 = vpop.f32.mrb[0].mxu0
      %3654 = vmatprep.mubr.f32.mxu0 0.0
      %3655 = vmatmul.mubr.f32.gmra.mrb[0].mxu0 %v2301
      %v3656 = vpop.f32.mrb[0].mxu0
      %v3657 = vadd.f32 0.0, %v3656
      %v3658 = vpop.f32.mrb[0].mxu0
      %3659 = vdwg.mxu0
      %3660 = vmatprep.subr.mxu0 0.0
      %3661 = vmatpush1.msra.mxu0 %v2217
      %3662 = vmatprep.subr.mxu0 0.0
      %3663 = vmatpush1.msra.mxu0 %v2218
      %3664 = vmatprep.subr.mxu0 0.0
      %3665 = vmatpush1.msra.mxu0 0.0
      %3666 = vmatprep.subr.mxu0 0.0
      %3667 = vmatpush1.msra.mxu0 0.0
      %3668 = vmatprep.subr.mxu0 0.0
      %3669 = vmatpush1.msra.mxu0 0.0
      %3670 = vmatprep.subr.mxu0 0.0
      %3671 = vmatpush1.msra.mxu0 0.0
      %3672 = vmatprep.subr.mxu0 0.0
      %3673 = vmatpush1.msra.mxu0 0.0
      %3674 = vmatprep.subr.mxu0 0.0
      %3675 = vmatpush1.msra.mxu0 0.0
      %3676 = vmatprep.subr.mxu0 0.0
      %3677 = vmatpush1.msra.mxu0 0.0
      %3678 = vmatprep.subr.mxu0 0.0
      %3679 = vmatpush1.msra.mxu0 0.0
      %3680 = vmatprep.subr.mxu0 0.0
      %3681 = vmatpush1.msra.mxu0 0.0
      %3682 = vmatprep.subr.mxu0 0.0
      %3683 = vmatpush1.msra.mxu0 0.0
      %3684 = vmatprep.subr.mxu0 0.0
      %3685 = vmatpush1.msra.mxu0 0.0
      %3686 = vmatprep.subr.mxu0 0.0
      %3687 = vmatpush1.msra.mxu0 0.0
      %3688 = vmatprep.subr.mxu0 0.0
      %3689 = vmatpush1.msra.mxu0 0.0
      %3690 = vmatprep.subr.mxu0 0.0
      %3691 = vmatpush1.msra.mxu0 0.0
      %3692 = vmatprep.subr.mxu0 0.0
      %3693 = vmatpush1.msra.mxu0 0.0
      %3694 = vmatprep.subr.mxu0 0.0
      %3695 = vmatpush1.msra.mxu0 0.0
      %3696 = vmatprep.subr.mxu0 0.0
      %3697 = vmatpush1.msra.mxu0 0.0
      %3698 = vmatprep.subr.mxu0 0.0
      %3699 = vmatpush1.msra.mxu0 0.0
      %3700 = vmatprep.subr.mxu0 0.0
      %3701 = vmatpush1.msra.mxu0 0.0
      %3702 = vmatprep.subr.mxu0 0.0
      %3703 = vmatpush1.msra.mxu0 0.0
      %3704 = vmatprep.subr.mxu0 0.0
      %3705 = vmatpush1.msra.mxu0 0.0
      %3706 = vmatprep.subr.mxu0 0.0
      %3707 = vmatpush1.msra.mxu0 0.0
      %3708 = vmatprep.subr.mxu0 0.0
      %3709 = vmatpush1.msra.mxu0 0.0
      %3710 = vmatprep.subr.mxu0 0.0
      %3711 = vmatpush1.msra.mxu0 0.0
      %3712 = vmatprep.subr.mxu0 0.0
      %3713 = vmatpush1.msra.mxu0 0.0
      %3714 = vmatprep.subr.mxu0 0.0
      %3715 = vmatpush1.msra.mxu0 0.0
      %3716 = vmatprep.subr.mxu0 0.0
      %3717 = vmatpush1.msra.mxu0 0.0
      %3718 = vmatprep.subr.mxu0 0.0
      %3719 = vmatpush1.msra.mxu0 0.0
      %3720 = vmatprep.subr.mxu0 0.0
      %3721 = vmatpush1.msra.mxu0 0.0
      %3722 = vmatprep.subr.mxu0 0.0
      %3723 = vmatpush1.msra.mxu0 0.0
      %3724 = vmatprep.mubr.f32.mxu0 0.0
      %3725 = vmatmul.mubr.f32.gmra.mrb[0].mxu0 %v1846
      %v3726 = vpop.f32.mrb[0].mxu0
      %v3727 = vadd.f32 0.0, %v3726
      %v3728 = vpop.f32.mrb[0].mxu0
      %3729 = vmatprep.mubr.f32.mxu0 0.0
      %3730 = vmatmul.mubr.f32.gmra.mrb[0].mxu0 %v1849
      %v3731 = vpop.f32.mrb[0].mxu0
      %v3732 = vadd.f32 0.0, %v3731
      %v3733 = vpop.f32.mrb[0].mxu0
      %3734 = vdwg.mxu0
      %3735 = vmatprep.subr.mxu0 0.0
      %3736 = vmatpush1.msra.mxu0 %v3727
      %3737 = vmatprep.subr.mxu0 0.0
      %3738 = vmatpush1.msra.mxu0 %v3732
      %3739 = vmatprep.subr.mxu0 0.0
      %3740 = vmatpush1.msra.mxu0 0.0
      %3741 = vmatprep.subr.mxu0 0.0
      %3742 = vmatpush1.msra.mxu0 0.0
      %3743 = vmatprep.subr.mxu0 0.0
      %3744 = vmatpush1.msra.mxu0 0.0
      %3745 = vmatprep.subr.mxu0 0.0
      %3746 = vmatpush1.msra.mxu0 0.0
      %3747 = vmatprep.subr.mxu0 0.0
      %3748 = vmatpush1.msra.mxu0 0.0
      %3749 = vmatprep.subr.mxu0 0.0
      %3750 = vmatpush1.msra.mxu0 0.0
      %3751 = vmatprep.subr.mxu0 0.0
      %3752 = vmatpush1.msra.mxu0 0.0
      %3753 = vmatprep.subr.mxu0 0.0
      %3754 = vmatpush1.msra.mxu0 0.0
      %3755 = vmatprep.subr.mxu0 0.0
      %3756 = vmatpush1.msra.mxu0 0.0
      %3757 = vmatprep.subr.mxu0 0.0
      %3758 = vmatpush1.msra.mxu0 0.0
      %3759 = vmatprep.subr.mxu0 0.0
      %3760 = vmatpush1.msra.mxu0 0.0
      %3761 = vmatprep.subr.mxu0 0.0
      %3762 = vmatpush1.msra.mxu0 0.0
      %3763 = vmatprep.subr.mxu0 0.0
      %3764 = vmatpush1.msra.mxu0 0.0
      %3765 = vmatprep.subr.mxu0 0.0
      %3766 = vmatpush1.msra.mxu0 0.0
      %3767 = vmatprep.subr.mxu0 0.0
      %3768 = vmatpush1.msra.mxu0 0.0
      %3769 = vmatprep.subr.mxu0 0.0
      %3770 = vmatpush1.msra.mxu0 0.0
      %3771 = vmatprep.subr.mxu0 0.0
      %3772 = vmatpush1.msra.mxu0 0.0
      %3773 = vmatprep.subr.mxu0 0.0
      %3774 = vmatpush1.msra.mxu0 0.0
      %3775 = vmatprep.subr.mxu0 0.0
      %3776 = vmatpush1.msra.mxu0 0.0
      %3777 = vmatprep.subr.mxu0 0.0
      %3778 = vmatpush1.msra.mxu0 0.0
      %3779 = vmatprep.subr.mxu0 0.0
      %3780 = vmatpush1.msra.mxu0 0.0
      %3781 = vmatprep.subr.mxu0 0.0
      %3782 = vmatpush1.msra.mxu0 0.0
      %3783 = vmatprep.subr.mxu0 0.0
      %3784 = vmatpush1.msra.mxu0 0.0
      %3785 = vmatprep.subr.mxu0 0.0
      %3786 = vmatpush1.msra.mxu0 0.0
      %3787 = vmatprep.subr.mxu0 0.0
      %3788 = vmatpush1.msra.mxu0 0.0
      %3789 = vmatprep.subr.mxu0 0.0
      %3790 = vmatpush1.msra.mxu0 0.0
      %3791 = vmatprep.subr.mxu0 0.0
      %3792 = vmatpush1.msra.mxu0 0.0
      %3793 = vmatprep.subr.mxu0 0.0
      %3794 = vmatpush1.msra.mxu0 0.0
      %3795 = vmatprep.subr.mxu0 0.0
      %3796 = vmatpush1.msra.mxu0 0.0
      %3797 = vmatprep.subr.mxu0 0.0
      %3798 = vmatpush1.msra.mxu0 0.0
      %3799 = vmatprep.mubr.f32.mxu0 0.0
      %3800 = vmatmul.mubr.f32.gmra.mrb[0].mxu0 %v2298
      %v3801 = vpop.f32.mrb[0].mxu0
      %v3802 = vadd.f32 0.0, %v3801
      %v3803 = vpop.f32.mrb[0].mxu0
      %3804 = vmatprep.mubr.f32.mxu0 0.0
      %3805 = vmatmul.mubr.f32.gmra.mrb[0].mxu0 %v2301
      %v3806 = vpop.f32.mrb[0].mxu0
      %v3807 = vadd.f32 0.0, %v3806
      %v3808 = vpop.f32.mrb[0].mxu0
      %3809 = vdwg.mxu0
      %v3810 = vmul.f32 %v3652, %v3652
      %v3811 = vmul.f32 %v3657, %v3657
      %v3812 = vsub.f32 %v3802, %v3810
      %v3813 = vsub.f32 %v3807, %v3811
      %3814 = vmatprep.subr.mxu0 0.0
      %3815 = vmatpush1.msra.mxu0 %v2217
      %3816 = vmatprep.subr.mxu0 0.0
      %3817 = vmatpush1.msra.mxu0 %v2218
      %3818 = vmatprep.subr.mxu0 0.0
      %3819 = vmatpush1.msra.mxu0 0.0
      %3820 = vmatprep.subr.mxu0 0.0
      %3821 = vmatpush1.msra.mxu0 0.0
      %3822 = vmatprep.subr.mxu0 0.0
      %3823 = vmatpush1.msra.mxu0 0.0
      %3824 = vmatprep.subr.mxu0 0.0
      %3825 = vmatpush1.msra.mxu0 0.0
      %3826 = vmatprep.subr.mxu0 0.0
      %3827 = vmatpush1.msra.mxu0 0.0
      %3828 = vmatprep.subr.mxu0 0.0
      %3829 = vmatpush1.msra.mxu0 0.0
      %3830 = vmatprep.subr.mxu0 0.0
      %3831 = vmatpush1.msra.mxu0 0.0
      %3832 = vmatprep.subr.mxu0 0.0
      %3833 = vmatpush1.msra.mxu0 0.0
      %3834 = vmatprep.subr.mxu0 0.0
      %3835 = vmatpush1.msra.mxu0 0.0
      %3836 = vmatprep.subr.mxu0 0.0
      %3837 = vmatpush1.msra.mxu0 0.0
      %3838 = vmatprep.subr.mxu0 0.0
      %3839 = vmatpush1.msra.mxu0 0.0
      %3840 = vmatprep.subr.mxu0 0.0
      %3841 = vmatpush1.msra.mxu0 0.0
      %3842 = vmatprep.subr.mxu0 0.0
      %3843 = vmatpush1.msra.mxu0 0.0
      %3844 = vmatprep.subr.mxu0 0.0
      %3845 = vmatpush1.msra.mxu0 0.0
      %3846 = vmatprep.subr.mxu0 0.0
      %3847 = vmatpush1.msra.mxu0 0.0
      %3848 = vmatprep.subr.mxu0 0.0
      %3849 = vmatpush1.msra.mxu0 0.0
      %3850 = vmatprep.subr.mxu0 0.0
      %3851 = vmatpush1.msra.mxu0 0.0
      %3852 = vmatprep.subr.mxu0 0.0
      %3853 = vmatpush1.msra.mxu0 0.0
      %3854 = vmatprep.subr.mxu0 0.0
      %3855 = vmatpush1.msra.mxu0 0.0
      %3856 = vmatprep.subr.mxu0 0.0
      %3857 = vmatpush1.msra.mxu0 0.0
      %3858 = vmatprep.subr.mxu0 0.0
      %3859 = vmatpush1.msra.mxu0 0.0
      %3860 = vmatprep.subr.mxu0 0.0
      %3861 = vmatpush1.msra.mxu0 0.0
      %3862 = vmatprep.subr.mxu0 0.0
      %3863 = vmatpush1.msra.mxu0 0.0
      %3864 = vmatprep.subr.mxu0 0.0
      %3865 = vmatpush1.msra.mxu0 0.0
      %3866 = vmatprep.subr.mxu0 0.0
      %3867 = vmatpush1.msra.mxu0 0.0
      %3868 = vmatprep.subr.mxu0 0.0
      %3869 = vmatpush1.msra.mxu0 0.0
      %3870 = vmatprep.subr.mxu0 0.0
      %3871 = vmatpush1.msra.mxu0 0.0
      %3872 = vmatprep.subr.mxu0 0.0
      %3873 = vmatpush1.msra.mxu0 0.0
      %3874 = vmatprep.subr.mxu0 0.0
      %3875 = vmatpush1.msra.mxu0 0.0
      %3876 = vmatprep.subr.mxu0 0.0
      %3877 = vmatpush1.msra.mxu0 0.0
      %3878 = vmatprep.mubr.f32.mxu0 0.0
      %3879 = vmatmul.mubr.f32.gmra.mrb[0].mxu0 %v2006
      %v3880 = vpop.f32.mrb[0].mxu0
      %v3881 = vadd.f32 0.0, %v3880
      %v3882 = vpop.f32.mrb[0].mxu0
      %3883 = vmatprep.mubr.f32.mxu0 0.0
      %3884 = vmatmul.mubr.f32.gmra.mrb[0].mxu0 %v2009
      %v3885 = vpop.f32.mrb[0].mxu0
      %v3886 = vadd.f32 0.0, %v3885
      %v3887 = vpop.f32.mrb[0].mxu0
      %3888 = vdwg.mxu0
      %3889 = vmatprep.subr.mxu0 0.0
      %3890 = vmatpush1.msra.mxu0 %v3881
      %3891 = vmatprep.subr.mxu0 0.0
      %3892 = vmatpush1.msra.mxu0 %v3886
      %3893 = vmatprep.subr.mxu0 0.0
      %3894 = vmatpush1.msra.mxu0 0.0
      %3895 = vmatprep.subr.mxu0 0.0
      %3896 = vmatpush1.msra.mxu0 0.0
      %3897 = vmatprep.subr.mxu0 0.0
      %3898 = vmatpush1.msra.mxu0 0.0
      %3899 = vmatprep.subr.mxu0 0.0
      %3900 = vmatpush1.msra.mxu0 0.0
      %3901 = vmatprep.subr.mxu0 0.0
      %3902 = vmatpush1.msra.mxu0 0.0
      %3903 = vmatprep.subr.mxu0 0.0
      %3904 = vmatpush1.msra.mxu0 0.0
      %3905 = vmatprep.subr.mxu0 0.0
      %3906 = vmatpush1.msra.mxu0 0.0
      %3907 = vmatprep.subr.mxu0 0.0
      %3908 = vmatpush1.msra.mxu0 0.0
      %3909 = vmatprep.subr.mxu0 0.0
      %3910 = vmatpush1.msra.mxu0 0.0
      %3911 = vmatprep.subr.mxu0 0.0
      %3912 = vmatpush1.msra.mxu0 0.0
      %3913 = vmatprep.subr.mxu0 0.0
      %3914 = vmatpush1.msra.mxu0 0.0
      %3915 = vmatprep.subr.mxu0 0.0
      %3916 = vmatpush1.msra.mxu0 0.0
      %3917 = vmatprep.subr.mxu0 0.0
      %3918 = vmatpush1.msra.mxu0 0.0
      %3919 = vmatprep.subr.mxu0 0.0
      %3920 = vmatpush1.msra.mxu0 0.0
      %3921 = vmatprep.subr.mxu0 0.0
      %3922 = vmatpush1.msra.mxu0 0.0
      %3923 = vmatprep.subr.mxu0 0.0
      %3924 = vmatpush1.msra.mxu0 0.0
      %3925 = vmatprep.subr.mxu0 0.0
      %3926 = vmatpush1.msra.mxu0 0.0
      %3927 = vmatprep.subr.mxu0 0.0
      %3928 = vmatpush1.msra.mxu0 0.0
      %3929 = vmatprep.subr.mxu0 0.0
      %3930 = vmatpush1.msra.mxu0 0.0
      %3931 = vmatprep.subr.mxu0 0.0
      %3932 = vmatpush1.msra.mxu0 0.0
      %3933 = vmatprep.subr.mxu0 0.0
      %3934 = vmatpush1.msra.mxu0 0.0
      %3935 = vmatprep.subr.mxu0 0.0
      %3936 = vmatpush1.msra.mxu0 0.0
      %3937 = vmatprep.subr.mxu0 0.0
      %3938 = vmatpush1.msra.mxu0 0.0
      %3939 = vmatprep.subr.mxu0 0.0
      %3940 = vmatpush1.msra.mxu0 0.0
      %3941 = vmatprep.subr.mxu0 0.0
      %3942 = vmatpush1.msra.mxu0 0.0
      %3943 = vmatprep.subr.mxu0 0.0
      %3944 = vmatpush1.msra.mxu0 0.0
      %3945 = vmatprep.subr.mxu0 0.0
      %3946 = vmatpush1.msra.mxu0 0.0
      %3947 = vmatprep.subr.mxu0 0.0
      %3948 = vmatpush1.msra.mxu0 0.0
      %3949 = vmatprep.subr.mxu0 0.0
      %3950 = vmatpush1.msra.mxu0 0.0
      %3951 = vmatprep.subr.mxu0 0.0
      %3952 = vmatpush1.msra.mxu0 0.0
      %3953 = vmatprep.mubr.f32.mxu0 0.0
      %3954 = vmatmul.mubr.f32.gmra.mrb[0].mxu0 %v2298
      %v3955 = vpop.f32.mrb[0].mxu0
      %v3956 = vadd.f32 0.0, %v3955
      %v3957 = vpop.f32.mrb[0].mxu0
      %3958 = vmatprep.mubr.f32.mxu0 0.0
      %3959 = vmatmul.mubr.f32.gmra.mrb[0].mxu0 %v2301
      %v3960 = vpop.f32.mrb[0].mxu0
      %v3961 = vadd.f32 0.0, %v3960
      %v3962 = vpop.f32.mrb[0].mxu0
      %3963 = vdwg.mxu0
      %v3964 = vmul.f32 %v3652, %v2370
      %v3965 = vmul.f32 %v3657, %v2375
      %v3966 = vsub.f32 %v3956, %v3964
      %v3967 = vsub.f32 %v3961, %v3965
      %v3968 = vmul.f32 %v3652, 2.0
      %v3969 = vmul.f32 %v3657, 2.0
      %v3970 = vmul.f32 %v3968, %v2370
      %v3971 = vmul.f32 %v3969, %v2375
      %v3972 = vadd.f32 %v3970, 0.0001
      %v3973 = vadd.f32 %v3971, 0.0001
      %v3974 = vmul.f32 %v3966, 2.0
      %v3975 = vmul.f32 %v3967, 2.0
      %v3976 = vadd.f32 %v3974, 0.0009
      %v3977 = vadd.f32 %v3975, 0.0009
      %v3978 = vmul.f32 %v3972, %v3976
      %v3979 = vmul.f32 %v3973, %v3977
      %v3980 = vadd.f32 %v3810, %v2378
      %v3981 = vadd.f32 %v3811, %v2379
      %v3982 = vadd.f32 %v3980, 0.0001
      %v3983 = vadd.f32 %v3981, 0.0001
      %v3984 = vadd.f32 %v3812, %v2532
      %v3985 = vadd.f32 %v3813, %v2533
      %v3986 = vmul.f32 %v3982, %v3984
      %v3987 = vmul.f32 %v3983, %v3985
      %v3988 = vrcp.pop %v3986
      %v3989 = vrcp.pop %v3987
      %v3990 = vmul.f32 %v3978, %v3988
      %v3991 = vmul.f32 %v3979, %v3989
      %v3992 = vmax.f32 %v3812, 0.0001
      %v3993 = vmax.f32 %v3813, 0.0001
      %v3994 = vmul.f32 %v3992, %v3990
      %v3995 = vmul.f32 %v3993, %v3991
      %v3996 = vadd.f32 %v3506, %v3994
      %v3997 = vadd.f32 %v3507, %v3995
      %v3998 = vadd.f32 %v3508, %v3992
      %v3999 = vadd.f32 %v3509, %v3993
      %v4000 = vadd.f32 %v3998, 1e-07
      %v4001 = vadd.f32 %v3999, 1e-07
      %v4002 = vrcp.pop %v4000
      %v4003 = vrcp.pop %v4001
      %v4004 = vmul.f32 %v3996, %v4002
      %v4005 = vmul.f32 %v3997, %v4003
      %v4006 = vsel %vm352, %v4004, 0.0
      %v4007 = vsel %vm352, %v4005, 0.0
      %v4008 = vadd.f32 %v4006, %v4007
      %4009 = vadd.xlane.f32.xlu0 %v4008
      %v4010 = vpop.xlane.xlu0 %4009
      %v4011 = vrot.slane %v4010, 4
      %v4012 = vadd.f32 %v4010, %v4011
      %v4013 = vrot.slane %v4012, 2
      %v4014 = vadd.f32 %v4012, %v4013
      %v4015 = vrot.slane %v4014, 1
      %v4016 = vadd.f32 %v4014, %v4015
      %s4017 = vtos %v4016
      %s4018 = sadd.f32 %s2215, %s4017
      %s4019 = scalar_lea.vmem %s0, 32
      %v4020 = vld [vmem:[%s4019] sm:$0xff]
      %v4021 = vld [vmem:[%s4019 + $0x8] sm:$0xff]
      %s4022 = scalar_lea.vmem %s1, 32
      %v4023 = vld [vmem:[%s4022] sm:$0xff]
      %v4024 = vld [vmem:[%s4022 + $0x8] sm:$0xff]
      %4025 = vmatprep.subr.mxu0 0.0
      %4026 = vmatpush1.msra.mxu0 %v4020
      %4027 = vmatprep.subr.mxu0 0.0
      %4028 = vmatpush1.msra.mxu0 %v4021
      %4029 = vmatprep.subr.mxu0 0.0
      %4030 = vmatpush1.msra.mxu0 0.0
      %4031 = vmatprep.subr.mxu0 0.0
      %4032 = vmatpush1.msra.mxu0 0.0
      %4033 = vmatprep.subr.mxu0 0.0
      %4034 = vmatpush1.msra.mxu0 0.0
      %4035 = vmatprep.subr.mxu0 0.0
      %4036 = vmatpush1.msra.mxu0 0.0
      %4037 = vmatprep.subr.mxu0 0.0
      %4038 = vmatpush1.msra.mxu0 0.0
      %4039 = vmatprep.subr.mxu0 0.0
      %4040 = vmatpush1.msra.mxu0 0.0
      %4041 = vmatprep.subr.mxu0 0.0
      %4042 = vmatpush1.msra.mxu0 0.0
      %4043 = vmatprep.subr.mxu0 0.0
      %4044 = vmatpush1.msra.mxu0 0.0
      %4045 = vmatprep.subr.mxu0 0.0
      %4046 = vmatpush1.msra.mxu0 0.0
      %4047 = vmatprep.subr.mxu0 0.0
      %4048 = vmatpush1.msra.mxu0 0.0
      %4049 = vmatprep.subr.mxu0 0.0
      %4050 = vmatpush1.msra.mxu0 0.0
      %4051 = vmatprep.subr.mxu0 0.0
      %4052 = vmatpush1.msra.mxu0 0.0
      %4053 = vmatprep.subr.mxu0 0.0
      %4054 = vmatpush1.msra.mxu0 0.0
      %4055 = vmatprep.subr.mxu0 0.0
      %4056 = vmatpush1.msra.mxu0 0.0
      %4057 = vmatprep.subr.mxu0 0.0
      %4058 = vmatpush1.msra.mxu0 0.0
      %4059 = vmatprep.subr.mxu0 0.0
      %4060 = vmatpush1.msra.mxu0 0.0
      %4061 = vmatprep.subr.mxu0 0.0
      %4062 = vmatpush1.msra.mxu0 0.0
      %4063 = vmatprep.subr.mxu0 0.0
      %4064 = vmatpush1.msra.mxu0 0.0
      %4065 = vmatprep.subr.mxu0 0.0
      %4066 = vmatpush1.msra.mxu0 0.0
      %4067 = vmatprep.subr.mxu0 0.0
      %4068 = vmatpush1.msra.mxu0 0.0
      %4069 = vmatprep.subr.mxu0 0.0
      %4070 = vmatpush1.msra.mxu0 0.0
      %4071 = vmatprep.subr.mxu0 0.0
      %4072 = vmatpush1.msra.mxu0 0.0
      %4073 = vmatprep.subr.mxu0 0.0
      %4074 = vmatpush1.msra.mxu0 0.0
      %4075 = vmatprep.subr.mxu0 0.0
      %4076 = vmatpush1.msra.mxu0 0.0
      %4077 = vmatprep.subr.mxu0 0.0
      %4078 = vmatpush1.msra.mxu0 0.0
      %4079 = vmatprep.subr.mxu0 0.0
      %4080 = vmatpush1.msra.mxu0 0.0
      %4081 = vmatprep.subr.mxu0 0.0
      %4082 = vmatpush1.msra.mxu0 0.0
      %4083 = vmatprep.subr.mxu0 0.0
      %4084 = vmatpush1.msra.mxu0 0.0
      %4085 = vmatprep.subr.mxu0 0.0
      %4086 = vmatpush1.msra.mxu0 0.0
      %4087 = vmatprep.subr.mxu0 0.0
      %4088 = vmatpush1.msra.mxu0 0.0
      %4089 = vmatprep.mubr.f32.mxu0 0.0
      %4090 = vmatmul.mubr.f32.gmra.mrb[0].mxu0 %v354
      %v4091 = vpop.f32.mrb[0].mxu0
      %v4092 = vadd.f32 0.0, %v4091
      %v4093 = vpop.f32.mrb[0].mxu0
      %4094 = vmatprep.mubr.f32.mxu0 0.0
      %4095 = vmatmul.mubr.f32.gmra.mrb[0].mxu0 %v357
      %v4096 = vpop.f32.mrb[0].mxu0
      %v4097 = vadd.f32 0.0, %v4096
      %v4098 = vpop.f32.mrb[0].mxu0
      %4099 = vdwg.mxu0
      %v4101 = vsel %vm352, %v4023, 0
      %v4104 = vsel %vm352, %v4024, 0
      %4106 = vmatprep.subr.mxu0 0.0
      %4107 = vmatpush1.msra.mxu0 %v4092
      %4108 = vmatprep.subr.mxu0 0.0
      %4109 = vmatpush1.msra.mxu0 %v4097
      %4110 = vmatprep.subr.mxu0 0.0
      %4111 = vmatpush1.msra.mxu0 0.0
      %4112 = vmatprep.subr.mxu0 0.0
      %4113 = vmatpush1.msra.mxu0 0.0
      %4114 = vmatprep.subr.mxu0 0.0
      %4115 = vmatpush1.msra.mxu0 0.0
      %4116 = vmatprep.subr.mxu0 0.0
      %4117 = vmatpush1.msra.mxu0 0.0
      %4118 = vmatprep.subr.mxu0 0.0
      %4119 = vmatpush1.msra.mxu0 0.0
      %4120 = vmatprep.subr.mxu0 0.0
      %4121 = vmatpush1.msra.mxu0 0.0
      %4122 = vmatprep.subr.mxu0 0.0
      %4123 = vmatpush1.msra.mxu0 0.0
      %4124 = vmatprep.subr.mxu0 0.0
      %4125 = vmatpush1.msra.mxu0 0.0
      %4126 = vmatprep.subr.mxu0 0.0
      %4127 = vmatpush1.msra.mxu0 0.0
      %4128 = vmatprep.subr.mxu0 0.0
      %4129 = vmatpush1.msra.mxu0 0.0
      %4130 = vmatprep.subr.mxu0 0.0
      %4131 = vmatpush1.msra.mxu0 0.0
      %4132 = vmatprep.subr.mxu0 0.0
      %4133 = vmatpush1.msra.mxu0 0.0
      %4134 = vmatprep.subr.mxu0 0.0
      %4135 = vmatpush1.msra.mxu0 0.0
      %4136 = vmatprep.subr.mxu0 0.0
      %4137 = vmatpush1.msra.mxu0 0.0
      %4138 = vmatprep.subr.mxu0 0.0
      %4139 = vmatpush1.msra.mxu0 0.0
      %4140 = vmatprep.subr.mxu0 0.0
      %4141 = vmatpush1.msra.mxu0 0.0
      %4142 = vmatprep.subr.mxu0 0.0
      %4143 = vmatpush1.msra.mxu0 0.0
      %4144 = vmatprep.subr.mxu0 0.0
      %4145 = vmatpush1.msra.mxu0 0.0
      %4146 = vmatprep.subr.mxu0 0.0
      %4147 = vmatpush1.msra.mxu0 0.0
      %4148 = vmatprep.subr.mxu0 0.0
      %4149 = vmatpush1.msra.mxu0 0.0
      %4150 = vmatprep.subr.mxu0 0.0
      %4151 = vmatpush1.msra.mxu0 0.0
      %4152 = vmatprep.subr.mxu0 0.0
      %4153 = vmatpush1.msra.mxu0 0.0
      %4154 = vmatprep.subr.mxu0 0.0
      %4155 = vmatpush1.msra.mxu0 0.0
      %4156 = vmatprep.subr.mxu0 0.0
      %4157 = vmatpush1.msra.mxu0 0.0
      %4158 = vmatprep.subr.mxu0 0.0
      %4159 = vmatpush1.msra.mxu0 0.0
      %4160 = vmatprep.subr.mxu0 0.0
      %4161 = vmatpush1.msra.mxu0 0.0
      %4162 = vmatprep.subr.mxu0 0.0
      %4163 = vmatpush1.msra.mxu0 0.0
      %4164 = vmatprep.subr.mxu0 0.0
      %4165 = vmatpush1.msra.mxu0 0.0
      %4166 = vmatprep.subr.mxu0 0.0
      %4167 = vmatpush1.msra.mxu0 0.0
      %4168 = vmatprep.subr.mxu0 0.0
      %4169 = vmatpush1.msra.mxu0 0.0
      %4170 = vmatprep.mubr.f32.mxu0 0.0
      %4171 = vmatmul.mubr.f32.gmra.mrb[0].mxu0 %v4101
      %v4172 = vpop.f32.mrb[0].mxu0
      %v4173 = vadd.f32 0.0, %v4172
      %v4174 = vpop.f32.mrb[0].mxu0
      %4175 = vmatprep.mubr.f32.mxu0 0.0
      %4176 = vmatmul.mubr.f32.gmra.mrb[0].mxu0 %v4104
      %v4177 = vpop.f32.mrb[0].mxu0
      %v4178 = vadd.f32 0.0, %v4177
      %v4179 = vpop.f32.mrb[0].mxu0
      %4180 = vdwg.mxu0
      %v4181 = vmul.f32 %v4173, %v4173
      %v4182 = vmul.f32 %v4178, %v4178
      %4183 = vmatprep.subr.mxu0 0.0
      %4184 = vmatpush1.msra.mxu0 %v4020
      %4185 = vmatprep.subr.mxu0 0.0
      %4186 = vmatpush1.msra.mxu0 %v4021
      %4187 = vmatprep.subr.mxu0 0.0
      %4188 = vmatpush1.msra.mxu0 0.0
      %4189 = vmatprep.subr.mxu0 0.0
      %4190 = vmatpush1.msra.mxu0 0.0
      %4191 = vmatprep.subr.mxu0 0.0
      %4192 = vmatpush1.msra.mxu0 0.0
      %4193 = vmatprep.subr.mxu0 0.0
      %4194 = vmatpush1.msra.mxu0 0.0
      %4195 = vmatprep.subr.mxu0 0.0
      %4196 = vmatpush1.msra.mxu0 0.0
      %4197 = vmatprep.subr.mxu0 0.0
      %4198 = vmatpush1.msra.mxu0 0.0
      %4199 = vmatprep.subr.mxu0 0.0
      %4200 = vmatpush1.msra.mxu0 0.0
      %4201 = vmatprep.subr.mxu0 0.0
      %4202 = vmatpush1.msra.mxu0 0.0
      %4203 = vmatprep.subr.mxu0 0.0
      %4204 = vmatpush1.msra.mxu0 0.0
      %4205 = vmatprep.subr.mxu0 0.0
      %4206 = vmatpush1.msra.mxu0 0.0
      %4207 = vmatprep.subr.mxu0 0.0
      %4208 = vmatpush1.msra.mxu0 0.0
      %4209 = vmatprep.subr.mxu0 0.0
      %4210 = vmatpush1.msra.mxu0 0.0
      %4211 = vmatprep.subr.mxu0 0.0
      %4212 = vmatpush1.msra.mxu0 0.0
      %4213 = vmatprep.subr.mxu0 0.0
      %4214 = vmatpush1.msra.mxu0 0.0
      %4215 = vmatprep.subr.mxu0 0.0
      %4216 = vmatpush1.msra.mxu0 0.0
      %4217 = vmatprep.subr.mxu0 0.0
      %4218 = vmatpush1.msra.mxu0 0.0
      %4219 = vmatprep.subr.mxu0 0.0
      %4220 = vmatpush1.msra.mxu0 0.0
      %4221 = vmatprep.subr.mxu0 0.0
      %4222 = vmatpush1.msra.mxu0 0.0
      %4223 = vmatprep.subr.mxu0 0.0
      %4224 = vmatpush1.msra.mxu0 0.0
      %4225 = vmatprep.subr.mxu0 0.0
      %4226 = vmatpush1.msra.mxu0 0.0
      %4227 = vmatprep.subr.mxu0 0.0
      %4228 = vmatpush1.msra.mxu0 0.0
      %4229 = vmatprep.subr.mxu0 0.0
      %4230 = vmatpush1.msra.mxu0 0.0
      %4231 = vmatprep.subr.mxu0 0.0
      %4232 = vmatpush1.msra.mxu0 0.0
      %4233 = vmatprep.subr.mxu0 0.0
      %4234 = vmatpush1.msra.mxu0 0.0
      %4235 = vmatprep.subr.mxu0 0.0
      %4236 = vmatpush1.msra.mxu0 0.0
      %4237 = vmatprep.subr.mxu0 0.0
      %4238 = vmatpush1.msra.mxu0 0.0
      %4239 = vmatprep.subr.mxu0 0.0
      %4240 = vmatpush1.msra.mxu0 0.0
      %4241 = vmatprep.subr.mxu0 0.0
      %4242 = vmatpush1.msra.mxu0 0.0
      %4243 = vmatprep.subr.mxu0 0.0
      %4244 = vmatpush1.msra.mxu0 0.0
      %4245 = vmatprep.subr.mxu0 0.0
      %4246 = vmatpush1.msra.mxu0 0.0
      %4247 = vmatprep.mubr.f32.mxu0 0.0
      %4248 = vmatmul.mubr.f32.gmra.mrb[0].mxu0 %v518
      %v4249 = vpop.f32.mrb[0].mxu0
      %v4250 = vadd.f32 0.0, %v4249
      %v4251 = vpop.f32.mrb[0].mxu0
      %4252 = vmatprep.mubr.f32.mxu0 0.0
      %4253 = vmatmul.mubr.f32.gmra.mrb[0].mxu0 %v521
      %v4254 = vpop.f32.mrb[0].mxu0
      %v4255 = vadd.f32 0.0, %v4254
      %v4256 = vpop.f32.mrb[0].mxu0
      %4257 = vdwg.mxu0
      %4258 = vmatprep.subr.mxu0 0.0
      %4259 = vmatpush1.msra.mxu0 %v4250
      %4260 = vmatprep.subr.mxu0 0.0
      %4261 = vmatpush1.msra.mxu0 %v4255
      %4262 = vmatprep.subr.mxu0 0.0
      %4263 = vmatpush1.msra.mxu0 0.0
      %4264 = vmatprep.subr.mxu0 0.0
      %4265 = vmatpush1.msra.mxu0 0.0
      %4266 = vmatprep.subr.mxu0 0.0
      %4267 = vmatpush1.msra.mxu0 0.0
      %4268 = vmatprep.subr.mxu0 0.0
      %4269 = vmatpush1.msra.mxu0 0.0
      %4270 = vmatprep.subr.mxu0 0.0
      %4271 = vmatpush1.msra.mxu0 0.0
      %4272 = vmatprep.subr.mxu0 0.0
      %4273 = vmatpush1.msra.mxu0 0.0
      %4274 = vmatprep.subr.mxu0 0.0
      %4275 = vmatpush1.msra.mxu0 0.0
      %4276 = vmatprep.subr.mxu0 0.0
      %4277 = vmatpush1.msra.mxu0 0.0
      %4278 = vmatprep.subr.mxu0 0.0
      %4279 = vmatpush1.msra.mxu0 0.0
      %4280 = vmatprep.subr.mxu0 0.0
      %4281 = vmatpush1.msra.mxu0 0.0
      %4282 = vmatprep.subr.mxu0 0.0
      %4283 = vmatpush1.msra.mxu0 0.0
      %4284 = vmatprep.subr.mxu0 0.0
      %4285 = vmatpush1.msra.mxu0 0.0
      %4286 = vmatprep.subr.mxu0 0.0
      %4287 = vmatpush1.msra.mxu0 0.0
      %4288 = vmatprep.subr.mxu0 0.0
      %4289 = vmatpush1.msra.mxu0 0.0
      %4290 = vmatprep.subr.mxu0 0.0
      %4291 = vmatpush1.msra.mxu0 0.0
      %4292 = vmatprep.subr.mxu0 0.0
      %4293 = vmatpush1.msra.mxu0 0.0
      %4294 = vmatprep.subr.mxu0 0.0
      %4295 = vmatpush1.msra.mxu0 0.0
      %4296 = vmatprep.subr.mxu0 0.0
      %4297 = vmatpush1.msra.mxu0 0.0
      %4298 = vmatprep.subr.mxu0 0.0
      %4299 = vmatpush1.msra.mxu0 0.0
      %4300 = vmatprep.subr.mxu0 0.0
      %4301 = vmatpush1.msra.mxu0 0.0
      %4302 = vmatprep.subr.mxu0 0.0
      %4303 = vmatpush1.msra.mxu0 0.0
      %4304 = vmatprep.subr.mxu0 0.0
      %4305 = vmatpush1.msra.mxu0 0.0
      %4306 = vmatprep.subr.mxu0 0.0
      %4307 = vmatpush1.msra.mxu0 0.0
      %4308 = vmatprep.subr.mxu0 0.0
      %4309 = vmatpush1.msra.mxu0 0.0
      %4310 = vmatprep.subr.mxu0 0.0
      %4311 = vmatpush1.msra.mxu0 0.0
      %4312 = vmatprep.subr.mxu0 0.0
      %4313 = vmatpush1.msra.mxu0 0.0
      %4314 = vmatprep.subr.mxu0 0.0
      %4315 = vmatpush1.msra.mxu0 0.0
      %4316 = vmatprep.subr.mxu0 0.0
      %4317 = vmatpush1.msra.mxu0 0.0
      %4318 = vmatprep.subr.mxu0 0.0
      %4319 = vmatpush1.msra.mxu0 0.0
      %4320 = vmatprep.subr.mxu0 0.0
      %4321 = vmatpush1.msra.mxu0 0.0
      %4322 = vmatprep.mubr.f32.mxu0 0.0
      %4323 = vmatmul.mubr.f32.gmra.mrb[0].mxu0 %v4101
      %v4324 = vpop.f32.mrb[0].mxu0
      %v4325 = vadd.f32 0.0, %v4324
      %v4326 = vpop.f32.mrb[0].mxu0
      %4327 = vmatprep.mubr.f32.mxu0 0.0
      %4328 = vmatmul.mubr.f32.gmra.mrb[0].mxu0 %v4104
      %v4329 = vpop.f32.mrb[0].mxu0
      %v4330 = vadd.f32 0.0, %v4329
      %v4331 = vpop.f32.mrb[0].mxu0
      %4332 = vdwg.mxu0
      %v4333 = vsub.f32 %v4325, %v4181
      %v4334 = vsub.f32 %v4330, %v4182
      %v4335 = vadd.f32 %v4333, 0.0009
      %v4336 = vadd.f32 %v4334, 0.0009
      %4337 = vmatprep.subr.mxu0 0.0
      %4338 = vmatpush1.msra.mxu0 %v4020
      %4339 = vmatprep.subr.mxu0 0.0
      %4340 = vmatpush1.msra.mxu0 %v4021
      %4341 = vmatprep.subr.mxu0 0.0
      %4342 = vmatpush1.msra.mxu0 0.0
      %4343 = vmatprep.subr.mxu0 0.0
      %4344 = vmatpush1.msra.mxu0 0.0
      %4345 = vmatprep.subr.mxu0 0.0
      %4346 = vmatpush1.msra.mxu0 0.0
      %4347 = vmatprep.subr.mxu0 0.0
      %4348 = vmatpush1.msra.mxu0 0.0
      %4349 = vmatprep.subr.mxu0 0.0
      %4350 = vmatpush1.msra.mxu0 0.0
      %4351 = vmatprep.subr.mxu0 0.0
      %4352 = vmatpush1.msra.mxu0 0.0
      %4353 = vmatprep.subr.mxu0 0.0
      %4354 = vmatpush1.msra.mxu0 0.0
      %4355 = vmatprep.subr.mxu0 0.0
      %4356 = vmatpush1.msra.mxu0 0.0
      %4357 = vmatprep.subr.mxu0 0.0
      %4358 = vmatpush1.msra.mxu0 0.0
      %4359 = vmatprep.subr.mxu0 0.0
      %4360 = vmatpush1.msra.mxu0 0.0
      %4361 = vmatprep.subr.mxu0 0.0
      %4362 = vmatpush1.msra.mxu0 0.0
      %4363 = vmatprep.subr.mxu0 0.0
      %4364 = vmatpush1.msra.mxu0 0.0
      %4365 = vmatprep.subr.mxu0 0.0
      %4366 = vmatpush1.msra.mxu0 0.0
      %4367 = vmatprep.subr.mxu0 0.0
      %4368 = vmatpush1.msra.mxu0 0.0
      %4369 = vmatprep.subr.mxu0 0.0
      %4370 = vmatpush1.msra.mxu0 0.0
      %4371 = vmatprep.subr.mxu0 0.0
      %4372 = vmatpush1.msra.mxu0 0.0
      %4373 = vmatprep.subr.mxu0 0.0
      %4374 = vmatpush1.msra.mxu0 0.0
      %4375 = vmatprep.subr.mxu0 0.0
      %4376 = vmatpush1.msra.mxu0 0.0
      %4377 = vmatprep.subr.mxu0 0.0
      %4378 = vmatpush1.msra.mxu0 0.0
      %4379 = vmatprep.subr.mxu0 0.0
      %4380 = vmatpush1.msra.mxu0 0.0
      %4381 = vmatprep.subr.mxu0 0.0
      %4382 = vmatpush1.msra.mxu0 0.0
      %4383 = vmatprep.subr.mxu0 0.0
      %4384 = vmatpush1.msra.mxu0 0.0
      %4385 = vmatprep.subr.mxu0 0.0
      %4386 = vmatpush1.msra.mxu0 0.0
      %4387 = vmatprep.subr.mxu0 0.0
      %4388 = vmatpush1.msra.mxu0 0.0
      %4389 = vmatprep.subr.mxu0 0.0
      %4390 = vmatpush1.msra.mxu0 0.0
      %4391 = vmatprep.subr.mxu0 0.0
      %4392 = vmatpush1.msra.mxu0 0.0
      %4393 = vmatprep.subr.mxu0 0.0
      %4394 = vmatpush1.msra.mxu0 0.0
      %4395 = vmatprep.subr.mxu0 0.0
      %4396 = vmatpush1.msra.mxu0 0.0
      %4397 = vmatprep.subr.mxu0 0.0
      %4398 = vmatpush1.msra.mxu0 0.0
      %4399 = vmatprep.subr.mxu0 0.0
      %4400 = vmatpush1.msra.mxu0 0.0
      %4401 = vmatprep.mubr.f32.mxu0 0.0
      %4402 = vmatmul.mubr.f32.gmra.mrb[0].mxu0 %v678
      %v4403 = vpop.f32.mrb[0].mxu0
      %v4404 = vadd.f32 0.0, %v4403
      %v4405 = vpop.f32.mrb[0].mxu0
      %4406 = vmatprep.mubr.f32.mxu0 0.0
      %4407 = vmatmul.mubr.f32.gmra.mrb[0].mxu0 %v681
      %v4408 = vpop.f32.mrb[0].mxu0
      %v4409 = vadd.f32 0.0, %v4408
      %v4410 = vpop.f32.mrb[0].mxu0
      %4411 = vdwg.mxu0
      %4412 = vmatprep.subr.mxu0 0.0
      %4413 = vmatpush1.msra.mxu0 %v4404
      %4414 = vmatprep.subr.mxu0 0.0
      %4415 = vmatpush1.msra.mxu0 %v4409
      %4416 = vmatprep.subr.mxu0 0.0
      %4417 = vmatpush1.msra.mxu0 0.0
      %4418 = vmatprep.subr.mxu0 0.0
      %4419 = vmatpush1.msra.mxu0 0.0
      %4420 = vmatprep.subr.mxu0 0.0
      %4421 = vmatpush1.msra.mxu0 0.0
      %4422 = vmatprep.subr.mxu0 0.0
      %4423 = vmatpush1.msra.mxu0 0.0
      %4424 = vmatprep.subr.mxu0 0.0
      %4425 = vmatpush1.msra.mxu0 0.0
      %4426 = vmatprep.subr.mxu0 0.0
      %4427 = vmatpush1.msra.mxu0 0.0
      %4428 = vmatprep.subr.mxu0 0.0
      %4429 = vmatpush1.msra.mxu0 0.0
      %4430 = vmatprep.subr.mxu0 0.0
      %4431 = vmatpush1.msra.mxu0 0.0
      %4432 = vmatprep.subr.mxu0 0.0
      %4433 = vmatpush1.msra.mxu0 0.0
      %4434 = vmatprep.subr.mxu0 0.0
      %4435 = vmatpush1.msra.mxu0 0.0
      %4436 = vmatprep.subr.mxu0 0.0
      %4437 = vmatpush1.msra.mxu0 0.0
      %4438 = vmatprep.subr.mxu0 0.0
      %4439 = vmatpush1.msra.mxu0 0.0
      %4440 = vmatprep.subr.mxu0 0.0
      %4441 = vmatpush1.msra.mxu0 0.0
      %4442 = vmatprep.subr.mxu0 0.0
      %4443 = vmatpush1.msra.mxu0 0.0
      %4444 = vmatprep.subr.mxu0 0.0
      %4445 = vmatpush1.msra.mxu0 0.0
      %4446 = vmatprep.subr.mxu0 0.0
      %4447 = vmatpush1.msra.mxu0 0.0
      %4448 = vmatprep.subr.mxu0 0.0
      %4449 = vmatpush1.msra.mxu0 0.0
      %4450 = vmatprep.subr.mxu0 0.0
      %4451 = vmatpush1.msra.mxu0 0.0
      %4452 = vmatprep.subr.mxu0 0.0
      %4453 = vmatpush1.msra.mxu0 0.0
      %4454 = vmatprep.subr.mxu0 0.0
      %4455 = vmatpush1.msra.mxu0 0.0
      %4456 = vmatprep.subr.mxu0 0.0
      %4457 = vmatpush1.msra.mxu0 0.0
      %4458 = vmatprep.subr.mxu0 0.0
      %4459 = vmatpush1.msra.mxu0 0.0
      %4460 = vmatprep.subr.mxu0 0.0
      %4461 = vmatpush1.msra.mxu0 0.0
      %4462 = vmatprep.subr.mxu0 0.0
      %4463 = vmatpush1.msra.mxu0 0.0
      %4464 = vmatprep.subr.mxu0 0.0
      %4465 = vmatpush1.msra.mxu0 0.0
      %4466 = vmatprep.subr.mxu0 0.0
      %4467 = vmatpush1.msra.mxu0 0.0
      %4468 = vmatprep.subr.mxu0 0.0
      %4469 = vmatpush1.msra.mxu0 0.0
      %4470 = vmatprep.subr.mxu0 0.0
      %4471 = vmatpush1.msra.mxu0 0.0
      %4472 = vmatprep.subr.mxu0 0.0
      %4473 = vmatpush1.msra.mxu0 0.0
      %4474 = vmatprep.subr.mxu0 0.0
      %4475 = vmatpush1.msra.mxu0 0.0
      %4476 = vmatprep.mubr.f32.mxu0 0.0
      %4477 = vmatmul.mubr.f32.gmra.mrb[0].mxu0 %v4101
      %v4478 = vpop.f32.mrb[0].mxu0
      %v4479 = vadd.f32 0.0, %v4478
      %v4480 = vpop.f32.mrb[0].mxu0
      %4481 = vmatprep.mubr.f32.mxu0 0.0
      %4482 = vmatmul.mubr.f32.gmra.mrb[0].mxu0 %v4104
      %v4483 = vpop.f32.mrb[0].mxu0
      %v4484 = vadd.f32 0.0, %v4483
      %v4485 = vpop.f32.mrb[0].mxu0
      %4486 = vdwg.mxu0
      %4487 = vmatprep.subr.mxu0 0.0
      %4488 = vmatpush1.msra.mxu0 %v4020
      %4489 = vmatprep.subr.mxu0 0.0
      %4490 = vmatpush1.msra.mxu0 %v4021
      %4491 = vmatprep.subr.mxu0 0.0
      %4492 = vmatpush1.msra.mxu0 0.0
      %4493 = vmatprep.subr.mxu0 0.0
      %4494 = vmatpush1.msra.mxu0 0.0
      %4495 = vmatprep.subr.mxu0 0.0
      %4496 = vmatpush1.msra.mxu0 0.0
      %4497 = vmatprep.subr.mxu0 0.0
      %4498 = vmatpush1.msra.mxu0 0.0
      %4499 = vmatprep.subr.mxu0 0.0
      %4500 = vmatpush1.msra.mxu0 0.0
      %4501 = vmatprep.subr.mxu0 0.0
      %4502 = vmatpush1.msra.mxu0 0.0
      %4503 = vmatprep.subr.mxu0 0.0
      %4504 = vmatpush1.msra.mxu0 0.0
      %4505 = vmatprep.subr.mxu0 0.0
      %4506 = vmatpush1.msra.mxu0 0.0
      %4507 = vmatprep.subr.mxu0 0.0
      %4508 = vmatpush1.msra.mxu0 0.0
      %4509 = vmatprep.subr.mxu0 0.0
      %4510 = vmatpush1.msra.mxu0 0.0
      %4511 = vmatprep.subr.mxu0 0.0
      %4512 = vmatpush1.msra.mxu0 0.0
      %4513 = vmatprep.subr.mxu0 0.0
      %4514 = vmatpush1.msra.mxu0 0.0
      %4515 = vmatprep.subr.mxu0 0.0
      %4516 = vmatpush1.msra.mxu0 0.0
      %4517 = vmatprep.subr.mxu0 0.0
      %4518 = vmatpush1.msra.mxu0 0.0
      %4519 = vmatprep.subr.mxu0 0.0
      %4520 = vmatpush1.msra.mxu0 0.0
      %4521 = vmatprep.subr.mxu0 0.0
      %4522 = vmatpush1.msra.mxu0 0.0
      %4523 = vmatprep.subr.mxu0 0.0
      %4524 = vmatpush1.msra.mxu0 0.0
      %4525 = vmatprep.subr.mxu0 0.0
      %4526 = vmatpush1.msra.mxu0 0.0
      %4527 = vmatprep.subr.mxu0 0.0
      %4528 = vmatpush1.msra.mxu0 0.0
      %4529 = vmatprep.subr.mxu0 0.0
      %4530 = vmatpush1.msra.mxu0 0.0
      %4531 = vmatprep.subr.mxu0 0.0
      %4532 = vmatpush1.msra.mxu0 0.0
      %4533 = vmatprep.subr.mxu0 0.0
      %4534 = vmatpush1.msra.mxu0 0.0
      %4535 = vmatprep.subr.mxu0 0.0
      %4536 = vmatpush1.msra.mxu0 0.0
      %4537 = vmatprep.subr.mxu0 0.0
      %4538 = vmatpush1.msra.mxu0 0.0
      %4539 = vmatprep.subr.mxu0 0.0
      %4540 = vmatpush1.msra.mxu0 0.0
      %4541 = vmatprep.subr.mxu0 0.0
      %4542 = vmatpush1.msra.mxu0 0.0
      %4543 = vmatprep.subr.mxu0 0.0
      %4544 = vmatpush1.msra.mxu0 0.0
      %4545 = vmatprep.subr.mxu0 0.0
      %4546 = vmatpush1.msra.mxu0 0.0
      %4547 = vmatprep.subr.mxu0 0.0
      %4548 = vmatpush1.msra.mxu0 0.0
      %4549 = vmatprep.subr.mxu0 0.0
      %4550 = vmatpush1.msra.mxu0 0.0
      %4551 = vmatprep.mubr.f32.mxu0 0.0
      %4552 = vmatmul.mubr.f32.gmra.mrb[0].mxu0 %v834
      %v4553 = vpop.f32.mrb[0].mxu0
      %v4554 = vadd.f32 0.0, %v4553
      %v4555 = vpop.f32.mrb[0].mxu0
      %4556 = vmatprep.mubr.f32.mxu0 0.0
      %4557 = vmatmul.mubr.f32.gmra.mrb[0].mxu0 %v837
      %v4558 = vpop.f32.mrb[0].mxu0
      %v4559 = vadd.f32 0.0, %v4558
      %v4560 = vpop.f32.mrb[0].mxu0
      %4561 = vdwg.mxu0
      %4562 = vmatprep.subr.mxu0 0.0
      %4563 = vmatpush1.msra.mxu0 %v4554
      %4564 = vmatprep.subr.mxu0 0.0
      %4565 = vmatpush1.msra.mxu0 %v4559
      %4566 = vmatprep.subr.mxu0 0.0
      %4567 = vmatpush1.msra.mxu0 0.0
      %4568 = vmatprep.subr.mxu0 0.0
      %4569 = vmatpush1.msra.mxu0 0.0
      %4570 = vmatprep.subr.mxu0 0.0
      %4571 = vmatpush1.msra.mxu0 0.0
      %4572 = vmatprep.subr.mxu0 0.0
      %4573 = vmatpush1.msra.mxu0 0.0
      %4574 = vmatprep.subr.mxu0 0.0
      %4575 = vmatpush1.msra.mxu0 0.0
      %4576 = vmatprep.subr.mxu0 0.0
      %4577 = vmatpush1.msra.mxu0 0.0
      %4578 = vmatprep.subr.mxu0 0.0
      %4579 = vmatpush1.msra.mxu0 0.0
      %4580 = vmatprep.subr.mxu0 0.0
      %4581 = vmatpush1.msra.mxu0 0.0
      %4582 = vmatprep.subr.mxu0 0.0
      %4583 = vmatpush1.msra.mxu0 0.0
      %4584 = vmatprep.subr.mxu0 0.0
      %4585 = vmatpush1.msra.mxu0 0.0
      %4586 = vmatprep.subr.mxu0 0.0
      %4587 = vmatpush1.msra.mxu0 0.0
      %4588 = vmatprep.subr.mxu0 0.0
      %4589 = vmatpush1.msra.mxu0 0.0
      %4590 = vmatprep.subr.mxu0 0.0
      %4591 = vmatpush1.msra.mxu0 0.0
      %4592 = vmatprep.subr.mxu0 0.0
      %4593 = vmatpush1.msra.mxu0 0.0
      %4594 = vmatprep.subr.mxu0 0.0
      %4595 = vmatpush1.msra.mxu0 0.0
      %4596 = vmatprep.subr.mxu0 0.0
      %4597 = vmatpush1.msra.mxu0 0.0
      %4598 = vmatprep.subr.mxu0 0.0
      %4599 = vmatpush1.msra.mxu0 0.0
      %4600 = vmatprep.subr.mxu0 0.0
      %4601 = vmatpush1.msra.mxu0 0.0
      %4602 = vmatprep.subr.mxu0 0.0
      %4603 = vmatpush1.msra.mxu0 0.0
      %4604 = vmatprep.subr.mxu0 0.0
      %4605 = vmatpush1.msra.mxu0 0.0
      %4606 = vmatprep.subr.mxu0 0.0
      %4607 = vmatpush1.msra.mxu0 0.0
      %4608 = vmatprep.subr.mxu0 0.0
      %4609 = vmatpush1.msra.mxu0 0.0
      %4610 = vmatprep.subr.mxu0 0.0
      %4611 = vmatpush1.msra.mxu0 0.0
      %4612 = vmatprep.subr.mxu0 0.0
      %4613 = vmatpush1.msra.mxu0 0.0
      %4614 = vmatprep.subr.mxu0 0.0
      %4615 = vmatpush1.msra.mxu0 0.0
      %4616 = vmatprep.subr.mxu0 0.0
      %4617 = vmatpush1.msra.mxu0 0.0
      %4618 = vmatprep.subr.mxu0 0.0
      %4619 = vmatpush1.msra.mxu0 0.0
      %4620 = vmatprep.subr.mxu0 0.0
      %4621 = vmatpush1.msra.mxu0 0.0
      %4622 = vmatprep.subr.mxu0 0.0
      %4623 = vmatpush1.msra.mxu0 0.0
      %4624 = vmatprep.subr.mxu0 0.0
      %4625 = vmatpush1.msra.mxu0 0.0
      %4626 = vmatprep.mubr.f32.mxu0 0.0
      %4627 = vmatmul.mubr.f32.gmra.mrb[0].mxu0 %v4101
      %v4628 = vpop.f32.mrb[0].mxu0
      %v4629 = vadd.f32 0.0, %v4628
      %v4630 = vpop.f32.mrb[0].mxu0
      %4631 = vmatprep.mubr.f32.mxu0 0.0
      %4632 = vmatmul.mubr.f32.gmra.mrb[0].mxu0 %v4104
      %v4633 = vpop.f32.mrb[0].mxu0
      %v4634 = vadd.f32 0.0, %v4633
      %v4635 = vpop.f32.mrb[0].mxu0
      %4636 = vdwg.mxu0
      %v4637 = vmul.f32 %v4479, %v4479
      %v4638 = vmul.f32 %v4484, %v4484
      %v4639 = vsub.f32 %v4629, %v4637
      %v4640 = vsub.f32 %v4634, %v4638
      %4641 = vmatprep.subr.mxu0 0.0
      %4642 = vmatpush1.msra.mxu0 %v4020
      %4643 = vmatprep.subr.mxu0 0.0
      %4644 = vmatpush1.msra.mxu0 %v4021
      %4645 = vmatprep.subr.mxu0 0.0
      %4646 = vmatpush1.msra.mxu0 0.0
      %4647 = vmatprep.subr.mxu0 0.0
      %4648 = vmatpush1.msra.mxu0 0.0
      %4649 = vmatprep.subr.mxu0 0.0
      %4650 = vmatpush1.msra.mxu0 0.0
      %4651 = vmatprep.subr.mxu0 0.0
      %4652 = vmatpush1.msra.mxu0 0.0
      %4653 = vmatprep.subr.mxu0 0.0
      %4654 = vmatpush1.msra.mxu0 0.0
      %4655 = vmatprep.subr.mxu0 0.0
      %4656 = vmatpush1.msra.mxu0 0.0
      %4657 = vmatprep.subr.mxu0 0.0
      %4658 = vmatpush1.msra.mxu0 0.0
      %4659 = vmatprep.subr.mxu0 0.0
      %4660 = vmatpush1.msra.mxu0 0.0
      %4661 = vmatprep.subr.mxu0 0.0
      %4662 = vmatpush1.msra.mxu0 0.0
      %4663 = vmatprep.subr.mxu0 0.0
      %4664 = vmatpush1.msra.mxu0 0.0
      %4665 = vmatprep.subr.mxu0 0.0
      %4666 = vmatpush1.msra.mxu0 0.0
      %4667 = vmatprep.subr.mxu0 0.0
      %4668 = vmatpush1.msra.mxu0 0.0
      %4669 = vmatprep.subr.mxu0 0.0
      %4670 = vmatpush1.msra.mxu0 0.0
      %4671 = vmatprep.subr.mxu0 0.0
      %4672 = vmatpush1.msra.mxu0 0.0
      %4673 = vmatprep.subr.mxu0 0.0
      %4674 = vmatpush1.msra.mxu0 0.0
      %4675 = vmatprep.subr.mxu0 0.0
      %4676 = vmatpush1.msra.mxu0 0.0
      %4677 = vmatprep.subr.mxu0 0.0
      %4678 = vmatpush1.msra.mxu0 0.0
      %4679 = vmatprep.subr.mxu0 0.0
      %4680 = vmatpush1.msra.mxu0 0.0
      %4681 = vmatprep.subr.mxu0 0.0
      %4682 = vmatpush1.msra.mxu0 0.0
      %4683 = vmatprep.subr.mxu0 0.0
      %4684 = vmatpush1.msra.mxu0 0.0
      %4685 = vmatprep.subr.mxu0 0.0
      %4686 = vmatpush1.msra.mxu0 0.0
      %4687 = vmatprep.subr.mxu0 0.0
      %4688 = vmatpush1.msra.mxu0 0.0
      %4689 = vmatprep.subr.mxu0 0.0
      %4690 = vmatpush1.msra.mxu0 0.0
      %4691 = vmatprep.subr.mxu0 0.0
      %4692 = vmatpush1.msra.mxu0 0.0
      %4693 = vmatprep.subr.mxu0 0.0
      %4694 = vmatpush1.msra.mxu0 0.0
      %4695 = vmatprep.subr.mxu0 0.0
      %4696 = vmatpush1.msra.mxu0 0.0
      %4697 = vmatprep.subr.mxu0 0.0
      %4698 = vmatpush1.msra.mxu0 0.0
      %4699 = vmatprep.subr.mxu0 0.0
      %4700 = vmatpush1.msra.mxu0 0.0
      %4701 = vmatprep.subr.mxu0 0.0
      %4702 = vmatpush1.msra.mxu0 0.0
      %4703 = vmatprep.subr.mxu0 0.0
      %4704 = vmatpush1.msra.mxu0 0.0
      %4705 = vmatprep.mubr.f32.mxu0 0.0
      %4706 = vmatmul.mubr.f32.gmra.mrb[0].mxu0 %v994
      %v4707 = vpop.f32.mrb[0].mxu0
      %v4708 = vadd.f32 0.0, %v4707
      %v4709 = vpop.f32.mrb[0].mxu0
      %4710 = vmatprep.mubr.f32.mxu0 0.0
      %4711 = vmatmul.mubr.f32.gmra.mrb[0].mxu0 %v997
      %v4712 = vpop.f32.mrb[0].mxu0
      %v4713 = vadd.f32 0.0, %v4712
      %v4714 = vpop.f32.mrb[0].mxu0
      %4715 = vdwg.mxu0
      %4716 = vmatprep.subr.mxu0 0.0
      %4717 = vmatpush1.msra.mxu0 %v4708
      %4718 = vmatprep.subr.mxu0 0.0
      %4719 = vmatpush1.msra.mxu0 %v4713
      %4720 = vmatprep.subr.mxu0 0.0
      %4721 = vmatpush1.msra.mxu0 0.0
      %4722 = vmatprep.subr.mxu0 0.0
      %4723 = vmatpush1.msra.mxu0 0.0
      %4724 = vmatprep.subr.mxu0 0.0
      %4725 = vmatpush1.msra.mxu0 0.0
      %4726 = vmatprep.subr.mxu0 0.0
      %4727 = vmatpush1.msra.mxu0 0.0
      %4728 = vmatprep.subr.mxu0 0.0
      %4729 = vmatpush1.msra.mxu0 0.0
      %4730 = vmatprep.subr.mxu0 0.0
      %4731 = vmatpush1.msra.mxu0 0.0
      %4732 = vmatprep.subr.mxu0 0.0
      %4733 = vmatpush1.msra.mxu0 0.0
      %4734 = vmatprep.subr.mxu0 0.0
      %4735 = vmatpush1.msra.mxu0 0.0
      %4736 = vmatprep.subr.mxu0 0.0
      %4737 = vmatpush1.msra.mxu0 0.0
      %4738 = vmatprep.subr.mxu0 0.0
      %4739 = vmatpush1.msra.mxu0 0.0
      %4740 = vmatprep.subr.mxu0 0.0
      %4741 = vmatpush1.msra.mxu0 0.0
      %4742 = vmatprep.subr.mxu0 0.0
      %4743 = vmatpush1.msra.mxu0 0.0
      %4744 = vmatprep.subr.mxu0 0.0
      %4745 = vmatpush1.msra.mxu0 0.0
      %4746 = vmatprep.subr.mxu0 0.0
      %4747 = vmatpush1.msra.mxu0 0.0
      %4748 = vmatprep.subr.mxu0 0.0
      %4749 = vmatpush1.msra.mxu0 0.0
      %4750 = vmatprep.subr.mxu0 0.0
      %4751 = vmatpush1.msra.mxu0 0.0
      %4752 = vmatprep.subr.mxu0 0.0
      %4753 = vmatpush1.msra.mxu0 0.0
      %4754 = vmatprep.subr.mxu0 0.0
      %4755 = vmatpush1.msra.mxu0 0.0
      %4756 = vmatprep.subr.mxu0 0.0
      %4757 = vmatpush1.msra.mxu0 0.0
      %4758 = vmatprep.subr.mxu0 0.0
      %4759 = vmatpush1.msra.mxu0 0.0
      %4760 = vmatprep.subr.mxu0 0.0
      %4761 = vmatpush1.msra.mxu0 0.0
      %4762 = vmatprep.subr.mxu0 0.0
      %4763 = vmatpush1.msra.mxu0 0.0
      %4764 = vmatprep.subr.mxu0 0.0
      %4765 = vmatpush1.msra.mxu0 0.0
      %4766 = vmatprep.subr.mxu0 0.0
      %4767 = vmatpush1.msra.mxu0 0.0
      %4768 = vmatprep.subr.mxu0 0.0
      %4769 = vmatpush1.msra.mxu0 0.0
      %4770 = vmatprep.subr.mxu0 0.0
      %4771 = vmatpush1.msra.mxu0 0.0
      %4772 = vmatprep.subr.mxu0 0.0
      %4773 = vmatpush1.msra.mxu0 0.0
      %4774 = vmatprep.subr.mxu0 0.0
      %4775 = vmatpush1.msra.mxu0 0.0
      %4776 = vmatprep.subr.mxu0 0.0
      %4777 = vmatpush1.msra.mxu0 0.0
      %4778 = vmatprep.subr.mxu0 0.0
      %4779 = vmatpush1.msra.mxu0 0.0
      %4780 = vmatprep.mubr.f32.mxu0 0.0
      %4781 = vmatmul.mubr.f32.gmra.mrb[0].mxu0 %v4101
      %v4782 = vpop.f32.mrb[0].mxu0
      %v4783 = vadd.f32 0.0, %v4782
      %v4784 = vpop.f32.mrb[0].mxu0
      %4785 = vmatprep.mubr.f32.mxu0 0.0
      %4786 = vmatmul.mubr.f32.gmra.mrb[0].mxu0 %v4104
      %v4787 = vpop.f32.mrb[0].mxu0
      %v4788 = vadd.f32 0.0, %v4787
      %v4789 = vpop.f32.mrb[0].mxu0
      %4790 = vdwg.mxu0
      %v4791 = vmul.f32 %v4479, %v4173
      %v4792 = vmul.f32 %v4484, %v4178
      %v4793 = vsub.f32 %v4783, %v4791
      %v4794 = vsub.f32 %v4788, %v4792
      %v4795 = vmul.f32 %v4479, 2.0
      %v4796 = vmul.f32 %v4484, 2.0
      %v4797 = vmul.f32 %v4795, %v4173
      %v4798 = vmul.f32 %v4796, %v4178
      %v4799 = vadd.f32 %v4797, 0.0001
      %v4800 = vadd.f32 %v4798, 0.0001
      %v4801 = vmul.f32 %v4793, 2.0
      %v4802 = vmul.f32 %v4794, 2.0
      %v4803 = vadd.f32 %v4801, 0.0009
      %v4804 = vadd.f32 %v4802, 0.0009
      %v4805 = vmul.f32 %v4799, %v4803
      %v4806 = vmul.f32 %v4800, %v4804
      %v4807 = vadd.f32 %v4637, %v4181
      %v4808 = vadd.f32 %v4638, %v4182
      %v4809 = vadd.f32 %v4807, 0.0001
      %v4810 = vadd.f32 %v4808, 0.0001
      %v4811 = vadd.f32 %v4639, %v4335
      %v4812 = vadd.f32 %v4640, %v4336
      %v4813 = vmul.f32 %v4809, %v4811
      %v4814 = vmul.f32 %v4810, %v4812
      %v4815 = vrcp.pop %v4813
      %v4816 = vrcp.pop %v4814
      %v4817 = vmul.f32 %v4805, %v4815
      %v4818 = vmul.f32 %v4806, %v4816
      %v4819 = vmax.f32 %v4639, 0.0001
      %v4820 = vmax.f32 %v4640, 0.0001
      %v4821 = vmul.f32 %v4819, %v4817
      %v4822 = vmul.f32 %v4820, %v4818
      %4823 = vmatprep.subr.mxu0 0.0
      %4824 = vmatpush1.msra.mxu0 %v4020
      %4825 = vmatprep.subr.mxu0 0.0
      %4826 = vmatpush1.msra.mxu0 %v4021
      %4827 = vmatprep.subr.mxu0 0.0
      %4828 = vmatpush1.msra.mxu0 0.0
      %4829 = vmatprep.subr.mxu0 0.0
      %4830 = vmatpush1.msra.mxu0 0.0
      %4831 = vmatprep.subr.mxu0 0.0
      %4832 = vmatpush1.msra.mxu0 0.0
      %4833 = vmatprep.subr.mxu0 0.0
      %4834 = vmatpush1.msra.mxu0 0.0
      %4835 = vmatprep.subr.mxu0 0.0
      %4836 = vmatpush1.msra.mxu0 0.0
      %4837 = vmatprep.subr.mxu0 0.0
      %4838 = vmatpush1.msra.mxu0 0.0
      %4839 = vmatprep.subr.mxu0 0.0
      %4840 = vmatpush1.msra.mxu0 0.0
      %4841 = vmatprep.subr.mxu0 0.0
      %4842 = vmatpush1.msra.mxu0 0.0
      %4843 = vmatprep.subr.mxu0 0.0
      %4844 = vmatpush1.msra.mxu0 0.0
      %4845 = vmatprep.subr.mxu0 0.0
      %4846 = vmatpush1.msra.mxu0 0.0
      %4847 = vmatprep.subr.mxu0 0.0
      %4848 = vmatpush1.msra.mxu0 0.0
      %4849 = vmatprep.subr.mxu0 0.0
      %4850 = vmatpush1.msra.mxu0 0.0
      %4851 = vmatprep.subr.mxu0 0.0
      %4852 = vmatpush1.msra.mxu0 0.0
      %4853 = vmatprep.subr.mxu0 0.0
      %4854 = vmatpush1.msra.mxu0 0.0
      %4855 = vmatprep.subr.mxu0 0.0
      %4856 = vmatpush1.msra.mxu0 0.0
      %4857 = vmatprep.subr.mxu0 0.0
      %4858 = vmatpush1.msra.mxu0 0.0
      %4859 = vmatprep.subr.mxu0 0.0
      %4860 = vmatpush1.msra.mxu0 0.0
      %4861 = vmatprep.subr.mxu0 0.0
      %4862 = vmatpush1.msra.mxu0 0.0
      %4863 = vmatprep.subr.mxu0 0.0
      %4864 = vmatpush1.msra.mxu0 0.0
      %4865 = vmatprep.subr.mxu0 0.0
      %4866 = vmatpush1.msra.mxu0 0.0
      %4867 = vmatprep.subr.mxu0 0.0
      %4868 = vmatpush1.msra.mxu0 0.0
      %4869 = vmatprep.subr.mxu0 0.0
      %4870 = vmatpush1.msra.mxu0 0.0
      %4871 = vmatprep.subr.mxu0 0.0
      %4872 = vmatpush1.msra.mxu0 0.0
      %4873 = vmatprep.subr.mxu0 0.0
      %4874 = vmatpush1.msra.mxu0 0.0
      %4875 = vmatprep.subr.mxu0 0.0
      %4876 = vmatpush1.msra.mxu0 0.0
      %4877 = vmatprep.subr.mxu0 0.0
      %4878 = vmatpush1.msra.mxu0 0.0
      %4879 = vmatprep.subr.mxu0 0.0
      %4880 = vmatpush1.msra.mxu0 0.0
      %4881 = vmatprep.subr.mxu0 0.0
      %4882 = vmatpush1.msra.mxu0 0.0
      %4883 = vmatprep.subr.mxu0 0.0
      %4884 = vmatpush1.msra.mxu0 0.0
      %4885 = vmatprep.subr.mxu0 0.0
      %4886 = vmatpush1.msra.mxu0 0.0
      %4887 = vmatprep.mubr.f32.mxu0 0.0
      %4888 = vmatmul.mubr.f32.gmra.mrb[0].mxu0 %v1182
      %v4889 = vpop.f32.mrb[0].mxu0
      %v4890 = vadd.f32 0.0, %v4889
      %v4891 = vpop.f32.mrb[0].mxu0
      %4892 = vmatprep.mubr.f32.mxu0 0.0
      %4893 = vmatmul.mubr.f32.gmra.mrb[0].mxu0 %v1185
      %v4894 = vpop.f32.mrb[0].mxu0
      %v4895 = vadd.f32 0.0, %v4894
      %v4896 = vpop.f32.mrb[0].mxu0
      %4897 = vdwg.mxu0
      %4898 = vmatprep.subr.mxu0 0.0
      %4899 = vmatpush1.msra.mxu0 %v4890
      %4900 = vmatprep.subr.mxu0 0.0
      %4901 = vmatpush1.msra.mxu0 %v4895
      %4902 = vmatprep.subr.mxu0 0.0
      %4903 = vmatpush1.msra.mxu0 0.0
      %4904 = vmatprep.subr.mxu0 0.0
      %4905 = vmatpush1.msra.mxu0 0.0
      %4906 = vmatprep.subr.mxu0 0.0
      %4907 = vmatpush1.msra.mxu0 0.0
      %4908 = vmatprep.subr.mxu0 0.0
      %4909 = vmatpush1.msra.mxu0 0.0
      %4910 = vmatprep.subr.mxu0 0.0
      %4911 = vmatpush1.msra.mxu0 0.0
      %4912 = vmatprep.subr.mxu0 0.0
      %4913 = vmatpush1.msra.mxu0 0.0
      %4914 = vmatprep.subr.mxu0 0.0
      %4915 = vmatpush1.msra.mxu0 0.0
      %4916 = vmatprep.subr.mxu0 0.0
      %4917 = vmatpush1.msra.mxu0 0.0
      %4918 = vmatprep.subr.mxu0 0.0
      %4919 = vmatpush1.msra.mxu0 0.0
      %4920 = vmatprep.subr.mxu0 0.0
      %4921 = vmatpush1.msra.mxu0 0.0
      %4922 = vmatprep.subr.mxu0 0.0
      %4923 = vmatpush1.msra.mxu0 0.0
      %4924 = vmatprep.subr.mxu0 0.0
      %4925 = vmatpush1.msra.mxu0 0.0
      %4926 = vmatprep.subr.mxu0 0.0
      %4927 = vmatpush1.msra.mxu0 0.0
      %4928 = vmatprep.subr.mxu0 0.0
      %4929 = vmatpush1.msra.mxu0 0.0
      %4930 = vmatprep.subr.mxu0 0.0
      %4931 = vmatpush1.msra.mxu0 0.0
      %4932 = vmatprep.subr.mxu0 0.0
      %4933 = vmatpush1.msra.mxu0 0.0
      %4934 = vmatprep.subr.mxu0 0.0
      %4935 = vmatpush1.msra.mxu0 0.0
      %4936 = vmatprep.subr.mxu0 0.0
      %4937 = vmatpush1.msra.mxu0 0.0
      %4938 = vmatprep.subr.mxu0 0.0
      %4939 = vmatpush1.msra.mxu0 0.0
      %4940 = vmatprep.subr.mxu0 0.0
      %4941 = vmatpush1.msra.mxu0 0.0
      %4942 = vmatprep.subr.mxu0 0.0
      %4943 = vmatpush1.msra.mxu0 0.0
      %4944 = vmatprep.subr.mxu0 0.0
      %4945 = vmatpush1.msra.mxu0 0.0
      %4946 = vmatprep.subr.mxu0 0.0
      %4947 = vmatpush1.msra.mxu0 0.0
      %4948 = vmatprep.subr.mxu0 0.0
      %4949 = vmatpush1.msra.mxu0 0.0
      %4950 = vmatprep.subr.mxu0 0.0
      %4951 = vmatpush1.msra.mxu0 0.0
      %4952 = vmatprep.subr.mxu0 0.0
      %4953 = vmatpush1.msra.mxu0 0.0
      %4954 = vmatprep.subr.mxu0 0.0
      %4955 = vmatpush1.msra.mxu0 0.0
      %4956 = vmatprep.subr.mxu0 0.0
      %4957 = vmatpush1.msra.mxu0 0.0
      %4958 = vmatprep.subr.mxu0 0.0
      %4959 = vmatpush1.msra.mxu0 0.0
      %4960 = vmatprep.subr.mxu0 0.0
      %4961 = vmatpush1.msra.mxu0 0.0
      %4962 = vmatprep.mubr.f32.mxu0 0.0
      %4963 = vmatmul.mubr.f32.gmra.mrb[0].mxu0 %v4101
      %v4964 = vpop.f32.mrb[0].mxu0
      %v4965 = vadd.f32 0.0, %v4964
      %v4966 = vpop.f32.mrb[0].mxu0
      %4967 = vmatprep.mubr.f32.mxu0 0.0
      %4968 = vmatmul.mubr.f32.gmra.mrb[0].mxu0 %v4104
      %v4969 = vpop.f32.mrb[0].mxu0
      %v4970 = vadd.f32 0.0, %v4969
      %v4971 = vpop.f32.mrb[0].mxu0
      %4972 = vdwg.mxu0
      %4973 = vmatprep.subr.mxu0 0.0
      %4974 = vmatpush1.msra.mxu0 %v4020
      %4975 = vmatprep.subr.mxu0 0.0
      %4976 = vmatpush1.msra.mxu0 %v4021
      %4977 = vmatprep.subr.mxu0 0.0
      %4978 = vmatpush1.msra.mxu0 0.0
      %4979 = vmatprep.subr.mxu0 0.0
      %4980 = vmatpush1.msra.mxu0 0.0
      %4981 = vmatprep.subr.mxu0 0.0
      %4982 = vmatpush1.msra.mxu0 0.0
      %4983 = vmatprep.subr.mxu0 0.0
      %4984 = vmatpush1.msra.mxu0 0.0
      %4985 = vmatprep.subr.mxu0 0.0
      %4986 = vmatpush1.msra.mxu0 0.0
      %4987 = vmatprep.subr.mxu0 0.0
      %4988 = vmatpush1.msra.mxu0 0.0
      %4989 = vmatprep.subr.mxu0 0.0
      %4990 = vmatpush1.msra.mxu0 0.0
      %4991 = vmatprep.subr.mxu0 0.0
      %4992 = vmatpush1.msra.mxu0 0.0
      %4993 = vmatprep.subr.mxu0 0.0
      %4994 = vmatpush1.msra.mxu0 0.0
      %4995 = vmatprep.subr.mxu0 0.0
      %4996 = vmatpush1.msra.mxu0 0.0
      %4997 = vmatprep.subr.mxu0 0.0
      %4998 = vmatpush1.msra.mxu0 0.0
      %4999 = vmatprep.subr.mxu0 0.0
      %5000 = vmatpush1.msra.mxu0 0.0
      %5001 = vmatprep.subr.mxu0 0.0
      %5002 = vmatpush1.msra.mxu0 0.0
      %5003 = vmatprep.subr.mxu0 0.0
      %5004 = vmatpush1.msra.mxu0 0.0
      %5005 = vmatprep.subr.mxu0 0.0
      %5006 = vmatpush1.msra.mxu0 0.0
      %5007 = vmatprep.subr.mxu0 0.0
      %5008 = vmatpush1.msra.mxu0 0.0
      %5009 = vmatprep.subr.mxu0 0.0
      %5010 = vmatpush1.msra.mxu0 0.0
      %5011 = vmatprep.subr.mxu0 0.0
      %5012 = vmatpush1.msra.mxu0 0.0
      %5013 = vmatprep.subr.mxu0 0.0
      %5014 = vmatpush1.msra.mxu0 0.0
      %5015 = vmatprep.subr.mxu0 0.0
      %5016 = vmatpush1.msra.mxu0 0.0
      %5017 = vmatprep.subr.mxu0 0.0
      %5018 = vmatpush1.msra.mxu0 0.0
      %5019 = vmatprep.subr.mxu0 0.0
      %5020 = vmatpush1.msra.mxu0 0.0
      %5021 = vmatprep.subr.mxu0 0.0
      %5022 = vmatpush1.msra.mxu0 0.0
      %5023 = vmatprep.subr.mxu0 0.0
      %5024 = vmatpush1.msra.mxu0 0.0
      %5025 = vmatprep.subr.mxu0 0.0
      %5026 = vmatpush1.msra.mxu0 0.0
      %5027 = vmatprep.subr.mxu0 0.0
      %5028 = vmatpush1.msra.mxu0 0.0
      %5029 = vmatprep.subr.mxu0 0.0
      %5030 = vmatpush1.msra.mxu0 0.0
      %5031 = vmatprep.subr.mxu0 0.0
      %5032 = vmatpush1.msra.mxu0 0.0
      %5033 = vmatprep.subr.mxu0 0.0
      %5034 = vmatpush1.msra.mxu0 0.0
      %5035 = vmatprep.subr.mxu0 0.0
      %5036 = vmatpush1.msra.mxu0 0.0
      %5037 = vmatprep.mubr.f32.mxu0 0.0
      %5038 = vmatmul.mubr.f32.gmra.mrb[0].mxu0 %v1338
      %v5039 = vpop.f32.mrb[0].mxu0
      %v5040 = vadd.f32 0.0, %v5039
      %v5041 = vpop.f32.mrb[0].mxu0
      %5042 = vmatprep.mubr.f32.mxu0 0.0
      %5043 = vmatmul.mubr.f32.gmra.mrb[0].mxu0 %v1341
      %v5044 = vpop.f32.mrb[0].mxu0
      %v5045 = vadd.f32 0.0, %v5044
      %v5046 = vpop.f32.mrb[0].mxu0
      %5047 = vdwg.mxu0
      %5048 = vmatprep.subr.mxu0 0.0
      %5049 = vmatpush1.msra.mxu0 %v5040
      %5050 = vmatprep.subr.mxu0 0.0
      %5051 = vmatpush1.msra.mxu0 %v5045
      %5052 = vmatprep.subr.mxu0 0.0
      %5053 = vmatpush1.msra.mxu0 0.0
      %5054 = vmatprep.subr.mxu0 0.0
      %5055 = vmatpush1.msra.mxu0 0.0
      %5056 = vmatprep.subr.mxu0 0.0
      %5057 = vmatpush1.msra.mxu0 0.0
      %5058 = vmatprep.subr.mxu0 0.0
      %5059 = vmatpush1.msra.mxu0 0.0
      %5060 = vmatprep.subr.mxu0 0.0
      %5061 = vmatpush1.msra.mxu0 0.0
      %5062 = vmatprep.subr.mxu0 0.0
      %5063 = vmatpush1.msra.mxu0 0.0
      %5064 = vmatprep.subr.mxu0 0.0
      %5065 = vmatpush1.msra.mxu0 0.0
      %5066 = vmatprep.subr.mxu0 0.0
      %5067 = vmatpush1.msra.mxu0 0.0
      %5068 = vmatprep.subr.mxu0 0.0
      %5069 = vmatpush1.msra.mxu0 0.0
      %5070 = vmatprep.subr.mxu0 0.0
      %5071 = vmatpush1.msra.mxu0 0.0
      %5072 = vmatprep.subr.mxu0 0.0
      %5073 = vmatpush1.msra.mxu0 0.0
      %5074 = vmatprep.subr.mxu0 0.0
      %5075 = vmatpush1.msra.mxu0 0.0
      %5076 = vmatprep.subr.mxu0 0.0
      %5077 = vmatpush1.msra.mxu0 0.0
      %5078 = vmatprep.subr.mxu0 0.0
      %5079 = vmatpush1.msra.mxu0 0.0
      %5080 = vmatprep.subr.mxu0 0.0
      %5081 = vmatpush1.msra.mxu0 0.0
      %5082 = vmatprep.subr.mxu0 0.0
      %5083 = vmatpush1.msra.mxu0 0.0
      %5084 = vmatprep.subr.mxu0 0.0
      %5085 = vmatpush1.msra.mxu0 0.0
      %5086 = vmatprep.subr.mxu0 0.0
      %5087 = vmatpush1.msra.mxu0 0.0
      %5088 = vmatprep.subr.mxu0 0.0
      %5089 = vmatpush1.msra.mxu0 0.0
      %5090 = vmatprep.subr.mxu0 0.0
      %5091 = vmatpush1.msra.mxu0 0.0
      %5092 = vmatprep.subr.mxu0 0.0
      %5093 = vmatpush1.msra.mxu0 0.0
      %5094 = vmatprep.subr.mxu0 0.0
      %5095 = vmatpush1.msra.mxu0 0.0
      %5096 = vmatprep.subr.mxu0 0.0
      %5097 = vmatpush1.msra.mxu0 0.0
      %5098 = vmatprep.subr.mxu0 0.0
      %5099 = vmatpush1.msra.mxu0 0.0
      %5100 = vmatprep.subr.mxu0 0.0
      %5101 = vmatpush1.msra.mxu0 0.0
      %5102 = vmatprep.subr.mxu0 0.0
      %5103 = vmatpush1.msra.mxu0 0.0
      %5104 = vmatprep.subr.mxu0 0.0
      %5105 = vmatpush1.msra.mxu0 0.0
      %5106 = vmatprep.subr.mxu0 0.0
      %5107 = vmatpush1.msra.mxu0 0.0
      %5108 = vmatprep.subr.mxu0 0.0
      %5109 = vmatpush1.msra.mxu0 0.0
      %5110 = vmatprep.subr.mxu0 0.0
      %5111 = vmatpush1.msra.mxu0 0.0
      %5112 = vmatprep.mubr.f32.mxu0 0.0
      %5113 = vmatmul.mubr.f32.gmra.mrb[0].mxu0 %v4101
      %v5114 = vpop.f32.mrb[0].mxu0
      %v5115 = vadd.f32 0.0, %v5114
      %v5116 = vpop.f32.mrb[0].mxu0
      %5117 = vmatprep.mubr.f32.mxu0 0.0
      %5118 = vmatmul.mubr.f32.gmra.mrb[0].mxu0 %v4104
      %v5119 = vpop.f32.mrb[0].mxu0
      %v5120 = vadd.f32 0.0, %v5119
      %v5121 = vpop.f32.mrb[0].mxu0
      %5122 = vdwg.mxu0
      %v5123 = vmul.f32 %v4965, %v4965
      %v5124 = vmul.f32 %v4970, %v4970
      %v5125 = vsub.f32 %v5115, %v5123
      %v5126 = vsub.f32 %v5120, %v5124
      %5127 = vmatprep.subr.mxu0 0.0
      %5128 = vmatpush1.msra.mxu0 %v4020
      %5129 = vmatprep.subr.mxu0 0.0
      %5130 = vmatpush1.msra.mxu0 %v4021
      %5131 = vmatprep.subr.mxu0 0.0
      %5132 = vmatpush1.msra.mxu0 0.0
      %5133 = vmatprep.subr.mxu0 0.0
      %5134 = vmatpush1.msra.mxu0 0.0
      %5135 = vmatprep.subr.mxu0 0.0
      %5136 = vmatpush1.msra.mxu0 0.0
      %5137 = vmatprep.subr.mxu0 0.0
      %5138 = vmatpush1.msra.mxu0 0.0
      %5139 = vmatprep.subr.mxu0 0.0
      %5140 = vmatpush1.msra.mxu0 0.0
      %5141 = vmatprep.subr.mxu0 0.0
      %5142 = vmatpush1.msra.mxu0 0.0
      %5143 = vmatprep.subr.mxu0 0.0
      %5144 = vmatpush1.msra.mxu0 0.0
      %5145 = vmatprep.subr.mxu0 0.0
      %5146 = vmatpush1.msra.mxu0 0.0
      %5147 = vmatprep.subr.mxu0 0.0
      %5148 = vmatpush1.msra.mxu0 0.0
      %5149 = vmatprep.subr.mxu0 0.0
      %5150 = vmatpush1.msra.mxu0 0.0
      %5151 = vmatprep.subr.mxu0 0.0
      %5152 = vmatpush1.msra.mxu0 0.0
      %5153 = vmatprep.subr.mxu0 0.0
      %5154 = vmatpush1.msra.mxu0 0.0
      %5155 = vmatprep.subr.mxu0 0.0
      %5156 = vmatpush1.msra.mxu0 0.0
      %5157 = vmatprep.subr.mxu0 0.0
      %5158 = vmatpush1.msra.mxu0 0.0
      %5159 = vmatprep.subr.mxu0 0.0
      %5160 = vmatpush1.msra.mxu0 0.0
      %5161 = vmatprep.subr.mxu0 0.0
      %5162 = vmatpush1.msra.mxu0 0.0
      %5163 = vmatprep.subr.mxu0 0.0
      %5164 = vmatpush1.msra.mxu0 0.0
      %5165 = vmatprep.subr.mxu0 0.0
      %5166 = vmatpush1.msra.mxu0 0.0
      %5167 = vmatprep.subr.mxu0 0.0
      %5168 = vmatpush1.msra.mxu0 0.0
      %5169 = vmatprep.subr.mxu0 0.0
      %5170 = vmatpush1.msra.mxu0 0.0
      %5171 = vmatprep.subr.mxu0 0.0
      %5172 = vmatpush1.msra.mxu0 0.0
      %5173 = vmatprep.subr.mxu0 0.0
      %5174 = vmatpush1.msra.mxu0 0.0
      %5175 = vmatprep.subr.mxu0 0.0
      %5176 = vmatpush1.msra.mxu0 0.0
      %5177 = vmatprep.subr.mxu0 0.0
      %5178 = vmatpush1.msra.mxu0 0.0
      %5179 = vmatprep.subr.mxu0 0.0
      %5180 = vmatpush1.msra.mxu0 0.0
      %5181 = vmatprep.subr.mxu0 0.0
      %5182 = vmatpush1.msra.mxu0 0.0
      %5183 = vmatprep.subr.mxu0 0.0
      %5184 = vmatpush1.msra.mxu0 0.0
      %5185 = vmatprep.subr.mxu0 0.0
      %5186 = vmatpush1.msra.mxu0 0.0
      %5187 = vmatprep.subr.mxu0 0.0
      %5188 = vmatpush1.msra.mxu0 0.0
      %5189 = vmatprep.subr.mxu0 0.0
      %5190 = vmatpush1.msra.mxu0 0.0
      %5191 = vmatprep.mubr.f32.mxu0 0.0
      %5192 = vmatmul.mubr.f32.gmra.mrb[0].mxu0 %v1498
      %v5193 = vpop.f32.mrb[0].mxu0
      %v5194 = vadd.f32 0.0, %v5193
      %v5195 = vpop.f32.mrb[0].mxu0
      %5196 = vmatprep.mubr.f32.mxu0 0.0
      %5197 = vmatmul.mubr.f32.gmra.mrb[0].mxu0 %v1501
      %v5198 = vpop.f32.mrb[0].mxu0
      %v5199 = vadd.f32 0.0, %v5198
      %v5200 = vpop.f32.mrb[0].mxu0
      %5201 = vdwg.mxu0
      %5202 = vmatprep.subr.mxu0 0.0
      %5203 = vmatpush1.msra.mxu0 %v5194
      %5204 = vmatprep.subr.mxu0 0.0
      %5205 = vmatpush1.msra.mxu0 %v5199
      %5206 = vmatprep.subr.mxu0 0.0
      %5207 = vmatpush1.msra.mxu0 0.0
      %5208 = vmatprep.subr.mxu0 0.0
      %5209 = vmatpush1.msra.mxu0 0.0
      %5210 = vmatprep.subr.mxu0 0.0
      %5211 = vmatpush1.msra.mxu0 0.0
      %5212 = vmatprep.subr.mxu0 0.0
      %5213 = vmatpush1.msra.mxu0 0.0
      %5214 = vmatprep.subr.mxu0 0.0
      %5215 = vmatpush1.msra.mxu0 0.0
      %5216 = vmatprep.subr.mxu0 0.0
      %5217 = vmatpush1.msra.mxu0 0.0
      %5218 = vmatprep.subr.mxu0 0.0
      %5219 = vmatpush1.msra.mxu0 0.0
      %5220 = vmatprep.subr.mxu0 0.0
      %5221 = vmatpush1.msra.mxu0 0.0
      %5222 = vmatprep.subr.mxu0 0.0
      %5223 = vmatpush1.msra.mxu0 0.0
      %5224 = vmatprep.subr.mxu0 0.0
      %5225 = vmatpush1.msra.mxu0 0.0
      %5226 = vmatprep.subr.mxu0 0.0
      %5227 = vmatpush1.msra.mxu0 0.0
      %5228 = vmatprep.subr.mxu0 0.0
      %5229 = vmatpush1.msra.mxu0 0.0
      %5230 = vmatprep.subr.mxu0 0.0
      %5231 = vmatpush1.msra.mxu0 0.0
      %5232 = vmatprep.subr.mxu0 0.0
      %5233 = vmatpush1.msra.mxu0 0.0
      %5234 = vmatprep.subr.mxu0 0.0
      %5235 = vmatpush1.msra.mxu0 0.0
      %5236 = vmatprep.subr.mxu0 0.0
      %5237 = vmatpush1.msra.mxu0 0.0
      %5238 = vmatprep.subr.mxu0 0.0
      %5239 = vmatpush1.msra.mxu0 0.0
      %5240 = vmatprep.subr.mxu0 0.0
      %5241 = vmatpush1.msra.mxu0 0.0
      %5242 = vmatprep.subr.mxu0 0.0
      %5243 = vmatpush1.msra.mxu0 0.0
      %5244 = vmatprep.subr.mxu0 0.0
      %5245 = vmatpush1.msra.mxu0 0.0
      %5246 = vmatprep.subr.mxu0 0.0
      %5247 = vmatpush1.msra.mxu0 0.0
      %5248 = vmatprep.subr.mxu0 0.0
      %5249 = vmatpush1.msra.mxu0 0.0
      %5250 = vmatprep.subr.mxu0 0.0
      %5251 = vmatpush1.msra.mxu0 0.0
      %5252 = vmatprep.subr.mxu0 0.0
      %5253 = vmatpush1.msra.mxu0 0.0
      %5254 = vmatprep.subr.mxu0 0.0
      %5255 = vmatpush1.msra.mxu0 0.0
      %5256 = vmatprep.subr.mxu0 0.0
      %5257 = vmatpush1.msra.mxu0 0.0
      %5258 = vmatprep.subr.mxu0 0.0
      %5259 = vmatpush1.msra.mxu0 0.0
      %5260 = vmatprep.subr.mxu0 0.0
      %5261 = vmatpush1.msra.mxu0 0.0
      %5262 = vmatprep.subr.mxu0 0.0
      %5263 = vmatpush1.msra.mxu0 0.0
      %5264 = vmatprep.subr.mxu0 0.0
      %5265 = vmatpush1.msra.mxu0 0.0
      %5266 = vmatprep.mubr.f32.mxu0 0.0
      %5267 = vmatmul.mubr.f32.gmra.mrb[0].mxu0 %v4101
      %v5268 = vpop.f32.mrb[0].mxu0
      %v5269 = vadd.f32 0.0, %v5268
      %v5270 = vpop.f32.mrb[0].mxu0
      %5271 = vmatprep.mubr.f32.mxu0 0.0
      %5272 = vmatmul.mubr.f32.gmra.mrb[0].mxu0 %v4104
      %v5273 = vpop.f32.mrb[0].mxu0
      %v5274 = vadd.f32 0.0, %v5273
      %v5275 = vpop.f32.mrb[0].mxu0
      %5276 = vdwg.mxu0
      %v5277 = vmul.f32 %v4965, %v4173
      %v5278 = vmul.f32 %v4970, %v4178
      %v5279 = vsub.f32 %v5269, %v5277
      %v5280 = vsub.f32 %v5274, %v5278
      %v5281 = vmul.f32 %v4965, 2.0
      %v5282 = vmul.f32 %v4970, 2.0
      %v5283 = vmul.f32 %v5281, %v4173
      %v5284 = vmul.f32 %v5282, %v4178
      %v5285 = vadd.f32 %v5283, 0.0001
      %v5286 = vadd.f32 %v5284, 0.0001
      %v5287 = vmul.f32 %v5279, 2.0
      %v5288 = vmul.f32 %v5280, 2.0
      %v5289 = vadd.f32 %v5287, 0.0009
      %v5290 = vadd.f32 %v5288, 0.0009
      %v5291 = vmul.f32 %v5285, %v5289
      %v5292 = vmul.f32 %v5286, %v5290
      %v5293 = vadd.f32 %v5123, %v4181
      %v5294 = vadd.f32 %v5124, %v4182
      %v5295 = vadd.f32 %v5293, 0.0001
      %v5296 = vadd.f32 %v5294, 0.0001
      %v5297 = vadd.f32 %v5125, %v4335
      %v5298 = vadd.f32 %v5126, %v4336
      %v5299 = vmul.f32 %v5295, %v5297
      %v5300 = vmul.f32 %v5296, %v5298
      %v5301 = vrcp.pop %v5299
      %v5302 = vrcp.pop %v5300
      %v5303 = vmul.f32 %v5291, %v5301
      %v5304 = vmul.f32 %v5292, %v5302
      %v5305 = vmax.f32 %v5125, 0.0001
      %v5306 = vmax.f32 %v5126, 0.0001
      %v5307 = vmul.f32 %v5305, %v5303
      %v5308 = vmul.f32 %v5306, %v5304
      %v5309 = vadd.f32 %v4821, %v5307
      %v5310 = vadd.f32 %v4822, %v5308
      %v5311 = vadd.f32 %v4819, %v5305
      %v5312 = vadd.f32 %v4820, %v5306
      %5313 = vmatprep.subr.mxu0 0.0
      %5314 = vmatpush1.msra.mxu0 %v4020
      %5315 = vmatprep.subr.mxu0 0.0
      %5316 = vmatpush1.msra.mxu0 %v4021
      %5317 = vmatprep.subr.mxu0 0.0
      %5318 = vmatpush1.msra.mxu0 0.0
      %5319 = vmatprep.subr.mxu0 0.0
      %5320 = vmatpush1.msra.mxu0 0.0
      %5321 = vmatprep.subr.mxu0 0.0
      %5322 = vmatpush1.msra.mxu0 0.0
      %5323 = vmatprep.subr.mxu0 0.0
      %5324 = vmatpush1.msra.mxu0 0.0
      %5325 = vmatprep.subr.mxu0 0.0
      %5326 = vmatpush1.msra.mxu0 0.0
      %5327 = vmatprep.subr.mxu0 0.0
      %5328 = vmatpush1.msra.mxu0 0.0
      %5329 = vmatprep.subr.mxu0 0.0
      %5330 = vmatpush1.msra.mxu0 0.0
      %5331 = vmatprep.subr.mxu0 0.0
      %5332 = vmatpush1.msra.mxu0 0.0
      %5333 = vmatprep.subr.mxu0 0.0
      %5334 = vmatpush1.msra.mxu0 0.0
      %5335 = vmatprep.subr.mxu0 0.0
      %5336 = vmatpush1.msra.mxu0 0.0
      %5337 = vmatprep.subr.mxu0 0.0
      %5338 = vmatpush1.msra.mxu0 0.0
      %5339 = vmatprep.subr.mxu0 0.0
      %5340 = vmatpush1.msra.mxu0 0.0
      %5341 = vmatprep.subr.mxu0 0.0
      %5342 = vmatpush1.msra.mxu0 0.0
      %5343 = vmatprep.subr.mxu0 0.0
      %5344 = vmatpush1.msra.mxu0 0.0
      %5345 = vmatprep.subr.mxu0 0.0
      %5346 = vmatpush1.msra.mxu0 0.0
      %5347 = vmatprep.subr.mxu0 0.0
      %5348 = vmatpush1.msra.mxu0 0.0
      %5349 = vmatprep.subr.mxu0 0.0
      %5350 = vmatpush1.msra.mxu0 0.0
      %5351 = vmatprep.subr.mxu0 0.0
      %5352 = vmatpush1.msra.mxu0 0.0
      %5353 = vmatprep.subr.mxu0 0.0
      %5354 = vmatpush1.msra.mxu0 0.0
      %5355 = vmatprep.subr.mxu0 0.0
      %5356 = vmatpush1.msra.mxu0 0.0
      %5357 = vmatprep.subr.mxu0 0.0
      %5358 = vmatpush1.msra.mxu0 0.0
      %5359 = vmatprep.subr.mxu0 0.0
      %5360 = vmatpush1.msra.mxu0 0.0
      %5361 = vmatprep.subr.mxu0 0.0
      %5362 = vmatpush1.msra.mxu0 0.0
      %5363 = vmatprep.subr.mxu0 0.0
      %5364 = vmatpush1.msra.mxu0 0.0
      %5365 = vmatprep.subr.mxu0 0.0
      %5366 = vmatpush1.msra.mxu0 0.0
      %5367 = vmatprep.subr.mxu0 0.0
      %5368 = vmatpush1.msra.mxu0 0.0
      %5369 = vmatprep.subr.mxu0 0.0
      %5370 = vmatpush1.msra.mxu0 0.0
      %5371 = vmatprep.subr.mxu0 0.0
      %5372 = vmatpush1.msra.mxu0 0.0
      %5373 = vmatprep.subr.mxu0 0.0
      %5374 = vmatpush1.msra.mxu0 0.0
      %5375 = vmatprep.subr.mxu0 0.0
      %5376 = vmatpush1.msra.mxu0 0.0
      %5377 = vmatprep.mubr.f32.mxu0 0.0
      %5378 = vmatmul.mubr.f32.gmra.mrb[0].mxu0 %v1690
      %v5379 = vpop.f32.mrb[0].mxu0
      %v5380 = vadd.f32 0.0, %v5379
      %v5381 = vpop.f32.mrb[0].mxu0
      %5382 = vmatprep.mubr.f32.mxu0 0.0
      %5383 = vmatmul.mubr.f32.gmra.mrb[0].mxu0 %v1693
      %v5384 = vpop.f32.mrb[0].mxu0
      %v5385 = vadd.f32 0.0, %v5384
      %v5386 = vpop.f32.mrb[0].mxu0
      %5387 = vdwg.mxu0
      %5388 = vmatprep.subr.mxu0 0.0
      %5389 = vmatpush1.msra.mxu0 %v5380
      %5390 = vmatprep.subr.mxu0 0.0
      %5391 = vmatpush1.msra.mxu0 %v5385
      %5392 = vmatprep.subr.mxu0 0.0
      %5393 = vmatpush1.msra.mxu0 0.0
      %5394 = vmatprep.subr.mxu0 0.0
      %5395 = vmatpush1.msra.mxu0 0.0
      %5396 = vmatprep.subr.mxu0 0.0
      %5397 = vmatpush1.msra.mxu0 0.0
      %5398 = vmatprep.subr.mxu0 0.0
      %5399 = vmatpush1.msra.mxu0 0.0
      %5400 = vmatprep.subr.mxu0 0.0
      %5401 = vmatpush1.msra.mxu0 0.0
      %5402 = vmatprep.subr.mxu0 0.0
      %5403 = vmatpush1.msra.mxu0 0.0
      %5404 = vmatprep.subr.mxu0 0.0
      %5405 = vmatpush1.msra.mxu0 0.0
      %5406 = vmatprep.subr.mxu0 0.0
      %5407 = vmatpush1.msra.mxu0 0.0
      %5408 = vmatprep.subr.mxu0 0.0
      %5409 = vmatpush1.msra.mxu0 0.0
      %5410 = vmatprep.subr.mxu0 0.0
      %5411 = vmatpush1.msra.mxu0 0.0
      %5412 = vmatprep.subr.mxu0 0.0
      %5413 = vmatpush1.msra.mxu0 0.0
      %5414 = vmatprep.subr.mxu0 0.0
      %5415 = vmatpush1.msra.mxu0 0.0
      %5416 = vmatprep.subr.mxu0 0.0
      %5417 = vmatpush1.msra.mxu0 0.0
      %5418 = vmatprep.subr.mxu0 0.0
      %5419 = vmatpush1.msra.mxu0 0.0
      %5420 = vmatprep.subr.mxu0 0.0
      %5421 = vmatpush1.msra.mxu0 0.0
      %5422 = vmatprep.subr.mxu0 0.0
      %5423 = vmatpush1.msra.mxu0 0.0
      %5424 = vmatprep.subr.mxu0 0.0
      %5425 = vmatpush1.msra.mxu0 0.0
      %5426 = vmatprep.subr.mxu0 0.0
      %5427 = vmatpush1.msra.mxu0 0.0
      %5428 = vmatprep.subr.mxu0 0.0
      %5429 = vmatpush1.msra.mxu0 0.0
      %5430 = vmatprep.subr.mxu0 0.0
      %5431 = vmatpush1.msra.mxu0 0.0
      %5432 = vmatprep.subr.mxu0 0.0
      %5433 = vmatpush1.msra.mxu0 0.0
      %5434 = vmatprep.subr.mxu0 0.0
      %5435 = vmatpush1.msra.mxu0 0.0
      %5436 = vmatprep.subr.mxu0 0.0
      %5437 = vmatpush1.msra.mxu0 0.0
      %5438 = vmatprep.subr.mxu0 0.0
      %5439 = vmatpush1.msra.mxu0 0.0
      %5440 = vmatprep.subr.mxu0 0.0
      %5441 = vmatpush1.msra.mxu0 0.0
      %5442 = vmatprep.subr.mxu0 0.0
      %5443 = vmatpush1.msra.mxu0 0.0
      %5444 = vmatprep.subr.mxu0 0.0
      %5445 = vmatpush1.msra.mxu0 0.0
      %5446 = vmatprep.subr.mxu0 0.0
      %5447 = vmatpush1.msra.mxu0 0.0
      %5448 = vmatprep.subr.mxu0 0.0
      %5449 = vmatpush1.msra.mxu0 0.0
      %5450 = vmatprep.subr.mxu0 0.0
      %5451 = vmatpush1.msra.mxu0 0.0
      %5452 = vmatprep.mubr.f32.mxu0 0.0
      %5453 = vmatmul.mubr.f32.gmra.mrb[0].mxu0 %v4101
      %v5454 = vpop.f32.mrb[0].mxu0
      %v5455 = vadd.f32 0.0, %v5454
      %v5456 = vpop.f32.mrb[0].mxu0
      %5457 = vmatprep.mubr.f32.mxu0 0.0
      %5458 = vmatmul.mubr.f32.gmra.mrb[0].mxu0 %v4104
      %v5459 = vpop.f32.mrb[0].mxu0
      %v5460 = vadd.f32 0.0, %v5459
      %v5461 = vpop.f32.mrb[0].mxu0
      %5462 = vdwg.mxu0
      %5463 = vmatprep.subr.mxu0 0.0
      %5464 = vmatpush1.msra.mxu0 %v4020
      %5465 = vmatprep.subr.mxu0 0.0
      %5466 = vmatpush1.msra.mxu0 %v4021
      %5467 = vmatprep.subr.mxu0 0.0
      %5468 = vmatpush1.msra.mxu0 0.0
      %5469 = vmatprep.subr.mxu0 0.0
      %5470 = vmatpush1.msra.mxu0 0.0
      %5471 = vmatprep.subr.mxu0 0.0
      %5472 = vmatpush1.msra.mxu0 0.0
      %5473 = vmatprep.subr.mxu0 0.0
      %5474 = vmatpush1.msra.mxu0 0.0
      %5475 = vmatprep.subr.mxu0 0.0
      %5476 = vmatpush1.msra.mxu0 0.0
      %5477 = vmatprep.subr.mxu0 0.0
      %5478 = vmatpush1.msra.mxu0 0.0
      %5479 = vmatprep.subr.mxu0 0.0
      %5480 = vmatpush1.msra.mxu0 0.0
      %5481 = vmatprep.subr.mxu0 0.0
      %5482 = vmatpush1.msra.mxu0 0.0
      %5483 = vmatprep.subr.mxu0 0.0
      %5484 = vmatpush1.msra.mxu0 0.0
      %5485 = vmatprep.subr.mxu0 0.0
      %5486 = vmatpush1.msra.mxu0 0.0
      %5487 = vmatprep.subr.mxu0 0.0
      %5488 = vmatpush1.msra.mxu0 0.0
      %5489 = vmatprep.subr.mxu0 0.0
      %5490 = vmatpush1.msra.mxu0 0.0
      %5491 = vmatprep.subr.mxu0 0.0
      %5492 = vmatpush1.msra.mxu0 0.0
      %5493 = vmatprep.subr.mxu0 0.0
      %5494 = vmatpush1.msra.mxu0 0.0
      %5495 = vmatprep.subr.mxu0 0.0
      %5496 = vmatpush1.msra.mxu0 0.0
      %5497 = vmatprep.subr.mxu0 0.0
      %5498 = vmatpush1.msra.mxu0 0.0
      %5499 = vmatprep.subr.mxu0 0.0
      %5500 = vmatpush1.msra.mxu0 0.0
      %5501 = vmatprep.subr.mxu0 0.0
      %5502 = vmatpush1.msra.mxu0 0.0
      %5503 = vmatprep.subr.mxu0 0.0
      %5504 = vmatpush1.msra.mxu0 0.0
      %5505 = vmatprep.subr.mxu0 0.0
      %5506 = vmatpush1.msra.mxu0 0.0
      %5507 = vmatprep.subr.mxu0 0.0
      %5508 = vmatpush1.msra.mxu0 0.0
      %5509 = vmatprep.subr.mxu0 0.0
      %5510 = vmatpush1.msra.mxu0 0.0
      %5511 = vmatprep.subr.mxu0 0.0
      %5512 = vmatpush1.msra.mxu0 0.0
      %5513 = vmatprep.subr.mxu0 0.0
      %5514 = vmatpush1.msra.mxu0 0.0
      %5515 = vmatprep.subr.mxu0 0.0
      %5516 = vmatpush1.msra.mxu0 0.0
      %5517 = vmatprep.subr.mxu0 0.0
      %5518 = vmatpush1.msra.mxu0 0.0
      %5519 = vmatprep.subr.mxu0 0.0
      %5520 = vmatpush1.msra.mxu0 0.0
      %5521 = vmatprep.subr.mxu0 0.0
      %5522 = vmatpush1.msra.mxu0 0.0
      %5523 = vmatprep.subr.mxu0 0.0
      %5524 = vmatpush1.msra.mxu0 0.0
      %5525 = vmatprep.subr.mxu0 0.0
      %5526 = vmatpush1.msra.mxu0 0.0
      %5527 = vmatprep.mubr.f32.mxu0 0.0
      %5528 = vmatmul.mubr.f32.gmra.mrb[0].mxu0 %v1846
      %v5529 = vpop.f32.mrb[0].mxu0
      %v5530 = vadd.f32 0.0, %v5529
      %v5531 = vpop.f32.mrb[0].mxu0
      %5532 = vmatprep.mubr.f32.mxu0 0.0
      %5533 = vmatmul.mubr.f32.gmra.mrb[0].mxu0 %v1849
      %v5534 = vpop.f32.mrb[0].mxu0
      %v5535 = vadd.f32 0.0, %v5534
      %v5536 = vpop.f32.mrb[0].mxu0
      %5537 = vdwg.mxu0
      %5538 = vmatprep.subr.mxu0 0.0
      %5539 = vmatpush1.msra.mxu0 %v5530
      %5540 = vmatprep.subr.mxu0 0.0
      %5541 = vmatpush1.msra.mxu0 %v5535
      %5542 = vmatprep.subr.mxu0 0.0
      %5543 = vmatpush1.msra.mxu0 0.0
      %5544 = vmatprep.subr.mxu0 0.0
      %5545 = vmatpush1.msra.mxu0 0.0
      %5546 = vmatprep.subr.mxu0 0.0
      %5547 = vmatpush1.msra.mxu0 0.0
      %5548 = vmatprep.subr.mxu0 0.0
      %5549 = vmatpush1.msra.mxu0 0.0
      %5550 = vmatprep.subr.mxu0 0.0
      %5551 = vmatpush1.msra.mxu0 0.0
      %5552 = vmatprep.subr.mxu0 0.0
      %5553 = vmatpush1.msra.mxu0 0.0
      %5554 = vmatprep.subr.mxu0 0.0
      %5555 = vmatpush1.msra.mxu0 0.0
      %5556 = vmatprep.subr.mxu0 0.0
      %5557 = vmatpush1.msra.mxu0 0.0
      %5558 = vmatprep.subr.mxu0 0.0
      %5559 = vmatpush1.msra.mxu0 0.0
      %5560 = vmatprep.subr.mxu0 0.0
      %5561 = vmatpush1.msra.mxu0 0.0
      %5562 = vmatprep.subr.mxu0 0.0
      %5563 = vmatpush1.msra.mxu0 0.0
      %5564 = vmatprep.subr.mxu0 0.0
      %5565 = vmatpush1.msra.mxu0 0.0
      %5566 = vmatprep.subr.mxu0 0.0
      %5567 = vmatpush1.msra.mxu0 0.0
      %5568 = vmatprep.subr.mxu0 0.0
      %5569 = vmatpush1.msra.mxu0 0.0
      %5570 = vmatprep.subr.mxu0 0.0
      %5571 = vmatpush1.msra.mxu0 0.0
      %5572 = vmatprep.subr.mxu0 0.0
      %5573 = vmatpush1.msra.mxu0 0.0
      %5574 = vmatprep.subr.mxu0 0.0
      %5575 = vmatpush1.msra.mxu0 0.0
      %5576 = vmatprep.subr.mxu0 0.0
      %5577 = vmatpush1.msra.mxu0 0.0
      %5578 = vmatprep.subr.mxu0 0.0
      %5579 = vmatpush1.msra.mxu0 0.0
      %5580 = vmatprep.subr.mxu0 0.0
      %5581 = vmatpush1.msra.mxu0 0.0
      %5582 = vmatprep.subr.mxu0 0.0
      %5583 = vmatpush1.msra.mxu0 0.0
      %5584 = vmatprep.subr.mxu0 0.0
      %5585 = vmatpush1.msra.mxu0 0.0
      %5586 = vmatprep.subr.mxu0 0.0
      %5587 = vmatpush1.msra.mxu0 0.0
      %5588 = vmatprep.subr.mxu0 0.0
      %5589 = vmatpush1.msra.mxu0 0.0
      %5590 = vmatprep.subr.mxu0 0.0
      %5591 = vmatpush1.msra.mxu0 0.0
      %5592 = vmatprep.subr.mxu0 0.0
      %5593 = vmatpush1.msra.mxu0 0.0
      %5594 = vmatprep.subr.mxu0 0.0
      %5595 = vmatpush1.msra.mxu0 0.0
      %5596 = vmatprep.subr.mxu0 0.0
      %5597 = vmatpush1.msra.mxu0 0.0
      %5598 = vmatprep.subr.mxu0 0.0
      %5599 = vmatpush1.msra.mxu0 0.0
      %5600 = vmatprep.subr.mxu0 0.0
      %5601 = vmatpush1.msra.mxu0 0.0
      %5602 = vmatprep.mubr.f32.mxu0 0.0
      %5603 = vmatmul.mubr.f32.gmra.mrb[0].mxu0 %v4101
      %v5604 = vpop.f32.mrb[0].mxu0
      %v5605 = vadd.f32 0.0, %v5604
      %v5606 = vpop.f32.mrb[0].mxu0
      %5607 = vmatprep.mubr.f32.mxu0 0.0
      %5608 = vmatmul.mubr.f32.gmra.mrb[0].mxu0 %v4104
      %v5609 = vpop.f32.mrb[0].mxu0
      %v5610 = vadd.f32 0.0, %v5609
      %v5611 = vpop.f32.mrb[0].mxu0
      %5612 = vdwg.mxu0
      %v5613 = vmul.f32 %v5455, %v5455
      %v5614 = vmul.f32 %v5460, %v5460
      %v5615 = vsub.f32 %v5605, %v5613
      %v5616 = vsub.f32 %v5610, %v5614
      %5617 = vmatprep.subr.mxu0 0.0
      %5618 = vmatpush1.msra.mxu0 %v4020
      %5619 = vmatprep.subr.mxu0 0.0
      %5620 = vmatpush1.msra.mxu0 %v4021
      %5621 = vmatprep.subr.mxu0 0.0
      %5622 = vmatpush1.msra.mxu0 0.0
      %5623 = vmatprep.subr.mxu0 0.0
      %5624 = vmatpush1.msra.mxu0 0.0
      %5625 = vmatprep.subr.mxu0 0.0
      %5626 = vmatpush1.msra.mxu0 0.0
      %5627 = vmatprep.subr.mxu0 0.0
      %5628 = vmatpush1.msra.mxu0 0.0
      %5629 = vmatprep.subr.mxu0 0.0
      %5630 = vmatpush1.msra.mxu0 0.0
      %5631 = vmatprep.subr.mxu0 0.0
      %5632 = vmatpush1.msra.mxu0 0.0
      %5633 = vmatprep.subr.mxu0 0.0
      %5634 = vmatpush1.msra.mxu0 0.0
      %5635 = vmatprep.subr.mxu0 0.0
      %5636 = vmatpush1.msra.mxu0 0.0
      %5637 = vmatprep.subr.mxu0 0.0
      %5638 = vmatpush1.msra.mxu0 0.0
      %5639 = vmatprep.subr.mxu0 0.0
      %5640 = vmatpush1.msra.mxu0 0.0
      %5641 = vmatprep.subr.mxu0 0.0
      %5642 = vmatpush1.msra.mxu0 0.0
      %5643 = vmatprep.subr.mxu0 0.0
      %5644 = vmatpush1.msra.mxu0 0.0
      %5645 = vmatprep.subr.mxu0 0.0
      %5646 = vmatpush1.msra.mxu0 0.0
      %5647 = vmatprep.subr.mxu0 0.0
      %5648 = vmatpush1.msra.mxu0 0.0
      %5649 = vmatprep.subr.mxu0 0.0
      %5650 = vmatpush1.msra.mxu0 0.0
      %5651 = vmatprep.subr.mxu0 0.0
      %5652 = vmatpush1.msra.mxu0 0.0
      %5653 = vmatprep.subr.mxu0 0.0
      %5654 = vmatpush1.msra.mxu0 0.0
      %5655 = vmatprep.subr.mxu0 0.0
      %5656 = vmatpush1.msra.mxu0 0.0
      %5657 = vmatprep.subr.mxu0 0.0
      %5658 = vmatpush1.msra.mxu0 0.0
      %5659 = vmatprep.subr.mxu0 0.0
      %5660 = vmatpush1.msra.mxu0 0.0
      %5661 = vmatprep.subr.mxu0 0.0
      %5662 = vmatpush1.msra.mxu0 0.0
      %5663 = vmatprep.subr.mxu0 0.0
      %5664 = vmatpush1.msra.mxu0 0.0
      %5665 = vmatprep.subr.mxu0 0.0
      %5666 = vmatpush1.msra.mxu0 0.0
      %5667 = vmatprep.subr.mxu0 0.0
      %5668 = vmatpush1.msra.mxu0 0.0
      %5669 = vmatprep.subr.mxu0 0.0
      %5670 = vmatpush1.msra.mxu0 0.0
      %5671 = vmatprep.subr.mxu0 0.0
      %5672 = vmatpush1.msra.mxu0 0.0
      %5673 = vmatprep.subr.mxu0 0.0
      %5674 = vmatpush1.msra.mxu0 0.0
      %5675 = vmatprep.subr.mxu0 0.0
      %5676 = vmatpush1.msra.mxu0 0.0
      %5677 = vmatprep.subr.mxu0 0.0
      %5678 = vmatpush1.msra.mxu0 0.0
      %5679 = vmatprep.subr.mxu0 0.0
      %5680 = vmatpush1.msra.mxu0 0.0
      %5681 = vmatprep.mubr.f32.mxu0 0.0
      %5682 = vmatmul.mubr.f32.gmra.mrb[0].mxu0 %v2006
      %v5683 = vpop.f32.mrb[0].mxu0
      %v5684 = vadd.f32 0.0, %v5683
      %v5685 = vpop.f32.mrb[0].mxu0
      %5686 = vmatprep.mubr.f32.mxu0 0.0
      %5687 = vmatmul.mubr.f32.gmra.mrb[0].mxu0 %v2009
      %v5688 = vpop.f32.mrb[0].mxu0
      %v5689 = vadd.f32 0.0, %v5688
      %v5690 = vpop.f32.mrb[0].mxu0
      %5691 = vdwg.mxu0
      %5692 = vmatprep.subr.mxu0 0.0
      %5693 = vmatpush1.msra.mxu0 %v5684
      %5694 = vmatprep.subr.mxu0 0.0
      %5695 = vmatpush1.msra.mxu0 %v5689
      %5696 = vmatprep.subr.mxu0 0.0
      %5697 = vmatpush1.msra.mxu0 0.0
      %5698 = vmatprep.subr.mxu0 0.0
      %5699 = vmatpush1.msra.mxu0 0.0
      %5700 = vmatprep.subr.mxu0 0.0
      %5701 = vmatpush1.msra.mxu0 0.0
      %5702 = vmatprep.subr.mxu0 0.0
      %5703 = vmatpush1.msra.mxu0 0.0
      %5704 = vmatprep.subr.mxu0 0.0
      %5705 = vmatpush1.msra.mxu0 0.0
      %5706 = vmatprep.subr.mxu0 0.0
      %5707 = vmatpush1.msra.mxu0 0.0
      %5708 = vmatprep.subr.mxu0 0.0
      %5709 = vmatpush1.msra.mxu0 0.0
      %5710 = vmatprep.subr.mxu0 0.0
      %5711 = vmatpush1.msra.mxu0 0.0
      %5712 = vmatprep.subr.mxu0 0.0
      %5713 = vmatpush1.msra.mxu0 0.0
      %5714 = vmatprep.subr.mxu0 0.0
      %5715 = vmatpush1.msra.mxu0 0.0
      %5716 = vmatprep.subr.mxu0 0.0
      %5717 = vmatpush1.msra.mxu0 0.0
      %5718 = vmatprep.subr.mxu0 0.0
      %5719 = vmatpush1.msra.mxu0 0.0
      %5720 = vmatprep.subr.mxu0 0.0
      %5721 = vmatpush1.msra.mxu0 0.0
      %5722 = vmatprep.subr.mxu0 0.0
      %5723 = vmatpush1.msra.mxu0 0.0
      %5724 = vmatprep.subr.mxu0 0.0
      %5725 = vmatpush1.msra.mxu0 0.0
      %5726 = vmatprep.subr.mxu0 0.0
      %5727 = vmatpush1.msra.mxu0 0.0
      %5728 = vmatprep.subr.mxu0 0.0
      %5729 = vmatpush1.msra.mxu0 0.0
      %5730 = vmatprep.subr.mxu0 0.0
      %5731 = vmatpush1.msra.mxu0 0.0
      %5732 = vmatprep.subr.mxu0 0.0
      %5733 = vmatpush1.msra.mxu0 0.0
      %5734 = vmatprep.subr.mxu0 0.0
      %5735 = vmatpush1.msra.mxu0 0.0
      %5736 = vmatprep.subr.mxu0 0.0
      %5737 = vmatpush1.msra.mxu0 0.0
      %5738 = vmatprep.subr.mxu0 0.0
      %5739 = vmatpush1.msra.mxu0 0.0
      %5740 = vmatprep.subr.mxu0 0.0
      %5741 = vmatpush1.msra.mxu0 0.0
      %5742 = vmatprep.subr.mxu0 0.0
      %5743 = vmatpush1.msra.mxu0 0.0
      %5744 = vmatprep.subr.mxu0 0.0
      %5745 = vmatpush1.msra.mxu0 0.0
      %5746 = vmatprep.subr.mxu0 0.0
      %5747 = vmatpush1.msra.mxu0 0.0
      %5748 = vmatprep.subr.mxu0 0.0
      %5749 = vmatpush1.msra.mxu0 0.0
      %5750 = vmatprep.subr.mxu0 0.0
      %5751 = vmatpush1.msra.mxu0 0.0
      %5752 = vmatprep.subr.mxu0 0.0
      %5753 = vmatpush1.msra.mxu0 0.0
      %5754 = vmatprep.subr.mxu0 0.0
      %5755 = vmatpush1.msra.mxu0 0.0
      %5756 = vmatprep.mubr.f32.mxu0 0.0
      %5757 = vmatmul.mubr.f32.gmra.mrb[0].mxu0 %v4101
      %v5758 = vpop.f32.mrb[0].mxu0
      %v5759 = vadd.f32 0.0, %v5758
      %v5760 = vpop.f32.mrb[0].mxu0
      %5761 = vmatprep.mubr.f32.mxu0 0.0
      %5762 = vmatmul.mubr.f32.gmra.mrb[0].mxu0 %v4104
      %v5763 = vpop.f32.mrb[0].mxu0
      %v5764 = vadd.f32 0.0, %v5763
      %v5765 = vpop.f32.mrb[0].mxu0
      %5766 = vdwg.mxu0
      %v5767 = vmul.f32 %v5455, %v4173
      %v5768 = vmul.f32 %v5460, %v4178
      %v5769 = vsub.f32 %v5759, %v5767
      %v5770 = vsub.f32 %v5764, %v5768
      %v5771 = vmul.f32 %v5455, 2.0
      %v5772 = vmul.f32 %v5460, 2.0
      %v5773 = vmul.f32 %v5771, %v4173
      %v5774 = vmul.f32 %v5772, %v4178
      %v5775 = vadd.f32 %v5773, 0.0001
      %v5776 = vadd.f32 %v5774, 0.0001
      %v5777 = vmul.f32 %v5769, 2.0
      %v5778 = vmul.f32 %v5770, 2.0
      %v5779 = vadd.f32 %v5777, 0.0009
      %v5780 = vadd.f32 %v5778, 0.0009
      %v5781 = vmul.f32 %v5775, %v5779
      %v5782 = vmul.f32 %v5776, %v5780
      %v5783 = vadd.f32 %v5613, %v4181
      %v5784 = vadd.f32 %v5614, %v4182
      %v5785 = vadd.f32 %v5783, 0.0001
      %v5786 = vadd.f32 %v5784, 0.0001
      %v5787 = vadd.f32 %v5615, %v4335
      %v5788 = vadd.f32 %v5616, %v4336
      %v5789 = vmul.f32 %v5785, %v5787
      %v5790 = vmul.f32 %v5786, %v5788
      %v5791 = vrcp.pop %v5789
      %v5792 = vrcp.pop %v5790
      %v5793 = vmul.f32 %v5781, %v5791
      %v5794 = vmul.f32 %v5782, %v5792
      %v5795 = vmax.f32 %v5615, 0.0001
      %v5796 = vmax.f32 %v5616, 0.0001
      %v5797 = vmul.f32 %v5795, %v5793
      %v5798 = vmul.f32 %v5796, %v5794
      %v5799 = vadd.f32 %v5309, %v5797
      %v5800 = vadd.f32 %v5310, %v5798
      %v5801 = vadd.f32 %v5311, %v5795
      %v5802 = vadd.f32 %v5312, %v5796
      %v5803 = vadd.f32 %v5801, 1e-07
      %v5804 = vadd.f32 %v5802, 1e-07
      %v5805 = vrcp.pop %v5803
      %v5806 = vrcp.pop %v5804
      %v5807 = vmul.f32 %v5799, %v5805
      %v5808 = vmul.f32 %v5800, %v5806
      %v5809 = vsel %vm352, %v5807, 0.0
      %v5810 = vsel %vm352, %v5808, 0.0
      %v5811 = vadd.f32 %v5809, %v5810
      %5812 = vadd.xlane.f32.xlu0 %v5811
      %v5813 = vpop.xlane.xlu0 %5812
      %v5814 = vrot.slane %v5813, 4
      %v5815 = vadd.f32 %v5813, %v5814
      %v5816 = vrot.slane %v5815, 2
      %v5817 = vadd.f32 %v5815, %v5816
      %v5818 = vrot.slane %v5817, 1
      %v5819 = vadd.f32 %v5817, %v5818
      %s5820 = vtos %v5819
      %s5821 = sadd.f32 %s4018, %s5820
      %s5822 = scalar_lea.vmem %s0, 48
      %v5823 = vld [vmem:[%s5822] sm:$0xff]
      %v5824 = vld [vmem:[%s5822 + $0x8] sm:$0xff]
      %s5825 = scalar_lea.vmem %s1, 48
      %v5826 = vld [vmem:[%s5825] sm:$0xff]
      %v5827 = vld [vmem:[%s5825 + $0x8] sm:$0xff]
      %5828 = vmatprep.subr.mxu0 0.0
      %5829 = vmatpush1.msra.mxu0 %v5823
      %5830 = vmatprep.subr.mxu0 0.0
      %5831 = vmatpush1.msra.mxu0 %v5824
      %5832 = vmatprep.subr.mxu0 0.0
      %5833 = vmatpush1.msra.mxu0 0.0
      %5834 = vmatprep.subr.mxu0 0.0
      %5835 = vmatpush1.msra.mxu0 0.0
      %5836 = vmatprep.subr.mxu0 0.0
      %5837 = vmatpush1.msra.mxu0 0.0
      %5838 = vmatprep.subr.mxu0 0.0
      %5839 = vmatpush1.msra.mxu0 0.0
      %5840 = vmatprep.subr.mxu0 0.0
      %5841 = vmatpush1.msra.mxu0 0.0
      %5842 = vmatprep.subr.mxu0 0.0
      %5843 = vmatpush1.msra.mxu0 0.0
      %5844 = vmatprep.subr.mxu0 0.0
      %5845 = vmatpush1.msra.mxu0 0.0
      %5846 = vmatprep.subr.mxu0 0.0
      %5847 = vmatpush1.msra.mxu0 0.0
      %5848 = vmatprep.subr.mxu0 0.0
      %5849 = vmatpush1.msra.mxu0 0.0
      %5850 = vmatprep.subr.mxu0 0.0
      %5851 = vmatpush1.msra.mxu0 0.0
      %5852 = vmatprep.subr.mxu0 0.0
      %5853 = vmatpush1.msra.mxu0 0.0
      %5854 = vmatprep.subr.mxu0 0.0
      %5855 = vmatpush1.msra.mxu0 0.0
      %5856 = vmatprep.subr.mxu0 0.0
      %5857 = vmatpush1.msra.mxu0 0.0
      %5858 = vmatprep.subr.mxu0 0.0
      %5859 = vmatpush1.msra.mxu0 0.0
      %5860 = vmatprep.subr.mxu0 0.0
      %5861 = vmatpush1.msra.mxu0 0.0
      %5862 = vmatprep.subr.mxu0 0.0
      %5863 = vmatpush1.msra.mxu0 0.0
      %5864 = vmatprep.subr.mxu0 0.0
      %5865 = vmatpush1.msra.mxu0 0.0
      %5866 = vmatprep.subr.mxu0 0.0
      %5867 = vmatpush1.msra.mxu0 0.0
      %5868 = vmatprep.subr.mxu0 0.0
      %5869 = vmatpush1.msra.mxu0 0.0
      %5870 = vmatprep.subr.mxu0 0.0
      %5871 = vmatpush1.msra.mxu0 0.0
      %5872 = vmatprep.subr.mxu0 0.0
      %5873 = vmatpush1.msra.mxu0 0.0
      %5874 = vmatprep.subr.mxu0 0.0
      %5875 = vmatpush1.msra.mxu0 0.0
      %5876 = vmatprep.subr.mxu0 0.0
      %5877 = vmatpush1.msra.mxu0 0.0
      %5878 = vmatprep.subr.mxu0 0.0
      %5879 = vmatpush1.msra.mxu0 0.0
      %5880 = vmatprep.subr.mxu0 0.0
      %5881 = vmatpush1.msra.mxu0 0.0
      %5882 = vmatprep.subr.mxu0 0.0
      %5883 = vmatpush1.msra.mxu0 0.0
      %5884 = vmatprep.subr.mxu0 0.0
      %5885 = vmatpush1.msra.mxu0 0.0
      %5886 = vmatprep.subr.mxu0 0.0
      %5887 = vmatpush1.msra.mxu0 0.0
      %5888 = vmatprep.subr.mxu0 0.0
      %5889 = vmatpush1.msra.mxu0 0.0
      %5890 = vmatprep.subr.mxu0 0.0
      %5891 = vmatpush1.msra.mxu0 0.0
      %5892 = vmatprep.mubr.f32.mxu0 0.0
      %5893 = vmatmul.mubr.f32.gmra.mrb[0].mxu0 %v354
      %v5894 = vpop.f32.mrb[0].mxu0
      %v5895 = vadd.f32 0.0, %v5894
      %v5896 = vpop.f32.mrb[0].mxu0
      %5897 = vmatprep.mubr.f32.mxu0 0.0
      %5898 = vmatmul.mubr.f32.gmra.mrb[0].mxu0 %v357
      %v5899 = vpop.f32.mrb[0].mxu0
      %v5900 = vadd.f32 0.0, %v5899
      %v5901 = vpop.f32.mrb[0].mxu0
      %5902 = vdwg.mxu0
      %v5904 = vsel %vm352, %v5826, 0
      %v5907 = vsel %vm352, %v5827, 0
      %5909 = vmatprep.subr.mxu0 0.0
      %5910 = vmatpush1.msra.mxu0 %v5895
      %5911 = vmatprep.subr.mxu0 0.0
      %5912 = vmatpush1.msra.mxu0 %v5900
      %5913 = vmatprep.subr.mxu0 0.0
      %5914 = vmatpush1.msra.mxu0 0.0
      %5915 = vmatprep.subr.mxu0 0.0
      %5916 = vmatpush1.msra.mxu0 0.0
      %5917 = vmatprep.subr.mxu0 0.0
      %5918 = vmatpush1.msra.mxu0 0.0
      %5919 = vmatprep.subr.mxu0 0.0
      %5920 = vmatpush1.msra.mxu0 0.0
      %5921 = vmatprep.subr.mxu0 0.0
      %5922 = vmatpush1.msra.mxu0 0.0
      %5923 = vmatprep.subr.mxu0 0.0
      %5924 = vmatpush1.msra.mxu0 0.0
      %5925 = vmatprep.subr.mxu0 0.0
      %5926 = vmatpush1.msra.mxu0 0.0
      %5927 = vmatprep.subr.mxu0 0.0
      %5928 = vmatpush1.msra.mxu0 0.0
      %5929 = vmatprep.subr.mxu0 0.0
      %5930 = vmatpush1.msra.mxu0 0.0
      %5931 = vmatprep.subr.mxu0 0.0
      %5932 = vmatpush1.msra.mxu0 0.0
      %5933 = vmatprep.subr.mxu0 0.0
      %5934 = vmatpush1.msra.mxu0 0.0
      %5935 = vmatprep.subr.mxu0 0.0
      %5936 = vmatpush1.msra.mxu0 0.0
      %5937 = vmatprep.subr.mxu0 0.0
      %5938 = vmatpush1.msra.mxu0 0.0
      %5939 = vmatprep.subr.mxu0 0.0
      %5940 = vmatpush1.msra.mxu0 0.0
      %5941 = vmatprep.subr.mxu0 0.0
      %5942 = vmatpush1.msra.mxu0 0.0
      %5943 = vmatprep.subr.mxu0 0.0
      %5944 = vmatpush1.msra.mxu0 0.0
      %5945 = vmatprep.subr.mxu0 0.0
      %5946 = vmatpush1.msra.mxu0 0.0
      %5947 = vmatprep.subr.mxu0 0.0
      %5948 = vmatpush1.msra.mxu0 0.0
      %5949 = vmatprep.subr.mxu0 0.0
      %5950 = vmatpush1.msra.mxu0 0.0
      %5951 = vmatprep.subr.mxu0 0.0
      %5952 = vmatpush1.msra.mxu0 0.0
      %5953 = vmatprep.subr.mxu0 0.0
      %5954 = vmatpush1.msra.mxu0 0.0
      %5955 = vmatprep.subr.mxu0 0.0
      %5956 = vmatpush1.msra.mxu0 0.0
      %5957 = vmatprep.subr.mxu0 0.0
      %5958 = vmatpush1.msra.mxu0 0.0
      %5959 = vmatprep.subr.mxu0 0.0
      %5960 = vmatpush1.msra.mxu0 0.0
      %5961 = vmatprep.subr.mxu0 0.0
      %5962 = vmatpush1.msra.mxu0 0.0
      %5963 = vmatprep.subr.mxu0 0.0
      %5964 = vmatpush1.msra.mxu0 0.0
      %5965 = vmatprep.subr.mxu0 0.0
      %5966 = vmatpush1.msra.mxu0 0.0
      %5967 = vmatprep.subr.mxu0 0.0
      %5968 = vmatpush1.msra.mxu0 0.0
      %5969 = vmatprep.subr.mxu0 0.0
      %5970 = vmatpush1.msra.mxu0 0.0
      %5971 = vmatprep.subr.mxu0 0.0
      %5972 = vmatpush1.msra.mxu0 0.0
      %5973 = vmatprep.mubr.f32.mxu0 0.0
      %5974 = vmatmul.mubr.f32.gmra.mrb[0].mxu0 %v5904
      %v5975 = vpop.f32.mrb[0].mxu0
      %v5976 = vadd.f32 0.0, %v5975
      %v5977 = vpop.f32.mrb[0].mxu0
      %5978 = vmatprep.mubr.f32.mxu0 0.0
      %5979 = vmatmul.mubr.f32.gmra.mrb[0].mxu0 %v5907
      %v5980 = vpop.f32.mrb[0].mxu0
      %v5981 = vadd.f32 0.0, %v5980
      %v5982 = vpop.f32.mrb[0].mxu0
      %5983 = vdwg.mxu0
      %v5984 = vmul.f32 %v5976, %v5976
      %v5985 = vmul.f32 %v5981, %v5981
      %5986 = vmatprep.subr.mxu0 0.0
      %5987 = vmatpush1.msra.mxu0 %v5823
      %5988 = vmatprep.subr.mxu0 0.0
      %5989 = vmatpush1.msra.mxu0 %v5824
      %5990 = vmatprep.subr.mxu0 0.0
      %5991 = vmatpush1.msra.mxu0 0.0
      %5992 = vmatprep.subr.mxu0 0.0
      %5993 = vmatpush1.msra.mxu0 0.0
      %5994 = vmatprep.subr.mxu0 0.0
      %5995 = vmatpush1.msra.mxu0 0.0
      %5996 = vmatprep.subr.mxu0 0.0
      %5997 = vmatpush1.msra.mxu0 0.0
      %5998 = vmatprep.subr.mxu0 0.0
      %5999 = vmatpush1.msra.mxu0 0.0
      %6000 = vmatprep.subr.mxu0 0.0
      %6001 = vmatpush1.msra.mxu0 0.0
      %6002 = vmatprep.subr.mxu0 0.0
      %6003 = vmatpush1.msra.mxu0 0.0
      %6004 = vmatprep.subr.mxu0 0.0
      %6005 = vmatpush1.msra.mxu0 0.0
      %6006 = vmatprep.subr.mxu0 0.0
      %6007 = vmatpush1.msra.mxu0 0.0
      %6008 = vmatprep.subr.mxu0 0.0
      %6009 = vmatpush1.msra.mxu0 0.0
      %6010 = vmatprep.subr.mxu0 0.0
      %6011 = vmatpush1.msra.mxu0 0.0
      %6012 = vmatprep.subr.mxu0 0.0
      %6013 = vmatpush1.msra.mxu0 0.0
      %6014 = vmatprep.subr.mxu0 0.0
      %6015 = vmatpush1.msra.mxu0 0.0
      %6016 = vmatprep.subr.mxu0 0.0
      %6017 = vmatpush1.msra.mxu0 0.0
      %6018 = vmatprep.subr.mxu0 0.0
      %6019 = vmatpush1.msra.mxu0 0.0
      %6020 = vmatprep.subr.mxu0 0.0
      %6021 = vmatpush1.msra.mxu0 0.0
      %6022 = vmatprep.subr.mxu0 0.0
      %6023 = vmatpush1.msra.mxu0 0.0
      %6024 = vmatprep.subr.mxu0 0.0
      %6025 = vmatpush1.msra.mxu0 0.0
      %6026 = vmatprep.subr.mxu0 0.0
      %6027 = vmatpush1.msra.mxu0 0.0
      %6028 = vmatprep.subr.mxu0 0.0
      %6029 = vmatpush1.msra.mxu0 0.0
      %6030 = vmatprep.subr.mxu0 0.0
      %6031 = vmatpush1.msra.mxu0 0.0
      %6032 = vmatprep.subr.mxu0 0.0
      %6033 = vmatpush1.msra.mxu0 0.0
      %6034 = vmatprep.subr.mxu0 0.0
      %6035 = vmatpush1.msra.mxu0 0.0
      %6036 = vmatprep.subr.mxu0 0.0
      %6037 = vmatpush1.msra.mxu0 0.0
      %6038 = vmatprep.subr.mxu0 0.0
      %6039 = vmatpush1.msra.mxu0 0.0
      %6040 = vmatprep.subr.mxu0 0.0
      %6041 = vmatpush1.msra.mxu0 0.0
      %6042 = vmatprep.subr.mxu0 0.0
      %6043 = vmatpush1.msra.mxu0 0.0
      %6044 = vmatprep.subr.mxu0 0.0
      %6045 = vmatpush1.msra.mxu0 0.0
      %6046 = vmatprep.subr.mxu0 0.0
      %6047 = vmatpush1.msra.mxu0 0.0
      %6048 = vmatprep.subr.mxu0 0.0
      %6049 = vmatpush1.msra.mxu0 0.0
      %6050 = vmatprep.mubr.f32.mxu0 0.0
      %6051 = vmatmul.mubr.f32.gmra.mrb[0].mxu0 %v518
      %v6052 = vpop.f32.mrb[0].mxu0
      %v6053 = vadd.f32 0.0, %v6052
      %v6054 = vpop.f32.mrb[0].mxu0
      %6055 = vmatprep.mubr.f32.mxu0 0.0
      %6056 = vmatmul.mubr.f32.gmra.mrb[0].mxu0 %v521
      %v6057 = vpop.f32.mrb[0].mxu0
      %v6058 = vadd.f32 0.0, %v6057
      %v6059 = vpop.f32.mrb[0].mxu0
      %6060 = vdwg.mxu0
      %6061 = vmatprep.subr.mxu0 0.0
      %6062 = vmatpush1.msra.mxu0 %v6053
      %6063 = vmatprep.subr.mxu0 0.0
      %6064 = vmatpush1.msra.mxu0 %v6058
      %6065 = vmatprep.subr.mxu0 0.0
      %6066 = vmatpush1.msra.mxu0 0.0
      %6067 = vmatprep.subr.mxu0 0.0
      %6068 = vmatpush1.msra.mxu0 0.0
      %6069 = vmatprep.subr.mxu0 0.0
      %6070 = vmatpush1.msra.mxu0 0.0
      %6071 = vmatprep.subr.mxu0 0.0
      %6072 = vmatpush1.msra.mxu0 0.0
      %6073 = vmatprep.subr.mxu0 0.0
      %6074 = vmatpush1.msra.mxu0 0.0
      %6075 = vmatprep.subr.mxu0 0.0
      %6076 = vmatpush1.msra.mxu0 0.0
      %6077 = vmatprep.subr.mxu0 0.0
      %6078 = vmatpush1.msra.mxu0 0.0
      %6079 = vmatprep.subr.mxu0 0.0
      %6080 = vmatpush1.msra.mxu0 0.0
      %6081 = vmatprep.subr.mxu0 0.0
      %6082 = vmatpush1.msra.mxu0 0.0
      %6083 = vmatprep.subr.mxu0 0.0
      %6084 = vmatpush1.msra.mxu0 0.0
      %6085 = vmatprep.subr.mxu0 0.0
      %6086 = vmatpush1.msra.mxu0 0.0
      %6087 = vmatprep.subr.mxu0 0.0
      %6088 = vmatpush1.msra.mxu0 0.0
      %6089 = vmatprep.subr.mxu0 0.0
      %6090 = vmatpush1.msra.mxu0 0.0
      %6091 = vmatprep.subr.mxu0 0.0
      %6092 = vmatpush1.msra.mxu0 0.0
      %6093 = vmatprep.subr.mxu0 0.0
      %6094 = vmatpush1.msra.mxu0 0.0
      %6095 = vmatprep.subr.mxu0 0.0
      %6096 = vmatpush1.msra.mxu0 0.0
      %6097 = vmatprep.subr.mxu0 0.0
      %6098 = vmatpush1.msra.mxu0 0.0
      %6099 = vmatprep.subr.mxu0 0.0
      %6100 = vmatpush1.msra.mxu0 0.0
      %6101 = vmatprep.subr.mxu0 0.0
      %6102 = vmatpush1.msra.mxu0 0.0
      %6103 = vmatprep.subr.mxu0 0.0
      %6104 = vmatpush1.msra.mxu0 0.0
      %6105 = vmatprep.subr.mxu0 0.0
      %6106 = vmatpush1.msra.mxu0 0.0
      %6107 = vmatprep.subr.mxu0 0.0
      %6108 = vmatpush1.msra.mxu0 0.0
      %6109 = vmatprep.subr.mxu0 0.0
      %6110 = vmatpush1.msra.mxu0 0.0
      %6111 = vmatprep.subr.mxu0 0.0
      %6112 = vmatpush1.msra.mxu0 0.0
      %6113 = vmatprep.subr.mxu0 0.0
      %6114 = vmatpush1.msra.mxu0 0.0
      %6115 = vmatprep.subr.mxu0 0.0
      %6116 = vmatpush1.msra.mxu0 0.0
      %6117 = vmatprep.subr.mxu0 0.0
      %6118 = vmatpush1.msra.mxu0 0.0
      %6119 = vmatprep.subr.mxu0 0.0
      %6120 = vmatpush1.msra.mxu0 0.0
      %6121 = vmatprep.subr.mxu0 0.0
      %6122 = vmatpush1.msra.mxu0 0.0
      %6123 = vmatprep.subr.mxu0 0.0
      %6124 = vmatpush1.msra.mxu0 0.0
      %6125 = vmatprep.mubr.f32.mxu0 0.0
      %6126 = vmatmul.mubr.f32.gmra.mrb[0].mxu0 %v5904
      %v6127 = vpop.f32.mrb[0].mxu0
      %v6128 = vadd.f32 0.0, %v6127
      %v6129 = vpop.f32.mrb[0].mxu0
      %6130 = vmatprep.mubr.f32.mxu0 0.0
      %6131 = vmatmul.mubr.f32.gmra.mrb[0].mxu0 %v5907
      %v6132 = vpop.f32.mrb[0].mxu0
      %v6133 = vadd.f32 0.0, %v6132
      %v6134 = vpop.f32.mrb[0].mxu0
      %6135 = vdwg.mxu0
      %v6136 = vsub.f32 %v6128, %v5984
      %v6137 = vsub.f32 %v6133, %v5985
      %v6138 = vadd.f32 %v6136, 0.0009
      %v6139 = vadd.f32 %v6137, 0.0009
      %6140 = vmatprep.subr.mxu0 0.0
      %6141 = vmatpush1.msra.mxu0 %v5823
      %6142 = vmatprep.subr.mxu0 0.0
      %6143 = vmatpush1.msra.mxu0 %v5824
      %6144 = vmatprep.subr.mxu0 0.0
      %6145 = vmatpush1.msra.mxu0 0.0
      %6146 = vmatprep.subr.mxu0 0.0
      %6147 = vmatpush1.msra.mxu0 0.0
      %6148 = vmatprep.subr.mxu0 0.0
      %6149 = vmatpush1.msra.mxu0 0.0
      %6150 = vmatprep.subr.mxu0 0.0
      %6151 = vmatpush1.msra.mxu0 0.0
      %6152 = vmatprep.subr.mxu0 0.0
      %6153 = vmatpush1.msra.mxu0 0.0
      %6154 = vmatprep.subr.mxu0 0.0
      %6155 = vmatpush1.msra.mxu0 0.0
      %6156 = vmatprep.subr.mxu0 0.0
      %6157 = vmatpush1.msra.mxu0 0.0
      %6158 = vmatprep.subr.mxu0 0.0
      %6159 = vmatpush1.msra.mxu0 0.0
      %6160 = vmatprep.subr.mxu0 0.0
      %6161 = vmatpush1.msra.mxu0 0.0
      %6162 = vmatprep.subr.mxu0 0.0
      %6163 = vmatpush1.msra.mxu0 0.0
      %6164 = vmatprep.subr.mxu0 0.0
      %6165 = vmatpush1.msra.mxu0 0.0
      %6166 = vmatprep.subr.mxu0 0.0
      %6167 = vmatpush1.msra.mxu0 0.0
      %6168 = vmatprep.subr.mxu0 0.0
      %6169 = vmatpush1.msra.mxu0 0.0
      %6170 = vmatprep.subr.mxu0 0.0
      %6171 = vmatpush1.msra.mxu0 0.0
      %6172 = vmatprep.subr.mxu0 0.0
      %6173 = vmatpush1.msra.mxu0 0.0
      %6174 = vmatprep.subr.mxu0 0.0
      %6175 = vmatpush1.msra.mxu0 0.0
      %6176 = vmatprep.subr.mxu0 0.0
      %6177 = vmatpush1.msra.mxu0 0.0
      %6178 = vmatprep.subr.mxu0 0.0
      %6179 = vmatpush1.msra.mxu0 0.0
      %6180 = vmatprep.subr.mxu0 0.0
      %6181 = vmatpush1.msra.mxu0 0.0
      %6182 = vmatprep.subr.mxu0 0.0
      %6183 = vmatpush1.msra.mxu0 0.0
      %6184 = vmatprep.subr.mxu0 0.0
      %6185 = vmatpush1.msra.mxu0 0.0
      %6186 = vmatprep.subr.mxu0 0.0
      %6187 = vmatpush1.msra.mxu0 0.0
      %6188 = vmatprep.subr.mxu0 0.0
      %6189 = vmatpush1.msra.mxu0 0.0
      %6190 = vmatprep.subr.mxu0 0.0
      %6191 = vmatpush1.msra.mxu0 0.0
      %6192 = vmatprep.subr.mxu0 0.0
      %6193 = vmatpush1.msra.mxu0 0.0
      %6194 = vmatprep.subr.mxu0 0.0
      %6195 = vmatpush1.msra.mxu0 0.0
      %6196 = vmatprep.subr.mxu0 0.0
      %6197 = vmatpush1.msra.mxu0 0.0
      %6198 = vmatprep.subr.mxu0 0.0
      %6199 = vmatpush1.msra.mxu0 0.0
      %6200 = vmatprep.subr.mxu0 0.0
      %6201 = vmatpush1.msra.mxu0 0.0
      %6202 = vmatprep.subr.mxu0 0.0
      %6203 = vmatpush1.msra.mxu0 0.0
      %6204 = vmatprep.mubr.f32.mxu0 0.0
      %6205 = vmatmul.mubr.f32.gmra.mrb[0].mxu0 %v678
      %v6206 = vpop.f32.mrb[0].mxu0
      %v6207 = vadd.f32 0.0, %v6206
      %v6208 = vpop.f32.mrb[0].mxu0
      %6209 = vmatprep.mubr.f32.mxu0 0.0
      %6210 = vmatmul.mubr.f32.gmra.mrb[0].mxu0 %v681
      %v6211 = vpop.f32.mrb[0].mxu0
      %v6212 = vadd.f32 0.0, %v6211
      %v6213 = vpop.f32.mrb[0].mxu0
      %6214 = vdwg.mxu0
      %6215 = vmatprep.subr.mxu0 0.0
      %6216 = vmatpush1.msra.mxu0 %v6207
      %6217 = vmatprep.subr.mxu0 0.0
      %6218 = vmatpush1.msra.mxu0 %v6212
      %6219 = vmatprep.subr.mxu0 0.0
      %6220 = vmatpush1.msra.mxu0 0.0
      %6221 = vmatprep.subr.mxu0 0.0
      %6222 = vmatpush1.msra.mxu0 0.0
      %6223 = vmatprep.subr.mxu0 0.0
      %6224 = vmatpush1.msra.mxu0 0.0
      %6225 = vmatprep.subr.mxu0 0.0
      %6226 = vmatpush1.msra.mxu0 0.0
      %6227 = vmatprep.subr.mxu0 0.0
      %6228 = vmatpush1.msra.mxu0 0.0
      %6229 = vmatprep.subr.mxu0 0.0
      %6230 = vmatpush1.msra.mxu0 0.0
      %6231 = vmatprep.subr.mxu0 0.0
      %6232 = vmatpush1.msra.mxu0 0.0
      %6233 = vmatprep.subr.mxu0 0.0
      %6234 = vmatpush1.msra.mxu0 0.0
      %6235 = vmatprep.subr.mxu0 0.0
      %6236 = vmatpush1.msra.mxu0 0.0
      %6237 = vmatprep.subr.mxu0 0.0
      %6238 = vmatpush1.msra.mxu0 0.0
      %6239 = vmatprep.subr.mxu0 0.0
      %6240 = vmatpush1.msra.mxu0 0.0
      %6241 = vmatprep.subr.mxu0 0.0
      %6242 = vmatpush1.msra.mxu0 0.0
      %6243 = vmatprep.subr.mxu0 0.0
      %6244 = vmatpush1.msra.mxu0 0.0
      %6245 = vmatprep.subr.mxu0 0.0
      %6246 = vmatpush1.msra.mxu0 0.0
      %6247 = vmatprep.subr.mxu0 0.0
      %6248 = vmatpush1.msra.mxu0 0.0
      %6249 = vmatprep.subr.mxu0 0.0
      %6250 = vmatpush1.msra.mxu0 0.0
      %6251 = vmatprep.subr.mxu0 0.0
      %6252 = vmatpush1.msra.mxu0 0.0
      %6253 = vmatprep.subr.mxu0 0.0
      %6254 = vmatpush1.msra.mxu0 0.0
      %6255 = vmatprep.subr.mxu0 0.0
      %6256 = vmatpush1.msra.mxu0 0.0
      %6257 = vmatprep.subr.mxu0 0.0
      %6258 = vmatpush1.msra.mxu0 0.0
      %6259 = vmatprep.subr.mxu0 0.0
      %6260 = vmatpush1.msra.mxu0 0.0
      %6261 = vmatprep.subr.mxu0 0.0
      %6262 = vmatpush1.msra.mxu0 0.0
      %6263 = vmatprep.subr.mxu0 0.0
      %6264 = vmatpush1.msra.mxu0 0.0
      %6265 = vmatprep.subr.mxu0 0.0
      %6266 = vmatpush1.msra.mxu0 0.0
      %6267 = vmatprep.subr.mxu0 0.0
      %6268 = vmatpush1.msra.mxu0 0.0
      %6269 = vmatprep.subr.mxu0 0.0
      %6270 = vmatpush1.msra.mxu0 0.0
      %6271 = vmatprep.subr.mxu0 0.0
      %6272 = vmatpush1.msra.mxu0 0.0
      %6273 = vmatprep.subr.mxu0 0.0
      %6274 = vmatpush1.msra.mxu0 0.0
      %6275 = vmatprep.subr.mxu0 0.0
      %6276 = vmatpush1.msra.mxu0 0.0
      %6277 = vmatprep.subr.mxu0 0.0
      %6278 = vmatpush1.msra.mxu0 0.0
      %6279 = vmatprep.mubr.f32.mxu0 0.0
      %6280 = vmatmul.mubr.f32.gmra.mrb[0].mxu0 %v5904
      %v6281 = vpop.f32.mrb[0].mxu0
      %v6282 = vadd.f32 0.0, %v6281
      %v6283 = vpop.f32.mrb[0].mxu0
      %6284 = vmatprep.mubr.f32.mxu0 0.0
      %6285 = vmatmul.mubr.f32.gmra.mrb[0].mxu0 %v5907
      %v6286 = vpop.f32.mrb[0].mxu0
      %v6287 = vadd.f32 0.0, %v6286
      %v6288 = vpop.f32.mrb[0].mxu0
      %6289 = vdwg.mxu0
      %6290 = vmatprep.subr.mxu0 0.0
      %6291 = vmatpush1.msra.mxu0 %v5823
      %6292 = vmatprep.subr.mxu0 0.0
      %6293 = vmatpush1.msra.mxu0 %v5824
      %6294 = vmatprep.subr.mxu0 0.0
      %6295 = vmatpush1.msra.mxu0 0.0
      %6296 = vmatprep.subr.mxu0 0.0
      %6297 = vmatpush1.msra.mxu0 0.0
      %6298 = vmatprep.subr.mxu0 0.0
      %6299 = vmatpush1.msra.mxu0 0.0
      %6300 = vmatprep.subr.mxu0 0.0
      %6301 = vmatpush1.msra.mxu0 0.0
      %6302 = vmatprep.subr.mxu0 0.0
      %6303 = vmatpush1.msra.mxu0 0.0
      %6304 = vmatprep.subr.mxu0 0.0
      %6305 = vmatpush1.msra.mxu0 0.0
      %6306 = vmatprep.subr.mxu0 0.0
      %6307 = vmatpush1.msra.mxu0 0.0
      %6308 = vmatprep.subr.mxu0 0.0
      %6309 = vmatpush1.msra.mxu0 0.0
      %6310 = vmatprep.subr.mxu0 0.0
      %6311 = vmatpush1.msra.mxu0 0.0
      %6312 = vmatprep.subr.mxu0 0.0
      %6313 = vmatpush1.msra.mxu0 0.0
      %6314 = vmatprep.subr.mxu0 0.0
      %6315 = vmatpush1.msra.mxu0 0.0
      %6316 = vmatprep.subr.mxu0 0.0
      %6317 = vmatpush1.msra.mxu0 0.0
      %6318 = vmatprep.subr.mxu0 0.0
      %6319 = vmatpush1.msra.mxu0 0.0
      %6320 = vmatprep.subr.mxu0 0.0
      %6321 = vmatpush1.msra.mxu0 0.0
      %6322 = vmatprep.subr.mxu0 0.0
      %6323 = vmatpush1.msra.mxu0 0.0
      %6324 = vmatprep.subr.mxu0 0.0
      %6325 = vmatpush1.msra.mxu0 0.0
      %6326 = vmatprep.subr.mxu0 0.0
      %6327 = vmatpush1.msra.mxu0 0.0
      %6328 = vmatprep.subr.mxu0 0.0
      %6329 = vmatpush1.msra.mxu0 0.0
      %6330 = vmatprep.subr.mxu0 0.0
      %6331 = vmatpush1.msra.mxu0 0.0
      %6332 = vmatprep.subr.mxu0 0.0
      %6333 = vmatpush1.msra.mxu0 0.0
      %6334 = vmatprep.subr.mxu0 0.0
      %6335 = vmatpush1.msra.mxu0 0.0
      %6336 = vmatprep.subr.mxu0 0.0
      %6337 = vmatpush1.msra.mxu0 0.0
      %6338 = vmatprep.subr.mxu0 0.0
      %6339 = vmatpush1.msra.mxu0 0.0
      %6340 = vmatprep.subr.mxu0 0.0
      %6341 = vmatpush1.msra.mxu0 0.0
      %6342 = vmatprep.subr.mxu0 0.0
      %6343 = vmatpush1.msra.mxu0 0.0
      %6344 = vmatprep.subr.mxu0 0.0
      %6345 = vmatpush1.msra.mxu0 0.0
      %6346 = vmatprep.subr.mxu0 0.0
      %6347 = vmatpush1.msra.mxu0 0.0
      %6348 = vmatprep.subr.mxu0 0.0
      %6349 = vmatpush1.msra.mxu0 0.0
      %6350 = vmatprep.subr.mxu0 0.0
      %6351 = vmatpush1.msra.mxu0 0.0
      %6352 = vmatprep.subr.mxu0 0.0
      %6353 = vmatpush1.msra.mxu0 0.0
      %6354 = vmatprep.mubr.f32.mxu0 0.0
      %6355 = vmatmul.mubr.f32.gmra.mrb[0].mxu0 %v834
      %v6356 = vpop.f32.mrb[0].mxu0
      %v6357 = vadd.f32 0.0, %v6356
      %v6358 = vpop.f32.mrb[0].mxu0
      %6359 = vmatprep.mubr.f32.mxu0 0.0
      %6360 = vmatmul.mubr.f32.gmra.mrb[0].mxu0 %v837
      %v6361 = vpop.f32.mrb[0].mxu0
      %v6362 = vadd.f32 0.0, %v6361
      %v6363 = vpop.f32.mrb[0].mxu0
      %6364 = vdwg.mxu0
      %6365 = vmatprep.subr.mxu0 0.0
      %6366 = vmatpush1.msra.mxu0 %v6357
      %6367 = vmatprep.subr.mxu0 0.0
      %6368 = vmatpush1.msra.mxu0 %v6362
      %6369 = vmatprep.subr.mxu0 0.0
      %6370 = vmatpush1.msra.mxu0 0.0
      %6371 = vmatprep.subr.mxu0 0.0
      %6372 = vmatpush1.msra.mxu0 0.0
      %6373 = vmatprep.subr.mxu0 0.0
      %6374 = vmatpush1.msra.mxu0 0.0
      %6375 = vmatprep.subr.mxu0 0.0
      %6376 = vmatpush1.msra.mxu0 0.0
      %6377 = vmatprep.subr.mxu0 0.0
      %6378 = vmatpush1.msra.mxu0 0.0
      %6379 = vmatprep.subr.mxu0 0.0
      %6380 = vmatpush1.msra.mxu0 0.0
      %6381 = vmatprep.subr.mxu0 0.0
      %6382 = vmatpush1.msra.mxu0 0.0
      %6383 = vmatprep.subr.mxu0 0.0
      %6384 = vmatpush1.msra.mxu0 0.0
      %6385 = vmatprep.subr.mxu0 0.0
      %6386 = vmatpush1.msra.mxu0 0.0
      %6387 = vmatprep.subr.mxu0 0.0
      %6388 = vmatpush1.msra.mxu0 0.0
      %6389 = vmatprep.subr.mxu0 0.0
      %6390 = vmatpush1.msra.mxu0 0.0
      %6391 = vmatprep.subr.mxu0 0.0
      %6392 = vmatpush1.msra.mxu0 0.0
      %6393 = vmatprep.subr.mxu0 0.0
      %6394 = vmatpush1.msra.mxu0 0.0
      %6395 = vmatprep.subr.mxu0 0.0
      %6396 = vmatpush1.msra.mxu0 0.0
      %6397 = vmatprep.subr.mxu0 0.0
      %6398 = vmatpush1.msra.mxu0 0.0
      %6399 = vmatprep.subr.mxu0 0.0
      %6400 = vmatpush1.msra.mxu0 0.0
      %6401 = vmatprep.subr.mxu0 0.0
      %6402 = vmatpush1.msra.mxu0 0.0
      %6403 = vmatprep.subr.mxu0 0.0
      %6404 = vmatpush1.msra.mxu0 0.0
      %6405 = vmatprep.subr.mxu0 0.0
      %6406 = vmatpush1.msra.mxu0 0.0
      %6407 = vmatprep.subr.mxu0 0.0
      %6408 = vmatpush1.msra.mxu0 0.0
      %6409 = vmatprep.subr.mxu0 0.0
      %6410 = vmatpush1.msra.mxu0 0.0
      %6411 = vmatprep.subr.mxu0 0.0
      %6412 = vmatpush1.msra.mxu0 0.0
      %6413 = vmatprep.subr.mxu0 0.0
      %6414 = vmatpush1.msra.mxu0 0.0
      %6415 = vmatprep.subr.mxu0 0.0
      %6416 = vmatpush1.msra.mxu0 0.0
      %6417 = vmatprep.subr.mxu0 0.0
      %6418 = vmatpush1.msra.mxu0 0.0
      %6419 = vmatprep.subr.mxu0 0.0
      %6420 = vmatpush1.msra.mxu0 0.0
      %6421 = vmatprep.subr.mxu0 0.0
      %6422 = vmatpush1.msra.mxu0 0.0
      %6423 = vmatprep.subr.mxu0 0.0
      %6424 = vmatpush1.msra.mxu0 0.0
      %6425 = vmatprep.subr.mxu0 0.0
      %6426 = vmatpush1.msra.mxu0 0.0
      %6427 = vmatprep.subr.mxu0 0.0
      %6428 = vmatpush1.msra.mxu0 0.0
      %6429 = vmatprep.mubr.f32.mxu0 0.0
      %6430 = vmatmul.mubr.f32.gmra.mrb[0].mxu0 %v5904
      %v6431 = vpop.f32.mrb[0].mxu0
      %v6432 = vadd.f32 0.0, %v6431
      %v6433 = vpop.f32.mrb[0].mxu0
      %6434 = vmatprep.mubr.f32.mxu0 0.0
      %6435 = vmatmul.mubr.f32.gmra.mrb[0].mxu0 %v5907
      %v6436 = vpop.f32.mrb[0].mxu0
      %v6437 = vadd.f32 0.0, %v6436
      %v6438 = vpop.f32.mrb[0].mxu0
      %6439 = vdwg.mxu0
      %v6440 = vmul.f32 %v6282, %v6282
      %v6441 = vmul.f32 %v6287, %v6287
      %v6442 = vsub.f32 %v6432, %v6440
      %v6443 = vsub.f32 %v6437, %v6441
      %6444 = vmatprep.subr.mxu0 0.0
      %6445 = vmatpush1.msra.mxu0 %v5823
      %6446 = vmatprep.subr.mxu0 0.0
      %6447 = vmatpush1.msra.mxu0 %v5824
      %6448 = vmatprep.subr.mxu0 0.0
      %6449 = vmatpush1.msra.mxu0 0.0
      %6450 = vmatprep.subr.mxu0 0.0
      %6451 = vmatpush1.msra.mxu0 0.0
      %6452 = vmatprep.subr.mxu0 0.0
      %6453 = vmatpush1.msra.mxu0 0.0
      %6454 = vmatprep.subr.mxu0 0.0
      %6455 = vmatpush1.msra.mxu0 0.0
      %6456 = vmatprep.subr.mxu0 0.0
      %6457 = vmatpush1.msra.mxu0 0.0
      %6458 = vmatprep.subr.mxu0 0.0
      %6459 = vmatpush1.msra.mxu0 0.0
      %6460 = vmatprep.subr.mxu0 0.0
      %6461 = vmatpush1.msra.mxu0 0.0
      %6462 = vmatprep.subr.mxu0 0.0
      %6463 = vmatpush1.msra.mxu0 0.0
      %6464 = vmatprep.subr.mxu0 0.0
      %6465 = vmatpush1.msra.mxu0 0.0
      %6466 = vmatprep.subr.mxu0 0.0
      %6467 = vmatpush1.msra.mxu0 0.0
      %6468 = vmatprep.subr.mxu0 0.0
      %6469 = vmatpush1.msra.mxu0 0.0
      %6470 = vmatprep.subr.mxu0 0.0
      %6471 = vmatpush1.msra.mxu0 0.0
      %6472 = vmatprep.subr.mxu0 0.0
      %6473 = vmatpush1.msra.mxu0 0.0
      %6474 = vmatprep.subr.mxu0 0.0
      %6475 = vmatpush1.msra.mxu0 0.0
      %6476 = vmatprep.subr.mxu0 0.0
      %6477 = vmatpush1.msra.mxu0 0.0
      %6478 = vmatprep.subr.mxu0 0.0
      %6479 = vmatpush1.msra.mxu0 0.0
      %6480 = vmatprep.subr.mxu0 0.0
      %6481 = vmatpush1.msra.mxu0 0.0
      %6482 = vmatprep.subr.mxu0 0.0
      %6483 = vmatpush1.msra.mxu0 0.0
      %6484 = vmatprep.subr.mxu0 0.0
      %6485 = vmatpush1.msra.mxu0 0.0
      %6486 = vmatprep.subr.mxu0 0.0
      %6487 = vmatpush1.msra.mxu0 0.0
      %6488 = vmatprep.subr.mxu0 0.0
      %6489 = vmatpush1.msra.mxu0 0.0
      %6490 = vmatprep.subr.mxu0 0.0
      %6491 = vmatpush1.msra.mxu0 0.0
      %6492 = vmatprep.subr.mxu0 0.0
      %6493 = vmatpush1.msra.mxu0 0.0
      %6494 = vmatprep.subr.mxu0 0.0
      %6495 = vmatpush1.msra.mxu0 0.0
      %6496 = vmatprep.subr.mxu0 0.0
      %6497 = vmatpush1.msra.mxu0 0.0
      %6498 = vmatprep.subr.mxu0 0.0
      %6499 = vmatpush1.msra.mxu0 0.0
      %6500 = vmatprep.subr.mxu0 0.0
      %6501 = vmatpush1.msra.mxu0 0.0
      %6502 = vmatprep.subr.mxu0 0.0
      %6503 = vmatpush1.msra.mxu0 0.0
      %6504 = vmatprep.subr.mxu0 0.0
      %6505 = vmatpush1.msra.mxu0 0.0
      %6506 = vmatprep.subr.mxu0 0.0
      %6507 = vmatpush1.msra.mxu0 0.0
      %6508 = vmatprep.mubr.f32.mxu0 0.0
      %6509 = vmatmul.mubr.f32.gmra.mrb[0].mxu0 %v994
      %v6510 = vpop.f32.mrb[0].mxu0
      %v6511 = vadd.f32 0.0, %v6510
      %v6512 = vpop.f32.mrb[0].mxu0
      %6513 = vmatprep.mubr.f32.mxu0 0.0
      %6514 = vmatmul.mubr.f32.gmra.mrb[0].mxu0 %v997
      %v6515 = vpop.f32.mrb[0].mxu0
      %v6516 = vadd.f32 0.0, %v6515
      %v6517 = vpop.f32.mrb[0].mxu0
      %6518 = vdwg.mxu0
      %6519 = vmatprep.subr.mxu0 0.0
      %6520 = vmatpush1.msra.mxu0 %v6511
      %6521 = vmatprep.subr.mxu0 0.0
      %6522 = vmatpush1.msra.mxu0 %v6516
      %6523 = vmatprep.subr.mxu0 0.0
      %6524 = vmatpush1.msra.mxu0 0.0
      %6525 = vmatprep.subr.mxu0 0.0
      %6526 = vmatpush1.msra.mxu0 0.0
      %6527 = vmatprep.subr.mxu0 0.0
      %6528 = vmatpush1.msra.mxu0 0.0
      %6529 = vmatprep.subr.mxu0 0.0
      %6530 = vmatpush1.msra.mxu0 0.0
      %6531 = vmatprep.subr.mxu0 0.0
      %6532 = vmatpush1.msra.mxu0 0.0
      %6533 = vmatprep.subr.mxu0 0.0
      %6534 = vmatpush1.msra.mxu0 0.0
      %6535 = vmatprep.subr.mxu0 0.0
      %6536 = vmatpush1.msra.mxu0 0.0
      %6537 = vmatprep.subr.mxu0 0.0
      %6538 = vmatpush1.msra.mxu0 0.0
      %6539 = vmatprep.subr.mxu0 0.0
      %6540 = vmatpush1.msra.mxu0 0.0
      %6541 = vmatprep.subr.mxu0 0.0
      %6542 = vmatpush1.msra.mxu0 0.0
      %6543 = vmatprep.subr.mxu0 0.0
      %6544 = vmatpush1.msra.mxu0 0.0
      %6545 = vmatprep.subr.mxu0 0.0
      %6546 = vmatpush1.msra.mxu0 0.0
      %6547 = vmatprep.subr.mxu0 0.0
      %6548 = vmatpush1.msra.mxu0 0.0
      %6549 = vmatprep.subr.mxu0 0.0
      %6550 = vmatpush1.msra.mxu0 0.0
      %6551 = vmatprep.subr.mxu0 0.0
      %6552 = vmatpush1.msra.mxu0 0.0
      %6553 = vmatprep.subr.mxu0 0.0
      %6554 = vmatpush1.msra.mxu0 0.0
      %6555 = vmatprep.subr.mxu0 0.0
      %6556 = vmatpush1.msra.mxu0 0.0
      %6557 = vmatprep.subr.mxu0 0.0
      %6558 = vmatpush1.msra.mxu0 0.0
      %6559 = vmatprep.subr.mxu0 0.0
      %6560 = vmatpush1.msra.mxu0 0.0
      %6561 = vmatprep.subr.mxu0 0.0
      %6562 = vmatpush1.msra.mxu0 0.0
      %6563 = vmatprep.subr.mxu0 0.0
      %6564 = vmatpush1.msra.mxu0 0.0
      %6565 = vmatprep.subr.mxu0 0.0
      %6566 = vmatpush1.msra.mxu0 0.0
      %6567 = vmatprep.subr.mxu0 0.0
      %6568 = vmatpush1.msra.mxu0 0.0
      %6569 = vmatprep.subr.mxu0 0.0
      %6570 = vmatpush1.msra.mxu0 0.0
      %6571 = vmatprep.subr.mxu0 0.0
      %6572 = vmatpush1.msra.mxu0 0.0
      %6573 = vmatprep.subr.mxu0 0.0
      %6574 = vmatpush1.msra.mxu0 0.0
      %6575 = vmatprep.subr.mxu0 0.0
      %6576 = vmatpush1.msra.mxu0 0.0
      %6577 = vmatprep.subr.mxu0 0.0
      %6578 = vmatpush1.msra.mxu0 0.0
      %6579 = vmatprep.subr.mxu0 0.0
      %6580 = vmatpush1.msra.mxu0 0.0
      %6581 = vmatprep.subr.mxu0 0.0
      %6582 = vmatpush1.msra.mxu0 0.0
      %6583 = vmatprep.mubr.f32.mxu0 0.0
      %6584 = vmatmul.mubr.f32.gmra.mrb[0].mxu0 %v5904
      %v6585 = vpop.f32.mrb[0].mxu0
      %v6586 = vadd.f32 0.0, %v6585
      %v6587 = vpop.f32.mrb[0].mxu0
      %6588 = vmatprep.mubr.f32.mxu0 0.0
      %6589 = vmatmul.mubr.f32.gmra.mrb[0].mxu0 %v5907
      %v6590 = vpop.f32.mrb[0].mxu0
      %v6591 = vadd.f32 0.0, %v6590
      %v6592 = vpop.f32.mrb[0].mxu0
      %6593 = vdwg.mxu0
      %v6594 = vmul.f32 %v6282, %v5976
      %v6595 = vmul.f32 %v6287, %v5981
      %v6596 = vsub.f32 %v6586, %v6594
      %v6597 = vsub.f32 %v6591, %v6595
      %v6598 = vmul.f32 %v6282, 2.0
      %v6599 = vmul.f32 %v6287, 2.0
      %v6600 = vmul.f32 %v6598, %v5976
      %v6601 = vmul.f32 %v6599, %v5981
      %v6602 = vadd.f32 %v6600, 0.0001
      %v6603 = vadd.f32 %v6601, 0.0001
      %v6604 = vmul.f32 %v6596, 2.0
      %v6605 = vmul.f32 %v6597, 2.0
      %v6606 = vadd.f32 %v6604, 0.0009
      %v6607 = vadd.f32 %v6605, 0.0009
      %v6608 = vmul.f32 %v6602, %v6606
      %v6609 = vmul.f32 %v6603, %v6607
      %v6610 = vadd.f32 %v6440, %v5984
      %v6611 = vadd.f32 %v6441, %v5985
      %v6612 = vadd.f32 %v6610, 0.0001
      %v6613 = vadd.f32 %v6611, 0.0001
      %v6614 = vadd.f32 %v6442, %v6138
      %v6615 = vadd.f32 %v6443, %v6139
      %v6616 = vmul.f32 %v6612, %v6614
      %v6617 = vmul.f32 %v6613, %v6615
      %v6618 = vrcp.pop %v6616
      %v6619 = vrcp.pop %v6617
      %v6620 = vmul.f32 %v6608, %v6618
      %v6621 = vmul.f32 %v6609, %v6619
      %v6622 = vmax.f32 %v6442, 0.0001
      %v6623 = vmax.f32 %v6443, 0.0001
      %v6624 = vmul.f32 %v6622, %v6620
      %v6625 = vmul.f32 %v6623, %v6621
      %6626 = vmatprep.subr.mxu0 0.0
      %6627 = vmatpush1.msra.mxu0 %v5823
      %6628 = vmatprep.subr.mxu0 0.0
      %6629 = vmatpush1.msra.mxu0 %v5824
      %6630 = vmatprep.subr.mxu0 0.0
      %6631 = vmatpush1.msra.mxu0 0.0
      %6632 = vmatprep.subr.mxu0 0.0
      %6633 = vmatpush1.msra.mxu0 0.0
      %6634 = vmatprep.subr.mxu0 0.0
      %6635 = vmatpush1.msra.mxu0 0.0
      %6636 = vmatprep.subr.mxu0 0.0
      %6637 = vmatpush1.msra.mxu0 0.0
      %6638 = vmatprep.subr.mxu0 0.0
      %6639 = vmatpush1.msra.mxu0 0.0
      %6640 = vmatprep.subr.mxu0 0.0
      %6641 = vmatpush1.msra.mxu0 0.0
      %6642 = vmatprep.subr.mxu0 0.0
      %6643 = vmatpush1.msra.mxu0 0.0
      %6644 = vmatprep.subr.mxu0 0.0
      %6645 = vmatpush1.msra.mxu0 0.0
      %6646 = vmatprep.subr.mxu0 0.0
      %6647 = vmatpush1.msra.mxu0 0.0
      %6648 = vmatprep.subr.mxu0 0.0
      %6649 = vmatpush1.msra.mxu0 0.0
      %6650 = vmatprep.subr.mxu0 0.0
      %6651 = vmatpush1.msra.mxu0 0.0
      %6652 = vmatprep.subr.mxu0 0.0
      %6653 = vmatpush1.msra.mxu0 0.0
      %6654 = vmatprep.subr.mxu0 0.0
      %6655 = vmatpush1.msra.mxu0 0.0
      %6656 = vmatprep.subr.mxu0 0.0
      %6657 = vmatpush1.msra.mxu0 0.0
      %6658 = vmatprep.subr.mxu0 0.0
      %6659 = vmatpush1.msra.mxu0 0.0
      %6660 = vmatprep.subr.mxu0 0.0
      %6661 = vmatpush1.msra.mxu0 0.0
      %6662 = vmatprep.subr.mxu0 0.0
      %6663 = vmatpush1.msra.mxu0 0.0
      %6664 = vmatprep.subr.mxu0 0.0
      %6665 = vmatpush1.msra.mxu0 0.0
      %6666 = vmatprep.subr.mxu0 0.0
      %6667 = vmatpush1.msra.mxu0 0.0
      %6668 = vmatprep.subr.mxu0 0.0
      %6669 = vmatpush1.msra.mxu0 0.0
      %6670 = vmatprep.subr.mxu0 0.0
      %6671 = vmatpush1.msra.mxu0 0.0
      %6672 = vmatprep.subr.mxu0 0.0
      %6673 = vmatpush1.msra.mxu0 0.0
      %6674 = vmatprep.subr.mxu0 0.0
      %6675 = vmatpush1.msra.mxu0 0.0
      %6676 = vmatprep.subr.mxu0 0.0
      %6677 = vmatpush1.msra.mxu0 0.0
      %6678 = vmatprep.subr.mxu0 0.0
      %6679 = vmatpush1.msra.mxu0 0.0
      %6680 = vmatprep.subr.mxu0 0.0
      %6681 = vmatpush1.msra.mxu0 0.0
      %6682 = vmatprep.subr.mxu0 0.0
      %6683 = vmatpush1.msra.mxu0 0.0
      %6684 = vmatprep.subr.mxu0 0.0
      %6685 = vmatpush1.msra.mxu0 0.0
      %6686 = vmatprep.subr.mxu0 0.0
      %6687 = vmatpush1.msra.mxu0 0.0
      %6688 = vmatprep.subr.mxu0 0.0
      %6689 = vmatpush1.msra.mxu0 0.0
      %6690 = vmatprep.mubr.f32.mxu0 0.0
      %6691 = vmatmul.mubr.f32.gmra.mrb[0].mxu0 %v1182
      %v6692 = vpop.f32.mrb[0].mxu0
      %v6693 = vadd.f32 0.0, %v6692
      %v6694 = vpop.f32.mrb[0].mxu0
      %6695 = vmatprep.mubr.f32.mxu0 0.0
      %6696 = vmatmul.mubr.f32.gmra.mrb[0].mxu0 %v1185
      %v6697 = vpop.f32.mrb[0].mxu0
      %v6698 = vadd.f32 0.0, %v6697
      %v6699 = vpop.f32.mrb[0].mxu0
      %6700 = vdwg.mxu0
      %6701 = vmatprep.subr.mxu0 0.0
      %6702 = vmatpush1.msra.mxu0 %v6693
      %6703 = vmatprep.subr.mxu0 0.0
      %6704 = vmatpush1.msra.mxu0 %v6698
      %6705 = vmatprep.subr.mxu0 0.0
      %6706 = vmatpush1.msra.mxu0 0.0
      %6707 = vmatprep.subr.mxu0 0.0
      %6708 = vmatpush1.msra.mxu0 0.0
      %6709 = vmatprep.subr.mxu0 0.0
      %6710 = vmatpush1.msra.mxu0 0.0
      %6711 = vmatprep.subr.mxu0 0.0
      %6712 = vmatpush1.msra.mxu0 0.0
      %6713 = vmatprep.subr.mxu0 0.0
      %6714 = vmatpush1.msra.mxu0 0.0
      %6715 = vmatprep.subr.mxu0 0.0
      %6716 = vmatpush1.msra.mxu0 0.0
      %6717 = vmatprep.subr.mxu0 0.0
      %6718 = vmatpush1.msra.mxu0 0.0
      %6719 = vmatprep.subr.mxu0 0.0
      %6720 = vmatpush1.msra.mxu0 0.0
      %6721 = vmatprep.subr.mxu0 0.0
      %6722 = vmatpush1.msra.mxu0 0.0
      %6723 = vmatprep.subr.mxu0 0.0
      %6724 = vmatpush1.msra.mxu0 0.0
      %6725 = vmatprep.subr.mxu0 0.0
      %6726 = vmatpush1.msra.mxu0 0.0
      %6727 = vmatprep.subr.mxu0 0.0
      %6728 = vmatpush1.msra.mxu0 0.0
      %6729 = vmatprep.subr.mxu0 0.0
      %6730 = vmatpush1.msra.mxu0 0.0
      %6731 = vmatprep.subr.mxu0 0.0
      %6732 = vmatpush1.msra.mxu0 0.0
      %6733 = vmatprep.subr.mxu0 0.0
      %6734 = vmatpush1.msra.mxu0 0.0
      %6735 = vmatprep.subr.mxu0 0.0
      %6736 = vmatpush1.msra.mxu0 0.0
      %6737 = vmatprep.subr.mxu0 0.0
      %6738 = vmatpush1.msra.mxu0 0.0
      %6739 = vmatprep.subr.mxu0 0.0
      %6740 = vmatpush1.msra.mxu0 0.0
      %6741 = vmatprep.subr.mxu0 0.0
      %6742 = vmatpush1.msra.mxu0 0.0
      %6743 = vmatprep.subr.mxu0 0.0
      %6744 = vmatpush1.msra.mxu0 0.0
      %6745 = vmatprep.subr.mxu0 0.0
      %6746 = vmatpush1.msra.mxu0 0.0
      %6747 = vmatprep.subr.mxu0 0.0
      %6748 = vmatpush1.msra.mxu0 0.0
      %6749 = vmatprep.subr.mxu0 0.0
      %6750 = vmatpush1.msra.mxu0 0.0
      %6751 = vmatprep.subr.mxu0 0.0
      %6752 = vmatpush1.msra.mxu0 0.0
      %6753 = vmatprep.subr.mxu0 0.0
      %6754 = vmatpush1.msra.mxu0 0.0
      %6755 = vmatprep.subr.mxu0 0.0
      %6756 = vmatpush1.msra.mxu0 0.0
      %6757 = vmatprep.subr.mxu0 0.0
      %6758 = vmatpush1.msra.mxu0 0.0
      %6759 = vmatprep.subr.mxu0 0.0
      %6760 = vmatpush1.msra.mxu0 0.0
      %6761 = vmatprep.subr.mxu0 0.0
      %6762 = vmatpush1.msra.mxu0 0.0
      %6763 = vmatprep.subr.mxu0 0.0
      %6764 = vmatpush1.msra.mxu0 0.0
      %6765 = vmatprep.mubr.f32.mxu0 0.0
      %6766 = vmatmul.mubr.f32.gmra.mrb[0].mxu0 %v5904
      %v6767 = vpop.f32.mrb[0].mxu0
      %v6768 = vadd.f32 0.0, %v6767
      %v6769 = vpop.f32.mrb[0].mxu0
      %6770 = vmatprep.mubr.f32.mxu0 0.0
      %6771 = vmatmul.mubr.f32.gmra.mrb[0].mxu0 %v5907
      %v6772 = vpop.f32.mrb[0].mxu0
      %v6773 = vadd.f32 0.0, %v6772
      %v6774 = vpop.f32.mrb[0].mxu0
      %6775 = vdwg.mxu0
      %6776 = vmatprep.subr.mxu0 0.0
      %6777 = vmatpush1.msra.mxu0 %v5823
      %6778 = vmatprep.subr.mxu0 0.0
      %6779 = vmatpush1.msra.mxu0 %v5824
      %6780 = vmatprep.subr.mxu0 0.0
      %6781 = vmatpush1.msra.mxu0 0.0
      %6782 = vmatprep.subr.mxu0 0.0
      %6783 = vmatpush1.msra.mxu0 0.0
      %6784 = vmatprep.subr.mxu0 0.0
      %6785 = vmatpush1.msra.mxu0 0.0
      %6786 = vmatprep.subr.mxu0 0.0
      %6787 = vmatpush1.msra.mxu0 0.0
      %6788 = vmatprep.subr.mxu0 0.0
      %6789 = vmatpush1.msra.mxu0 0.0
      %6790 = vmatprep.subr.mxu0 0.0
      %6791 = vmatpush1.msra.mxu0 0.0
      %6792 = vmatprep.subr.mxu0 0.0
      %6793 = vmatpush1.msra.mxu0 0.0
      %6794 = vmatprep.subr.mxu0 0.0
      %6795 = vmatpush1.msra.mxu0 0.0
      %6796 = vmatprep.subr.mxu0 0.0
      %6797 = vmatpush1.msra.mxu0 0.0
      %6798 = vmatprep.subr.mxu0 0.0
      %6799 = vmatpush1.msra.mxu0 0.0
      %6800 = vmatprep.subr.mxu0 0.0
      %6801 = vmatpush1.msra.mxu0 0.0
      %6802 = vmatprep.subr.mxu0 0.0
      %6803 = vmatpush1.msra.mxu0 0.0
      %6804 = vmatprep.subr.mxu0 0.0
      %6805 = vmatpush1.msra.mxu0 0.0
      %6806 = vmatprep.subr.mxu0 0.0
      %6807 = vmatpush1.msra.mxu0 0.0
      %6808 = vmatprep.subr.mxu0 0.0
      %6809 = vmatpush1.msra.mxu0 0.0
      %6810 = vmatprep.subr.mxu0 0.0
      %6811 = vmatpush1.msra.mxu0 0.0
      %6812 = vmatprep.subr.mxu0 0.0
      %6813 = vmatpush1.msra.mxu0 0.0
      %6814 = vmatprep.subr.mxu0 0.0
      %6815 = vmatpush1.msra.mxu0 0.0
      %6816 = vmatprep.subr.mxu0 0.0
      %6817 = vmatpush1.msra.mxu0 0.0
      %6818 = vmatprep.subr.mxu0 0.0
      %6819 = vmatpush1.msra.mxu0 0.0
      %6820 = vmatprep.subr.mxu0 0.0
      %6821 = vmatpush1.msra.mxu0 0.0
      %6822 = vmatprep.subr.mxu0 0.0
      %6823 = vmatpush1.msra.mxu0 0.0
      %6824 = vmatprep.subr.mxu0 0.0
      %6825 = vmatpush1.msra.mxu0 0.0
      %6826 = vmatprep.subr.mxu0 0.0
      %6827 = vmatpush1.msra.mxu0 0.0
      %6828 = vmatprep.subr.mxu0 0.0
      %6829 = vmatpush1.msra.mxu0 0.0
      %6830 = vmatprep.subr.mxu0 0.0
      %6831 = vmatpush1.msra.mxu0 0.0
      %6832 = vmatprep.subr.mxu0 0.0
      %6833 = vmatpush1.msra.mxu0 0.0
      %6834 = vmatprep.subr.mxu0 0.0
      %6835 = vmatpush1.msra.mxu0 0.0
      %6836 = vmatprep.subr.mxu0 0.0
      %6837 = vmatpush1.msra.mxu0 0.0
      %6838 = vmatprep.subr.mxu0 0.0
      %6839 = vmatpush1.msra.mxu0 0.0
      %6840 = vmatprep.mubr.f32.mxu0 0.0
      %6841 = vmatmul.mubr.f32.gmra.mrb[0].mxu0 %v1338
      %v6842 = vpop.f32.mrb[0].mxu0
      %v6843 = vadd.f32 0.0, %v6842
      %v6844 = vpop.f32.mrb[0].mxu0
      %6845 = vmatprep.mubr.f32.mxu0 0.0
      %6846 = vmatmul.mubr.f32.gmra.mrb[0].mxu0 %v1341
      %v6847 = vpop.f32.mrb[0].mxu0
      %v6848 = vadd.f32 0.0, %v6847
      %v6849 = vpop.f32.mrb[0].mxu0
      %6850 = vdwg.mxu0
      %6851 = vmatprep.subr.mxu0 0.0
      %6852 = vmatpush1.msra.mxu0 %v6843
      %6853 = vmatprep.subr.mxu0 0.0
      %6854 = vmatpush1.msra.mxu0 %v6848
      %6855 = vmatprep.subr.mxu0 0.0
      %6856 = vmatpush1.msra.mxu0 0.0
      %6857 = vmatprep.subr.mxu0 0.0
      %6858 = vmatpush1.msra.mxu0 0.0
      %6859 = vmatprep.subr.mxu0 0.0
      %6860 = vmatpush1.msra.mxu0 0.0
      %6861 = vmatprep.subr.mxu0 0.0
      %6862 = vmatpush1.msra.mxu0 0.0
      %6863 = vmatprep.subr.mxu0 0.0
      %6864 = vmatpush1.msra.mxu0 0.0
      %6865 = vmatprep.subr.mxu0 0.0
      %6866 = vmatpush1.msra.mxu0 0.0
      %6867 = vmatprep.subr.mxu0 0.0
      %6868 = vmatpush1.msra.mxu0 0.0
      %6869 = vmatprep.subr.mxu0 0.0
      %6870 = vmatpush1.msra.mxu0 0.0
      %6871 = vmatprep.subr.mxu0 0.0
      %6872 = vmatpush1.msra.mxu0 0.0
      %6873 = vmatprep.subr.mxu0 0.0
      %6874 = vmatpush1.msra.mxu0 0.0
      %6875 = vmatprep.subr.mxu0 0.0
      %6876 = vmatpush1.msra.mxu0 0.0
      %6877 = vmatprep.subr.mxu0 0.0
      %6878 = vmatpush1.msra.mxu0 0.0
      %6879 = vmatprep.subr.mxu0 0.0
      %6880 = vmatpush1.msra.mxu0 0.0
      %6881 = vmatprep.subr.mxu0 0.0
      %6882 = vmatpush1.msra.mxu0 0.0
      %6883 = vmatprep.subr.mxu0 0.0
      %6884 = vmatpush1.msra.mxu0 0.0
      %6885 = vmatprep.subr.mxu0 0.0
      %6886 = vmatpush1.msra.mxu0 0.0
      %6887 = vmatprep.subr.mxu0 0.0
      %6888 = vmatpush1.msra.mxu0 0.0
      %6889 = vmatprep.subr.mxu0 0.0
      %6890 = vmatpush1.msra.mxu0 0.0
      %6891 = vmatprep.subr.mxu0 0.0
      %6892 = vmatpush1.msra.mxu0 0.0
      %6893 = vmatprep.subr.mxu0 0.0
      %6894 = vmatpush1.msra.mxu0 0.0
      %6895 = vmatprep.subr.mxu0 0.0
      %6896 = vmatpush1.msra.mxu0 0.0
      %6897 = vmatprep.subr.mxu0 0.0
      %6898 = vmatpush1.msra.mxu0 0.0
      %6899 = vmatprep.subr.mxu0 0.0
      %6900 = vmatpush1.msra.mxu0 0.0
      %6901 = vmatprep.subr.mxu0 0.0
      %6902 = vmatpush1.msra.mxu0 0.0
      %6903 = vmatprep.subr.mxu0 0.0
      %6904 = vmatpush1.msra.mxu0 0.0
      %6905 = vmatprep.subr.mxu0 0.0
      %6906 = vmatpush1.msra.mxu0 0.0
      %6907 = vmatprep.subr.mxu0 0.0
      %6908 = vmatpush1.msra.mxu0 0.0
      %6909 = vmatprep.subr.mxu0 0.0
      %6910 = vmatpush1.msra.mxu0 0.0
      %6911 = vmatprep.subr.mxu0 0.0
      %6912 = vmatpush1.msra.mxu0 0.0
      %6913 = vmatprep.subr.mxu0 0.0
      %6914 = vmatpush1.msra.mxu0 0.0
      %6915 = vmatprep.mubr.f32.mxu0 0.0
      %6916 = vmatmul.mubr.f32.gmra.mrb[0].mxu0 %v5904
      %v6917 = vpop.f32.mrb[0].mxu0
      %v6918 = vadd.f32 0.0, %v6917
      %v6919 = vpop.f32.mrb[0].mxu0
      %6920 = vmatprep.mubr.f32.mxu0 0.0
      %6921 = vmatmul.mubr.f32.gmra.mrb[0].mxu0 %v5907
      %v6922 = vpop.f32.mrb[0].mxu0
      %v6923 = vadd.f32 0.0, %v6922
      %v6924 = vpop.f32.mrb[0].mxu0
      %6925 = vdwg.mxu0
      %v6926 = vmul.f32 %v6768, %v6768
      %v6927 = vmul.f32 %v6773, %v6773
      %v6928 = vsub.f32 %v6918, %v6926
      %v6929 = vsub.f32 %v6923, %v6927
      %6930 = vmatprep.subr.mxu0 0.0
      %6931 = vmatpush1.msra.mxu0 %v5823
      %6932 = vmatprep.subr.mxu0 0.0
      %6933 = vmatpush1.msra.mxu0 %v5824
      %6934 = vmatprep.subr.mxu0 0.0
      %6935 = vmatpush1.msra.mxu0 0.0
      %6936 = vmatprep.subr.mxu0 0.0
      %6937 = vmatpush1.msra.mxu0 0.0
      %6938 = vmatprep.subr.mxu0 0.0
      %6939 = vmatpush1.msra.mxu0 0.0
      %6940 = vmatprep.subr.mxu0 0.0
      %6941 = vmatpush1.msra.mxu0 0.0
      %6942 = vmatprep.subr.mxu0 0.0
      %6943 = vmatpush1.msra.mxu0 0.0
      %6944 = vmatprep.subr.mxu0 0.0
      %6945 = vmatpush1.msra.mxu0 0.0
      %6946 = vmatprep.subr.mxu0 0.0
      %6947 = vmatpush1.msra.mxu0 0.0
      %6948 = vmatprep.subr.mxu0 0.0
      %6949 = vmatpush1.msra.mxu0 0.0
      %6950 = vmatprep.subr.mxu0 0.0
      %6951 = vmatpush1.msra.mxu0 0.0
      %6952 = vmatprep.subr.mxu0 0.0
      %6953 = vmatpush1.msra.mxu0 0.0
      %6954 = vmatprep.subr.mxu0 0.0
      %6955 = vmatpush1.msra.mxu0 0.0
      %6956 = vmatprep.subr.mxu0 0.0
      %6957 = vmatpush1.msra.mxu0 0.0
      %6958 = vmatprep.subr.mxu0 0.0
      %6959 = vmatpush1.msra.mxu0 0.0
      %6960 = vmatprep.subr.mxu0 0.0
      %6961 = vmatpush1.msra.mxu0 0.0
      %6962 = vmatprep.subr.mxu0 0.0
      %6963 = vmatpush1.msra.mxu0 0.0
      %6964 = vmatprep.subr.mxu0 0.0
      %6965 = vmatpush1.msra.mxu0 0.0
      %6966 = vmatprep.subr.mxu0 0.0
      %6967 = vmatpush1.msra.mxu0 0.0
      %6968 = vmatprep.subr.mxu0 0.0
      %6969 = vmatpush1.msra.mxu0 0.0
      %6970 = vmatprep.subr.mxu0 0.0
      %6971 = vmatpush1.msra.mxu0 0.0
      %6972 = vmatprep.subr.mxu0 0.0
      %6973 = vmatpush1.msra.mxu0 0.0
      %6974 = vmatprep.subr.mxu0 0.0
      %6975 = vmatpush1.msra.mxu0 0.0
      %6976 = vmatprep.subr.mxu0 0.0
      %6977 = vmatpush1.msra.mxu0 0.0
      %6978 = vmatprep.subr.mxu0 0.0
      %6979 = vmatpush1.msra.mxu0 0.0
      %6980 = vmatprep.subr.mxu0 0.0
      %6981 = vmatpush1.msra.mxu0 0.0
      %6982 = vmatprep.subr.mxu0 0.0
      %6983 = vmatpush1.msra.mxu0 0.0
      %6984 = vmatprep.subr.mxu0 0.0
      %6985 = vmatpush1.msra.mxu0 0.0
      %6986 = vmatprep.subr.mxu0 0.0
      %6987 = vmatpush1.msra.mxu0 0.0
      %6988 = vmatprep.subr.mxu0 0.0
      %6989 = vmatpush1.msra.mxu0 0.0
      %6990 = vmatprep.subr.mxu0 0.0
      %6991 = vmatpush1.msra.mxu0 0.0
      %6992 = vmatprep.subr.mxu0 0.0
      %6993 = vmatpush1.msra.mxu0 0.0
      %6994 = vmatprep.mubr.f32.mxu0 0.0
      %6995 = vmatmul.mubr.f32.gmra.mrb[0].mxu0 %v1498
      %v6996 = vpop.f32.mrb[0].mxu0
      %v6997 = vadd.f32 0.0, %v6996
      %v6998 = vpop.f32.mrb[0].mxu0
      %6999 = vmatprep.mubr.f32.mxu0 0.0
      %7000 = vmatmul.mubr.f32.gmra.mrb[0].mxu0 %v1501
      %v7001 = vpop.f32.mrb[0].mxu0
      %v7002 = vadd.f32 0.0, %v7001
      %v7003 = vpop.f32.mrb[0].mxu0
      %7004 = vdwg.mxu0
      %7005 = vmatprep.subr.mxu0 0.0
      %7006 = vmatpush1.msra.mxu0 %v6997
      %7007 = vmatprep.subr.mxu0 0.0
      %7008 = vmatpush1.msra.mxu0 %v7002
      %7009 = vmatprep.subr.mxu0 0.0
      %7010 = vmatpush1.msra.mxu0 0.0
      %7011 = vmatprep.subr.mxu0 0.0
      %7012 = vmatpush1.msra.mxu0 0.0
      %7013 = vmatprep.subr.mxu0 0.0
      %7014 = vmatpush1.msra.mxu0 0.0
      %7015 = vmatprep.subr.mxu0 0.0
      %7016 = vmatpush1.msra.mxu0 0.0
      %7017 = vmatprep.subr.mxu0 0.0
      %7018 = vmatpush1.msra.mxu0 0.0
      %7019 = vmatprep.subr.mxu0 0.0
      %7020 = vmatpush1.msra.mxu0 0.0
      %7021 = vmatprep.subr.mxu0 0.0
      %7022 = vmatpush1.msra.mxu0 0.0
      %7023 = vmatprep.subr.mxu0 0.0
      %7024 = vmatpush1.msra.mxu0 0.0
      %7025 = vmatprep.subr.mxu0 0.0
      %7026 = vmatpush1.msra.mxu0 0.0
      %7027 = vmatprep.subr.mxu0 0.0
      %7028 = vmatpush1.msra.mxu0 0.0
      %7029 = vmatprep.subr.mxu0 0.0
      %7030 = vmatpush1.msra.mxu0 0.0
      %7031 = vmatprep.subr.mxu0 0.0
      %7032 = vmatpush1.msra.mxu0 0.0
      %7033 = vmatprep.subr.mxu0 0.0
      %7034 = vmatpush1.msra.mxu0 0.0
      %7035 = vmatprep.subr.mxu0 0.0
      %7036 = vmatpush1.msra.mxu0 0.0
      %7037 = vmatprep.subr.mxu0 0.0
      %7038 = vmatpush1.msra.mxu0 0.0
      %7039 = vmatprep.subr.mxu0 0.0
      %7040 = vmatpush1.msra.mxu0 0.0
      %7041 = vmatprep.subr.mxu0 0.0
      %7042 = vmatpush1.msra.mxu0 0.0
      %7043 = vmatprep.subr.mxu0 0.0
      %7044 = vmatpush1.msra.mxu0 0.0
      %7045 = vmatprep.subr.mxu0 0.0
      %7046 = vmatpush1.msra.mxu0 0.0
      %7047 = vmatprep.subr.mxu0 0.0
      %7048 = vmatpush1.msra.mxu0 0.0
      %7049 = vmatprep.subr.mxu0 0.0
      %7050 = vmatpush1.msra.mxu0 0.0
      %7051 = vmatprep.subr.mxu0 0.0
      %7052 = vmatpush1.msra.mxu0 0.0
      %7053 = vmatprep.subr.mxu0 0.0
      %7054 = vmatpush1.msra.mxu0 0.0
      %7055 = vmatprep.subr.mxu0 0.0
      %7056 = vmatpush1.msra.mxu0 0.0
      %7057 = vmatprep.subr.mxu0 0.0
      %7058 = vmatpush1.msra.mxu0 0.0
      %7059 = vmatprep.subr.mxu0 0.0
      %7060 = vmatpush1.msra.mxu0 0.0
      %7061 = vmatprep.subr.mxu0 0.0
      %7062 = vmatpush1.msra.mxu0 0.0
      %7063 = vmatprep.subr.mxu0 0.0
      %7064 = vmatpush1.msra.mxu0 0.0
      %7065 = vmatprep.subr.mxu0 0.0
      %7066 = vmatpush1.msra.mxu0 0.0
      %7067 = vmatprep.subr.mxu0 0.0
      %7068 = vmatpush1.msra.mxu0 0.0
      %7069 = vmatprep.mubr.f32.mxu0 0.0
      %7070 = vmatmul.mubr.f32.gmra.mrb[0].mxu0 %v5904
      %v7071 = vpop.f32.mrb[0].mxu0
      %v7072 = vadd.f32 0.0, %v7071
      %v7073 = vpop.f32.mrb[0].mxu0
      %7074 = vmatprep.mubr.f32.mxu0 0.0
      %7075 = vmatmul.mubr.f32.gmra.mrb[0].mxu0 %v5907
      %v7076 = vpop.f32.mrb[0].mxu0
      %v7077 = vadd.f32 0.0, %v7076
      %v7078 = vpop.f32.mrb[0].mxu0
      %7079 = vdwg.mxu0
      %v7080 = vmul.f32 %v6768, %v5976
      %v7081 = vmul.f32 %v6773, %v5981
      %v7082 = vsub.f32 %v7072, %v7080
      %v7083 = vsub.f32 %v7077, %v7081
      %v7084 = vmul.f32 %v6768, 2.0
      %v7085 = vmul.f32 %v6773, 2.0
      %v7086 = vmul.f32 %v7084, %v5976
      %v7087 = vmul.f32 %v7085, %v5981
      %v7088 = vadd.f32 %v7086, 0.0001
      %v7089 = vadd.f32 %v7087, 0.0001
      %v7090 = vmul.f32 %v7082, 2.0
      %v7091 = vmul.f32 %v7083, 2.0
      %v7092 = vadd.f32 %v7090, 0.0009
      %v7093 = vadd.f32 %v7091, 0.0009
      %v7094 = vmul.f32 %v7088, %v7092
      %v7095 = vmul.f32 %v7089, %v7093
      %v7096 = vadd.f32 %v6926, %v5984
      %v7097 = vadd.f32 %v6927, %v5985
      %v7098 = vadd.f32 %v7096, 0.0001
      %v7099 = vadd.f32 %v7097, 0.0001
      %v7100 = vadd.f32 %v6928, %v6138
      %v7101 = vadd.f32 %v6929, %v6139
      %v7102 = vmul.f32 %v7098, %v7100
      %v7103 = vmul.f32 %v7099, %v7101
      %v7104 = vrcp.pop %v7102
      %v7105 = vrcp.pop %v7103
      %v7106 = vmul.f32 %v7094, %v7104
      %v7107 = vmul.f32 %v7095, %v7105
      %v7108 = vmax.f32 %v6928, 0.0001
      %v7109 = vmax.f32 %v6929, 0.0001
      %v7110 = vmul.f32 %v7108, %v7106
      %v7111 = vmul.f32 %v7109, %v7107
      %v7112 = vadd.f32 %v6624, %v7110
      %v7113 = vadd.f32 %v6625, %v7111
      %v7114 = vadd.f32 %v6622, %v7108
      %v7115 = vadd.f32 %v6623, %v7109
      %7116 = vmatprep.subr.mxu0 0.0
      %7117 = vmatpush1.msra.mxu0 %v5823
      %7118 = vmatprep.subr.mxu0 0.0
      %7119 = vmatpush1.msra.mxu0 %v5824
      %7120 = vmatprep.subr.mxu0 0.0
      %7121 = vmatpush1.msra.mxu0 0.0
      %7122 = vmatprep.subr.mxu0 0.0
      %7123 = vmatpush1.msra.mxu0 0.0
      %7124 = vmatprep.subr.mxu0 0.0
      %7125 = vmatpush1.msra.mxu0 0.0
      %7126 = vmatprep.subr.mxu0 0.0
      %7127 = vmatpush1.msra.mxu0 0.0
      %7128 = vmatprep.subr.mxu0 0.0
      %7129 = vmatpush1.msra.mxu0 0.0
      %7130 = vmatprep.subr.mxu0 0.0
      %7131 = vmatpush1.msra.mxu0 0.0
      %7132 = vmatprep.subr.mxu0 0.0
      %7133 = vmatpush1.msra.mxu0 0.0
      %7134 = vmatprep.subr.mxu0 0.0
      %7135 = vmatpush1.msra.mxu0 0.0
      %7136 = vmatprep.subr.mxu0 0.0
      %7137 = vmatpush1.msra.mxu0 0.0
      %7138 = vmatprep.subr.mxu0 0.0
      %7139 = vmatpush1.msra.mxu0 0.0
      %7140 = vmatprep.subr.mxu0 0.0
      %7141 = vmatpush1.msra.mxu0 0.0
      %7142 = vmatprep.subr.mxu0 0.0
      %7143 = vmatpush1.msra.mxu0 0.0
      %7144 = vmatprep.subr.mxu0 0.0
      %7145 = vmatpush1.msra.mxu0 0.0
      %7146 = vmatprep.subr.mxu0 0.0
      %7147 = vmatpush1.msra.mxu0 0.0
      %7148 = vmatprep.subr.mxu0 0.0
      %7149 = vmatpush1.msra.mxu0 0.0
      %7150 = vmatprep.subr.mxu0 0.0
      %7151 = vmatpush1.msra.mxu0 0.0
      %7152 = vmatprep.subr.mxu0 0.0
      %7153 = vmatpush1.msra.mxu0 0.0
      %7154 = vmatprep.subr.mxu0 0.0
      %7155 = vmatpush1.msra.mxu0 0.0
      %7156 = vmatprep.subr.mxu0 0.0
      %7157 = vmatpush1.msra.mxu0 0.0
      %7158 = vmatprep.subr.mxu0 0.0
      %7159 = vmatpush1.msra.mxu0 0.0
      %7160 = vmatprep.subr.mxu0 0.0
      %7161 = vmatpush1.msra.mxu0 0.0
      %7162 = vmatprep.subr.mxu0 0.0
      %7163 = vmatpush1.msra.mxu0 0.0
      %7164 = vmatprep.subr.mxu0 0.0
      %7165 = vmatpush1.msra.mxu0 0.0
      %7166 = vmatprep.subr.mxu0 0.0
      %7167 = vmatpush1.msra.mxu0 0.0
      %7168 = vmatprep.subr.mxu0 0.0
      %7169 = vmatpush1.msra.mxu0 0.0
      %7170 = vmatprep.subr.mxu0 0.0
      %7171 = vmatpush1.msra.mxu0 0.0
      %7172 = vmatprep.subr.mxu0 0.0
      %7173 = vmatpush1.msra.mxu0 0.0
      %7174 = vmatprep.subr.mxu0 0.0
      %7175 = vmatpush1.msra.mxu0 0.0
      %7176 = vmatprep.subr.mxu0 0.0
      %7177 = vmatpush1.msra.mxu0 0.0
      %7178 = vmatprep.subr.mxu0 0.0
      %7179 = vmatpush1.msra.mxu0 0.0
      %7180 = vmatprep.mubr.f32.mxu0 0.0
      %7181 = vmatmul.mubr.f32.gmra.mrb[0].mxu0 %v1690
      %v7182 = vpop.f32.mrb[0].mxu0
      %v7183 = vadd.f32 0.0, %v7182
      %v7184 = vpop.f32.mrb[0].mxu0
      %7185 = vmatprep.mubr.f32.mxu0 0.0
      %7186 = vmatmul.mubr.f32.gmra.mrb[0].mxu0 %v1693
      %v7187 = vpop.f32.mrb[0].mxu0
      %v7188 = vadd.f32 0.0, %v7187
      %v7189 = vpop.f32.mrb[0].mxu0
      %7190 = vdwg.mxu0
      %7191 = vmatprep.subr.mxu0 0.0
      %7192 = vmatpush1.msra.mxu0 %v7183
      %7193 = vmatprep.subr.mxu0 0.0
      %7194 = vmatpush1.msra.mxu0 %v7188
      %7195 = vmatprep.subr.mxu0 0.0
      %7196 = vmatpush1.msra.mxu0 0.0
      %7197 = vmatprep.subr.mxu0 0.0
      %7198 = vmatpush1.msra.mxu0 0.0
      %7199 = vmatprep.subr.mxu0 0.0
      %7200 = vmatpush1.msra.mxu0 0.0
      %7201 = vmatprep.subr.mxu0 0.0
      %7202 = vmatpush1.msra.mxu0 0.0
      %7203 = vmatprep.subr.mxu0 0.0
      %7204 = vmatpush1.msra.mxu0 0.0
      %7205 = vmatprep.subr.mxu0 0.0
      %7206 = vmatpush1.msra.mxu0 0.0
      %7207 = vmatprep.subr.mxu0 0.0
      %7208 = vmatpush1.msra.mxu0 0.0
      %7209 = vmatprep.subr.mxu0 0.0
      %7210 = vmatpush1.msra.mxu0 0.0
      %7211 = vmatprep.subr.mxu0 0.0
      %7212 = vmatpush1.msra.mxu0 0.0
      %7213 = vmatprep.subr.mxu0 0.0
      %7214 = vmatpush1.msra.mxu0 0.0
      %7215 = vmatprep.subr.mxu0 0.0
      %7216 = vmatpush1.msra.mxu0 0.0
      %7217 = vmatprep.subr.mxu0 0.0
      %7218 = vmatpush1.msra.mxu0 0.0
      %7219 = vmatprep.subr.mxu0 0.0
      %7220 = vmatpush1.msra.mxu0 0.0
      %7221 = vmatprep.subr.mxu0 0.0
      %7222 = vmatpush1.msra.mxu0 0.0
      %7223 = vmatprep.subr.mxu0 0.0
      %7224 = vmatpush1.msra.mxu0 0.0
      %7225 = vmatprep.subr.mxu0 0.0
      %7226 = vmatpush1.msra.mxu0 0.0
      %7227 = vmatprep.subr.mxu0 0.0
      %7228 = vmatpush1.msra.mxu0 0.0
      %7229 = vmatprep.subr.mxu0 0.0
      %7230 = vmatpush1.msra.mxu0 0.0
      %7231 = vmatprep.subr.mxu0 0.0
      %7232 = vmatpush1.msra.mxu0 0.0
      %7233 = vmatprep.subr.mxu0 0.0
      %7234 = vmatpush1.msra.mxu0 0.0
      %7235 = vmatprep.subr.mxu0 0.0
      %7236 = vmatpush1.msra.mxu0 0.0
      %7237 = vmatprep.subr.mxu0 0.0
      %7238 = vmatpush1.msra.mxu0 0.0
      %7239 = vmatprep.subr.mxu0 0.0
      %7240 = vmatpush1.msra.mxu0 0.0
      %7241 = vmatprep.subr.mxu0 0.0
      %7242 = vmatpush1.msra.mxu0 0.0
      %7243 = vmatprep.subr.mxu0 0.0
      %7244 = vmatpush1.msra.mxu0 0.0
      %7245 = vmatprep.subr.mxu0 0.0
      %7246 = vmatpush1.msra.mxu0 0.0
      %7247 = vmatprep.subr.mxu0 0.0
      %7248 = vmatpush1.msra.mxu0 0.0
      %7249 = vmatprep.subr.mxu0 0.0
      %7250 = vmatpush1.msra.mxu0 0.0
      %7251 = vmatprep.subr.mxu0 0.0
      %7252 = vmatpush1.msra.mxu0 0.0
      %7253 = vmatprep.subr.mxu0 0.0
      %7254 = vmatpush1.msra.mxu0 0.0
      %7255 = vmatprep.mubr.f32.mxu0 0.0
      %7256 = vmatmul.mubr.f32.gmra.mrb[0].mxu0 %v5904
      %v7257 = vpop.f32.mrb[0].mxu0
      %v7258 = vadd.f32 0.0, %v7257
      %v7259 = vpop.f32.mrb[0].mxu0
      %7260 = vmatprep.mubr.f32.mxu0 0.0
      %7261 = vmatmul.mubr.f32.gmra.mrb[0].mxu0 %v5907
      %v7262 = vpop.f32.mrb[0].mxu0
      %v7263 = vadd.f32 0.0, %v7262
      %v7264 = vpop.f32.mrb[0].mxu0
      %7265 = vdwg.mxu0
      %7266 = vmatprep.subr.mxu0 0.0
      %7267 = vmatpush1.msra.mxu0 %v5823
      %7268 = vmatprep.subr.mxu0 0.0
      %7269 = vmatpush1.msra.mxu0 %v5824
      %7270 = vmatprep.subr.mxu0 0.0
      %7271 = vmatpush1.msra.mxu0 0.0
      %7272 = vmatprep.subr.mxu0 0.0
      %7273 = vmatpush1.msra.mxu0 0.0
      %7274 = vmatprep.subr.mxu0 0.0
      %7275 = vmatpush1.msra.mxu0 0.0
      %7276 = vmatprep.subr.mxu0 0.0
      %7277 = vmatpush1.msra.mxu0 0.0
      %7278 = vmatprep.subr.mxu0 0.0
      %7279 = vmatpush1.msra.mxu0 0.0
      %7280 = vmatprep.subr.mxu0 0.0
      %7281 = vmatpush1.msra.mxu0 0.0
      %7282 = vmatprep.subr.mxu0 0.0
      %7283 = vmatpush1.msra.mxu0 0.0
      %7284 = vmatprep.subr.mxu0 0.0
      %7285 = vmatpush1.msra.mxu0 0.0
      %7286 = vmatprep.subr.mxu0 0.0
      %7287 = vmatpush1.msra.mxu0 0.0
      %7288 = vmatprep.subr.mxu0 0.0
      %7289 = vmatpush1.msra.mxu0 0.0
      %7290 = vmatprep.subr.mxu0 0.0
      %7291 = vmatpush1.msra.mxu0 0.0
      %7292 = vmatprep.subr.mxu0 0.0
      %7293 = vmatpush1.msra.mxu0 0.0
      %7294 = vmatprep.subr.mxu0 0.0
      %7295 = vmatpush1.msra.mxu0 0.0
      %7296 = vmatprep.subr.mxu0 0.0
      %7297 = vmatpush1.msra.mxu0 0.0
      %7298 = vmatprep.subr.mxu0 0.0
      %7299 = vmatpush1.msra.mxu0 0.0
      %7300 = vmatprep.subr.mxu0 0.0
      %7301 = vmatpush1.msra.mxu0 0.0
      %7302 = vmatprep.subr.mxu0 0.0
      %7303 = vmatpush1.msra.mxu0 0.0
      %7304 = vmatprep.subr.mxu0 0.0
      %7305 = vmatpush1.msra.mxu0 0.0
      %7306 = vmatprep.subr.mxu0 0.0
      %7307 = vmatpush1.msra.mxu0 0.0
      %7308 = vmatprep.subr.mxu0 0.0
      %7309 = vmatpush1.msra.mxu0 0.0
      %7310 = vmatprep.subr.mxu0 0.0
      %7311 = vmatpush1.msra.mxu0 0.0
      %7312 = vmatprep.subr.mxu0 0.0
      %7313 = vmatpush1.msra.mxu0 0.0
      %7314 = vmatprep.subr.mxu0 0.0
      %7315 = vmatpush1.msra.mxu0 0.0
      %7316 = vmatprep.subr.mxu0 0.0
      %7317 = vmatpush1.msra.mxu0 0.0
      %7318 = vmatprep.subr.mxu0 0.0
      %7319 = vmatpush1.msra.mxu0 0.0
      %7320 = vmatprep.subr.mxu0 0.0
      %7321 = vmatpush1.msra.mxu0 0.0
      %7322 = vmatprep.subr.mxu0 0.0
      %7323 = vmatpush1.msra.mxu0 0.0
      %7324 = vmatprep.subr.mxu0 0.0
      %7325 = vmatpush1.msra.mxu0 0.0
      %7326 = vmatprep.subr.mxu0 0.0
      %7327 = vmatpush1.msra.mxu0 0.0
      %7328 = vmatprep.subr.mxu0 0.0
      %7329 = vmatpush1.msra.mxu0 0.0
      %7330 = vmatprep.mubr.f32.mxu0 0.0
      %7331 = vmatmul.mubr.f32.gmra.mrb[0].mxu0 %v1846
      %v7332 = vpop.f32.mrb[0].mxu0
      %v7333 = vadd.f32 0.0, %v7332
      %v7334 = vpop.f32.mrb[0].mxu0
      %7335 = vmatprep.mubr.f32.mxu0 0.0
      %7336 = vmatmul.mubr.f32.gmra.mrb[0].mxu0 %v1849
      %v7337 = vpop.f32.mrb[0].mxu0
      %v7338 = vadd.f32 0.0, %v7337
      %v7339 = vpop.f32.mrb[0].mxu0
      %7340 = vdwg.mxu0
      %7341 = vmatprep.subr.mxu0 0.0
      %7342 = vmatpush1.msra.mxu0 %v7333
      %7343 = vmatprep.subr.mxu0 0.0
      %7344 = vmatpush1.msra.mxu0 %v7338
      %7345 = vmatprep.subr.mxu0 0.0
      %7346 = vmatpush1.msra.mxu0 0.0
      %7347 = vmatprep.subr.mxu0 0.0
      %7348 = vmatpush1.msra.mxu0 0.0
      %7349 = vmatprep.subr.mxu0 0.0
      %7350 = vmatpush1.msra.mxu0 0.0
      %7351 = vmatprep.subr.mxu0 0.0
      %7352 = vmatpush1.msra.mxu0 0.0
      %7353 = vmatprep.subr.mxu0 0.0
      %7354 = vmatpush1.msra.mxu0 0.0
      %7355 = vmatprep.subr.mxu0 0.0
      %7356 = vmatpush1.msra.mxu0 0.0
      %7357 = vmatprep.subr.mxu0 0.0
      %7358 = vmatpush1.msra.mxu0 0.0
      %7359 = vmatprep.subr.mxu0 0.0
      %7360 = vmatpush1.msra.mxu0 0.0
      %7361 = vmatprep.subr.mxu0 0.0
      %7362 = vmatpush1.msra.mxu0 0.0
      %7363 = vmatprep.subr.mxu0 0.0
      %7364 = vmatpush1.msra.mxu0 0.0
      %7365 = vmatprep.subr.mxu0 0.0
      %7366 = vmatpush1.msra.mxu0 0.0
      %7367 = vmatprep.subr.mxu0 0.0
      %7368 = vmatpush1.msra.mxu0 0.0
      %7369 = vmatprep.subr.mxu0 0.0
      %7370 = vmatpush1.msra.mxu0 0.0
      %7371 = vmatprep.subr.mxu0 0.0
      %7372 = vmatpush1.msra.mxu0 0.0
      %7373 = vmatprep.subr.mxu0 0.0
      %7374 = vmatpush1.msra.mxu0 0.0
      %7375 = vmatprep.subr.mxu0 0.0
      %7376 = vmatpush1.msra.mxu0 0.0
      %7377 = vmatprep.subr.mxu0 0.0
      %7378 = vmatpush1.msra.mxu0 0.0
      %7379 = vmatprep.subr.mxu0 0.0
      %7380 = vmatpush1.msra.mxu0 0.0
      %7381 = vmatprep.subr.mxu0 0.0
      %7382 = vmatpush1.msra.mxu0 0.0
      %7383 = vmatprep.subr.mxu0 0.0
      %7384 = vmatpush1.msra.mxu0 0.0
      %7385 = vmatprep.subr.mxu0 0.0
      %7386 = vmatpush1.msra.mxu0 0.0
      %7387 = vmatprep.subr.mxu0 0.0
      %7388 = vmatpush1.msra.mxu0 0.0
      %7389 = vmatprep.subr.mxu0 0.0
      %7390 = vmatpush1.msra.mxu0 0.0
      %7391 = vmatprep.subr.mxu0 0.0
      %7392 = vmatpush1.msra.mxu0 0.0
      %7393 = vmatprep.subr.mxu0 0.0
      %7394 = vmatpush1.msra.mxu0 0.0
      %7395 = vmatprep.subr.mxu0 0.0
      %7396 = vmatpush1.msra.mxu0 0.0
      %7397 = vmatprep.subr.mxu0 0.0
      %7398 = vmatpush1.msra.mxu0 0.0
      %7399 = vmatprep.subr.mxu0 0.0
      %7400 = vmatpush1.msra.mxu0 0.0
      %7401 = vmatprep.subr.mxu0 0.0
      %7402 = vmatpush1.msra.mxu0 0.0
      %7403 = vmatprep.subr.mxu0 0.0
      %7404 = vmatpush1.msra.mxu0 0.0
      %7405 = vmatprep.mubr.f32.mxu0 0.0
      %7406 = vmatmul.mubr.f32.gmra.mrb[0].mxu0 %v5904
      %v7407 = vpop.f32.mrb[0].mxu0
      %v7408 = vadd.f32 0.0, %v7407
      %v7409 = vpop.f32.mrb[0].mxu0
      %7410 = vmatprep.mubr.f32.mxu0 0.0
      %7411 = vmatmul.mubr.f32.gmra.mrb[0].mxu0 %v5907
      %v7412 = vpop.f32.mrb[0].mxu0
      %v7413 = vadd.f32 0.0, %v7412
      %v7414 = vpop.f32.mrb[0].mxu0
      %7415 = vdwg.mxu0
      %v7416 = vmul.f32 %v7258, %v7258
      %v7417 = vmul.f32 %v7263, %v7263
      %v7418 = vsub.f32 %v7408, %v7416
      %v7419 = vsub.f32 %v7413, %v7417
      %7420 = vmatprep.subr.mxu0 0.0
      %7421 = vmatpush1.msra.mxu0 %v5823
      %7422 = vmatprep.subr.mxu0 0.0
      %7423 = vmatpush1.msra.mxu0 %v5824
      %7424 = vmatprep.subr.mxu0 0.0
      %7425 = vmatpush1.msra.mxu0 0.0
      %7426 = vmatprep.subr.mxu0 0.0
      %7427 = vmatpush1.msra.mxu0 0.0
      %7428 = vmatprep.subr.mxu0 0.0
      %7429 = vmatpush1.msra.mxu0 0.0
      %7430 = vmatprep.subr.mxu0 0.0
      %7431 = vmatpush1.msra.mxu0 0.0
      %7432 = vmatprep.subr.mxu0 0.0
      %7433 = vmatpush1.msra.mxu0 0.0
      %7434 = vmatprep.subr.mxu0 0.0
      %7435 = vmatpush1.msra.mxu0 0.0
      %7436 = vmatprep.subr.mxu0 0.0
      %7437 = vmatpush1.msra.mxu0 0.0
      %7438 = vmatprep.subr.mxu0 0.0
      %7439 = vmatpush1.msra.mxu0 0.0
      %7440 = vmatprep.subr.mxu0 0.0
      %7441 = vmatpush1.msra.mxu0 0.0
      %7442 = vmatprep.subr.mxu0 0.0
      %7443 = vmatpush1.msra.mxu0 0.0
      %7444 = vmatprep.subr.mxu0 0.0
      %7445 = vmatpush1.msra.mxu0 0.0
      %7446 = vmatprep.subr.mxu0 0.0
      %7447 = vmatpush1.msra.mxu0 0.0
      %7448 = vmatprep.subr.mxu0 0.0
      %7449 = vmatpush1.msra.mxu0 0.0
      %7450 = vmatprep.subr.mxu0 0.0
      %7451 = vmatpush1.msra.mxu0 0.0
      %7452 = vmatprep.subr.mxu0 0.0
      %7453 = vmatpush1.msra.mxu0 0.0
      %7454 = vmatprep.subr.mxu0 0.0
      %7455 = vmatpush1.msra.mxu0 0.0
      %7456 = vmatprep.subr.mxu0 0.0
      %7457 = vmatpush1.msra.mxu0 0.0
      %7458 = vmatprep.subr.mxu0 0.0
      %7459 = vmatpush1.msra.mxu0 0.0
      %7460 = vmatprep.subr.mxu0 0.0
      %7461 = vmatpush1.msra.mxu0 0.0
      %7462 = vmatprep.subr.mxu0 0.0
      %7463 = vmatpush1.msra.mxu0 0.0
      %7464 = vmatprep.subr.mxu0 0.0
      %7465 = vmatpush1.msra.mxu0 0.0
      %7466 = vmatprep.subr.mxu0 0.0
      %7467 = vmatpush1.msra.mxu0 0.0
      %7468 = vmatprep.subr.mxu0 0.0
      %7469 = vmatpush1.msra.mxu0 0.0
      %7470 = vmatprep.subr.mxu0 0.0
      %7471 = vmatpush1.msra.mxu0 0.0
      %7472 = vmatprep.subr.mxu0 0.0
      %7473 = vmatpush1.msra.mxu0 0.0
      %7474 = vmatprep.subr.mxu0 0.0
      %7475 = vmatpush1.msra.mxu0 0.0
      %7476 = vmatprep.subr.mxu0 0.0
      %7477 = vmatpush1.msra.mxu0 0.0
      %7478 = vmatprep.subr.mxu0 0.0
      %7479 = vmatpush1.msra.mxu0 0.0
      %7480 = vmatprep.subr.mxu0 0.0
      %7481 = vmatpush1.msra.mxu0 0.0
      %7482 = vmatprep.subr.mxu0 0.0
      %7483 = vmatpush1.msra.mxu0 0.0
      %7484 = vmatprep.mubr.f32.mxu0 0.0
      %7485 = vmatmul.mubr.f32.gmra.mrb[0].mxu0 %v2006
      %v7486 = vpop.f32.mrb[0].mxu0
      %v7487 = vadd.f32 0.0, %v7486
      %v7488 = vpop.f32.mrb[0].mxu0
      %7489 = vmatprep.mubr.f32.mxu0 0.0
      %7490 = vmatmul.mubr.f32.gmra.mrb[0].mxu0 %v2009
      %v7491 = vpop.f32.mrb[0].mxu0
      %v7492 = vadd.f32 0.0, %v7491
      %v7493 = vpop.f32.mrb[0].mxu0
      %7494 = vdwg.mxu0
      %7495 = vmatprep.subr.mxu0 0.0
      %7496 = vmatpush1.msra.mxu0 %v7487
      %7497 = vmatprep.subr.mxu0 0.0
      %7498 = vmatpush1.msra.mxu0 %v7492
      %7499 = vmatprep.subr.mxu0 0.0
      %7500 = vmatpush1.msra.mxu0 0.0
      %7501 = vmatprep.subr.mxu0 0.0
      %7502 = vmatpush1.msra.mxu0 0.0
      %7503 = vmatprep.subr.mxu0 0.0
      %7504 = vmatpush1.msra.mxu0 0.0
      %7505 = vmatprep.subr.mxu0 0.0
      %7506 = vmatpush1.msra.mxu0 0.0
      %7507 = vmatprep.subr.mxu0 0.0
      %7508 = vmatpush1.msra.mxu0 0.0
      %7509 = vmatprep.subr.mxu0 0.0
      %7510 = vmatpush1.msra.mxu0 0.0
      %7511 = vmatprep.subr.mxu0 0.0
      %7512 = vmatpush1.msra.mxu0 0.0
      %7513 = vmatprep.subr.mxu0 0.0
      %7514 = vmatpush1.msra.mxu0 0.0
      %7515 = vmatprep.subr.mxu0 0.0
      %7516 = vmatpush1.msra.mxu0 0.0
      %7517 = vmatprep.subr.mxu0 0.0
      %7518 = vmatpush1.msra.mxu0 0.0
      %7519 = vmatprep.subr.mxu0 0.0
      %7520 = vmatpush1.msra.mxu0 0.0
      %7521 = vmatprep.subr.mxu0 0.0
      %7522 = vmatpush1.msra.mxu0 0.0
      %7523 = vmatprep.subr.mxu0 0.0
      %7524 = vmatpush1.msra.mxu0 0.0
      %7525 = vmatprep.subr.mxu0 0.0
      %7526 = vmatpush1.msra.mxu0 0.0
      %7527 = vmatprep.subr.mxu0 0.0
      %7528 = vmatpush1.msra.mxu0 0.0
      %7529 = vmatprep.subr.mxu0 0.0
      %7530 = vmatpush1.msra.mxu0 0.0
      %7531 = vmatprep.subr.mxu0 0.0
      %7532 = vmatpush1.msra.mxu0 0.0
      %7533 = vmatprep.subr.mxu0 0.0
      %7534 = vmatpush1.msra.mxu0 0.0
      %7535 = vmatprep.subr.mxu0 0.0
      %7536 = vmatpush1.msra.mxu0 0.0
      %7537 = vmatprep.subr.mxu0 0.0
      %7538 = vmatpush1.msra.mxu0 0.0
      %7539 = vmatprep.subr.mxu0 0.0
      %7540 = vmatpush1.msra.mxu0 0.0
      %7541 = vmatprep.subr.mxu0 0.0
      %7542 = vmatpush1.msra.mxu0 0.0
      %7543 = vmatprep.subr.mxu0 0.0
      %7544 = vmatpush1.msra.mxu0 0.0
      %7545 = vmatprep.subr.mxu0 0.0
      %7546 = vmatpush1.msra.mxu0 0.0
      %7547 = vmatprep.subr.mxu0 0.0
      %7548 = vmatpush1.msra.mxu0 0.0
      %7549 = vmatprep.subr.mxu0 0.0
      %7550 = vmatpush1.msra.mxu0 0.0
      %7551 = vmatprep.subr.mxu0 0.0
      %7552 = vmatpush1.msra.mxu0 0.0
      %7553 = vmatprep.subr.mxu0 0.0
      %7554 = vmatpush1.msra.mxu0 0.0
      %7555 = vmatprep.subr.mxu0 0.0
      %7556 = vmatpush1.msra.mxu0 0.0
      %7557 = vmatprep.subr.mxu0 0.0
      %7558 = vmatpush1.msra.mxu0 0.0
      %7559 = vmatprep.mubr.f32.mxu0 0.0
      %7560 = vmatmul.mubr.f32.gmra.mrb[0].mxu0 %v5904
      %v7561 = vpop.f32.mrb[0].mxu0
      %v7562 = vadd.f32 0.0, %v7561
      %v7563 = vpop.f32.mrb[0].mxu0
      %7564 = vmatprep.mubr.f32.mxu0 0.0
      %7565 = vmatmul.mubr.f32.gmra.mrb[0].mxu0 %v5907
      %v7566 = vpop.f32.mrb[0].mxu0
      %v7567 = vadd.f32 0.0, %v7566
      %v7568 = vpop.f32.mrb[0].mxu0
      %7569 = vdwg.mxu0
      %v7570 = vmul.f32 %v7258, %v5976
      %v7571 = vmul.f32 %v7263, %v5981
      %v7572 = vsub.f32 %v7562, %v7570
      %v7573 = vsub.f32 %v7567, %v7571
      %v7574 = vmul.f32 %v7258, 2.0
      %v7575 = vmul.f32 %v7263, 2.0
      %v7576 = vmul.f32 %v7574, %v5976
      %v7577 = vmul.f32 %v7575, %v5981
      %v7578 = vadd.f32 %v7576, 0.0001
      %v7579 = vadd.f32 %v7577, 0.0001
      %v7580 = vmul.f32 %v7572, 2.0
      %v7581 = vmul.f32 %v7573, 2.0
      %v7582 = vadd.f32 %v7580, 0.0009
      %v7583 = vadd.f32 %v7581, 0.0009
      %v7584 = vmul.f32 %v7578, %v7582
      %v7585 = vmul.f32 %v7579, %v7583
      %v7586 = vadd.f32 %v7416, %v5984
      %v7587 = vadd.f32 %v7417, %v5985
      %v7588 = vadd.f32 %v7586, 0.0001
      %v7589 = vadd.f32 %v7587, 0.0001
      %v7590 = vadd.f32 %v7418, %v6138
      %v7591 = vadd.f32 %v7419, %v6139
      %v7592 = vmul.f32 %v7588, %v7590
      %v7593 = vmul.f32 %v7589, %v7591
      %v7594 = vrcp.pop %v7592
      %v7595 = vrcp.pop %v7593
      %v7596 = vmul.f32 %v7584, %v7594
      %v7597 = vmul.f32 %v7585, %v7595
      %v7598 = vmax.f32 %v7418, 0.0001
      %v7599 = vmax.f32 %v7419, 0.0001
      %v7600 = vmul.f32 %v7598, %v7596
      %v7601 = vmul.f32 %v7599, %v7597
      %v7602 = vadd.f32 %v7112, %v7600
      %v7603 = vadd.f32 %v7113, %v7601
      %v7604 = vadd.f32 %v7114, %v7598
      %v7605 = vadd.f32 %v7115, %v7599
      %v7606 = vadd.f32 %v7604, 1e-07
      %v7607 = vadd.f32 %v7605, 1e-07
      %v7608 = vrcp.pop %v7606
      %v7609 = vrcp.pop %v7607
      %v7610 = vmul.f32 %v7602, %v7608
      %v7611 = vmul.f32 %v7603, %v7609
      %v7612 = vsel %vm352, %v7610, 0.0
      %v7613 = vsel %vm352, %v7611, 0.0
      %v7614 = vadd.f32 %v7612, %v7613
      %7615 = vadd.xlane.f32.xlu0 %v7614
      %v7616 = vpop.xlane.xlu0 %7615
      %v7617 = vrot.slane %v7616, 4
      %v7618 = vadd.f32 %v7616, %v7617
      %v7619 = vrot.slane %v7618, 2
      %v7620 = vadd.f32 %v7618, %v7619
      %v7621 = vrot.slane %v7620, 1
      %v7622 = vadd.f32 %v7620, %v7621
      %s7623 = vtos %v7622
      %s7624 = sadd.f32 %s5821, %s7623
      %s7625 = scalar_lea.vmem %s0, 64
      %v7626 = vld [vmem:[%s7625] sm:$0xff]
      %v7627 = vld [vmem:[%s7625 + $0x8] sm:$0xff]
      %s7628 = scalar_lea.vmem %s1, 64
      %v7629 = vld [vmem:[%s7628] sm:$0xff]
      %v7630 = vld [vmem:[%s7628 + $0x8] sm:$0xff]
      %7631 = vmatprep.subr.mxu0 0.0
      %7632 = vmatpush1.msra.mxu0 %v7626
      %7633 = vmatprep.subr.mxu0 0.0
      %7634 = vmatpush1.msra.mxu0 %v7627
      %7635 = vmatprep.subr.mxu0 0.0
      %7636 = vmatpush1.msra.mxu0 0.0
      %7637 = vmatprep.subr.mxu0 0.0
      %7638 = vmatpush1.msra.mxu0 0.0
      %7639 = vmatprep.subr.mxu0 0.0
      %7640 = vmatpush1.msra.mxu0 0.0
      %7641 = vmatprep.subr.mxu0 0.0
      %7642 = vmatpush1.msra.mxu0 0.0
      %7643 = vmatprep.subr.mxu0 0.0
      %7644 = vmatpush1.msra.mxu0 0.0
      %7645 = vmatprep.subr.mxu0 0.0
      %7646 = vmatpush1.msra.mxu0 0.0
      %7647 = vmatprep.subr.mxu0 0.0
      %7648 = vmatpush1.msra.mxu0 0.0
      %7649 = vmatprep.subr.mxu0 0.0
      %7650 = vmatpush1.msra.mxu0 0.0
      %7651 = vmatprep.subr.mxu0 0.0
      %7652 = vmatpush1.msra.mxu0 0.0
      %7653 = vmatprep.subr.mxu0 0.0
      %7654 = vmatpush1.msra.mxu0 0.0
      %7655 = vmatprep.subr.mxu0 0.0
      %7656 = vmatpush1.msra.mxu0 0.0
      %7657 = vmatprep.subr.mxu0 0.0
      %7658 = vmatpush1.msra.mxu0 0.0
      %7659 = vmatprep.subr.mxu0 0.0
      %7660 = vmatpush1.msra.mxu0 0.0
      %7661 = vmatprep.subr.mxu0 0.0
      %7662 = vmatpush1.msra.mxu0 0.0
      %7663 = vmatprep.subr.mxu0 0.0
      %7664 = vmatpush1.msra.mxu0 0.0
      %7665 = vmatprep.subr.mxu0 0.0
      %7666 = vmatpush1.msra.mxu0 0.0
      %7667 = vmatprep.subr.mxu0 0.0
      %7668 = vmatpush1.msra.mxu0 0.0
      %7669 = vmatprep.subr.mxu0 0.0
      %7670 = vmatpush1.msra.mxu0 0.0
      %7671 = vmatprep.subr.mxu0 0.0
      %7672 = vmatpush1.msra.mxu0 0.0
      %7673 = vmatprep.subr.mxu0 0.0
      %7674 = vmatpush1.msra.mxu0 0.0
      %7675 = vmatprep.subr.mxu0 0.0
      %7676 = vmatpush1.msra.mxu0 0.0
      %7677 = vmatprep.subr.mxu0 0.0
      %7678 = vmatpush1.msra.mxu0 0.0
      %7679 = vmatprep.subr.mxu0 0.0
      %7680 = vmatpush1.msra.mxu0 0.0
      %7681 = vmatprep.subr.mxu0 0.0
      %7682 = vmatpush1.msra.mxu0 0.0
      %7683 = vmatprep.subr.mxu0 0.0
      %7684 = vmatpush1.msra.mxu0 0.0
      %7685 = vmatprep.subr.mxu0 0.0
      %7686 = vmatpush1.msra.mxu0 0.0
      %7687 = vmatprep.subr.mxu0 0.0
      %7688 = vmatpush1.msra.mxu0 0.0
      %7689 = vmatprep.subr.mxu0 0.0
      %7690 = vmatpush1.msra.mxu0 0.0
      %7691 = vmatprep.subr.mxu0 0.0
      %7692 = vmatpush1.msra.mxu0 0.0
      %7693 = vmatprep.subr.mxu0 0.0
      %7694 = vmatpush1.msra.mxu0 0.0
      %7695 = vmatprep.mubr.f32.mxu0 0.0
      %7696 = vmatmul.mubr.f32.gmra.mrb[0].mxu0 %v354
      %v7697 = vpop.f32.mrb[0].mxu0
      %v7698 = vadd.f32 0.0, %v7697
      %v7699 = vpop.f32.mrb[0].mxu0
      %7700 = vmatprep.mubr.f32.mxu0 0.0
      %7701 = vmatmul.mubr.f32.gmra.mrb[0].mxu0 %v357
      %v7702 = vpop.f32.mrb[0].mxu0
      %v7703 = vadd.f32 0.0, %v7702
      %v7704 = vpop.f32.mrb[0].mxu0
      %7705 = vdwg.mxu0
      %v7707 = vsel %vm352, %v7629, 0
      %v7710 = vsel %vm352, %v7630, 0
      %7712 = vmatprep.subr.mxu0 0.0
      %7713 = vmatpush1.msra.mxu0 %v7698
      %7714 = vmatprep.subr.mxu0 0.0
      %7715 = vmatpush1.msra.mxu0 %v7703
      %7716 = vmatprep.subr.mxu0 0.0
      %7717 = vmatpush1.msra.mxu0 0.0
      %7718 = vmatprep.subr.mxu0 0.0
      %7719 = vmatpush1.msra.mxu0 0.0
      %7720 = vmatprep.subr.mxu0 0.0
      %7721 = vmatpush1.msra.mxu0 0.0
      %7722 = vmatprep.subr.mxu0 0.0
      %7723 = vmatpush1.msra.mxu0 0.0
      %7724 = vmatprep.subr.mxu0 0.0
      %7725 = vmatpush1.msra.mxu0 0.0
      %7726 = vmatprep.subr.mxu0 0.0
      %7727 = vmatpush1.msra.mxu0 0.0
      %7728 = vmatprep.subr.mxu0 0.0
      %7729 = vmatpush1.msra.mxu0 0.0
      %7730 = vmatprep.subr.mxu0 0.0
      %7731 = vmatpush1.msra.mxu0 0.0
      %7732 = vmatprep.subr.mxu0 0.0
      %7733 = vmatpush1.msra.mxu0 0.0
      %7734 = vmatprep.subr.mxu0 0.0
      %7735 = vmatpush1.msra.mxu0 0.0
      %7736 = vmatprep.subr.mxu0 0.0
      %7737 = vmatpush1.msra.mxu0 0.0
      %7738 = vmatprep.subr.mxu0 0.0
      %7739 = vmatpush1.msra.mxu0 0.0
      %7740 = vmatprep.subr.mxu0 0.0
      %7741 = vmatpush1.msra.mxu0 0.0
      %7742 = vmatprep.subr.mxu0 0.0
      %7743 = vmatpush1.msra.mxu0 0.0
      %7744 = vmatprep.subr.mxu0 0.0
      %7745 = vmatpush1.msra.mxu0 0.0
      %7746 = vmatprep.subr.mxu0 0.0
      %7747 = vmatpush1.msra.mxu0 0.0
      %7748 = vmatprep.subr.mxu0 0.0
      %7749 = vmatpush1.msra.mxu0 0.0
      %7750 = vmatprep.subr.mxu0 0.0
      %7751 = vmatpush1.msra.mxu0 0.0
      %7752 = vmatprep.subr.mxu0 0.0
      %7753 = vmatpush1.msra.mxu0 0.0
      %7754 = vmatprep.subr.mxu0 0.0
      %7755 = vmatpush1.msra.mxu0 0.0
      %7756 = vmatprep.subr.mxu0 0.0
      %7757 = vmatpush1.msra.mxu0 0.0
      %7758 = vmatprep.subr.mxu0 0.0
      %7759 = vmatpush1.msra.mxu0 0.0
      %7760 = vmatprep.subr.mxu0 0.0
      %7761 = vmatpush1.msra.mxu0 0.0
      %7762 = vmatprep.subr.mxu0 0.0
      %7763 = vmatpush1.msra.mxu0 0.0
      %7764 = vmatprep.subr.mxu0 0.0
      %7765 = vmatpush1.msra.mxu0 0.0
      %7766 = vmatprep.subr.mxu0 0.0
      %7767 = vmatpush1.msra.mxu0 0.0
      %7768 = vmatprep.subr.mxu0 0.0
      %7769 = vmatpush1.msra.mxu0 0.0
      %7770 = vmatprep.subr.mxu0 0.0
      %7771 = vmatpush1.msra.mxu0 0.0
      %7772 = vmatprep.subr.mxu0 0.0
      %7773 = vmatpush1.msra.mxu0 0.0
      %7774 = vmatprep.subr.mxu0 0.0
      %7775 = vmatpush1.msra.mxu0 0.0
      %7776 = vmatprep.mubr.f32.mxu0 0.0
      %7777 = vmatmul.mubr.f32.gmra.mrb[0].mxu0 %v7707
      %v7778 = vpop.f32.mrb[0].mxu0
      %v7779 = vadd.f32 0.0, %v7778
      %v7780 = vpop.f32.mrb[0].mxu0
      %7781 = vmatprep.mubr.f32.mxu0 0.0
      %7782 = vmatmul.mubr.f32.gmra.mrb[0].mxu0 %v7710
      %v7783 = vpop.f32.mrb[0].mxu0
      %v7784 = vadd.f32 0.0, %v7783
      %v7785 = vpop.f32.mrb[0].mxu0
      %7786 = vdwg.mxu0
      %v7787 = vmul.f32 %v7779, %v7779
      %v7788 = vmul.f32 %v7784, %v7784
      %7789 = vmatprep.subr.mxu0 0.0
      %7790 = vmatpush1.msra.mxu0 %v7626
      %7791 = vmatprep.subr.mxu0 0.0
      %7792 = vmatpush1.msra.mxu0 %v7627
      %7793 = vmatprep.subr.mxu0 0.0
      %7794 = vmatpush1.msra.mxu0 0.0
      %7795 = vmatprep.subr.mxu0 0.0
      %7796 = vmatpush1.msra.mxu0 0.0
      %7797 = vmatprep.subr.mxu0 0.0
      %7798 = vmatpush1.msra.mxu0 0.0
      %7799 = vmatprep.subr.mxu0 0.0
      %7800 = vmatpush1.msra.mxu0 0.0
      %7801 = vmatprep.subr.mxu0 0.0
      %7802 = vmatpush1.msra.mxu0 0.0
      %7803 = vmatprep.subr.mxu0 0.0
      %7804 = vmatpush1.msra.mxu0 0.0
      %7805 = vmatprep.subr.mxu0 0.0
      %7806 = vmatpush1.msra.mxu0 0.0
      %7807 = vmatprep.subr.mxu0 0.0
      %7808 = vmatpush1.msra.mxu0 0.0
      %7809 = vmatprep.subr.mxu0 0.0
      %7810 = vmatpush1.msra.mxu0 0.0
      %7811 = vmatprep.subr.mxu0 0.0
      %7812 = vmatpush1.msra.mxu0 0.0
      %7813 = vmatprep.subr.mxu0 0.0
      %7814 = vmatpush1.msra.mxu0 0.0
      %7815 = vmatprep.subr.mxu0 0.0
      %7816 = vmatpush1.msra.mxu0 0.0
      %7817 = vmatprep.subr.mxu0 0.0
      %7818 = vmatpush1.msra.mxu0 0.0
      %7819 = vmatprep.subr.mxu0 0.0
      %7820 = vmatpush1.msra.mxu0 0.0
      %7821 = vmatprep.subr.mxu0 0.0
      %7822 = vmatpush1.msra.mxu0 0.0
      %7823 = vmatprep.subr.mxu0 0.0
      %7824 = vmatpush1.msra.mxu0 0.0
      %7825 = vmatprep.subr.mxu0 0.0
      %7826 = vmatpush1.msra.mxu0 0.0
      %7827 = vmatprep.subr.mxu0 0.0
      %7828 = vmatpush1.msra.mxu0 0.0
      %7829 = vmatprep.subr.mxu0 0.0
      %7830 = vmatpush1.msra.mxu0 0.0
      %7831 = vmatprep.subr.mxu0 0.0
      %7832 = vmatpush1.msra.mxu0 0.0
      %7833 = vmatprep.subr.mxu0 0.0
      %7834 = vmatpush1.msra.mxu0 0.0
      %7835 = vmatprep.subr.mxu0 0.0
      %7836 = vmatpush1.msra.mxu0 0.0
      %7837 = vmatprep.subr.mxu0 0.0
      %7838 = vmatpush1.msra.mxu0 0.0
      %7839 = vmatprep.subr.mxu0 0.0
      %7840 = vmatpush1.msra.mxu0 0.0
      %7841 = vmatprep.subr.mxu0 0.0
      %7842 = vmatpush1.msra.mxu0 0.0
      %7843 = vmatprep.subr.mxu0 0.0
      %7844 = vmatpush1.msra.mxu0 0.0
      %7845 = vmatprep.subr.mxu0 0.0
      %7846 = vmatpush1.msra.mxu0 0.0
      %7847 = vmatprep.subr.mxu0 0.0
      %7848 = vmatpush1.msra.mxu0 0.0
      %7849 = vmatprep.subr.mxu0 0.0
      %7850 = vmatpush1.msra.mxu0 0.0
      %7851 = vmatprep.subr.mxu0 0.0
      %7852 = vmatpush1.msra.mxu0 0.0
      %7853 = vmatprep.mubr.f32.mxu0 0.0
      %7854 = vmatmul.mubr.f32.gmra.mrb[0].mxu0 %v518
      %v7855 = vpop.f32.mrb[0].mxu0
      %v7856 = vadd.f32 0.0, %v7855
      %v7857 = vpop.f32.mrb[0].mxu0
      %7858 = vmatprep.mubr.f32.mxu0 0.0
      %7859 = vmatmul.mubr.f32.gmra.mrb[0].mxu0 %v521
      %v7860 = vpop.f32.mrb[0].mxu0
      %v7861 = vadd.f32 0.0, %v7860
      %v7862 = vpop.f32.mrb[0].mxu0
      %7863 = vdwg.mxu0
      %7864 = vmatprep.subr.mxu0 0.0
      %7865 = vmatpush1.msra.mxu0 %v7856
      %7866 = vmatprep.subr.mxu0 0.0
      %7867 = vmatpush1.msra.mxu0 %v7861
      %7868 = vmatprep.subr.mxu0 0.0
      %7869 = vmatpush1.msra.mxu0 0.0
      %7870 = vmatprep.subr.mxu0 0.0
      %7871 = vmatpush1.msra.mxu0 0.0
      %7872 = vmatprep.subr.mxu0 0.0
      %7873 = vmatpush1.msra.mxu0 0.0
      %7874 = vmatprep.subr.mxu0 0.0
      %7875 = vmatpush1.msra.mxu0 0.0
      %7876 = vmatprep.subr.mxu0 0.0
      %7877 = vmatpush1.msra.mxu0 0.0
      %7878 = vmatprep.subr.mxu0 0.0
      %7879 = vmatpush1.msra.mxu0 0.0
      %7880 = vmatprep.subr.mxu0 0.0
      %7881 = vmatpush1.msra.mxu0 0.0
      %7882 = vmatprep.subr.mxu0 0.0
      %7883 = vmatpush1.msra.mxu0 0.0
      %7884 = vmatprep.subr.mxu0 0.0
      %7885 = vmatpush1.msra.mxu0 0.0
      %7886 = vmatprep.subr.mxu0 0.0
      %7887 = vmatpush1.msra.mxu0 0.0
      %7888 = vmatprep.subr.mxu0 0.0
      %7889 = vmatpush1.msra.mxu0 0.0
      %7890 = vmatprep.subr.mxu0 0.0
      %7891 = vmatpush1.msra.mxu0 0.0
      %7892 = vmatprep.subr.mxu0 0.0
      %7893 = vmatpush1.msra.mxu0 0.0
      %7894 = vmatprep.subr.mxu0 0.0
      %7895 = vmatpush1.msra.mxu0 0.0
      %7896 = vmatprep.subr.mxu0 0.0
      %7897 = vmatpush1.msra.mxu0 0.0
      %7898 = vmatprep.subr.mxu0 0.0
      %7899 = vmatpush1.msra.mxu0 0.0
      %7900 = vmatprep.subr.mxu0 0.0
      %7901 = vmatpush1.msra.mxu0 0.0
      %7902 = vmatprep.subr.mxu0 0.0
      %7903 = vmatpush1.msra.mxu0 0.0
      %7904 = vmatprep.subr.mxu0 0.0
      %7905 = vmatpush1.msra.mxu0 0.0
      %7906 = vmatprep.subr.mxu0 0.0
      %7907 = vmatpush1.msra.mxu0 0.0
      %7908 = vmatprep.subr.mxu0 0.0
      %7909 = vmatpush1.msra.mxu0 0.0
      %7910 = vmatprep.subr.mxu0 0.0
      %7911 = vmatpush1.msra.mxu0 0.0
      %7912 = vmatprep.subr.mxu0 0.0
      %7913 = vmatpush1.msra.mxu0 0.0
      %7914 = vmatprep.subr.mxu0 0.0
      %7915 = vmatpush1.msra.mxu0 0.0
      %7916 = vmatprep.subr.mxu0 0.0
      %7917 = vmatpush1.msra.mxu0 0.0
      %7918 = vmatprep.subr.mxu0 0.0
      %7919 = vmatpush1.msra.mxu0 0.0
      %7920 = vmatprep.subr.mxu0 0.0
      %7921 = vmatpush1.msra.mxu0 0.0
      %7922 = vmatprep.subr.mxu0 0.0
      %7923 = vmatpush1.msra.mxu0 0.0
      %7924 = vmatprep.subr.mxu0 0.0
      %7925 = vmatpush1.msra.mxu0 0.0
      %7926 = vmatprep.subr.mxu0 0.0
      %7927 = vmatpush1.msra.mxu0 0.0
      %7928 = vmatprep.mubr.f32.mxu0 0.0
      %7929 = vmatmul.mubr.f32.gmra.mrb[0].mxu0 %v7707
      %v7930 = vpop.f32.mrb[0].mxu0
      %v7931 = vadd.f32 0.0, %v7930
      %v7932 = vpop.f32.mrb[0].mxu0
      %7933 = vmatprep.mubr.f32.mxu0 0.0
      %7934 = vmatmul.mubr.f32.gmra.mrb[0].mxu0 %v7710
      %v7935 = vpop.f32.mrb[0].mxu0
      %v7936 = vadd.f32 0.0, %v7935
      %v7937 = vpop.f32.mrb[0].mxu0
      %7938 = vdwg.mxu0
      %v7939 = vsub.f32 %v7931, %v7787
      %v7940 = vsub.f32 %v7936, %v7788
      %v7941 = vadd.f32 %v7939, 0.0009
      %v7942 = vadd.f32 %v7940, 0.0009
      %7943 = vmatprep.subr.mxu0 0.0
      %7944 = vmatpush1.msra.mxu0 %v7626
      %7945 = vmatprep.subr.mxu0 0.0
      %7946 = vmatpush1.msra.mxu0 %v7627
      %7947 = vmatprep.subr.mxu0 0.0
      %7948 = vmatpush1.msra.mxu0 0.0
      %7949 = vmatprep.subr.mxu0 0.0
      %7950 = vmatpush1.msra.mxu0 0.0
      %7951 = vmatprep.subr.mxu0 0.0
      %7952 = vmatpush1.msra.mxu0 0.0
      %7953 = vmatprep.subr.mxu0 0.0
      %7954 = vmatpush1.msra.mxu0 0.0
      %7955 = vmatprep.subr.mxu0 0.0
      %7956 = vmatpush1.msra.mxu0 0.0
      %7957 = vmatprep.subr.mxu0 0.0
      %7958 = vmatpush1.msra.mxu0 0.0
      %7959 = vmatprep.subr.mxu0 0.0
      %7960 = vmatpush1.msra.mxu0 0.0
      %7961 = vmatprep.subr.mxu0 0.0
      %7962 = vmatpush1.msra.mxu0 0.0
      %7963 = vmatprep.subr.mxu0 0.0
      %7964 = vmatpush1.msra.mxu0 0.0
      %7965 = vmatprep.subr.mxu0 0.0
      %7966 = vmatpush1.msra.mxu0 0.0
      %7967 = vmatprep.subr.mxu0 0.0
      %7968 = vmatpush1.msra.mxu0 0.0
      %7969 = vmatprep.subr.mxu0 0.0
      %7970 = vmatpush1.msra.mxu0 0.0
      %7971 = vmatprep.subr.mxu0 0.0
      %7972 = vmatpush1.msra.mxu0 0.0
      %7973 = vmatprep.subr.mxu0 0.0
      %7974 = vmatpush1.msra.mxu0 0.0
      %7975 = vmatprep.subr.mxu0 0.0
      %7976 = vmatpush1.msra.mxu0 0.0
      %7977 = vmatprep.subr.mxu0 0.0
      %7978 = vmatpush1.msra.mxu0 0.0
      %7979 = vmatprep.subr.mxu0 0.0
      %7980 = vmatpush1.msra.mxu0 0.0
      %7981 = vmatprep.subr.mxu0 0.0
      %7982 = vmatpush1.msra.mxu0 0.0
      %7983 = vmatprep.subr.mxu0 0.0
      %7984 = vmatpush1.msra.mxu0 0.0
      %7985 = vmatprep.subr.mxu0 0.0
      %7986 = vmatpush1.msra.mxu0 0.0
      %7987 = vmatprep.subr.mxu0 0.0
      %7988 = vmatpush1.msra.mxu0 0.0
      %7989 = vmatprep.subr.mxu0 0.0
      %7990 = vmatpush1.msra.mxu0 0.0
      %7991 = vmatprep.subr.mxu0 0.0
      %7992 = vmatpush1.msra.mxu0 0.0
      %7993 = vmatprep.subr.mxu0 0.0
      %7994 = vmatpush1.msra.mxu0 0.0
      %7995 = vmatprep.subr.mxu0 0.0
      %7996 = vmatpush1.msra.mxu0 0.0
      %7997 = vmatprep.subr.mxu0 0.0
      %7998 = vmatpush1.msra.mxu0 0.0
      %7999 = vmatprep.subr.mxu0 0.0
      %8000 = vmatpush1.msra.mxu0 0.0
      %8001 = vmatprep.subr.mxu0 0.0
      %8002 = vmatpush1.msra.mxu0 0.0
      %8003 = vmatprep.subr.mxu0 0.0
      %8004 = vmatpush1.msra.mxu0 0.0
      %8005 = vmatprep.subr.mxu0 0.0
      %8006 = vmatpush1.msra.mxu0 0.0
      %8007 = vmatprep.mubr.f32.mxu0 0.0
      %8008 = vmatmul.mubr.f32.gmra.mrb[0].mxu0 %v678
      %v8009 = vpop.f32.mrb[0].mxu0
      %v8010 = vadd.f32 0.0, %v8009
      %v8011 = vpop.f32.mrb[0].mxu0
      %8012 = vmatprep.mubr.f32.mxu0 0.0
      %8013 = vmatmul.mubr.f32.gmra.mrb[0].mxu0 %v681
      %v8014 = vpop.f32.mrb[0].mxu0
      %v8015 = vadd.f32 0.0, %v8014
      %v8016 = vpop.f32.mrb[0].mxu0
      %8017 = vdwg.mxu0
      %8018 = vmatprep.subr.mxu0 0.0
      %8019 = vmatpush1.msra.mxu0 %v8010
      %8020 = vmatprep.subr.mxu0 0.0
      %8021 = vmatpush1.msra.mxu0 %v8015
      %8022 = vmatprep.subr.mxu0 0.0
      %8023 = vmatpush1.msra.mxu0 0.0
      %8024 = vmatprep.subr.mxu0 0.0
      %8025 = vmatpush1.msra.mxu0 0.0
      %8026 = vmatprep.subr.mxu0 0.0
      %8027 = vmatpush1.msra.mxu0 0.0
      %8028 = vmatprep.subr.mxu0 0.0
      %8029 = vmatpush1.msra.mxu0 0.0
      %8030 = vmatprep.subr.mxu0 0.0
      %8031 = vmatpush1.msra.mxu0 0.0
      %8032 = vmatprep.subr.mxu0 0.0
      %8033 = vmatpush1.msra.mxu0 0.0
      %8034 = vmatprep.subr.mxu0 0.0
      %8035 = vmatpush1.msra.mxu0 0.0
      %8036 = vmatprep.subr.mxu0 0.0
      %8037 = vmatpush1.msra.mxu0 0.0
      %8038 = vmatprep.subr.mxu0 0.0
      %8039 = vmatpush1.msra.mxu0 0.0
      %8040 = vmatprep.subr.mxu0 0.0
      %8041 = vmatpush1.msra.mxu0 0.0
      %8042 = vmatprep.subr.mxu0 0.0
      %8043 = vmatpush1.msra.mxu0 0.0
      %8044 = vmatprep.subr.mxu0 0.0
      %8045 = vmatpush1.msra.mxu0 0.0
      %8046 = vmatprep.subr.mxu0 0.0
      %8047 = vmatpush1.msra.mxu0 0.0
      %8048 = vmatprep.subr.mxu0 0.0
      %8049 = vmatpush1.msra.mxu0 0.0
      %8050 = vmatprep.subr.mxu0 0.0
      %8051 = vmatpush1.msra.mxu0 0.0
      %8052 = vmatprep.subr.mxu0 0.0
      %8053 = vmatpush1.msra.mxu0 0.0
      %8054 = vmatprep.subr.mxu0 0.0
      %8055 = vmatpush1.msra.mxu0 0.0
      %8056 = vmatprep.subr.mxu0 0.0
      %8057 = vmatpush1.msra.mxu0 0.0
      %8058 = vmatprep.subr.mxu0 0.0
      %8059 = vmatpush1.msra.mxu0 0.0
      %8060 = vmatprep.subr.mxu0 0.0
      %8061 = vmatpush1.msra.mxu0 0.0
      %8062 = vmatprep.subr.mxu0 0.0
      %8063 = vmatpush1.msra.mxu0 0.0
      %8064 = vmatprep.subr.mxu0 0.0
      %8065 = vmatpush1.msra.mxu0 0.0
      %8066 = vmatprep.subr.mxu0 0.0
      %8067 = vmatpush1.msra.mxu0 0.0
      %8068 = vmatprep.subr.mxu0 0.0
      %8069 = vmatpush1.msra.mxu0 0.0
      %8070 = vmatprep.subr.mxu0 0.0
      %8071 = vmatpush1.msra.mxu0 0.0
      %8072 = vmatprep.subr.mxu0 0.0
      %8073 = vmatpush1.msra.mxu0 0.0
      %8074 = vmatprep.subr.mxu0 0.0
      %8075 = vmatpush1.msra.mxu0 0.0
      %8076 = vmatprep.subr.mxu0 0.0
      %8077 = vmatpush1.msra.mxu0 0.0
      %8078 = vmatprep.subr.mxu0 0.0
      %8079 = vmatpush1.msra.mxu0 0.0
      %8080 = vmatprep.subr.mxu0 0.0
      %8081 = vmatpush1.msra.mxu0 0.0
      %8082 = vmatprep.mubr.f32.mxu0 0.0
      %8083 = vmatmul.mubr.f32.gmra.mrb[0].mxu0 %v7707
      %v8084 = vpop.f32.mrb[0].mxu0
      %v8085 = vadd.f32 0.0, %v8084
      %v8086 = vpop.f32.mrb[0].mxu0
      %8087 = vmatprep.mubr.f32.mxu0 0.0
      %8088 = vmatmul.mubr.f32.gmra.mrb[0].mxu0 %v7710
      %v8089 = vpop.f32.mrb[0].mxu0
      %v8090 = vadd.f32 0.0, %v8089
      %v8091 = vpop.f32.mrb[0].mxu0
      %8092 = vdwg.mxu0
      %8093 = vmatprep.subr.mxu0 0.0
      %8094 = vmatpush1.msra.mxu0 %v7626
      %8095 = vmatprep.subr.mxu0 0.0
      %8096 = vmatpush1.msra.mxu0 %v7627
      %8097 = vmatprep.subr.mxu0 0.0
      %8098 = vmatpush1.msra.mxu0 0.0
      %8099 = vmatprep.subr.mxu0 0.0
      %8100 = vmatpush1.msra.mxu0 0.0
      %8101 = vmatprep.subr.mxu0 0.0
      %8102 = vmatpush1.msra.mxu0 0.0
      %8103 = vmatprep.subr.mxu0 0.0
      %8104 = vmatpush1.msra.mxu0 0.0
      %8105 = vmatprep.subr.mxu0 0.0
      %8106 = vmatpush1.msra.mxu0 0.0
      %8107 = vmatprep.subr.mxu0 0.0
      %8108 = vmatpush1.msra.mxu0 0.0
      %8109 = vmatprep.subr.mxu0 0.0
      %8110 = vmatpush1.msra.mxu0 0.0
      %8111 = vmatprep.subr.mxu0 0.0
      %8112 = vmatpush1.msra.mxu0 0.0
      %8113 = vmatprep.subr.mxu0 0.0
      %8114 = vmatpush1.msra.mxu0 0.0
      %8115 = vmatprep.subr.mxu0 0.0
      %8116 = vmatpush1.msra.mxu0 0.0
      %8117 = vmatprep.subr.mxu0 0.0
      %8118 = vmatpush1.msra.mxu0 0.0
      %8119 = vmatprep.subr.mxu0 0.0
      %8120 = vmatpush1.msra.mxu0 0.0
      %8121 = vmatprep.subr.mxu0 0.0
      %8122 = vmatpush1.msra.mxu0 0.0
      %8123 = vmatprep.subr.mxu0 0.0
      %8124 = vmatpush1.msra.mxu0 0.0
      %8125 = vmatprep.subr.mxu0 0.0
      %8126 = vmatpush1.msra.mxu0 0.0
      %8127 = vmatprep.subr.mxu0 0.0
      %8128 = vmatpush1.msra.mxu0 0.0
      %8129 = vmatprep.subr.mxu0 0.0
      %8130 = vmatpush1.msra.mxu0 0.0
      %8131 = vmatprep.subr.mxu0 0.0
      %8132 = vmatpush1.msra.mxu0 0.0
      %8133 = vmatprep.subr.mxu0 0.0
      %8134 = vmatpush1.msra.mxu0 0.0
      %8135 = vmatprep.subr.mxu0 0.0
      %8136 = vmatpush1.msra.mxu0 0.0
      %8137 = vmatprep.subr.mxu0 0.0
      %8138 = vmatpush1.msra.mxu0 0.0
      %8139 = vmatprep.subr.mxu0 0.0
      %8140 = vmatpush1.msra.mxu0 0.0
      %8141 = vmatprep.subr.mxu0 0.0
      %8142 = vmatpush1.msra.mxu0 0.0
      %8143 = vmatprep.subr.mxu0 0.0
      %8144 = vmatpush1.msra.mxu0 0.0
      %8145 = vmatprep.subr.mxu0 0.0
      %8146 = vmatpush1.msra.mxu0 0.0
      %8147 = vmatprep.subr.mxu0 0.0
      %8148 = vmatpush1.msra.mxu0 0.0
      %8149 = vmatprep.subr.mxu0 0.0
      %8150 = vmatpush1.msra.mxu0 0.0
      %8151 = vmatprep.subr.mxu0 0.0
      %8152 = vmatpush1.msra.mxu0 0.0
      %8153 = vmatprep.subr.mxu0 0.0
      %8154 = vmatpush1.msra.mxu0 0.0
      %8155 = vmatprep.subr.mxu0 0.0
      %8156 = vmatpush1.msra.mxu0 0.0
      %8157 = vmatprep.mubr.f32.mxu0 0.0
      %8158 = vmatmul.mubr.f32.gmra.mrb[0].mxu0 %v834
      %v8159 = vpop.f32.mrb[0].mxu0
      %v8160 = vadd.f32 0.0, %v8159
      %v8161 = vpop.f32.mrb[0].mxu0
      %8162 = vmatprep.mubr.f32.mxu0 0.0
      %8163 = vmatmul.mubr.f32.gmra.mrb[0].mxu0 %v837
      %v8164 = vpop.f32.mrb[0].mxu0
      %v8165 = vadd.f32 0.0, %v8164
      %v8166 = vpop.f32.mrb[0].mxu0
      %8167 = vdwg.mxu0
      %8168 = vmatprep.subr.mxu0 0.0
      %8169 = vmatpush1.msra.mxu0 %v8160
      %8170 = vmatprep.subr.mxu0 0.0
      %8171 = vmatpush1.msra.mxu0 %v8165
      %8172 = vmatprep.subr.mxu0 0.0
      %8173 = vmatpush1.msra.mxu0 0.0
      %8174 = vmatprep.subr.mxu0 0.0
      %8175 = vmatpush1.msra.mxu0 0.0
      %8176 = vmatprep.subr.mxu0 0.0
      %8177 = vmatpush1.msra.mxu0 0.0
      %8178 = vmatprep.subr.mxu0 0.0
      %8179 = vmatpush1.msra.mxu0 0.0
      %8180 = vmatprep.subr.mxu0 0.0
      %8181 = vmatpush1.msra.mxu0 0.0
      %8182 = vmatprep.subr.mxu0 0.0
      %8183 = vmatpush1.msra.mxu0 0.0
      %8184 = vmatprep.subr.mxu0 0.0
      %8185 = vmatpush1.msra.mxu0 0.0
      %8186 = vmatprep.subr.mxu0 0.0
      %8187 = vmatpush1.msra.mxu0 0.0
      %8188 = vmatprep.subr.mxu0 0.0
      %8189 = vmatpush1.msra.mxu0 0.0
      %8190 = vmatprep.subr.mxu0 0.0
      %8191 = vmatpush1.msra.mxu0 0.0
      %8192 = vmatprep.subr.mxu0 0.0
      %8193 = vmatpush1.msra.mxu0 0.0
      %8194 = vmatprep.subr.mxu0 0.0
      %8195 = vmatpush1.msra.mxu0 0.0
      %8196 = vmatprep.subr.mxu0 0.0
      %8197 = vmatpush1.msra.mxu0 0.0
      %8198 = vmatprep.subr.mxu0 0.0
      %8199 = vmatpush1.msra.mxu0 0.0
      %8200 = vmatprep.subr.mxu0 0.0
      %8201 = vmatpush1.msra.mxu0 0.0
      %8202 = vmatprep.subr.mxu0 0.0
      %8203 = vmatpush1.msra.mxu0 0.0
      %8204 = vmatprep.subr.mxu0 0.0
      %8205 = vmatpush1.msra.mxu0 0.0
      %8206 = vmatprep.subr.mxu0 0.0
      %8207 = vmatpush1.msra.mxu0 0.0
      %8208 = vmatprep.subr.mxu0 0.0
      %8209 = vmatpush1.msra.mxu0 0.0
      %8210 = vmatprep.subr.mxu0 0.0
      %8211 = vmatpush1.msra.mxu0 0.0
      %8212 = vmatprep.subr.mxu0 0.0
      %8213 = vmatpush1.msra.mxu0 0.0
      %8214 = vmatprep.subr.mxu0 0.0
      %8215 = vmatpush1.msra.mxu0 0.0
      %8216 = vmatprep.subr.mxu0 0.0
      %8217 = vmatpush1.msra.mxu0 0.0
      %8218 = vmatprep.subr.mxu0 0.0
      %8219 = vmatpush1.msra.mxu0 0.0
      %8220 = vmatprep.subr.mxu0 0.0
      %8221 = vmatpush1.msra.mxu0 0.0
      %8222 = vmatprep.subr.mxu0 0.0
      %8223 = vmatpush1.msra.mxu0 0.0
      %8224 = vmatprep.subr.mxu0 0.0
      %8225 = vmatpush1.msra.mxu0 0.0
      %8226 = vmatprep.subr.mxu0 0.0
      %8227 = vmatpush1.msra.mxu0 0.0
      %8228 = vmatprep.subr.mxu0 0.0
      %8229 = vmatpush1.msra.mxu0 0.0
      %8230 = vmatprep.subr.mxu0 0.0
      %8231 = vmatpush1.msra.mxu0 0.0
      %8232 = vmatprep.mubr.f32.mxu0 0.0
      %8233 = vmatmul.mubr.f32.gmra.mrb[0].mxu0 %v7707
      %v8234 = vpop.f32.mrb[0].mxu0
      %v8235 = vadd.f32 0.0, %v8234
      %v8236 = vpop.f32.mrb[0].mxu0
      %8237 = vmatprep.mubr.f32.mxu0 0.0
      %8238 = vmatmul.mubr.f32.gmra.mrb[0].mxu0 %v7710
      %v8239 = vpop.f32.mrb[0].mxu0
      %v8240 = vadd.f32 0.0, %v8239
      %v8241 = vpop.f32.mrb[0].mxu0
      %8242 = vdwg.mxu0
      %v8243 = vmul.f32 %v8085, %v8085
      %v8244 = vmul.f32 %v8090, %v8090
      %v8245 = vsub.f32 %v8235, %v8243
      %v8246 = vsub.f32 %v8240, %v8244
      %8247 = vmatprep.subr.mxu0 0.0
      %8248 = vmatpush1.msra.mxu0 %v7626
      %8249 = vmatprep.subr.mxu0 0.0
      %8250 = vmatpush1.msra.mxu0 %v7627
      %8251 = vmatprep.subr.mxu0 0.0
      %8252 = vmatpush1.msra.mxu0 0.0
      %8253 = vmatprep.subr.mxu0 0.0
      %8254 = vmatpush1.msra.mxu0 0.0
      %8255 = vmatprep.subr.mxu0 0.0
      %8256 = vmatpush1.msra.mxu0 0.0
      %8257 = vmatprep.subr.mxu0 0.0
      %8258 = vmatpush1.msra.mxu0 0.0
      %8259 = vmatprep.subr.mxu0 0.0
      %8260 = vmatpush1.msra.mxu0 0.0
      %8261 = vmatprep.subr.mxu0 0.0
      %8262 = vmatpush1.msra.mxu0 0.0
      %8263 = vmatprep.subr.mxu0 0.0
      %8264 = vmatpush1.msra.mxu0 0.0
      %8265 = vmatprep.subr.mxu0 0.0
      %8266 = vmatpush1.msra.mxu0 0.0
      %8267 = vmatprep.subr.mxu0 0.0
      %8268 = vmatpush1.msra.mxu0 0.0
      %8269 = vmatprep.subr.mxu0 0.0
      %8270 = vmatpush1.msra.mxu0 0.0
      %8271 = vmatprep.subr.mxu0 0.0
      %8272 = vmatpush1.msra.mxu0 0.0
      %8273 = vmatprep.subr.mxu0 0.0
      %8274 = vmatpush1.msra.mxu0 0.0
      %8275 = vmatprep.subr.mxu0 0.0
      %8276 = vmatpush1.msra.mxu0 0.0
      %8277 = vmatprep.subr.mxu0 0.0
      %8278 = vmatpush1.msra.mxu0 0.0
      %8279 = vmatprep.subr.mxu0 0.0
      %8280 = vmatpush1.msra.mxu0 0.0
      %8281 = vmatprep.subr.mxu0 0.0
      %8282 = vmatpush1.msra.mxu0 0.0
      %8283 = vmatprep.subr.mxu0 0.0
      %8284 = vmatpush1.msra.mxu0 0.0
      %8285 = vmatprep.subr.mxu0 0.0
      %8286 = vmatpush1.msra.mxu0 0.0
      %8287 = vmatprep.subr.mxu0 0.0
      %8288 = vmatpush1.msra.mxu0 0.0
      %8289 = vmatprep.subr.mxu0 0.0
      %8290 = vmatpush1.msra.mxu0 0.0
      %8291 = vmatprep.subr.mxu0 0.0
      %8292 = vmatpush1.msra.mxu0 0.0
      %8293 = vmatprep.subr.mxu0 0.0
      %8294 = vmatpush1.msra.mxu0 0.0
      %8295 = vmatprep.subr.mxu0 0.0
      %8296 = vmatpush1.msra.mxu0 0.0
      %8297 = vmatprep.subr.mxu0 0.0
      %8298 = vmatpush1.msra.mxu0 0.0
      %8299 = vmatprep.subr.mxu0 0.0
      %8300 = vmatpush1.msra.mxu0 0.0
      %8301 = vmatprep.subr.mxu0 0.0
      %8302 = vmatpush1.msra.mxu0 0.0
      %8303 = vmatprep.subr.mxu0 0.0
      %8304 = vmatpush1.msra.mxu0 0.0
      %8305 = vmatprep.subr.mxu0 0.0
      %8306 = vmatpush1.msra.mxu0 0.0
      %8307 = vmatprep.subr.mxu0 0.0
      %8308 = vmatpush1.msra.mxu0 0.0
      %8309 = vmatprep.subr.mxu0 0.0
      %8310 = vmatpush1.msra.mxu0 0.0
      %8311 = vmatprep.mubr.f32.mxu0 0.0
      %8312 = vmatmul.mubr.f32.gmra.mrb[0].mxu0 %v994
      %v8313 = vpop.f32.mrb[0].mxu0
      %v8314 = vadd.f32 0.0, %v8313
      %v8315 = vpop.f32.mrb[0].mxu0
      %8316 = vmatprep.mubr.f32.mxu0 0.0
      %8317 = vmatmul.mubr.f32.gmra.mrb[0].mxu0 %v997
      %v8318 = vpop.f32.mrb[0].mxu0
      %v8319 = vadd.f32 0.0, %v8318
      %v8320 = vpop.f32.mrb[0].mxu0
      %8321 = vdwg.mxu0
      %8322 = vmatprep.subr.mxu0 0.0
      %8323 = vmatpush1.msra.mxu0 %v8314
      %8324 = vmatprep.subr.mxu0 0.0
      %8325 = vmatpush1.msra.mxu0 %v8319
      %8326 = vmatprep.subr.mxu0 0.0
      %8327 = vmatpush1.msra.mxu0 0.0
      %8328 = vmatprep.subr.mxu0 0.0
      %8329 = vmatpush1.msra.mxu0 0.0
      %8330 = vmatprep.subr.mxu0 0.0
      %8331 = vmatpush1.msra.mxu0 0.0
      %8332 = vmatprep.subr.mxu0 0.0
      %8333 = vmatpush1.msra.mxu0 0.0
      %8334 = vmatprep.subr.mxu0 0.0
      %8335 = vmatpush1.msra.mxu0 0.0
      %8336 = vmatprep.subr.mxu0 0.0
      %8337 = vmatpush1.msra.mxu0 0.0
      %8338 = vmatprep.subr.mxu0 0.0
      %8339 = vmatpush1.msra.mxu0 0.0
      %8340 = vmatprep.subr.mxu0 0.0
      %8341 = vmatpush1.msra.mxu0 0.0
      %8342 = vmatprep.subr.mxu0 0.0
      %8343 = vmatpush1.msra.mxu0 0.0
      %8344 = vmatprep.subr.mxu0 0.0
      %8345 = vmatpush1.msra.mxu0 0.0
      %8346 = vmatprep.subr.mxu0 0.0
      %8347 = vmatpush1.msra.mxu0 0.0
      %8348 = vmatprep.subr.mxu0 0.0
      %8349 = vmatpush1.msra.mxu0 0.0
      %8350 = vmatprep.subr.mxu0 0.0
      %8351 = vmatpush1.msra.mxu0 0.0
      %8352 = vmatprep.subr.mxu0 0.0
      %8353 = vmatpush1.msra.mxu0 0.0
      %8354 = vmatprep.subr.mxu0 0.0
      %8355 = vmatpush1.msra.mxu0 0.0
      %8356 = vmatprep.subr.mxu0 0.0
      %8357 = vmatpush1.msra.mxu0 0.0
      %8358 = vmatprep.subr.mxu0 0.0
      %8359 = vmatpush1.msra.mxu0 0.0
      %8360 = vmatprep.subr.mxu0 0.0
      %8361 = vmatpush1.msra.mxu0 0.0
      %8362 = vmatprep.subr.mxu0 0.0
      %8363 = vmatpush1.msra.mxu0 0.0
      %8364 = vmatprep.subr.mxu0 0.0
      %8365 = vmatpush1.msra.mxu0 0.0
      %8366 = vmatprep.subr.mxu0 0.0
      %8367 = vmatpush1.msra.mxu0 0.0
      %8368 = vmatprep.subr.mxu0 0.0
      %8369 = vmatpush1.msra.mxu0 0.0
      %8370 = vmatprep.subr.mxu0 0.0
      %8371 = vmatpush1.msra.mxu0 0.0
      %8372 = vmatprep.subr.mxu0 0.0
      %8373 = vmatpush1.msra.mxu0 0.0
      %8374 = vmatprep.subr.mxu0 0.0
      %8375 = vmatpush1.msra.mxu0 0.0
      %8376 = vmatprep.subr.mxu0 0.0
      %8377 = vmatpush1.msra.mxu0 0.0
      %8378 = vmatprep.subr.mxu0 0.0
      %8379 = vmatpush1.msra.mxu0 0.0
      %8380 = vmatprep.subr.mxu0 0.0
      %8381 = vmatpush1.msra.mxu0 0.0
      %8382 = vmatprep.subr.mxu0 0.0
      %8383 = vmatpush1.msra.mxu0 0.0
      %8384 = vmatprep.subr.mxu0 0.0
      %8385 = vmatpush1.msra.mxu0 0.0
      %8386 = vmatprep.mubr.f32.mxu0 0.0
      %8387 = vmatmul.mubr.f32.gmra.mrb[0].mxu0 %v7707
      %v8388 = vpop.f32.mrb[0].mxu0
      %v8389 = vadd.f32 0.0, %v8388
      %v8390 = vpop.f32.mrb[0].mxu0
      %8391 = vmatprep.mubr.f32.mxu0 0.0
      %8392 = vmatmul.mubr.f32.gmra.mrb[0].mxu0 %v7710
      %v8393 = vpop.f32.mrb[0].mxu0
      %v8394 = vadd.f32 0.0, %v8393
      %v8395 = vpop.f32.mrb[0].mxu0
      %8396 = vdwg.mxu0
      %v8397 = vmul.f32 %v8085, %v7779
      %v8398 = vmul.f32 %v8090, %v7784
      %v8399 = vsub.f32 %v8389, %v8397
      %v8400 = vsub.f32 %v8394, %v8398
      %v8401 = vmul.f32 %v8085, 2.0
      %v8402 = vmul.f32 %v8090, 2.0
      %v8403 = vmul.f32 %v8401, %v7779
      %v8404 = vmul.f32 %v8402, %v7784
      %v8405 = vadd.f32 %v8403, 0.0001
      %v8406 = vadd.f32 %v8404, 0.0001
      %v8407 = vmul.f32 %v8399, 2.0
      %v8408 = vmul.f32 %v8400, 2.0
      %v8409 = vadd.f32 %v8407, 0.0009
      %v8410 = vadd.f32 %v8408, 0.0009
      %v8411 = vmul.f32 %v8405, %v8409
      %v8412 = vmul.f32 %v8406, %v8410
      %v8413 = vadd.f32 %v8243, %v7787
      %v8414 = vadd.f32 %v8244, %v7788
      %v8415 = vadd.f32 %v8413, 0.0001
      %v8416 = vadd.f32 %v8414, 0.0001
      %v8417 = vadd.f32 %v8245, %v7941
      %v8418 = vadd.f32 %v8246, %v7942
      %v8419 = vmul.f32 %v8415, %v8417
      %v8420 = vmul.f32 %v8416, %v8418
      %v8421 = vrcp.pop %v8419
      %v8422 = vrcp.pop %v8420
      %v8423 = vmul.f32 %v8411, %v8421
      %v8424 = vmul.f32 %v8412, %v8422
      %v8425 = vmax.f32 %v8245, 0.0001
      %v8426 = vmax.f32 %v8246, 0.0001
      %v8427 = vmul.f32 %v8425, %v8423
      %v8428 = vmul.f32 %v8426, %v8424
      %8429 = vmatprep.subr.mxu0 0.0
      %8430 = vmatpush1.msra.mxu0 %v7626
      %8431 = vmatprep.subr.mxu0 0.0
      %8432 = vmatpush1.msra.mxu0 %v7627
      %8433 = vmatprep.subr.mxu0 0.0
      %8434 = vmatpush1.msra.mxu0 0.0
      %8435 = vmatprep.subr.mxu0 0.0
      %8436 = vmatpush1.msra.mxu0 0.0
      %8437 = vmatprep.subr.mxu0 0.0
      %8438 = vmatpush1.msra.mxu0 0.0
      %8439 = vmatprep.subr.mxu0 0.0
      %8440 = vmatpush1.msra.mxu0 0.0
      %8441 = vmatprep.subr.mxu0 0.0
      %8442 = vmatpush1.msra.mxu0 0.0
      %8443 = vmatprep.subr.mxu0 0.0
      %8444 = vmatpush1.msra.mxu0 0.0
      %8445 = vmatprep.subr.mxu0 0.0
      %8446 = vmatpush1.msra.mxu0 0.0
      %8447 = vmatprep.subr.mxu0 0.0
      %8448 = vmatpush1.msra.mxu0 0.0
      %8449 = vmatprep.subr.mxu0 0.0
      %8450 = vmatpush1.msra.mxu0 0.0
      %8451 = vmatprep.subr.mxu0 0.0
      %8452 = vmatpush1.msra.mxu0 0.0
      %8453 = vmatprep.subr.mxu0 0.0
      %8454 = vmatpush1.msra.mxu0 0.0
      %8455 = vmatprep.subr.mxu0 0.0
      %8456 = vmatpush1.msra.mxu0 0.0
      %8457 = vmatprep.subr.mxu0 0.0
      %8458 = vmatpush1.msra.mxu0 0.0
      %8459 = vmatprep.subr.mxu0 0.0
      %8460 = vmatpush1.msra.mxu0 0.0
      %8461 = vmatprep.subr.mxu0 0.0
      %8462 = vmatpush1.msra.mxu0 0.0
      %8463 = vmatprep.subr.mxu0 0.0
      %8464 = vmatpush1.msra.mxu0 0.0
      %8465 = vmatprep.subr.mxu0 0.0
      %8466 = vmatpush1.msra.mxu0 0.0
      %8467 = vmatprep.subr.mxu0 0.0
      %8468 = vmatpush1.msra.mxu0 0.0
      %8469 = vmatprep.subr.mxu0 0.0
      %8470 = vmatpush1.msra.mxu0 0.0
      %8471 = vmatprep.subr.mxu0 0.0
      %8472 = vmatpush1.msra.mxu0 0.0
      %8473 = vmatprep.subr.mxu0 0.0
      %8474 = vmatpush1.msra.mxu0 0.0
      %8475 = vmatprep.subr.mxu0 0.0
      %8476 = vmatpush1.msra.mxu0 0.0
      %8477 = vmatprep.subr.mxu0 0.0
      %8478 = vmatpush1.msra.mxu0 0.0
      %8479 = vmatprep.subr.mxu0 0.0
      %8480 = vmatpush1.msra.mxu0 0.0
      %8481 = vmatprep.subr.mxu0 0.0
      %8482 = vmatpush1.msra.mxu0 0.0
      %8483 = vmatprep.subr.mxu0 0.0
      %8484 = vmatpush1.msra.mxu0 0.0
      %8485 = vmatprep.subr.mxu0 0.0
      %8486 = vmatpush1.msra.mxu0 0.0
      %8487 = vmatprep.subr.mxu0 0.0
      %8488 = vmatpush1.msra.mxu0 0.0
      %8489 = vmatprep.subr.mxu0 0.0
      %8490 = vmatpush1.msra.mxu0 0.0
      %8491 = vmatprep.subr.mxu0 0.0
      %8492 = vmatpush1.msra.mxu0 0.0
      %8493 = vmatprep.mubr.f32.mxu0 0.0
      %8494 = vmatmul.mubr.f32.gmra.mrb[0].mxu0 %v1182
      %v8495 = vpop.f32.mrb[0].mxu0
      %v8496 = vadd.f32 0.0, %v8495
      %v8497 = vpop.f32.mrb[0].mxu0
      %8498 = vmatprep.mubr.f32.mxu0 0.0
      %8499 = vmatmul.mubr.f32.gmra.mrb[0].mxu0 %v1185
      %v8500 = vpop.f32.mrb[0].mxu0
      %v8501 = vadd.f32 0.0, %v8500
      %v8502 = vpop.f32.mrb[0].mxu0
      %8503 = vdwg.mxu0
      %8504 = vmatprep.subr.mxu0 0.0
      %8505 = vmatpush1.msra.mxu0 %v8496
      %8506 = vmatprep.subr.mxu0 0.0
      %8507 = vmatpush1.msra.mxu0 %v8501
      %8508 = vmatprep.subr.mxu0 0.0
      %8509 = vmatpush1.msra.mxu0 0.0
      %8510 = vmatprep.subr.mxu0 0.0
      %8511 = vmatpush1.msra.mxu0 0.0
      %8512 = vmatprep.subr.mxu0 0.0
      %8513 = vmatpush1.msra.mxu0 0.0
      %8514 = vmatprep.subr.mxu0 0.0
      %8515 = vmatpush1.msra.mxu0 0.0
      %8516 = vmatprep.subr.mxu0 0.0
      %8517 = vmatpush1.msra.mxu0 0.0
      %8518 = vmatprep.subr.mxu0 0.0
      %8519 = vmatpush1.msra.mxu0 0.0
      %8520 = vmatprep.subr.mxu0 0.0
      %8521 = vmatpush1.msra.mxu0 0.0
      %8522 = vmatprep.subr.mxu0 0.0
      %8523 = vmatpush1.msra.mxu0 0.0
      %8524 = vmatprep.subr.mxu0 0.0
      %8525 = vmatpush1.msra.mxu0 0.0
      %8526 = vmatprep.subr.mxu0 0.0
      %8527 = vmatpush1.msra.mxu0 0.0
      %8528 = vmatprep.subr.mxu0 0.0
      %8529 = vmatpush1.msra.mxu0 0.0
      %8530 = vmatprep.subr.mxu0 0.0
      %8531 = vmatpush1.msra.mxu0 0.0
      %8532 = vmatprep.subr.mxu0 0.0
      %8533 = vmatpush1.msra.mxu0 0.0
      %8534 = vmatprep.subr.mxu0 0.0
      %8535 = vmatpush1.msra.mxu0 0.0
      %8536 = vmatprep.subr.mxu0 0.0
      %8537 = vmatpush1.msra.mxu0 0.0
      %8538 = vmatprep.subr.mxu0 0.0
      %8539 = vmatpush1.msra.mxu0 0.0
      %8540 = vmatprep.subr.mxu0 0.0
      %8541 = vmatpush1.msra.mxu0 0.0
      %8542 = vmatprep.subr.mxu0 0.0
      %8543 = vmatpush1.msra.mxu0 0.0
      %8544 = vmatprep.subr.mxu0 0.0
      %8545 = vmatpush1.msra.mxu0 0.0
      %8546 = vmatprep.subr.mxu0 0.0
      %8547 = vmatpush1.msra.mxu0 0.0
      %8548 = vmatprep.subr.mxu0 0.0
      %8549 = vmatpush1.msra.mxu0 0.0
      %8550 = vmatprep.subr.mxu0 0.0
      %8551 = vmatpush1.msra.mxu0 0.0
      %8552 = vmatprep.subr.mxu0 0.0
      %8553 = vmatpush1.msra.mxu0 0.0
      %8554 = vmatprep.subr.mxu0 0.0
      %8555 = vmatpush1.msra.mxu0 0.0
      %8556 = vmatprep.subr.mxu0 0.0
      %8557 = vmatpush1.msra.mxu0 0.0
      %8558 = vmatprep.subr.mxu0 0.0
      %8559 = vmatpush1.msra.mxu0 0.0
      %8560 = vmatprep.subr.mxu0 0.0
      %8561 = vmatpush1.msra.mxu0 0.0
      %8562 = vmatprep.subr.mxu0 0.0
      %8563 = vmatpush1.msra.mxu0 0.0
      %8564 = vmatprep.subr.mxu0 0.0
      %8565 = vmatpush1.msra.mxu0 0.0
      %8566 = vmatprep.subr.mxu0 0.0
      %8567 = vmatpush1.msra.mxu0 0.0
      %8568 = vmatprep.mubr.f32.mxu0 0.0
      %8569 = vmatmul.mubr.f32.gmra.mrb[0].mxu0 %v7707
      %v8570 = vpop.f32.mrb[0].mxu0
      %v8571 = vadd.f32 0.0, %v8570
      %v8572 = vpop.f32.mrb[0].mxu0
      %8573 = vmatprep.mubr.f32.mxu0 0.0
      %8574 = vmatmul.mubr.f32.gmra.mrb[0].mxu0 %v7710
      %v8575 = vpop.f32.mrb[0].mxu0
      %v8576 = vadd.f32 0.0, %v8575
      %v8577 = vpop.f32.mrb[0].mxu0
      %8578 = vdwg.mxu0
      %8579 = vmatprep.subr.mxu0 0.0
      %8580 = vmatpush1.msra.mxu0 %v7626
      %8581 = vmatprep.subr.mxu0 0.0
      %8582 = vmatpush1.msra.mxu0 %v7627
      %8583 = vmatprep.subr.mxu0 0.0
      %8584 = vmatpush1.msra.mxu0 0.0
      %8585 = vmatprep.subr.mxu0 0.0
      %8586 = vmatpush1.msra.mxu0 0.0
      %8587 = vmatprep.subr.mxu0 0.0
      %8588 = vmatpush1.msra.mxu0 0.0
      %8589 = vmatprep.subr.mxu0 0.0
      %8590 = vmatpush1.msra.mxu0 0.0
      %8591 = vmatprep.subr.mxu0 0.0
      %8592 = vmatpush1.msra.mxu0 0.0
      %8593 = vmatprep.subr.mxu0 0.0
      %8594 = vmatpush1.msra.mxu0 0.0
      %8595 = vmatprep.subr.mxu0 0.0
      %8596 = vmatpush1.msra.mxu0 0.0
      %8597 = vmatprep.subr.mxu0 0.0
      %8598 = vmatpush1.msra.mxu0 0.0
      %8599 = vmatprep.subr.mxu0 0.0
      %8600 = vmatpush1.msra.mxu0 0.0
      %8601 = vmatprep.subr.mxu0 0.0
      %8602 = vmatpush1.msra.mxu0 0.0
      %8603 = vmatprep.subr.mxu0 0.0
      %8604 = vmatpush1.msra.mxu0 0.0
      %8605 = vmatprep.subr.mxu0 0.0
      %8606 = vmatpush1.msra.mxu0 0.0
      %8607 = vmatprep.subr.mxu0 0.0
      %8608 = vmatpush1.msra.mxu0 0.0
      %8609 = vmatprep.subr.mxu0 0.0
      %8610 = vmatpush1.msra.mxu0 0.0
      %8611 = vmatprep.subr.mxu0 0.0
      %8612 = vmatpush1.msra.mxu0 0.0
      %8613 = vmatprep.subr.mxu0 0.0
      %8614 = vmatpush1.msra.mxu0 0.0
      %8615 = vmatprep.subr.mxu0 0.0
      %8616 = vmatpush1.msra.mxu0 0.0
      %8617 = vmatprep.subr.mxu0 0.0
      %8618 = vmatpush1.msra.mxu0 0.0
      %8619 = vmatprep.subr.mxu0 0.0
      %8620 = vmatpush1.msra.mxu0 0.0
      %8621 = vmatprep.subr.mxu0 0.0
      %8622 = vmatpush1.msra.mxu0 0.0
      %8623 = vmatprep.subr.mxu0 0.0
      %8624 = vmatpush1.msra.mxu0 0.0
      %8625 = vmatprep.subr.mxu0 0.0
      %8626 = vmatpush1.msra.mxu0 0.0
      %8627 = vmatprep.subr.mxu0 0.0
      %8628 = vmatpush1.msra.mxu0 0.0
      %8629 = vmatprep.subr.mxu0 0.0
      %8630 = vmatpush1.msra.mxu0 0.0
      %8631 = vmatprep.subr.mxu0 0.0
      %8632 = vmatpush1.msra.mxu0 0.0
      %8633 = vmatprep.subr.mxu0 0.0
      %8634 = vmatpush1.msra.mxu0 0.0
      %8635 = vmatprep.subr.mxu0 0.0
      %8636 = vmatpush1.msra.mxu0 0.0
      %8637 = vmatprep.subr.mxu0 0.0
      %8638 = vmatpush1.msra.mxu0 0.0
      %8639 = vmatprep.subr.mxu0 0.0
      %8640 = vmatpush1.msra.mxu0 0.0
      %8641 = vmatprep.subr.mxu0 0.0
      %8642 = vmatpush1.msra.mxu0 0.0
      %8643 = vmatprep.mubr.f32.mxu0 0.0
      %8644 = vmatmul.mubr.f32.gmra.mrb[0].mxu0 %v1338
      %v8645 = vpop.f32.mrb[0].mxu0
      %v8646 = vadd.f32 0.0, %v8645
      %v8647 = vpop.f32.mrb[0].mxu0
      %8648 = vmatprep.mubr.f32.mxu0 0.0
      %8649 = vmatmul.mubr.f32.gmra.mrb[0].mxu0 %v1341
      %v8650 = vpop.f32.mrb[0].mxu0
      %v8651 = vadd.f32 0.0, %v8650
      %v8652 = vpop.f32.mrb[0].mxu0
      %8653 = vdwg.mxu0
      %8654 = vmatprep.subr.mxu0 0.0
      %8655 = vmatpush1.msra.mxu0 %v8646
      %8656 = vmatprep.subr.mxu0 0.0
      %8657 = vmatpush1.msra.mxu0 %v8651
      %8658 = vmatprep.subr.mxu0 0.0
      %8659 = vmatpush1.msra.mxu0 0.0
      %8660 = vmatprep.subr.mxu0 0.0
      %8661 = vmatpush1.msra.mxu0 0.0
      %8662 = vmatprep.subr.mxu0 0.0
      %8663 = vmatpush1.msra.mxu0 0.0
      %8664 = vmatprep.subr.mxu0 0.0
      %8665 = vmatpush1.msra.mxu0 0.0
      %8666 = vmatprep.subr.mxu0 0.0
      %8667 = vmatpush1.msra.mxu0 0.0
      %8668 = vmatprep.subr.mxu0 0.0
      %8669 = vmatpush1.msra.mxu0 0.0
      %8670 = vmatprep.subr.mxu0 0.0
      %8671 = vmatpush1.msra.mxu0 0.0
      %8672 = vmatprep.subr.mxu0 0.0
      %8673 = vmatpush1.msra.mxu0 0.0
      %8674 = vmatprep.subr.mxu0 0.0
      %8675 = vmatpush1.msra.mxu0 0.0
      %8676 = vmatprep.subr.mxu0 0.0
      %8677 = vmatpush1.msra.mxu0 0.0
      %8678 = vmatprep.subr.mxu0 0.0
      %8679 = vmatpush1.msra.mxu0 0.0
      %8680 = vmatprep.subr.mxu0 0.0
      %8681 = vmatpush1.msra.mxu0 0.0
      %8682 = vmatprep.subr.mxu0 0.0
      %8683 = vmatpush1.msra.mxu0 0.0
      %8684 = vmatprep.subr.mxu0 0.0
      %8685 = vmatpush1.msra.mxu0 0.0
      %8686 = vmatprep.subr.mxu0 0.0
      %8687 = vmatpush1.msra.mxu0 0.0
      %8688 = vmatprep.subr.mxu0 0.0
      %8689 = vmatpush1.msra.mxu0 0.0
      %8690 = vmatprep.subr.mxu0 0.0
      %8691 = vmatpush1.msra.mxu0 0.0
      %8692 = vmatprep.subr.mxu0 0.0
      %8693 = vmatpush1.msra.mxu0 0.0
      %8694 = vmatprep.subr.mxu0 0.0
      %8695 = vmatpush1.msra.mxu0 0.0
      %8696 = vmatprep.subr.mxu0 0.0
      %8697 = vmatpush1.msra.mxu0 0.0
      %8698 = vmatprep.subr.mxu0 0.0
      %8699 = vmatpush1.msra.mxu0 0.0
      %8700 = vmatprep.subr.mxu0 0.0
      %8701 = vmatpush1.msra.mxu0 0.0
      %8702 = vmatprep.subr.mxu0 0.0
      %8703 = vmatpush1.msra.mxu0 0.0
      %8704 = vmatprep.subr.mxu0 0.0
      %8705 = vmatpush1.msra.mxu0 0.0
      %8706 = vmatprep.subr.mxu0 0.0
      %8707 = vmatpush1.msra.mxu0 0.0
      %8708 = vmatprep.subr.mxu0 0.0
      %8709 = vmatpush1.msra.mxu0 0.0
      %8710 = vmatprep.subr.mxu0 0.0
      %8711 = vmatpush1.msra.mxu0 0.0
      %8712 = vmatprep.subr.mxu0 0.0
      %8713 = vmatpush1.msra.mxu0 0.0
      %8714 = vmatprep.subr.mxu0 0.0
      %8715 = vmatpush1.msra.mxu0 0.0
      %8716 = vmatprep.subr.mxu0 0.0
      %8717 = vmatpush1.msra.mxu0 0.0
      %8718 = vmatprep.mubr.f32.mxu0 0.0
      %8719 = vmatmul.mubr.f32.gmra.mrb[0].mxu0 %v7707
      %v8720 = vpop.f32.mrb[0].mxu0
      %v8721 = vadd.f32 0.0, %v8720
      %v8722 = vpop.f32.mrb[0].mxu0
      %8723 = vmatprep.mubr.f32.mxu0 0.0
      %8724 = vmatmul.mubr.f32.gmra.mrb[0].mxu0 %v7710
      %v8725 = vpop.f32.mrb[0].mxu0
      %v8726 = vadd.f32 0.0, %v8725
      %v8727 = vpop.f32.mrb[0].mxu0
      %8728 = vdwg.mxu0
      %v8729 = vmul.f32 %v8571, %v8571
      %v8730 = vmul.f32 %v8576, %v8576
      %v8731 = vsub.f32 %v8721, %v8729
      %v8732 = vsub.f32 %v8726, %v8730
      %8733 = vmatprep.subr.mxu0 0.0
      %8734 = vmatpush1.msra.mxu0 %v7626
      %8735 = vmatprep.subr.mxu0 0.0
      %8736 = vmatpush1.msra.mxu0 %v7627
      %8737 = vmatprep.subr.mxu0 0.0
      %8738 = vmatpush1.msra.mxu0 0.0
      %8739 = vmatprep.subr.mxu0 0.0
      %8740 = vmatpush1.msra.mxu0 0.0
      %8741 = vmatprep.subr.mxu0 0.0
      %8742 = vmatpush1.msra.mxu0 0.0
      %8743 = vmatprep.subr.mxu0 0.0
      %8744 = vmatpush1.msra.mxu0 0.0
      %8745 = vmatprep.subr.mxu0 0.0
      %8746 = vmatpush1.msra.mxu0 0.0
      %8747 = vmatprep.subr.mxu0 0.0
      %8748 = vmatpush1.msra.mxu0 0.0
      %8749 = vmatprep.subr.mxu0 0.0
      %8750 = vmatpush1.msra.mxu0 0.0
      %8751 = vmatprep.subr.mxu0 0.0
      %8752 = vmatpush1.msra.mxu0 0.0
      %8753 = vmatprep.subr.mxu0 0.0
      %8754 = vmatpush1.msra.mxu0 0.0
      %8755 = vmatprep.subr.mxu0 0.0
      %8756 = vmatpush1.msra.mxu0 0.0
      %8757 = vmatprep.subr.mxu0 0.0
      %8758 = vmatpush1.msra.mxu0 0.0
      %8759 = vmatprep.subr.mxu0 0.0
      %8760 = vmatpush1.msra.mxu0 0.0
      %8761 = vmatprep.subr.mxu0 0.0
      %8762 = vmatpush1.msra.mxu0 0.0
      %8763 = vmatprep.subr.mxu0 0.0
      %8764 = vmatpush1.msra.mxu0 0.0
      %8765 = vmatprep.subr.mxu0 0.0
      %8766 = vmatpush1.msra.mxu0 0.0
      %8767 = vmatprep.subr.mxu0 0.0
      %8768 = vmatpush1.msra.mxu0 0.0
      %8769 = vmatprep.subr.mxu0 0.0
      %8770 = vmatpush1.msra.mxu0 0.0
      %8771 = vmatprep.subr.mxu0 0.0
      %8772 = vmatpush1.msra.mxu0 0.0
      %8773 = vmatprep.subr.mxu0 0.0
      %8774 = vmatpush1.msra.mxu0 0.0
      %8775 = vmatprep.subr.mxu0 0.0
      %8776 = vmatpush1.msra.mxu0 0.0
      %8777 = vmatprep.subr.mxu0 0.0
      %8778 = vmatpush1.msra.mxu0 0.0
      %8779 = vmatprep.subr.mxu0 0.0
      %8780 = vmatpush1.msra.mxu0 0.0
      %8781 = vmatprep.subr.mxu0 0.0
      %8782 = vmatpush1.msra.mxu0 0.0
      %8783 = vmatprep.subr.mxu0 0.0
      %8784 = vmatpush1.msra.mxu0 0.0
      %8785 = vmatprep.subr.mxu0 0.0
      %8786 = vmatpush1.msra.mxu0 0.0
      %8787 = vmatprep.subr.mxu0 0.0
      %8788 = vmatpush1.msra.mxu0 0.0
      %8789 = vmatprep.subr.mxu0 0.0
      %8790 = vmatpush1.msra.mxu0 0.0
      %8791 = vmatprep.subr.mxu0 0.0
      %8792 = vmatpush1.msra.mxu0 0.0
      %8793 = vmatprep.subr.mxu0 0.0
      %8794 = vmatpush1.msra.mxu0 0.0
      %8795 = vmatprep.subr.mxu0 0.0
      %8796 = vmatpush1.msra.mxu0 0.0
      %8797 = vmatprep.mubr.f32.mxu0 0.0
      %8798 = vmatmul.mubr.f32.gmra.mrb[0].mxu0 %v1498
      %v8799 = vpop.f32.mrb[0].mxu0
      %v8800 = vadd.f32 0.0, %v8799
      %v8801 = vpop.f32.mrb[0].mxu0
      %8802 = vmatprep.mubr.f32.mxu0 0.0
      %8803 = vmatmul.mubr.f32.gmra.mrb[0].mxu0 %v1501
      %v8804 = vpop.f32.mrb[0].mxu0
      %v8805 = vadd.f32 0.0, %v8804
      %v8806 = vpop.f32.mrb[0].mxu0
      %8807 = vdwg.mxu0
      %8808 = vmatprep.subr.mxu0 0.0
      %8809 = vmatpush1.msra.mxu0 %v8800
      %8810 = vmatprep.subr.mxu0 0.0
      %8811 = vmatpush1.msra.mxu0 %v8805
      %8812 = vmatprep.subr.mxu0 0.0
      %8813 = vmatpush1.msra.mxu0 0.0
      %8814 = vmatprep.subr.mxu0 0.0
      %8815 = vmatpush1.msra.mxu0 0.0
      %8816 = vmatprep.subr.mxu0 0.0
      %8817 = vmatpush1.msra.mxu0 0.0
      %8818 = vmatprep.subr.mxu0 0.0
      %8819 = vmatpush1.msra.mxu0 0.0
      %8820 = vmatprep.subr.mxu0 0.0
      %8821 = vmatpush1.msra.mxu0 0.0
      %8822 = vmatprep.subr.mxu0 0.0
      %8823 = vmatpush1.msra.mxu0 0.0
      %8824 = vmatprep.subr.mxu0 0.0
      %8825 = vmatpush1.msra.mxu0 0.0
      %8826 = vmatprep.subr.mxu0 0.0
      %8827 = vmatpush1.msra.mxu0 0.0
      %8828 = vmatprep.subr.mxu0 0.0
      %8829 = vmatpush1.msra.mxu0 0.0
      %8830 = vmatprep.subr.mxu0 0.0
      %8831 = vmatpush1.msra.mxu0 0.0
      %8832 = vmatprep.subr.mxu0 0.0
      %8833 = vmatpush1.msra.mxu0 0.0
      %8834 = vmatprep.subr.mxu0 0.0
      %8835 = vmatpush1.msra.mxu0 0.0
      %8836 = vmatprep.subr.mxu0 0.0
      %8837 = vmatpush1.msra.mxu0 0.0
      %8838 = vmatprep.subr.mxu0 0.0
      %8839 = vmatpush1.msra.mxu0 0.0
      %8840 = vmatprep.subr.mxu0 0.0
      %8841 = vmatpush1.msra.mxu0 0.0
      %8842 = vmatprep.subr.mxu0 0.0
      %8843 = vmatpush1.msra.mxu0 0.0
      %8844 = vmatprep.subr.mxu0 0.0
      %8845 = vmatpush1.msra.mxu0 0.0
      %8846 = vmatprep.subr.mxu0 0.0
      %8847 = vmatpush1.msra.mxu0 0.0
      %8848 = vmatprep.subr.mxu0 0.0
      %8849 = vmatpush1.msra.mxu0 0.0
      %8850 = vmatprep.subr.mxu0 0.0
      %8851 = vmatpush1.msra.mxu0 0.0
      %8852 = vmatprep.subr.mxu0 0.0
      %8853 = vmatpush1.msra.mxu0 0.0
      %8854 = vmatprep.subr.mxu0 0.0
      %8855 = vmatpush1.msra.mxu0 0.0
      %8856 = vmatprep.subr.mxu0 0.0
      %8857 = vmatpush1.msra.mxu0 0.0
      %8858 = vmatprep.subr.mxu0 0.0
      %8859 = vmatpush1.msra.mxu0 0.0
      %8860 = vmatprep.subr.mxu0 0.0
      %8861 = vmatpush1.msra.mxu0 0.0
      %8862 = vmatprep.subr.mxu0 0.0
      %8863 = vmatpush1.msra.mxu0 0.0
      %8864 = vmatprep.subr.mxu0 0.0
      %8865 = vmatpush1.msra.mxu0 0.0
      %8866 = vmatprep.subr.mxu0 0.0
      %8867 = vmatpush1.msra.mxu0 0.0
      %8868 = vmatprep.subr.mxu0 0.0
      %8869 = vmatpush1.msra.mxu0 0.0
      %8870 = vmatprep.subr.mxu0 0.0
      %8871 = vmatpush1.msra.mxu0 0.0
      %8872 = vmatprep.mubr.f32.mxu0 0.0
      %8873 = vmatmul.mubr.f32.gmra.mrb[0].mxu0 %v7707
      %v8874 = vpop.f32.mrb[0].mxu0
      %v8875 = vadd.f32 0.0, %v8874
      %v8876 = vpop.f32.mrb[0].mxu0
      %8877 = vmatprep.mubr.f32.mxu0 0.0
      %8878 = vmatmul.mubr.f32.gmra.mrb[0].mxu0 %v7710
      %v8879 = vpop.f32.mrb[0].mxu0
      %v8880 = vadd.f32 0.0, %v8879
      %v8881 = vpop.f32.mrb[0].mxu0
      %8882 = vdwg.mxu0
      %v8883 = vmul.f32 %v8571, %v7779
      %v8884 = vmul.f32 %v8576, %v7784
      %v8885 = vsub.f32 %v8875, %v8883
      %v8886 = vsub.f32 %v8880, %v8884
      %v8887 = vmul.f32 %v8571, 2.0
      %v8888 = vmul.f32 %v8576, 2.0
      %v8889 = vmul.f32 %v8887, %v7779
      %v8890 = vmul.f32 %v8888, %v7784
      %v8891 = vadd.f32 %v8889, 0.0001
      %v8892 = vadd.f32 %v8890, 0.0001
      %v8893 = vmul.f32 %v8885, 2.0
      %v8894 = vmul.f32 %v8886, 2.0
      %v8895 = vadd.f32 %v8893, 0.0009
      %v8896 = vadd.f32 %v8894, 0.0009
      %v8897 = vmul.f32 %v8891, %v8895
      %v8898 = vmul.f32 %v8892, %v8896
      %v8899 = vadd.f32 %v8729, %v7787
      %v8900 = vadd.f32 %v8730, %v7788
      %v8901 = vadd.f32 %v8899, 0.0001
      %v8902 = vadd.f32 %v8900, 0.0001
      %v8903 = vadd.f32 %v8731, %v7941
      %v8904 = vadd.f32 %v8732, %v7942
      %v8905 = vmul.f32 %v8901, %v8903
      %v8906 = vmul.f32 %v8902, %v8904
      %v8907 = vrcp.pop %v8905
      %v8908 = vrcp.pop %v8906
      %v8909 = vmul.f32 %v8897, %v8907
      %v8910 = vmul.f32 %v8898, %v8908
      %v8911 = vmax.f32 %v8731, 0.0001
      %v8912 = vmax.f32 %v8732, 0.0001
      %v8913 = vmul.f32 %v8911, %v8909
      %v8914 = vmul.f32 %v8912, %v8910
      %v8915 = vadd.f32 %v8427, %v8913
      %v8916 = vadd.f32 %v8428, %v8914
      %v8917 = vadd.f32 %v8425, %v8911
      %v8918 = vadd.f32 %v8426, %v8912
      %8919 = vmatprep.subr.mxu0 0.0
      %8920 = vmatpush1.msra.mxu0 %v7626
      %8921 = vmatprep.subr.mxu0 0.0
      %8922 = vmatpush1.msra.mxu0 %v7627
      %8923 = vmatprep.subr.mxu0 0.0
      %8924 = vmatpush1.msra.mxu0 0.0
      %8925 = vmatprep.subr.mxu0 0.0
      %8926 = vmatpush1.msra.mxu0 0.0
      %8927 = vmatprep.subr.mxu0 0.0
      %8928 = vmatpush1.msra.mxu0 0.0
      %8929 = vmatprep.subr.mxu0 0.0
      %8930 = vmatpush1.msra.mxu0 0.0
      %8931 = vmatprep.subr.mxu0 0.0
      %8932 = vmatpush1.msra.mxu0 0.0
      %8933 = vmatprep.subr.mxu0 0.0
      %8934 = vmatpush1.msra.mxu0 0.0
      %8935 = vmatprep.subr.mxu0 0.0
      %8936 = vmatpush1.msra.mxu0 0.0
      %8937 = vmatprep.subr.mxu0 0.0
      %8938 = vmatpush1.msra.mxu0 0.0
      %8939 = vmatprep.subr.mxu0 0.0
      %8940 = vmatpush1.msra.mxu0 0.0
      %8941 = vmatprep.subr.mxu0 0.0
      %8942 = vmatpush1.msra.mxu0 0.0
      %8943 = vmatprep.subr.mxu0 0.0
      %8944 = vmatpush1.msra.mxu0 0.0
      %8945 = vmatprep.subr.mxu0 0.0
      %8946 = vmatpush1.msra.mxu0 0.0
      %8947 = vmatprep.subr.mxu0 0.0
      %8948 = vmatpush1.msra.mxu0 0.0
      %8949 = vmatprep.subr.mxu0 0.0
      %8950 = vmatpush1.msra.mxu0 0.0
      %8951 = vmatprep.subr.mxu0 0.0
      %8952 = vmatpush1.msra.mxu0 0.0
      %8953 = vmatprep.subr.mxu0 0.0
      %8954 = vmatpush1.msra.mxu0 0.0
      %8955 = vmatprep.subr.mxu0 0.0
      %8956 = vmatpush1.msra.mxu0 0.0
      %8957 = vmatprep.subr.mxu0 0.0
      %8958 = vmatpush1.msra.mxu0 0.0
      %8959 = vmatprep.subr.mxu0 0.0
      %8960 = vmatpush1.msra.mxu0 0.0
      %8961 = vmatprep.subr.mxu0 0.0
      %8962 = vmatpush1.msra.mxu0 0.0
      %8963 = vmatprep.subr.mxu0 0.0
      %8964 = vmatpush1.msra.mxu0 0.0
      %8965 = vmatprep.subr.mxu0 0.0
      %8966 = vmatpush1.msra.mxu0 0.0
      %8967 = vmatprep.subr.mxu0 0.0
      %8968 = vmatpush1.msra.mxu0 0.0
      %8969 = vmatprep.subr.mxu0 0.0
      %8970 = vmatpush1.msra.mxu0 0.0
      %8971 = vmatprep.subr.mxu0 0.0
      %8972 = vmatpush1.msra.mxu0 0.0
      %8973 = vmatprep.subr.mxu0 0.0
      %8974 = vmatpush1.msra.mxu0 0.0
      %8975 = vmatprep.subr.mxu0 0.0
      %8976 = vmatpush1.msra.mxu0 0.0
      %8977 = vmatprep.subr.mxu0 0.0
      %8978 = vmatpush1.msra.mxu0 0.0
      %8979 = vmatprep.subr.mxu0 0.0
      %8980 = vmatpush1.msra.mxu0 0.0
      %8981 = vmatprep.subr.mxu0 0.0
      %8982 = vmatpush1.msra.mxu0 0.0
      %8983 = vmatprep.mubr.f32.mxu0 0.0
      %8984 = vmatmul.mubr.f32.gmra.mrb[0].mxu0 %v1690
      %v8985 = vpop.f32.mrb[0].mxu0
      %v8986 = vadd.f32 0.0, %v8985
      %v8987 = vpop.f32.mrb[0].mxu0
      %8988 = vmatprep.mubr.f32.mxu0 0.0
      %8989 = vmatmul.mubr.f32.gmra.mrb[0].mxu0 %v1693
      %v8990 = vpop.f32.mrb[0].mxu0
      %v8991 = vadd.f32 0.0, %v8990
      %v8992 = vpop.f32.mrb[0].mxu0
      %8993 = vdwg.mxu0
      %8994 = vmatprep.subr.mxu0 0.0
      %8995 = vmatpush1.msra.mxu0 %v8986
      %8996 = vmatprep.subr.mxu0 0.0
      %8997 = vmatpush1.msra.mxu0 %v8991
      %8998 = vmatprep.subr.mxu0 0.0
      %8999 = vmatpush1.msra.mxu0 0.0
      %9000 = vmatprep.subr.mxu0 0.0
      %9001 = vmatpush1.msra.mxu0 0.0
      %9002 = vmatprep.subr.mxu0 0.0
      %9003 = vmatpush1.msra.mxu0 0.0
      %9004 = vmatprep.subr.mxu0 0.0
      %9005 = vmatpush1.msra.mxu0 0.0
      %9006 = vmatprep.subr.mxu0 0.0
      %9007 = vmatpush1.msra.mxu0 0.0
      %9008 = vmatprep.subr.mxu0 0.0
      %9009 = vmatpush1.msra.mxu0 0.0
      %9010 = vmatprep.subr.mxu0 0.0
      %9011 = vmatpush1.msra.mxu0 0.0
      %9012 = vmatprep.subr.mxu0 0.0
      %9013 = vmatpush1.msra.mxu0 0.0
      %9014 = vmatprep.subr.mxu0 0.0
      %9015 = vmatpush1.msra.mxu0 0.0
      %9016 = vmatprep.subr.mxu0 0.0
      %9017 = vmatpush1.msra.mxu0 0.0
      %9018 = vmatprep.subr.mxu0 0.0
      %9019 = vmatpush1.msra.mxu0 0.0
      %9020 = vmatprep.subr.mxu0 0.0
      %9021 = vmatpush1.msra.mxu0 0.0
      %9022 = vmatprep.subr.mxu0 0.0
      %9023 = vmatpush1.msra.mxu0 0.0
      %9024 = vmatprep.subr.mxu0 0.0
      %9025 = vmatpush1.msra.mxu0 0.0
      %9026 = vmatprep.subr.mxu0 0.0
      %9027 = vmatpush1.msra.mxu0 0.0
      %9028 = vmatprep.subr.mxu0 0.0
      %9029 = vmatpush1.msra.mxu0 0.0
      %9030 = vmatprep.subr.mxu0 0.0
      %9031 = vmatpush1.msra.mxu0 0.0
      %9032 = vmatprep.subr.mxu0 0.0
      %9033 = vmatpush1.msra.mxu0 0.0
      %9034 = vmatprep.subr.mxu0 0.0
      %9035 = vmatpush1.msra.mxu0 0.0
      %9036 = vmatprep.subr.mxu0 0.0
      %9037 = vmatpush1.msra.mxu0 0.0
      %9038 = vmatprep.subr.mxu0 0.0
      %9039 = vmatpush1.msra.mxu0 0.0
      %9040 = vmatprep.subr.mxu0 0.0
      %9041 = vmatpush1.msra.mxu0 0.0
      %9042 = vmatprep.subr.mxu0 0.0
      %9043 = vmatpush1.msra.mxu0 0.0
      %9044 = vmatprep.subr.mxu0 0.0
      %9045 = vmatpush1.msra.mxu0 0.0
      %9046 = vmatprep.subr.mxu0 0.0
      %9047 = vmatpush1.msra.mxu0 0.0
      %9048 = vmatprep.subr.mxu0 0.0
      %9049 = vmatpush1.msra.mxu0 0.0
      %9050 = vmatprep.subr.mxu0 0.0
      %9051 = vmatpush1.msra.mxu0 0.0
      %9052 = vmatprep.subr.mxu0 0.0
      %9053 = vmatpush1.msra.mxu0 0.0
      %9054 = vmatprep.subr.mxu0 0.0
      %9055 = vmatpush1.msra.mxu0 0.0
      %9056 = vmatprep.subr.mxu0 0.0
      %9057 = vmatpush1.msra.mxu0 0.0
      %9058 = vmatprep.mubr.f32.mxu0 0.0
      %9059 = vmatmul.mubr.f32.gmra.mrb[0].mxu0 %v7707
      %v9060 = vpop.f32.mrb[0].mxu0
      %v9061 = vadd.f32 0.0, %v9060
      %v9062 = vpop.f32.mrb[0].mxu0
      %9063 = vmatprep.mubr.f32.mxu0 0.0
      %9064 = vmatmul.mubr.f32.gmra.mrb[0].mxu0 %v7710
      %v9065 = vpop.f32.mrb[0].mxu0
      %v9066 = vadd.f32 0.0, %v9065
      %v9067 = vpop.f32.mrb[0].mxu0
      %9068 = vdwg.mxu0
      %9069 = vmatprep.subr.mxu0 0.0
      %9070 = vmatpush1.msra.mxu0 %v7626
      %9071 = vmatprep.subr.mxu0 0.0
      %9072 = vmatpush1.msra.mxu0 %v7627
      %9073 = vmatprep.subr.mxu0 0.0
      %9074 = vmatpush1.msra.mxu0 0.0
      %9075 = vmatprep.subr.mxu0 0.0
      %9076 = vmatpush1.msra.mxu0 0.0
      %9077 = vmatprep.subr.mxu0 0.0
      %9078 = vmatpush1.msra.mxu0 0.0
      %9079 = vmatprep.subr.mxu0 0.0
      %9080 = vmatpush1.msra.mxu0 0.0
      %9081 = vmatprep.subr.mxu0 0.0
      %9082 = vmatpush1.msra.mxu0 0.0
      %9083 = vmatprep.subr.mxu0 0.0
      %9084 = vmatpush1.msra.mxu0 0.0
      %9085 = vmatprep.subr.mxu0 0.0
      %9086 = vmatpush1.msra.mxu0 0.0
      %9087 = vmatprep.subr.mxu0 0.0
      %9088 = vmatpush1.msra.mxu0 0.0
      %9089 = vmatprep.subr.mxu0 0.0
      %9090 = vmatpush1.msra.mxu0 0.0
      %9091 = vmatprep.subr.mxu0 0.0
      %9092 = vmatpush1.msra.mxu0 0.0
      %9093 = vmatprep.subr.mxu0 0.0
      %9094 = vmatpush1.msra.mxu0 0.0
      %9095 = vmatprep.subr.mxu0 0.0
      %9096 = vmatpush1.msra.mxu0 0.0
      %9097 = vmatprep.subr.mxu0 0.0
      %9098 = vmatpush1.msra.mxu0 0.0
      %9099 = vmatprep.subr.mxu0 0.0
      %9100 = vmatpush1.msra.mxu0 0.0
      %9101 = vmatprep.subr.mxu0 0.0
      %9102 = vmatpush1.msra.mxu0 0.0
      %9103 = vmatprep.subr.mxu0 0.0
      %9104 = vmatpush1.msra.mxu0 0.0
      %9105 = vmatprep.subr.mxu0 0.0
      %9106 = vmatpush1.msra.mxu0 0.0
      %9107 = vmatprep.subr.mxu0 0.0
      %9108 = vmatpush1.msra.mxu0 0.0
      %9109 = vmatprep.subr.mxu0 0.0
      %9110 = vmatpush1.msra.mxu0 0.0
      %9111 = vmatprep.subr.mxu0 0.0
      %9112 = vmatpush1.msra.mxu0 0.0
      %9113 = vmatprep.subr.mxu0 0.0
      %9114 = vmatpush1.msra.mxu0 0.0
      %9115 = vmatprep.subr.mxu0 0.0
      %9116 = vmatpush1.msra.mxu0 0.0
      %9117 = vmatprep.subr.mxu0 0.0
      %9118 = vmatpush1.msra.mxu0 0.0
      %9119 = vmatprep.subr.mxu0 0.0
      %9120 = vmatpush1.msra.mxu0 0.0
      %9121 = vmatprep.subr.mxu0 0.0
      %9122 = vmatpush1.msra.mxu0 0.0
      %9123 = vmatprep.subr.mxu0 0.0
      %9124 = vmatpush1.msra.mxu0 0.0
      %9125 = vmatprep.subr.mxu0 0.0
      %9126 = vmatpush1.msra.mxu0 0.0
      %9127 = vmatprep.subr.mxu0 0.0
      %9128 = vmatpush1.msra.mxu0 0.0
      %9129 = vmatprep.subr.mxu0 0.0
      %9130 = vmatpush1.msra.mxu0 0.0
      %9131 = vmatprep.subr.mxu0 0.0
      %9132 = vmatpush1.msra.mxu0 0.0
      %9133 = vmatprep.mubr.f32.mxu0 0.0
      %9134 = vmatmul.mubr.f32.gmra.mrb[0].mxu0 %v1846
      %v9135 = vpop.f32.mrb[0].mxu0
      %v9136 = vadd.f32 0.0, %v9135
      %v9137 = vpop.f32.mrb[0].mxu0
      %9138 = vmatprep.mubr.f32.mxu0 0.0
      %9139 = vmatmul.mubr.f32.gmra.mrb[0].mxu0 %v1849
      %v9140 = vpop.f32.mrb[0].mxu0
      %v9141 = vadd.f32 0.0, %v9140
      %v9142 = vpop.f32.mrb[0].mxu0
      %9143 = vdwg.mxu0
      %9144 = vmatprep.subr.mxu0 0.0
      %9145 = vmatpush1.msra.mxu0 %v9136
      %9146 = vmatprep.subr.mxu0 0.0
      %9147 = vmatpush1.msra.mxu0 %v9141
      %9148 = vmatprep.subr.mxu0 0.0
      %9149 = vmatpush1.msra.mxu0 0.0
      %9150 = vmatprep.subr.mxu0 0.0
      %9151 = vmatpush1.msra.mxu0 0.0
      %9152 = vmatprep.subr.mxu0 0.0
      %9153 = vmatpush1.msra.mxu0 0.0
      %9154 = vmatprep.subr.mxu0 0.0
      %9155 = vmatpush1.msra.mxu0 0.0
      %9156 = vmatprep.subr.mxu0 0.0
      %9157 = vmatpush1.msra.mxu0 0.0
      %9158 = vmatprep.subr.mxu0 0.0
      %9159 = vmatpush1.msra.mxu0 0.0
      %9160 = vmatprep.subr.mxu0 0.0
      %9161 = vmatpush1.msra.mxu0 0.0
      %9162 = vmatprep.subr.mxu0 0.0
      %9163 = vmatpush1.msra.mxu0 0.0
      %9164 = vmatprep.subr.mxu0 0.0
      %9165 = vmatpush1.msra.mxu0 0.0
      %9166 = vmatprep.subr.mxu0 0.0
      %9167 = vmatpush1.msra.mxu0 0.0
      %9168 = vmatprep.subr.mxu0 0.0
      %9169 = vmatpush1.msra.mxu0 0.0
      %9170 = vmatprep.subr.mxu0 0.0
      %9171 = vmatpush1.msra.mxu0 0.0
      %9172 = vmatprep.subr.mxu0 0.0
      %9173 = vmatpush1.msra.mxu0 0.0
      %9174 = vmatprep.subr.mxu0 0.0
      %9175 = vmatpush1.msra.mxu0 0.0
      %9176 = vmatprep.subr.mxu0 0.0
      %9177 = vmatpush1.msra.mxu0 0.0
      %9178 = vmatprep.subr.mxu0 0.0
      %9179 = vmatpush1.msra.mxu0 0.0
      %9180 = vmatprep.subr.mxu0 0.0
      %9181 = vmatpush1.msra.mxu0 0.0
      %9182 = vmatprep.subr.mxu0 0.0
      %9183 = vmatpush1.msra.mxu0 0.0
      %9184 = vmatprep.subr.mxu0 0.0
      %9185 = vmatpush1.msra.mxu0 0.0
      %9186 = vmatprep.subr.mxu0 0.0
      %9187 = vmatpush1.msra.mxu0 0.0
      %9188 = vmatprep.subr.mxu0 0.0
      %9189 = vmatpush1.msra.mxu0 0.0
      %9190 = vmatprep.subr.mxu0 0.0
      %9191 = vmatpush1.msra.mxu0 0.0
      %9192 = vmatprep.subr.mxu0 0.0
      %9193 = vmatpush1.msra.mxu0 0.0
      %9194 = vmatprep.subr.mxu0 0.0
      %9195 = vmatpush1.msra.mxu0 0.0
      %9196 = vmatprep.subr.mxu0 0.0
      %9197 = vmatpush1.msra.mxu0 0.0
      %9198 = vmatprep.subr.mxu0 0.0
      %9199 = vmatpush1.msra.mxu0 0.0
      %9200 = vmatprep.subr.mxu0 0.0
      %9201 = vmatpush1.msra.mxu0 0.0
      %9202 = vmatprep.subr.mxu0 0.0
      %9203 = vmatpush1.msra.mxu0 0.0
      %9204 = vmatprep.subr.mxu0 0.0
      %9205 = vmatpush1.msra.mxu0 0.0
      %9206 = vmatprep.subr.mxu0 0.0
      %9207 = vmatpush1.msra.mxu0 0.0
      %9208 = vmatprep.mubr.f32.mxu0 0.0
      %9209 = vmatmul.mubr.f32.gmra.mrb[0].mxu0 %v7707
      %v9210 = vpop.f32.mrb[0].mxu0
      %v9211 = vadd.f32 0.0, %v9210
      %v9212 = vpop.f32.mrb[0].mxu0
      %9213 = vmatprep.mubr.f32.mxu0 0.0
      %9214 = vmatmul.mubr.f32.gmra.mrb[0].mxu0 %v7710
      %v9215 = vpop.f32.mrb[0].mxu0
      %v9216 = vadd.f32 0.0, %v9215
      %v9217 = vpop.f32.mrb[0].mxu0
      %9218 = vdwg.mxu0
      %v9219 = vmul.f32 %v9061, %v9061
      %v9220 = vmul.f32 %v9066, %v9066
      %v9221 = vsub.f32 %v9211, %v9219
      %v9222 = vsub.f32 %v9216, %v9220
      %9223 = vmatprep.subr.mxu0 0.0
      %9224 = vmatpush1.msra.mxu0 %v7626
      %9225 = vmatprep.subr.mxu0 0.0
      %9226 = vmatpush1.msra.mxu0 %v7627
      %9227 = vmatprep.subr.mxu0 0.0
      %9228 = vmatpush1.msra.mxu0 0.0
      %9229 = vmatprep.subr.mxu0 0.0
      %9230 = vmatpush1.msra.mxu0 0.0
      %9231 = vmatprep.subr.mxu0 0.0
      %9232 = vmatpush1.msra.mxu0 0.0
      %9233 = vmatprep.subr.mxu0 0.0
      %9234 = vmatpush1.msra.mxu0 0.0
      %9235 = vmatprep.subr.mxu0 0.0
      %9236 = vmatpush1.msra.mxu0 0.0
      %9237 = vmatprep.subr.mxu0 0.0
      %9238 = vmatpush1.msra.mxu0 0.0
      %9239 = vmatprep.subr.mxu0 0.0
      %9240 = vmatpush1.msra.mxu0 0.0
      %9241 = vmatprep.subr.mxu0 0.0
      %9242 = vmatpush1.msra.mxu0 0.0
      %9243 = vmatprep.subr.mxu0 0.0
      %9244 = vmatpush1.msra.mxu0 0.0
      %9245 = vmatprep.subr.mxu0 0.0
      %9246 = vmatpush1.msra.mxu0 0.0
      %9247 = vmatprep.subr.mxu0 0.0
      %9248 = vmatpush1.msra.mxu0 0.0
      %9249 = vmatprep.subr.mxu0 0.0
      %9250 = vmatpush1.msra.mxu0 0.0
      %9251 = vmatprep.subr.mxu0 0.0
      %9252 = vmatpush1.msra.mxu0 0.0
      %9253 = vmatprep.subr.mxu0 0.0
      %9254 = vmatpush1.msra.mxu0 0.0
      %9255 = vmatprep.subr.mxu0 0.0
      %9256 = vmatpush1.msra.mxu0 0.0
      %9257 = vmatprep.subr.mxu0 0.0
      %9258 = vmatpush1.msra.mxu0 0.0
      %9259 = vmatprep.subr.mxu0 0.0
      %9260 = vmatpush1.msra.mxu0 0.0
      %9261 = vmatprep.subr.mxu0 0.0
      %9262 = vmatpush1.msra.mxu0 0.0
      %9263 = vmatprep.subr.mxu0 0.0
      %9264 = vmatpush1.msra.mxu0 0.0
      %9265 = vmatprep.subr.mxu0 0.0
      %9266 = vmatpush1.msra.mxu0 0.0
      %9267 = vmatprep.subr.mxu0 0.0
      %9268 = vmatpush1.msra.mxu0 0.0
      %9269 = vmatprep.subr.mxu0 0.0
      %9270 = vmatpush1.msra.mxu0 0.0
      %9271 = vmatprep.subr.mxu0 0.0
      %9272 = vmatpush1.msra.mxu0 0.0
      %9273 = vmatprep.subr.mxu0 0.0
      %9274 = vmatpush1.msra.mxu0 0.0
      %9275 = vmatprep.subr.mxu0 0.0
      %9276 = vmatpush1.msra.mxu0 0.0
      %9277 = vmatprep.subr.mxu0 0.0
      %9278 = vmatpush1.msra.mxu0 0.0
      %9279 = vmatprep.subr.mxu0 0.0
      %9280 = vmatpush1.msra.mxu0 0.0
      %9281 = vmatprep.subr.mxu0 0.0
      %9282 = vmatpush1.msra.mxu0 0.0
      %9283 = vmatprep.subr.mxu0 0.0
      %9284 = vmatpush1.msra.mxu0 0.0
      %9285 = vmatprep.subr.mxu0 0.0
      %9286 = vmatpush1.msra.mxu0 0.0
      %9287 = vmatprep.mubr.f32.mxu0 0.0
      %9288 = vmatmul.mubr.f32.gmra.mrb[0].mxu0 %v2006
      %v9289 = vpop.f32.mrb[0].mxu0
      %v9290 = vadd.f32 0.0, %v9289
      %v9291 = vpop.f32.mrb[0].mxu0
      %9292 = vmatprep.mubr.f32.mxu0 0.0
      %9293 = vmatmul.mubr.f32.gmra.mrb[0].mxu0 %v2009
      %v9294 = vpop.f32.mrb[0].mxu0
      %v9295 = vadd.f32 0.0, %v9294
      %v9296 = vpop.f32.mrb[0].mxu0
      %9297 = vdwg.mxu0
      %9298 = vmatprep.subr.mxu0 0.0
      %9299 = vmatpush1.msra.mxu0 %v9290
      %9300 = vmatprep.subr.mxu0 0.0
      %9301 = vmatpush1.msra.mxu0 %v9295
      %9302 = vmatprep.subr.mxu0 0.0
      %9303 = vmatpush1.msra.mxu0 0.0
      %9304 = vmatprep.subr.mxu0 0.0
      %9305 = vmatpush1.msra.mxu0 0.0
      %9306 = vmatprep.subr.mxu0 0.0
      %9307 = vmatpush1.msra.mxu0 0.0
      %9308 = vmatprep.subr.mxu0 0.0
      %9309 = vmatpush1.msra.mxu0 0.0
      %9310 = vmatprep.subr.mxu0 0.0
      %9311 = vmatpush1.msra.mxu0 0.0
      %9312 = vmatprep.subr.mxu0 0.0
      %9313 = vmatpush1.msra.mxu0 0.0
      %9314 = vmatprep.subr.mxu0 0.0
      %9315 = vmatpush1.msra.mxu0 0.0
      %9316 = vmatprep.subr.mxu0 0.0
      %9317 = vmatpush1.msra.mxu0 0.0
      %9318 = vmatprep.subr.mxu0 0.0
      %9319 = vmatpush1.msra.mxu0 0.0
      %9320 = vmatprep.subr.mxu0 0.0
      %9321 = vmatpush1.msra.mxu0 0.0
      %9322 = vmatprep.subr.mxu0 0.0
      %9323 = vmatpush1.msra.mxu0 0.0
      %9324 = vmatprep.subr.mxu0 0.0
      %9325 = vmatpush1.msra.mxu0 0.0
      %9326 = vmatprep.subr.mxu0 0.0
      %9327 = vmatpush1.msra.mxu0 0.0
      %9328 = vmatprep.subr.mxu0 0.0
      %9329 = vmatpush1.msra.mxu0 0.0
      %9330 = vmatprep.subr.mxu0 0.0
      %9331 = vmatpush1.msra.mxu0 0.0
      %9332 = vmatprep.subr.mxu0 0.0
      %9333 = vmatpush1.msra.mxu0 0.0
      %9334 = vmatprep.subr.mxu0 0.0
      %9335 = vmatpush1.msra.mxu0 0.0
      %9336 = vmatprep.subr.mxu0 0.0
      %9337 = vmatpush1.msra.mxu0 0.0
      %9338 = vmatprep.subr.mxu0 0.0
      %9339 = vmatpush1.msra.mxu0 0.0
      %9340 = vmatprep.subr.mxu0 0.0
      %9341 = vmatpush1.msra.mxu0 0.0
      %9342 = vmatprep.subr.mxu0 0.0
      %9343 = vmatpush1.msra.mxu0 0.0
      %9344 = vmatprep.subr.mxu0 0.0
      %9345 = vmatpush1.msra.mxu0 0.0
      %9346 = vmatprep.subr.mxu0 0.0
      %9347 = vmatpush1.msra.mxu0 0.0
      %9348 = vmatprep.subr.mxu0 0.0
      %9349 = vmatpush1.msra.mxu0 0.0
      %9350 = vmatprep.subr.mxu0 0.0
      %9351 = vmatpush1.msra.mxu0 0.0
      %9352 = vmatprep.subr.mxu0 0.0
      %9353 = vmatpush1.msra.mxu0 0.0
      %9354 = vmatprep.subr.mxu0 0.0
      %9355 = vmatpush1.msra.mxu0 0.0
      %9356 = vmatprep.subr.mxu0 0.0
      %9357 = vmatpush1.msra.mxu0 0.0
      %9358 = vmatprep.subr.mxu0 0.0
      %9359 = vmatpush1.msra.mxu0 0.0
      %9360 = vmatprep.subr.mxu0 0.0
      %9361 = vmatpush1.msra.mxu0 0.0
      %9362 = vmatprep.mubr.f32.mxu0 0.0
      %9363 = vmatmul.mubr.f32.gmra.mrb[0].mxu0 %v7707
      %v9364 = vpop.f32.mrb[0].mxu0
      %v9365 = vadd.f32 0.0, %v9364
      %v9366 = vpop.f32.mrb[0].mxu0
      %9367 = vmatprep.mubr.f32.mxu0 0.0
      %9368 = vmatmul.mubr.f32.gmra.mrb[0].mxu0 %v7710
      %v9369 = vpop.f32.mrb[0].mxu0
      %v9370 = vadd.f32 0.0, %v9369
      %v9371 = vpop.f32.mrb[0].mxu0
      %9372 = vdwg.mxu0
      %v9373 = vmul.f32 %v9061, %v7779
      %v9374 = vmul.f32 %v9066, %v7784
      %v9375 = vsub.f32 %v9365, %v9373
      %v9376 = vsub.f32 %v9370, %v9374
      %v9377 = vmul.f32 %v9061, 2.0
      %v9378 = vmul.f32 %v9066, 2.0
      %v9379 = vmul.f32 %v9377, %v7779
      %v9380 = vmul.f32 %v9378, %v7784
      %v9381 = vadd.f32 %v9379, 0.0001
      %v9382 = vadd.f32 %v9380, 0.0001
      %v9383 = vmul.f32 %v9375, 2.0
      %v9384 = vmul.f32 %v9376, 2.0
      %v9385 = vadd.f32 %v9383, 0.0009
      %v9386 = vadd.f32 %v9384, 0.0009
      %v9387 = vmul.f32 %v9381, %v9385
      %v9388 = vmul.f32 %v9382, %v9386
      %v9389 = vadd.f32 %v9219, %v7787
      %v9390 = vadd.f32 %v9220, %v7788
      %v9391 = vadd.f32 %v9389, 0.0001
      %v9392 = vadd.f32 %v9390, 0.0001
      %v9393 = vadd.f32 %v9221, %v7941
      %v9394 = vadd.f32 %v9222, %v7942
      %v9395 = vmul.f32 %v9391, %v9393
      %v9396 = vmul.f32 %v9392, %v9394
      %v9397 = vrcp.pop %v9395
      %v9398 = vrcp.pop %v9396
      %v9399 = vmul.f32 %v9387, %v9397
      %v9400 = vmul.f32 %v9388, %v9398
      %v9401 = vmax.f32 %v9221, 0.0001
      %v9402 = vmax.f32 %v9222, 0.0001
      %v9403 = vmul.f32 %v9401, %v9399
      %v9404 = vmul.f32 %v9402, %v9400
      %v9405 = vadd.f32 %v8915, %v9403
      %v9406 = vadd.f32 %v8916, %v9404
      %v9407 = vadd.f32 %v8917, %v9401
      %v9408 = vadd.f32 %v8918, %v9402
      %v9409 = vadd.f32 %v9407, 1e-07
      %v9410 = vadd.f32 %v9408, 1e-07
      %v9411 = vrcp.pop %v9409
      %v9412 = vrcp.pop %v9410
      %v9413 = vmul.f32 %v9405, %v9411
      %v9414 = vmul.f32 %v9406, %v9412
      %v9415 = vsel %vm352, %v9413, 0.0
      %v9416 = vsel %vm352, %v9414, 0.0
      %v9417 = vadd.f32 %v9415, %v9416
      %9418 = vadd.xlane.f32.xlu0 %v9417
      %v9419 = vpop.xlane.xlu0 %9418
      %v9420 = vrot.slane %v9419, 4
      %v9421 = vadd.f32 %v9419, %v9420
      %v9422 = vrot.slane %v9421, 2
      %v9423 = vadd.f32 %v9421, %v9422
      %v9424 = vrot.slane %v9423, 1
      %v9425 = vadd.f32 %v9423, %v9424
      %s9426 = vtos %v9425
      %s9427 = sadd.f32 %s7624, %s9426
      %v9428 = vstv %s9427
      %9429 = vst [vmem:[%s309] sm:$0xff] %v9428
      %p9430 = scmp.lt.s32.totalorder %s17, 1
      %s9431 = scalar_select %p9430, %s17, 1
      %s9432 = smul.addr %s9431, 8
      %s9433 = scalar_lea.vmem %s6, %s9432
      // Predicated region
      $region45: #{regularized_loss.2} parent=43 // pred_check
        %p9434 = pneg %p181
      $region46: #{regularized_loss.2} parent=43 // pred_check_branch
        %9436 = sbr.rel (%p9434) target = $region48
      $region47: #{regularized_loss.2} parent=43 // pred_region
        _
      $region48: #{regularized_loss.2} parent=43 // pred_fallthru
        _
    $region44: #{regularized_loss.2} parent=5 // pred_fallthru
      _
    %p9437 = scmp.le.s32.totalorder 2, %s12
    // Predicated region
    $region49: #{regularized_loss.2} parent=5 // pred_check
      %p9438 = pneg %p9437
    $region50: #{regularized_loss.2} parent=5 // pred_check_branch
      %9440 = sbr.rel (%p9438) target = $region52
    $region51: #{regularized_loss.2} parent=5 // pred_region
      %s9441 = ssub.s32 %s12, 2
      // Predicated region
      $region53: #{regularized_loss.2} parent=51 // pred_check
        %p9442 = pneg %p187
      $region54: #{regularized_loss.2} parent=51 // pred_check_branch
        %9444 = sbr.rel (%p9442) target = $region56
      $region55: #{regularized_loss.2} parent=51 // pred_region
        %p9445 = scmp.lt.s32.totalorder %s18, 1
        %s9446 = scalar_select %p9445, %s18, 1
        %s9447 = smul.addr %s9446, 8
        %s9448 = scalar_lea.vmem %s6, %s9447
      $region56: #{regularized_loss.2} parent=51 // pred_fallthru
        _
    $region52: #{regularized_loss.2} parent=5 // pred_fallthru
      _
  $region6: #{regularized_loss.2} parent=0 // loop_footer
    %s16 = sadd.s32 1, %s12
  $region7: #{regularized_loss.2} parent=0 // loop_footer_branch
    %11 = sbr.rel target = $region3
  $region8: #{regularized_loss.2} parent=0 // loop_exit
    _

</llo_original>
